<compile_context>
chip_gen: v6e
topology: v6e:2x2x1
jax: 0.10.0
libtpu: 0.0.40
codegen_flags: <defaults>
</compile_context>

<pallas_src>
import numpy as np
import jax
import jax.numpy as jnp
from jax.experimental import pallas as pl
from jax.experimental.pallas import tpu as pltpu


# ---------------------------------------------------------------------------
# Pallas kernels
# ---------------------------------------------------------------------------

def _make_encoder_kernel(nb, r_valid, r_pad, ln_eps=1e-5):
    """Fused encoder layer: batched im2col-GEMM + bias + per-sample LN + ReLU.

    Input patches are (nb*r_pad, K) with each sample's rows zero-padded from
    r_valid up to r_pad (multiple of 8) so the single MXU matmul has
    M = nb*r_pad and all per-sample slices stay sublane-aligned.
    """
    inv_n = 1.0 / float(r_valid)   # divided again by C below

    def kernel(p_ref, w_ref, b_ref, g_ref, bt_ref, o_ref):
        # One MXU matmul for the whole sample block (bf16 operands, f32 acc).
        acc = jnp.dot(p_ref[...].astype(jnp.bfloat16), w_ref[...],
                      preferred_element_type=jnp.float32)      # (nb*r_pad, C)
        x = acc + b_ref[...]                                   # (+ (1, C) bias)
        c = x.shape[-1]
        inv_elems = inv_n / float(c)

        # Mask for the zero-padded rows (excluded from LayerNorm statistics).
        row = jax.lax.broadcasted_iota(jnp.int32, (r_pad, 1), 0)
        mask = (row < r_valid).astype(jnp.float32)             # (r_pad, 1)

        g = g_ref[...]
        bt = bt_ref[...]
        # Per-sample LayerNorm over the whole (C, Ho, Wo) feature map.
        # nb is small & static -> unrolled; slices are sublane-aligned.
        for n in range(nb):
            xn = x[n * r_pad:(n + 1) * r_pad, :]               # (r_pad, C)
            xm = xn * mask
            mean = jnp.sum(jnp.sum(xm, axis=-1, keepdims=True),
                           axis=0, keepdims=True) * inv_elems
            d = (xn - mean) * mask
            var = jnp.sum(jnp.sum(d * d, axis=-1, keepdims=True),
                          axis=0, keepdims=True) * inv_elems
            y = (xn - mean) * jax.lax.rsqrt(var + ln_eps)
            o_ref[n] = jnp.maximum(y * g + bt, 0.0)

    return kernel


def encoder_layer_pallas(p2, w_mat, b, ln_g, ln_b, *, nb, r_valid, r_pad):
    """p2:(nb*r_pad, K) f32; w_mat:(K, C) bf16; b:(1,C); ln_g/ln_b:(r_pad, C)."""
    m, k = p2.shape
    c = w_mat.shape[1]
    kernel = _make_encoder_kernel(nb, r_valid, r_pad)
    return pl.pallas_call(
        kernel,
        out_shape=jax.ShapeDtypeStruct((nb, r_pad, c), jnp.float32),
        grid=(1,),   # at production batch sizes this axis tiles over sample
                     # blocks and splits across v7x TensorCores ("parallel").
        in_specs=[pl.BlockSpec((m, k), lambda i: (0, 0)),
                  pl.BlockSpec((k, c), lambda i: (0, 0)),
                  pl.BlockSpec((1, c), lambda i: (0, 0)),
                  pl.BlockSpec((r_pad, c), lambda i: (0, 0)),
                  pl.BlockSpec((r_pad, c), lambda i: (0, 0))],
        out_specs=pl.BlockSpec((nb, r_pad, c), lambda i: (0, 0, 0)),
        compiler_params=pltpu.CompilerParams(
            dimension_semantics=("parallel",)),
    )(p2, w_mat, b, ln_g, ln_b)


def _make_latent_kernel(latent_dim):
    """Fused fc_mu|fc_logvar (one concatenated matmul) + reparameterize +
    decoder fc.  Reads the flattened encoder features exactly once."""

    def kernel(h_ref, wml_ref, bml_ref, eps_ref, wd_ref, bd_ref,
               mu_ref, lv_ref, d0_ref):
        h = h_ref[...]
        ml = jnp.dot(h, wml_ref[...],
                     preferred_element_type=jnp.float32) + bml_ref[...]
        mu = ml[:, :latent_dim]
        lv = ml[:, latent_dim:]
        mu_ref[...] = mu
        lv_ref[...] = lv
        z = mu + eps_ref[...] * jnp.exp(0.5 * lv)
        d0_ref[...] = jnp.dot(z, wd_ref[...],
                              preferred_element_type=jnp.float32) + bd_ref[...]

    return kernel


def latent_decfc_pallas(hf, w_mulv, b_mulv, eps, w_dec, b_dec, *, latent_dim):
    n, f = hf.shape
    l2 = w_mulv.shape[1]
    fd = w_dec.shape[1]
    sds = lambda shp: jax.ShapeDtypeStruct(shp, jnp.float32)
    return pl.pallas_call(
        _make_latent_kernel(latent_dim),
        out_shape=(sds((n, latent_dim)), sds((n, latent_dim)), sds((n, fd))),
        grid=(1,),
        in_specs=[pl.BlockSpec((n, f), lambda i: (0, 0)),
                  pl.BlockSpec((f, l2), lambda i: (0, 0)),
                  pl.BlockSpec((1, l2), lambda i: (0, 0)),
                  pl.BlockSpec((n, latent_dim), lambda i: (0, 0)),
                  pl.BlockSpec((latent_dim, fd), lambda i: (0, 0)),
                  pl.BlockSpec((1, fd), lambda i: (0, 0))],
        out_specs=(pl.BlockSpec((n, latent_dim), lambda i: (0, 0)),
                   pl.BlockSpec((n, latent_dim), lambda i: (0, 0)),
                   pl.BlockSpec((n, fd), lambda i: (0, 0))),
        compiler_params=pltpu.CompilerParams(
            dimension_semantics=("arbitrary",)),
    )(hf, w_mulv, b_mulv, eps, w_dec, b_dec)


def _dec_layer_kernel(x_ref, t_ref, b_ref, g_ref, bt_ref, o_ref):
    """Fused decoder layer: (ConvTranspose + ReplicationPad folded into t_ref)
    matmul + bias + per-sample LayerNorm (two-pass) + ReLU, lane-dense output."""
    acc = jnp.dot(x_ref[...].astype(jnp.bfloat16), t_ref[...],
                  preferred_element_type=jnp.float32)          # (N, Hp*Wp*C)
    x = acc + b_ref[...]
    mean = jnp.mean(x, axis=-1, keepdims=True)
    d = x - mean
    var = jnp.mean(d * d, axis=-1, keepdims=True)
    xn = d * jax.lax.rsqrt(var + 1e-5)
    o_ref[...] = jnp.maximum(xn * g_ref[...] + bt_ref[...], 0.0)


def decoder_layer_pallas(x, t_mat, b_row, ln_g, ln_b):
    n, fin = x.shape
    fout = t_mat.shape[1]
    return pl.pallas_call(
        _dec_layer_kernel,
        out_shape=jax.ShapeDtypeStruct((n, fout), jnp.float32),
        grid=(1,),
        in_specs=[pl.BlockSpec((n, fin), lambda i: (0, 0)),
                  pl.BlockSpec((fin, fout), lambda i: (0, 0)),
                  pl.BlockSpec((1, fout), lambda i: (0, 0)),
                  pl.BlockSpec((1, fout), lambda i: (0, 0)),
                  pl.BlockSpec((1, fout), lambda i: (0, 0))],
        out_specs=pl.BlockSpec((n, fout), lambda i: (0, 0)),
        compiler_params=pltpu.CompilerParams(
            dimension_semantics=("parallel",)),
    )(x, t_mat, b_row, ln_g, ln_b)


def _dec_final_kernel(x_ref, t_ref, b_ref, o_ref):
    acc = jnp.dot(x_ref[...].astype(jnp.bfloat16), t_ref[...],
                  preferred_element_type=jnp.float32)
    o_ref[...] = jax.nn.sigmoid(acc + b_ref[...])


def decoder_final_pallas(x, t_mat, b_row):
    n, fin = x.shape
    fout = t_mat.shape[1]
    return pl.pallas_call(
        _dec_final_kernel,
        out_shape=jax.ShapeDtypeStruct((n, fout), jnp.float32),
        grid=(1,),
        in_specs=[pl.BlockSpec((n, fin), lambda i: (0, 0)),
                  pl.BlockSpec((fin, fout), lambda i: (0, 0)),
                  pl.BlockSpec((1, fout), lambda i: (0, 0))],
        out_specs=pl.BlockSpec((n, fout), lambda i: (0, 0)),
        compiler_params=pltpu.CompilerParams(
            dimension_semantics=("parallel",)),
    )(x, t_mat, b_row)


# ---------------------------------------------------------------------------
# Glue (pure data movement, fused by XLA under jit)
# ---------------------------------------------------------------------------

def _extract_patches_nhwc(x, k, stride, r_pad):
    """x:(N,H,W,C) -> (N*r_pad, k*k*C), feature order (kh,kw,c); each sample's
    Ho*Wo rows are zero-padded to r_pad (multiple of 8)."""
    n, h, w, c = x.shape
    ho = (h - k) // stride + 1
    wo = (w - k) // stride + 1
    slices = []
    for kh in range(k):
        for kw in range(k):
            slices.append(x[:, kh:kh + stride * (ho - 1) + 1:stride,
                              kw:kw + stride * (wo - 1) + 1:stride, :])
    p = jnp.concatenate(slices, axis=-1).reshape(n, ho * wo, k * k * c)
    p = jnp.pad(p, ((0, 0), (0, r_pad - ho * wo), (0, 0)))
    return p.reshape(n * r_pad, k * k * c)


# ---------------------------------------------------------------------------
# Parameter construction (matmul-ready layouts precomputed once at init)
# ---------------------------------------------------------------------------

def _conv_out(n, k, s):
    return (n - k) // s + 1


def _ceil8(n):
    return ((n + 7) // 8) * 8


def _build_deconv_matrix(w_np, h, w, cin, cout, k, s, op_h, op_w):
    """Fold ConvTranspose2d(cin,cout,k,s) + ReplicationPad2d((0,op_w,0,op_h))
    into one dense (h*w*cin, hp*wp*cout) matrix (NHWC-flat in and out)."""
    ho = (h - 1) * s + k
    wo = (w - 1) * s + k
    hp, wp = ho + op_h, wo + op_w
    t = np.zeros((h, w, cin, ho, wo, cout), np.float32)
    for kh in range(k):
        for kw in range(k):
            for ih in range(h):
                for iw in range(w):
                    t[ih, iw, :, ih * s + kh, iw * s + kw, :] += w_np[:, :, kh, kw]
    # replication pad = copy of the last output row / column
    t = np.take(t, np.minimum(np.arange(hp), ho - 1), axis=3)
    t = np.take(t, np.minimum(np.arange(wp), wo - 1), axis=4)
    return t.reshape(h * w * cin, hp * wp * cout), hp, wp


def init_vae_params(key, input_channels, hidden_size, num_layers, latent_dim,
                    image_size, kernel_size, stride):
    keys = iter(jax.random.split(key, 16 + 4 * num_layers))
    k = kernel_size

    def nrm(shape, scale=0.05):
        return (scale * jax.random.normal(next(keys), shape)).astype(jnp.float32)

    params = {'hidden_size': hidden_size, 'input_channels': input_channels,
              'image_size': image_size, 'latent_dim': latent_dim}

    # -------- encoder conv layers --------
    enc_layers = []
    h, w = image_size
    in_ch = input_channels
    for _ in range(num_layers):
        ho, wo = _conv_out(h, k, stride), _conv_out(w, k, stride)
        r = ho * wo
        r_pad = _ceil8(r)
        wt = nrm((hidden_size, in_ch, k, k))             # PyTorch (Cout,Cin,k,k)
        enc_layers.append(dict(
            # im2col weight (k*k*Cin, Cout), feature order (kh,kw,cin), bf16 MXU
            w_mat=wt.transpose(2, 3, 1, 0).reshape(k * k * in_ch, hidden_size)
                    .astype(jnp.bfloat16),
            b=jnp.zeros((1, hidden_size), jnp.float32),
            # LayerNorm([C,ho,wo]) default init, laid out NHWC (rows=h*w, lanes=C),
            # rows padded to r_pad (trained NCHW params would be transpose(1,2,0)+pad)
            ln_g=jnp.ones((r_pad, hidden_size), jnp.float32),
            ln_b=jnp.zeros((r_pad, hidden_size), jnp.float32),
            R=r, R_pad=r_pad, Ho=ho, Wo=wo))
        h, w = ho, wo
        in_ch = hidden_size
    params['enc_layers'] = enc_layers
    flat = h * w * hidden_size

    # -------- fc_mu / fc_logvar: one concatenated (F, 2L) matrix, NHWC columns --------
    wmu = nrm((latent_dim, flat))
    wlv = nrm((latent_dim, flat))

    def to_nhwc_cols(wfc):     # (L, NCHW-flat) -> (NHWC-flat, L)
        return (wfc.reshape(latent_dim, hidden_size, h, w)
                   .transpose(2, 3, 1, 0).reshape(flat, latent_dim))

    params['fc_mulv_w'] = jnp.concatenate([to_nhwc_cols(wmu), to_nhwc_cols(wlv)],
                                          axis=1)
    params['fc_mulv_b'] = jnp.zeros((1, 2 * latent_dim), jnp.float32)

    # -------- decoder fc (produces NHWC-flat activation directly) --------
    dh, dw = h, w
    fd = hidden_size * dh * dw
    wd = nrm((fd, latent_dim))                           # PyTorch Linear (out, in)
    params['dec_fc_w'] = (wd.reshape(hidden_size, dh, dw, latent_dim)
                            .transpose(3, 1, 2, 0).reshape(latent_dim, fd))
    params['dec_fc_b'] = jnp.zeros((1, fd), jnp.float32)

    def calc_size_layer(layer_num):
        hh, ww = image_size
        for _ in range(num_layers - layer_num - 1):
            hh, ww = _conv_out(hh, k, stride), _conv_out(ww, k, stride)
        return hh, ww

    # -------- decoder deconv layers: ConvTranspose+Pad folded into a matrix --------
    dec_layers = []
    ch, cw = dh, dw
    for layer_num in range(num_layers - 1):
        nh, nw = calc_size_layer(layer_num)
        op_h = nh - k - stride * (ch - 1)
        op_w = nw - k - stride * (cw - 1)
        wt = nrm((hidden_size, hidden_size, k, k))       # PyTorch (Cin,Cout,k,k)
        t, hp, wp = _build_deconv_matrix(np.asarray(wt), ch, cw,
                                         hidden_size, hidden_size,
                                         k, stride, op_h, op_w)
        assert (hp, wp) == (nh, nw)
        b = jnp.zeros((hidden_size,), jnp.float32)
        dec_layers.append(dict(
            t_mat=jnp.asarray(t, jnp.bfloat16),
            b_row=jnp.tile(b, hp * wp).reshape(1, hp * wp * hidden_size),
            ln_g=jnp.ones((1, hp * wp * hidden_size), jnp.float32),
            ln_b=jnp.zeros((1, hp * wp * hidden_size), jnp.float32)))
        ch, cw = nh, nw
    params['dec_layers'] = dec_layers

    nh, nw = image_size
    op_h = nh - k - stride * (ch - 1)
    op_w = nw - k - stride * (cw - 1)
    wt = nrm((hidden_size, input_channels, k, k))
    t, hp, wp = _build_deconv_matrix(np.asarray(wt), ch, cw,
                                     hidden_size, input_channels,
                                     k, stride, op_h, op_w)
    assert (hp, wp) == image_size
    b = jnp.zeros((input_channels,), jnp.float32)
    params['final'] = dict(
        t_mat=jnp.asarray(t, jnp.bfloat16),
        b_row=jnp.tile(b, hp * wp).reshape(1, hp * wp * input_channels),
        out_hw=(hp, wp))
    return params


# ---------------------------------------------------------------------------
# VAE forward pass
# ---------------------------------------------------------------------------

def vae_forward(params, x, eps, kernel_size, stride):
    k = kernel_size
    n = x.shape[0]
    h = jnp.transpose(x, (0, 2, 3, 1))                 # NCHW -> NHWC once

    # ----- encoder: one fused Pallas kernel per conv layer (whole batch) -----
    for layer in params['enc_layers']:
        p2 = _extract_patches_nhwc(h, k, stride, layer['R_pad'])
        out = encoder_layer_pallas(p2, layer['w_mat'], layer['b'],
                                   layer['ln_g'], layer['ln_b'],
                                   nb=n, r_valid=layer['R'], r_pad=layer['R_pad'])
        h = out[:, :layer['R'], :].reshape(n, layer['Ho'], layer['Wo'], -1)

    hf = h.reshape(n, -1)                              # NHWC flatten (weights permuted to match)

    # ----- fc_mu | fc_logvar + reparameterize + decoder fc: one kernel -----
    mu, logvar, d = latent_decfc_pallas(
        hf, params['fc_mulv_w'], params['fc_mulv_b'], eps,
        params['dec_fc_w'], params['dec_fc_b'],
        latent_dim=params['latent_dim'])

    # ----- decoder: one fused kernel per (deconv + pad + LN + ReLU) layer -----
    for layer in params['dec_layers']:
        d = decoder_layer_pallas(d, layer['t_mat'], layer['b_row'],
                                 layer['ln_g'], layer['ln_b'])

    fl = params['final']
    y = decoder_final_pallas(d, fl['t_mat'], fl['b_row'])
    hp, wp = fl['out_hw']
    x_recon = (y.reshape(n, hp, wp, params['input_channels'])
                .transpose(0, 3, 1, 2))                # back to NCHW
    return x_recon, mu, logvar


# ---------------------------------------------------------------------------
# Main
# ---------------------------------------------------------------------------

if __name__ == "__main__":
    input_channels = 4
    hidden_size = 32
    num_layers = 2
    latent_dim = 16
    image_size = (16, 16)
    kernel_size = 3
    stride = 2
    batch = 2

    key = jax.random.PRNGKey(0)
    pkey, xkey, ekey = jax.random.split(key, 3)

    params = init_vae_params(pkey, input_channels, hidden_size, num_layers,
                             latent_dim, image_size, kernel_size, stride)

    x = jax.random.uniform(xkey, (batch, input_channels) + image_size,
                           dtype=jnp.float32)
    # eps for reparameterize (torch.randn_like equivalent, made deterministic)
    eps = jax.random.normal(ekey, (batch, latent_dim), dtype=jnp.float32)

    # jit the whole forward so the remaining glue (patch extraction, reshapes,
    # transposes) fuses with the pallas_calls instead of dispatching op-by-op.
    fwd = jax.jit(lambda xx, ee: vae_forward(params, xx, ee, kernel_size, stride))

    x_recon, mu, logvar = fwd(x, eps)
    jax.block_until_ready((x_recon, mu, logvar))

    assert x_recon.shape == (batch, input_channels) + image_size
    assert mu.shape == (batch, latent_dim) and logvar.shape == (batch, latent_dim)
    assert bool(jnp.all(jnp.isfinite(x_recon)))
    assert bool(jnp.all(jnp.isfinite(mu))) and bool(jnp.all(jnp.isfinite(logvar)))
    print("KERNEL_OK")
</pallas_src>

<mosaic_0001>
module attributes {stable_mosaic.version = 11 : i64} {
  func.func @kernel(%arg0: i32, %arg1: memref<112x36xf32, #tpu.memory_space<vmem>>, %arg2: memref<36x32xbf16, #tpu.memory_space<vmem>>, %arg3: memref<1x32xf32, #tpu.memory_space<vmem>>, %arg4: memref<56x32xf32, #tpu.memory_space<vmem>>, %arg5: memref<56x32xf32, #tpu.memory_space<vmem>>, %arg6: memref<2x56x32xf32, #tpu.memory_space<vmem>>) attributes {dimension_semantics = [#tpu.dimension_semantics<parallel>], iteration_bounds = array<i64: 1>, scalar_prefetch = 0 : i64, scratch_operands = 0 : i64, tpu.core_type = #tpu.core_type<tc>, window_params = [{pipeline_mode = #tpu.pipeline_mode<synchronous>, transform_indices = @transform_0, window_bounds = array<i64: 112, 36>}, {pipeline_mode = #tpu.pipeline_mode<synchronous>, transform_indices = @transform_1, window_bounds = array<i64: 36, 32>}, {pipeline_mode = #tpu.pipeline_mode<synchronous>, transform_indices = @transform_2, window_bounds = array<i64: 1, 32>}, {pipeline_mode = #tpu.pipeline_mode<synchronous>, transform_indices = @transform_3, window_bounds = array<i64: 56, 32>}, {pipeline_mode = #tpu.pipeline_mode<synchronous>, transform_indices = @transform_4, window_bounds = array<i64: 56, 32>}, {pipeline_mode = #tpu.pipeline_mode<synchronous>, transform_indices = @transform_5, window_bounds = array<i64: 2, 56, 32>}]} {
    %c0 = arith.constant 0 : index
    %c0_0 = arith.constant 0 : index
    %0 = vector.load %arg1[%c0, %c0_0] : memref<112x36xf32, #tpu.memory_space<vmem>>, vector<112x36xf32>
    %1 = arith.truncf %0 : vector<112x36xf32> to vector<112x36xbf16>
    %c0_1 = arith.constant 0 : index
    %c0_2 = arith.constant 0 : index
    %2 = vector.load %arg2[%c0_1, %c0_2] : memref<36x32xbf16, #tpu.memory_space<vmem>>, vector<36x32xbf16>
    %cst = arith.constant dense<0.000000e+00> : vector<112x32xf32>
    %3 = tpu.matmul %1, %2, %cst {dimension_numbers = #tpu.dot_dimension_numbers<[1], [0], [0], [1], [0, 0, 1, 1], [], []>} : vector<112x36xbf16>, vector<36x32xbf16>, vector<112x32xf32> -> vector<112x32xf32>
    %c0_3 = arith.constant 0 : index
    %c0_4 = arith.constant 0 : index
    %4 = vector.load %arg3[%c0_3, %c0_4] : memref<1x32xf32, #tpu.memory_space<vmem>>, vector<1x32xf32>
    %5 = vector.broadcast %4 : vector<1x32xf32> to vector<112x32xf32>
    %6 = arith.addf %3, %5 : vector<112x32xf32>
    %7 = tpu.iota {dimensions = array<i32: 0>} : vector<56x1xi32>
    %c49_i32 = arith.constant 49 : i32
    %8 = vector.broadcast %c49_i32 : i32 to vector<56x1xi32>
    %9 = arith.cmpi slt, %7, %8 : vector<56x1xi32>
    %10 = arith.extui %9 : vector<56x1xi1> to vector<56x1xi32>
    %11 = arith.sitofp %10 : vector<56x1xi32> to vector<56x1xf32>
    %c0_5 = arith.constant 0 : index
    %c0_6 = arith.constant 0 : index
    %12 = vector.load %arg4[%c0_5, %c0_6] : memref<56x32xf32, #tpu.memory_space<vmem>>, vector<56x32xf32>
    %c0_7 = arith.constant 0 : index
    %c0_8 = arith.constant 0 : index
    %13 = vector.load %arg5[%c0_7, %c0_8] : memref<56x32xf32, #tpu.memory_space<vmem>>, vector<56x32xf32>
    %14 = vector.extract_strided_slice %6 {offsets = [0, 0], sizes = [56, 32], strides = [1, 1]} : vector<112x32xf32> to vector<56x32xf32>
    %15 = vector.broadcast %11 : vector<56x1xf32> to vector<56x32xf32>
    %16 = arith.mulf %14, %15 : vector<56x32xf32>
    %cst_9 = arith.constant dense<0.000000e+00> : vector<56xf32>
    %17 = vector.multi_reduction <add>, %16, %cst_9 [1] : vector<56x32xf32> to vector<56xf32>
    %18 = vector.shape_cast %17 : vector<56xf32> to vector<56x1xf32>
    %cst_10 = arith.constant dense<0.000000e+00> : vector<1xf32>
    %19 = vector.multi_reduction <add>, %18, %cst_10 [0] : vector<56x1xf32> to vector<1xf32>
    %20 = vector.shape_cast %19 : vector<1xf32> to vector<1x1xf32>
    %cst_11 = arith.constant 6.37755089E-4 : f32
    %21 = vector.broadcast %cst_11 : f32 to vector<1x1xf32>
    %22 = arith.mulf %20, %21 : vector<1x1xf32>
    %23 = vector.broadcast %22 : vector<1x1xf32> to vector<56x32xf32>
    %24 = arith.subf %14, %23 : vector<56x32xf32>
    %25 = vector.broadcast %11 : vector<56x1xf32> to vector<56x32xf32>
    %26 = arith.mulf %24, %25 : vector<56x32xf32>
    %27 = arith.mulf %26, %26 : vector<56x32xf32>
    %cst_12 = arith.constant dense<0.000000e+00> : vector<56xf32>
    %28 = vector.multi_reduction <add>, %27, %cst_12 [1] : vector<56x32xf32> to vector<56xf32>
    %29 = vector.shape_cast %28 : vector<56xf32> to vector<56x1xf32>
    %cst_13 = arith.constant dense<0.000000e+00> : vector<1xf32>
    %30 = vector.multi_reduction <add>, %29, %cst_13 [0] : vector<56x1xf32> to vector<1xf32>
    %31 = vector.shape_cast %30 : vector<1xf32> to vector<1x1xf32>
    %cst_14 = arith.constant 6.37755089E-4 : f32
    %32 = vector.broadcast %cst_14 : f32 to vector<1x1xf32>
    %33 = arith.mulf %31, %32 : vector<1x1xf32>
    %34 = vector.broadcast %22 : vector<1x1xf32> to vector<56x32xf32>
    %35 = arith.subf %14, %34 : vector<56x32xf32>
    %cst_15 = arith.constant 9.99999974E-6 : f32
    %36 = vector.broadcast %cst_15 : f32 to vector<1x1xf32>
    %37 = arith.addf %33, %36 : vector<1x1xf32>
    %38 = math.rsqrt %37 : vector<1x1xf32>
    %39 = vector.broadcast %38 : vector<1x1xf32> to vector<56x32xf32>
    %40 = arith.mulf %35, %39 : vector<56x32xf32>
    %41 = arith.mulf %40, %12 : vector<56x32xf32>
    %42 = arith.addf %41, %13 : vector<56x32xf32>
    %cst_16 = arith.constant 0.000000e+00 : f32
    %43 = vector.broadcast %cst_16 : f32 to vector<56x32xf32>
    %44 = arith.maximumf %42, %43 : vector<56x32xf32>
    %c0_17 = arith.constant 0 : index
    %c0_18 = arith.constant 0 : index
    %c0_19 = arith.constant 0 : index
    %45 = vector.load %arg6[%c0_17, %c0_18, %c0_19] : memref<2x56x32xf32, #tpu.memory_space<vmem>>, vector<1x56x32xf32>
    %46 = vector.shape_cast %45 : vector<1x56x32xf32> to vector<56x32xf32>
    %47 = vector.shape_cast %44 : vector<56x32xf32> to vector<1x56x32xf32>
    tpu.vector_store %arg6[%c0_17, %c0_18, %c0_19], %47 {strides = array<i32>} : memref<2x56x32xf32, #tpu.memory_space<vmem>>, vector<1x56x32xf32>,
    %48 = vector.extract_strided_slice %6 {offsets = [56, 0], sizes = [56, 32], strides = [1, 1]} : vector<112x32xf32> to vector<56x32xf32>
    %49 = vector.broadcast %11 : vector<56x1xf32> to vector<56x32xf32>
    %50 = arith.mulf %48, %49 : vector<56x32xf32>
    %cst_20 = arith.constant dense<0.000000e+00> : vector<56xf32>
    %51 = vector.multi_reduction <add>, %50, %cst_20 [1] : vector<56x32xf32> to vector<56xf32>
    %52 = vector.shape_cast %51 : vector<56xf32> to vector<56x1xf32>
    %cst_21 = arith.constant dense<0.000000e+00> : vector<1xf32>
    %53 = vector.multi_reduction <add>, %52, %cst_21 [0] : vector<56x1xf32> to vector<1xf32>
    %54 = vector.shape_cast %53 : vector<1xf32> to vector<1x1xf32>
    %cst_22 = arith.constant 6.37755089E-4 : f32
    %55 = vector.broadcast %cst_22 : f32 to vector<1x1xf32>
    %56 = arith.mulf %54, %55 : vector<1x1xf32>
    %57 = vector.broadcast %56 : vector<1x1xf32> to vector<56x32xf32>
    %58 = arith.subf %48, %57 : vector<56x32xf32>
    %59 = vector.broadcast %11 : vector<56x1xf32> to vector<56x32xf32>
    %60 = arith.mulf %58, %59 : vector<56x32xf32>
    %61 = arith.mulf %60, %60 : vector<56x32xf32>
    %cst_23 = arith.constant dense<0.000000e+00> : vector<56xf32>
    %62 = vector.multi_reduction <add>, %61, %cst_23 [1] : vector<56x32xf32> to vector<56xf32>
    %63 = vector.shape_cast %62 : vector<56xf32> to vector<56x1xf32>
    %cst_24 = arith.constant dense<0.000000e+00> : vector<1xf32>
    %64 = vector.multi_reduction <add>, %63, %cst_24 [0] : vector<56x1xf32> to vector<1xf32>
    %65 = vector.shape_cast %64 : vector<1xf32> to vector<1x1xf32>
    %cst_25 = arith.constant 6.37755089E-4 : f32
    %66 = vector.broadcast %cst_25 : f32 to vector<1x1xf32>
    %67 = arith.mulf %65, %66 : vector<1x1xf32>
    %68 = vector.broadcast %56 : vector<1x1xf32> to vector<56x32xf32>
    %69 = arith.subf %48, %68 : vector<56x32xf32>
    %cst_26 = arith.constant 9.99999974E-6 : f32
    %70 = vector.broadcast %cst_26 : f32 to vector<1x1xf32>
    %71 = arith.addf %67, %70 : vector<1x1xf32>
    %72 = math.rsqrt %71 : vector<1x1xf32>
    %73 = vector.broadcast %72 : vector<1x1xf32> to vector<56x32xf32>
    %74 = arith.mulf %69, %73 : vector<56x32xf32>
    %75 = arith.mulf %74, %12 : vector<56x32xf32>
    %76 = arith.addf %75, %13 : vector<56x32xf32>
    %cst_27 = arith.constant 0.000000e+00 : f32
    %77 = vector.broadcast %cst_27 : f32 to vector<56x32xf32>
    %78 = arith.maximumf %76, %77 : vector<56x32xf32>
    %c1 = arith.constant 1 : index
    %c0_28 = arith.constant 0 : index
    %c0_29 = arith.constant 0 : index
    %79 = vector.load %arg6[%c1, %c0_28, %c0_29] : memref<2x56x32xf32, #tpu.memory_space<vmem>>, vector<1x56x32xf32>
    %80 = vector.shape_cast %79 : vector<1x56x32xf32> to vector<56x32xf32>
    %81 = vector.shape_cast %78 : vector<56x32xf32> to vector<1x56x32xf32>
    tpu.vector_store %arg6[%c1, %c0_28, %c0_29], %81 {strides = array<i32>} : memref<2x56x32xf32, #tpu.memory_space<vmem>>, vector<1x56x32xf32>,
    return
  }
  func.func @transform_0(%arg0: i32) -> (i32, i32) {
    %c0_i32 = arith.constant 0 : i32
    %c0_i32_0 = arith.constant 0 : i32
    %c0_i32_1 = arith.constant 0 : i32
    return %c0_i32, %c0_i32_0 : i32, i32
  }
  func.func @transform_1(%arg0: i32) -> (i32, i32) {
    %c0_i32 = arith.constant 0 : i32
    %c0_i32_0 = arith.constant 0 : i32
    %c0_i32_1 = arith.constant 0 : i32
    return %c0_i32, %c0_i32_0 : i32, i32
  }
  func.func @transform_2(%arg0: i32) -> (i32, i32) {
    %c0_i32 = arith.constant 0 : i32
    %c0_i32_0 = arith.constant 0 : i32
    %c0_i32_1 = arith.constant 0 : i32
    return %c0_i32, %c0_i32_0 : i32, i32
  }
  func.func @transform_3(%arg0: i32) -> (i32, i32) {
    %c0_i32 = arith.constant 0 : i32
    %c0_i32_0 = arith.constant 0 : i32
    %c0_i32_1 = arith.constant 0 : i32
    return %c0_i32, %c0_i32_0 : i32, i32
  }
  func.func @transform_4(%arg0: i32) -> (i32, i32) {
    %c0_i32 = arith.constant 0 : i32
    %c0_i32_0 = arith.constant 0 : i32
    %c0_i32_1 = arith.constant 0 : i32
    return %c0_i32, %c0_i32_0 : i32, i32
  }
  func.func @transform_5(%arg0: i32) -> (i32, i32, i32) {
    %c0_i32 = arith.constant 0 : i32
    %c0_i32_0 = arith.constant 0 : i32
    %c0_i32_1 = arith.constant 0 : i32
    %c0_i32_2 = arith.constant 0 : i32
    return %c0_i32, %c0_i32_0, %c0_i32_1 : i32, i32, i32
  }
}

module attributes {stable_mosaic.version = 11 : i64} {
  func.func @kernel(%arg0: i32, %arg1: memref<32x288xf32, #tpu.memory_space<vmem>>, %arg2: memref<288x32xbf16, #tpu.memory_space<vmem>>, %arg3: memref<1x32xf32, #tpu.memory_space<vmem>>, %arg4: memref<16x32xf32, #tpu.memory_space<vmem>>, %arg5: memref<16x32xf32, #tpu.memory_space<vmem>>, %arg6: memref<2x16x32xf32, #tpu.memory_space<vmem>>) attributes {dimension_semantics = [#tpu.dimension_semantics<parallel>], iteration_bounds = array<i64: 1>, scalar_prefetch = 0 : i64, scratch_operands = 0 : i64, tpu.core_type = #tpu.core_type<tc>, window_params = [{pipeline_mode = #tpu.pipeline_mode<synchronous>, transform_indices = @transform_0, window_bounds = array<i64: 32, 288>}, {pipeline_mode = #tpu.pipeline_mode<synchronous>, transform_indices = @transform_1, window_bounds = array<i64: 288, 32>}, {pipeline_mode = #tpu.pipeline_mode<synchronous>, transform_indices = @transform_2, window_bounds = array<i64: 1, 32>}, {pipeline_mode = #tpu.pipeline_mode<synchronous>, transform_indices = @transform_3, window_bounds = array<i64: 16, 32>}, {pipeline_mode = #tpu.pipeline_mode<synchronous>, transform_indices = @transform_4, window_bounds = array<i64: 16, 32>}, {pipeline_mode = #tpu.pipeline_mode<synchronous>, transform_indices = @transform_5, window_bounds = array<i64: 2, 16, 32>}]} {
    %c0 = arith.constant 0 : index
    %c0_0 = arith.constant 0 : index
    %0 = vector.load %arg1[%c0, %c0_0] : memref<32x288xf32, #tpu.memory_space<vmem>>, vector<32x288xf32>
    %1 = arith.truncf %0 : vector<32x288xf32> to vector<32x288xbf16>
    %c0_1 = arith.constant 0 : index
    %c0_2 = arith.constant 0 : index
    %2 = vector.load %arg2[%c0_1, %c0_2] : memref<288x32xbf16, #tpu.memory_space<vmem>>, vector<288x32xbf16>
    %cst = arith.constant dense<0.000000e+00> : vector<32x32xf32>
    %3 = tpu.matmul %1, %2, %cst {dimension_numbers = #tpu.dot_dimension_numbers<[1], [0], [0], [1], [0, 0, 1, 1], [], []>} : vector<32x288xbf16>, vector<288x32xbf16>, vector<32x32xf32> -> vector<32x32xf32>
    %c0_3 = arith.constant 0 : index
    %c0_4 = arith.constant 0 : index
    %4 = vector.load %arg3[%c0_3, %c0_4] : memref<1x32xf32, #tpu.memory_space<vmem>>, vector<1x32xf32>
    %5 = vector.broadcast %4 : vector<1x32xf32> to vector<32x32xf32>
    %6 = arith.addf %3, %5 : vector<32x32xf32>
    %7 = tpu.iota {dimensions = array<i32: 0>} : vector<16x1xi32>
    %c9_i32 = arith.constant 9 : i32
    %8 = vector.broadcast %c9_i32 : i32 to vector<16x1xi32>
    %9 = arith.cmpi slt, %7, %8 : vector<16x1xi32>
    %10 = arith.extui %9 : vector<16x1xi1> to vector<16x1xi32>
    %11 = arith.sitofp %10 : vector<16x1xi32> to vector<16x1xf32>
    %c0_5 = arith.constant 0 : index
    %c0_6 = arith.constant 0 : index
    %12 = vector.load %arg4[%c0_5, %c0_6] : memref<16x32xf32, #tpu.memory_space<vmem>>, vector<16x32xf32>
    %c0_7 = arith.constant 0 : index
    %c0_8 = arith.constant 0 : index
    %13 = vector.load %arg5[%c0_7, %c0_8] : memref<16x32xf32, #tpu.memory_space<vmem>>, vector<16x32xf32>
    %14 = vector.extract_strided_slice %6 {offsets = [0, 0], sizes = [16, 32], strides = [1, 1]} : vector<32x32xf32> to vector<16x32xf32>
    %15 = vector.broadcast %11 : vector<16x1xf32> to vector<16x32xf32>
    %16 = arith.mulf %14, %15 : vector<16x32xf32>
    %cst_9 = arith.constant dense<0.000000e+00> : vector<16xf32>
    %17 = vector.multi_reduction <add>, %16, %cst_9 [1] : vector<16x32xf32> to vector<16xf32>
    %18 = vector.shape_cast %17 : vector<16xf32> to vector<16x1xf32>
    %cst_10 = arith.constant dense<0.000000e+00> : vector<1xf32>
    %19 = vector.multi_reduction <add>, %18, %cst_10 [0] : vector<16x1xf32> to vector<1xf32>
    %20 = vector.shape_cast %19 : vector<1xf32> to vector<1x1xf32>
    %cst_11 = arith.constant 0.00347222225 : f32
    %21 = vector.broadcast %cst_11 : f32 to vector<1x1xf32>
    %22 = arith.mulf %20, %21 : vector<1x1xf32>
    %23 = vector.broadcast %22 : vector<1x1xf32> to vector<16x32xf32>
    %24 = arith.subf %14, %23 : vector<16x32xf32>
    %25 = vector.broadcast %11 : vector<16x1xf32> to vector<16x32xf32>
    %26 = arith.mulf %24, %25 : vector<16x32xf32>
    %27 = arith.mulf %26, %26 : vector<16x32xf32>
    %cst_12 = arith.constant dense<0.000000e+00> : vector<16xf32>
    %28 = vector.multi_reduction <add>, %27, %cst_12 [1] : vector<16x32xf32> to vector<16xf32>
    %29 = vector.shape_cast %28 : vector<16xf32> to vector<16x1xf32>
    %cst_13 = arith.constant dense<0.000000e+00> : vector<1xf32>
    %30 = vector.multi_reduction <add>, %29, %cst_13 [0] : vector<16x1xf32> to vector<1xf32>
    %31 = vector.shape_cast %30 : vector<1xf32> to vector<1x1xf32>
    %cst_14 = arith.constant 0.00347222225 : f32
    %32 = vector.broadcast %cst_14 : f32 to vector<1x1xf32>
    %33 = arith.mulf %31, %32 : vector<1x1xf32>
    %34 = vector.broadcast %22 : vector<1x1xf32> to vector<16x32xf32>
    %35 = arith.subf %14, %34 : vector<16x32xf32>
    %cst_15 = arith.constant 9.99999974E-6 : f32
    %36 = vector.broadcast %cst_15 : f32 to vector<1x1xf32>
    %37 = arith.addf %33, %36 : vector<1x1xf32>
    %38 = math.rsqrt %37 : vector<1x1xf32>
    %39 = vector.broadcast %38 : vector<1x1xf32> to vector<16x32xf32>
    %40 = arith.mulf %35, %39 : vector<16x32xf32>
    %41 = arith.mulf %40, %12 : vector<16x32xf32>
    %42 = arith.addf %41, %13 : vector<16x32xf32>
    %cst_16 = arith.constant 0.000000e+00 : f32
    %43 = vector.broadcast %cst_16 : f32 to vector<16x32xf32>
    %44 = arith.maximumf %42, %43 : vector<16x32xf32>
    %c0_17 = arith.constant 0 : index
    %c0_18 = arith.constant 0 : index
    %c0_19 = arith.constant 0 : index
    %45 = vector.load %arg6[%c0_17, %c0_18, %c0_19] : memref<2x16x32xf32, #tpu.memory_space<vmem>>, vector<1x16x32xf32>
    %46 = vector.shape_cast %45 : vector<1x16x32xf32> to vector<16x32xf32>
    %47 = vector.shape_cast %44 : vector<16x32xf32> to vector<1x16x32xf32>
    tpu.vector_store %arg6[%c0_17, %c0_18, %c0_19], %47 {strides = array<i32>} : memref<2x16x32xf32, #tpu.memory_space<vmem>>, vector<1x16x32xf32>,
    %48 = vector.extract_strided_slice %6 {offsets = [16, 0], sizes = [16, 32], strides = [1, 1]} : vector<32x32xf32> to vector<16x32xf32>
    %49 = vector.broadcast %11 : vector<16x1xf32> to vector<16x32xf32>
    %50 = arith.mulf %48, %49 : vector<16x32xf32>
    %cst_20 = arith.constant dense<0.000000e+00> : vector<16xf32>
    %51 = vector.multi_reduction <add>, %50, %cst_20 [1] : vector<16x32xf32> to vector<16xf32>
    %52 = vector.shape_cast %51 : vector<16xf32> to vector<16x1xf32>
    %cst_21 = arith.constant dense<0.000000e+00> : vector<1xf32>
    %53 = vector.multi_reduction <add>, %52, %cst_21 [0] : vector<16x1xf32> to vector<1xf32>
    %54 = vector.shape_cast %53 : vector<1xf32> to vector<1x1xf32>
    %cst_22 = arith.constant 0.00347222225 : f32
    %55 = vector.broadcast %cst_22 : f32 to vector<1x1xf32>
    %56 = arith.mulf %54, %55 : vector<1x1xf32>
    %57 = vector.broadcast %56 : vector<1x1xf32> to vector<16x32xf32>
    %58 = arith.subf %48, %57 : vector<16x32xf32>
    %59 = vector.broadcast %11 : vector<16x1xf32> to vector<16x32xf32>
    %60 = arith.mulf %58, %59 : vector<16x32xf32>
    %61 = arith.mulf %60, %60 : vector<16x32xf32>
    %cst_23 = arith.constant dense<0.000000e+00> : vector<16xf32>
    %62 = vector.multi_reduction <add>, %61, %cst_23 [1] : vector<16x32xf32> to vector<16xf32>
    %63 = vector.shape_cast %62 : vector<16xf32> to vector<16x1xf32>
    %cst_24 = arith.constant dense<0.000000e+00> : vector<1xf32>
    %64 = vector.multi_reduction <add>, %63, %cst_24 [0] : vector<16x1xf32> to vector<1xf32>
    %65 = vector.shape_cast %64 : vector<1xf32> to vector<1x1xf32>
    %cst_25 = arith.constant 0.00347222225 : f32
    %66 = vector.broadcast %cst_25 : f32 to vector<1x1xf32>
    %67 = arith.mulf %65, %66 : vector<1x1xf32>
    %68 = vector.broadcast %56 : vector<1x1xf32> to vector<16x32xf32>
    %69 = arith.subf %48, %68 : vector<16x32xf32>
    %cst_26 = arith.constant 9.99999974E-6 : f32
    %70 = vector.broadcast %cst_26 : f32 to vector<1x1xf32>
    %71 = arith.addf %67, %70 : vector<1x1xf32>
    %72 = math.rsqrt %71 : vector<1x1xf32>
    %73 = vector.broadcast %72 : vector<1x1xf32> to vector<16x32xf32>
    %74 = arith.mulf %69, %73 : vector<16x32xf32>
    %75 = arith.mulf %74, %12 : vector<16x32xf32>
    %76 = arith.addf %75, %13 : vector<16x32xf32>
    %cst_27 = arith.constant 0.000000e+00 : f32
    %77 = vector.broadcast %cst_27 : f32 to vector<16x32xf32>
    %78 = arith.maximumf %76, %77 : vector<16x32xf32>
    %c1 = arith.constant 1 : index
    %c0_28 = arith.constant 0 : index
    %c0_29 = arith.constant 0 : index
    %79 = vector.load %arg6[%c1, %c0_28, %c0_29] : memref<2x16x32xf32, #tpu.memory_space<vmem>>, vector<1x16x32xf32>
    %80 = vector.shape_cast %79 : vector<1x16x32xf32> to vector<16x32xf32>
    %81 = vector.shape_cast %78 : vector<16x32xf32> to vector<1x16x32xf32>
    tpu.vector_store %arg6[%c1, %c0_28, %c0_29], %81 {strides = array<i32>} : memref<2x16x32xf32, #tpu.memory_space<vmem>>, vector<1x16x32xf32>,
    return
  }
  func.func @transform_0(%arg0: i32) -> (i32, i32) {
    %c0_i32 = arith.constant 0 : i32
    %c0_i32_0 = arith.constant 0 : i32
    %c0_i32_1 = arith.constant 0 : i32
    return %c0_i32, %c0_i32_0 : i32, i32
  }
  func.func @transform_1(%arg0: i32) -> (i32, i32) {
    %c0_i32 = arith.constant 0 : i32
    %c0_i32_0 = arith.constant 0 : i32
    %c0_i32_1 = arith.constant 0 : i32
    return %c0_i32, %c0_i32_0 : i32, i32
  }
  func.func @transform_2(%arg0: i32) -> (i32, i32) {
    %c0_i32 = arith.constant 0 : i32
    %c0_i32_0 = arith.constant 0 : i32
    %c0_i32_1 = arith.constant 0 : i32
    return %c0_i32, %c0_i32_0 : i32, i32
  }
  func.func @transform_3(%arg0: i32) -> (i32, i32) {
    %c0_i32 = arith.constant 0 : i32
    %c0_i32_0 = arith.constant 0 : i32
    %c0_i32_1 = arith.constant 0 : i32
    return %c0_i32, %c0_i32_0 : i32, i32
  }
  func.func @transform_4(%arg0: i32) -> (i32, i32) {
    %c0_i32 = arith.constant 0 : i32
    %c0_i32_0 = arith.constant 0 : i32
    %c0_i32_1 = arith.constant 0 : i32
    return %c0_i32, %c0_i32_0 : i32, i32
  }
  func.func @transform_5(%arg0: i32) -> (i32, i32, i32) {
    %c0_i32 = arith.constant 0 : i32
    %c0_i32_0 = arith.constant 0 : i32
    %c0_i32_1 = arith.constant 0 : i32
    %c0_i32_2 = arith.constant 0 : i32
    return %c0_i32, %c0_i32_0, %c0_i32_1 : i32, i32, i32
  }
}

module attributes {stable_mosaic.version = 11 : i64} {
  func.func @kernel(%arg0: i32, %arg1: memref<2x288xf32, #tpu.memory_space<vmem>>, %arg2: memref<288x32xf32, #tpu.memory_space<vmem>>, %arg3: memref<1x32xf32, #tpu.memory_space<vmem>>, %arg4: memref<2x16xf32, #tpu.memory_space<vmem>>, %arg5: memref<16x288xf32, #tpu.memory_space<vmem>>, %arg6: memref<1x288xf32, #tpu.memory_space<vmem>>, %arg7: memref<2x16xf32, #tpu.memory_space<vmem>>, %arg8: memref<2x16xf32, #tpu.memory_space<vmem>>, %arg9: memref<2x288xf32, #tpu.memory_space<vmem>>) attributes {dimension_semantics = [#tpu.dimension_semantics<arbitrary>], iteration_bounds = array<i64: 1>, scalar_prefetch = 0 : i64, scratch_operands = 0 : i64, tpu.core_type = #tpu.core_type<tc>, window_params = [{pipeline_mode = #tpu.pipeline_mode<synchronous>, transform_indices = @transform_0, window_bounds = array<i64: 2, 288>}, {pipeline_mode = #tpu.pipeline_mode<synchronous>, transform_indices = @transform_1, window_bounds = array<i64: 288, 32>}, {pipeline_mode = #tpu.pipeline_mode<synchronous>, transform_indices = @transform_2, window_bounds = array<i64: 1, 32>}, {pipeline_mode = #tpu.pipeline_mode<synchronous>, transform_indices = @transform_3, window_bounds = array<i64: 2, 16>}, {pipeline_mode = #tpu.pipeline_mode<synchronous>, transform_indices = @transform_4, window_bounds = array<i64: 16, 288>}, {pipeline_mode = #tpu.pipeline_mode<synchronous>, transform_indices = @transform_5, window_bounds = array<i64: 1, 288>}, {pipeline_mode = #tpu.pipeline_mode<synchronous>, transform_indices = @transform_6, window_bounds = array<i64: 2, 16>}, {pipeline_mode = #tpu.pipeline_mode<synchronous>, transform_indices = @transform_7, window_bounds = array<i64: 2, 16>}, {pipeline_mode = #tpu.pipeline_mode<synchronous>, transform_indices = @transform_8, window_bounds = array<i64: 2, 288>}]} {
    %c0 = arith.constant 0 : index
    %c0_0 = arith.constant 0 : index
    %0 = vector.load %arg1[%c0, %c0_0] : memref<2x288xf32, #tpu.memory_space<vmem>>, vector<2x288xf32>
    %c0_1 = arith.constant 0 : index
    %c0_2 = arith.constant 0 : index
    %1 = vector.load %arg2[%c0_1, %c0_2] : memref<288x32xf32, #tpu.memory_space<vmem>>, vector<288x32xf32>
    %cst = arith.constant dense<0.000000e+00> : vector<2x32xf32>
    %2 = tpu.matmul %0, %1, %cst {dimension_numbers = #tpu.dot_dimension_numbers<[1], [0], [0], [1], [0, 0, 1, 1], [], []>} : vector<2x288xf32>, vector<288x32xf32>, vector<2x32xf32> -> vector<2x32xf32>
    %c0_3 = arith.constant 0 : index
    %c0_4 = arith.constant 0 : index
    %3 = vector.load %arg3[%c0_3, %c0_4] : memref<1x32xf32, #tpu.memory_space<vmem>>, vector<1x32xf32>
    %4 = vector.broadcast %3 : vector<1x32xf32> to vector<2x32xf32>
    %5 = arith.addf %2, %4 : vector<2x32xf32>
    %6 = vector.extract_strided_slice %5 {offsets = [0, 0], sizes = [2, 16], strides = [1, 1]} : vector<2x32xf32> to vector<2x16xf32>
    %7 = vector.extract_strided_slice %5 {offsets = [0, 16], sizes = [2, 16], strides = [1, 1]} : vector<2x32xf32> to vector<2x16xf32>
    %c0_5 = arith.constant 0 : index
    %c0_6 = arith.constant 0 : index
    %8 = vector.load %arg7[%c0_5, %c0_6] : memref<2x16xf32, #tpu.memory_space<vmem>>, vector<2x16xf32>
    tpu.vector_store %arg7[%c0_5, %c0_6], %6 {strides = array<i32>} : memref<2x16xf32, #tpu.memory_space<vmem>>, vector<2x16xf32>,
    %c0_7 = arith.constant 0 : index
    %c0_8 = arith.constant 0 : index
    %9 = vector.load %arg8[%c0_7, %c0_8] : memref<2x16xf32, #tpu.memory_space<vmem>>, vector<2x16xf32>
    tpu.vector_store %arg8[%c0_7, %c0_8], %7 {strides = array<i32>} : memref<2x16xf32, #tpu.memory_space<vmem>>, vector<2x16xf32>,
    %c0_9 = arith.constant 0 : index
    %c0_10 = arith.constant 0 : index
    %10 = vector.load %arg4[%c0_9, %c0_10] : memref<2x16xf32, #tpu.memory_space<vmem>>, vector<2x16xf32>
    %cst_11 = arith.constant 5.000000e-01 : f32
    %11 = vector.broadcast %cst_11 : f32 to vector<2x16xf32>
    %12 = arith.mulf %11, %7 : vector<2x16xf32>
    %13 = math.exp %12 : vector<2x16xf32>
    %14 = arith.mulf %10, %13 : vector<2x16xf32>
    %15 = arith.addf %6, %14 : vector<2x16xf32>
    %c0_12 = arith.constant 0 : index
    %c0_13 = arith.constant 0 : index
    %16 = vector.load %arg5[%c0_12, %c0_13] : memref<16x288xf32, #tpu.memory_space<vmem>>, vector<16x288xf32>
    %cst_14 = arith.constant dense<0.000000e+00> : vector<2x288xf32>
    %17 = tpu.matmul %15, %16, %cst_14 {dimension_numbers = #tpu.dot_dimension_numbers<[1], [0], [0], [1], [0, 0, 1, 1], [], []>} : vector<2x16xf32>, vector<16x288xf32>, vector<2x288xf32> -> vector<2x288xf32>
    %c0_15 = arith.constant 0 : index
    %c0_16 = arith.constant 0 : index
    %18 = vector.load %arg6[%c0_15, %c0_16] : memref<1x288xf32, #tpu.memory_space<vmem>>, vector<1x288xf32>
    %19 = vector.broadcast %18 : vector<1x288xf32> to vector<2x288xf32>
    %20 = arith.addf %17, %19 : vector<2x288xf32>
    %c0_17 = arith.constant 0 : index
    %c0_18 = arith.constant 0 : index
    %21 = vector.load %arg9[%c0_17, %c0_18] : memref<2x288xf32, #tpu.memory_space<vmem>>, vector<2x288xf32>
    tpu.vector_store %arg9[%c0_17, %c0_18], %20 {strides = array<i32>} : memref<2x288xf32, #tpu.memory_space<vmem>>, vector<2x288xf32>,
    return
  }
  func.func @transform_0(%arg0: i32) -> (i32, i32) {
    %c0_i32 = arith.constant 0 : i32
    %c0_i32_0 = arith.constant 0 : i32
    %c0_i32_1 = arith.constant 0 : i32
    return %c0_i32, %c0_i32_0 : i32, i32
  }
  func.func @transform_1(%arg0: i32) -> (i32, i32) {
    %c0_i32 = arith.constant 0 : i32
    %c0_i32_0 = arith.constant 0 : i32
    %c0_i32_1 = arith.constant 0 : i32
    return %c0_i32, %c0_i32_0 : i32, i32
  }
  func.func @transform_2(%arg0: i32) -> (i32, i32) {
    %c0_i32 = arith.constant 0 : i32
    %c0_i32_0 = arith.constant 0 : i32
    %c0_i32_1 = arith.constant 0 : i32
    return %c0_i32, %c0_i32_0 : i32, i32
  }
  func.func @transform_3(%arg0: i32) -> (i32, i32) {
    %c0_i32 = arith.constant 0 : i32
    %c0_i32_0 = arith.constant 0 : i32
    %c0_i32_1 = arith.constant 0 : i32
    return %c0_i32, %c0_i32_0 : i32, i32
  }
  func.func @transform_4(%arg0: i32) -> (i32, i32) {
    %c0_i32 = arith.constant 0 : i32
    %c0_i32_0 = arith.constant 0 : i32
    %c0_i32_1 = arith.constant 0 : i32
    return %c0_i32, %c0_i32_0 : i32, i32
  }
  func.func @transform_5(%arg0: i32) -> (i32, i32) {
    %c0_i32 = arith.constant 0 : i32
    %c0_i32_0 = arith.constant 0 : i32
    %c0_i32_1 = arith.constant 0 : i32
    return %c0_i32, %c0_i32_0 : i32, i32
  }
  func.func @transform_6(%arg0: i32) -> (i32, i32) {
    %c0_i32 = arith.constant 0 : i32
    %c0_i32_0 = arith.constant 0 : i32
    %c0_i32_1 = arith.constant 0 : i32
    return %c0_i32, %c0_i32_0 : i32, i32
  }
  func.func @transform_7(%arg0: i32) -> (i32, i32) {
    %c0_i32 = arith.constant 0 : i32
    %c0_i32_0 = arith.constant 0 : i32
    %c0_i32_1 = arith.constant 0 : i32
    return %c0_i32, %c0_i32_0 : i32, i32
  }
  func.func @transform_8(%arg0: i32) -> (i32, i32) {
    %c0_i32 = arith.constant 0 : i32
    %c0_i32_0 = arith.constant 0 : i32
    %c0_i32_1 = arith.constant 0 : i32
    return %c0_i32, %c0_i32_0 : i32, i32
  }
}

module attributes {stable_mosaic.version = 11 : i64} {
  func.func @_dec_layer_kernel(%arg0: i32, %arg1: memref<2x288xf32, #tpu.memory_space<vmem>>, %arg2: memref<288x1568xbf16, #tpu.memory_space<vmem>>, %arg3: memref<1x1568xf32, #tpu.memory_space<vmem>>, %arg4: memref<1x1568xf32, #tpu.memory_space<vmem>>, %arg5: memref<1x1568xf32, #tpu.memory_space<vmem>>, %arg6: memref<2x1568xf32, #tpu.memory_space<vmem>>) attributes {dimension_semantics = [#tpu.dimension_semantics<parallel>], iteration_bounds = array<i64: 1>, scalar_prefetch = 0 : i64, scratch_operands = 0 : i64, tpu.core_type = #tpu.core_type<tc>, window_params = [{pipeline_mode = #tpu.pipeline_mode<synchronous>, transform_indices = @transform_0, window_bounds = array<i64: 2, 288>}, {pipeline_mode = #tpu.pipeline_mode<synchronous>, transform_indices = @transform_1, window_bounds = array<i64: 288, 1568>}, {pipeline_mode = #tpu.pipeline_mode<synchronous>, transform_indices = @transform_2, window_bounds = array<i64: 1, 1568>}, {pipeline_mode = #tpu.pipeline_mode<synchronous>, transform_indices = @transform_3, window_bounds = array<i64: 1, 1568>}, {pipeline_mode = #tpu.pipeline_mode<synchronous>, transform_indices = @transform_4, window_bounds = array<i64: 1, 1568>}, {pipeline_mode = #tpu.pipeline_mode<synchronous>, transform_indices = @transform_5, window_bounds = array<i64: 2, 1568>}]} {
    %c0 = arith.constant 0 : index
    %c0_0 = arith.constant 0 : index
    %0 = vector.load %arg1[%c0, %c0_0] : memref<2x288xf32, #tpu.memory_space<vmem>>, vector<2x288xf32>
    %1 = arith.truncf %0 : vector<2x288xf32> to vector<2x288xbf16>
    %c0_1 = arith.constant 0 : index
    %c0_2 = arith.constant 0 : index
    %2 = vector.load %arg2[%c0_1, %c0_2] : memref<288x1568xbf16, #tpu.memory_space<vmem>>, vector<288x1568xbf16>
    %cst = arith.constant dense<0.000000e+00> : vector<2x1568xf32>
    %3 = tpu.matmul %1, %2, %cst {dimension_numbers = #tpu.dot_dimension_numbers<[1], [0], [0], [1], [0, 0, 1, 1], [], []>} : vector<2x288xbf16>, vector<288x1568xbf16>, vector<2x1568xf32> -> vector<2x1568xf32>
    %c0_3 = arith.constant 0 : index
    %c0_4 = arith.constant 0 : index
    %4 = vector.load %arg3[%c0_3, %c0_4] : memref<1x1568xf32, #tpu.memory_space<vmem>>, vector<1x1568xf32>
    %5 = vector.broadcast %4 : vector<1x1568xf32> to vector<2x1568xf32>
    %6 = arith.addf %3, %5 : vector<2x1568xf32>
    %cst_5 = arith.constant dense<0.000000e+00> : vector<2xf32>
    %7 = vector.multi_reduction <add>, %6, %cst_5 [1] : vector<2x1568xf32> to vector<2xf32>
    %8 = vector.shape_cast %7 : vector<2xf32> to vector<2x1xf32>
    %cst_6 = arith.constant 1.568000e+03 : f32
    %9 = vector.broadcast %cst_6 : f32 to vector<2x1xf32>
    %10 = arith.divf %8, %9 : vector<2x1xf32>
    %11 = vector.broadcast %10 : vector<2x1xf32> to vector<2x1568xf32>
    %12 = arith.subf %6, %11 : vector<2x1568xf32>
    %13 = arith.mulf %12, %12 : vector<2x1568xf32>
    %cst_7 = arith.constant dense<0.000000e+00> : vector<2xf32>
    %14 = vector.multi_reduction <add>, %13, %cst_7 [1] : vector<2x1568xf32> to vector<2xf32>
    %15 = vector.shape_cast %14 : vector<2xf32> to vector<2x1xf32>
    %cst_8 = arith.constant 1.568000e+03 : f32
    %16 = vector.broadcast %cst_8 : f32 to vector<2x1xf32>
    %17 = arith.divf %15, %16 : vector<2x1xf32>
    %cst_9 = arith.constant 9.99999974E-6 : f32
    %18 = vector.broadcast %cst_9 : f32 to vector<2x1xf32>
    %19 = arith.addf %17, %18 : vector<2x1xf32>
    %20 = math.rsqrt %19 : vector<2x1xf32>
    %21 = vector.broadcast %20 : vector<2x1xf32> to vector<2x1568xf32>
    %22 = arith.mulf %12, %21 : vector<2x1568xf32>
    %c0_10 = arith.constant 0 : index
    %c0_11 = arith.constant 0 : index
    %23 = vector.load %arg4[%c0_10, %c0_11] : memref<1x1568xf32, #tpu.memory_space<vmem>>, vector<1x1568xf32>
    %24 = vector.broadcast %23 : vector<1x1568xf32> to vector<2x1568xf32>
    %25 = arith.mulf %22, %24 : vector<2x1568xf32>
    %c0_12 = arith.constant 0 : index
    %c0_13 = arith.constant 0 : index
    %26 = vector.load %arg5[%c0_12, %c0_13] : memref<1x1568xf32, #tpu.memory_space<vmem>>, vector<1x1568xf32>
    %27 = vector.broadcast %26 : vector<1x1568xf32> to vector<2x1568xf32>
    %28 = arith.addf %25, %27 : vector<2x1568xf32>
    %cst_14 = arith.constant 0.000000e+00 : f32
    %29 = vector.broadcast %cst_14 : f32 to vector<2x1568xf32>
    %30 = arith.maximumf %28, %29 : vector<2x1568xf32>
    %c0_15 = arith.constant 0 : index
    %c0_16 = arith.constant 0 : index
    %31 = vector.load %arg6[%c0_15, %c0_16] : memref<2x1568xf32, #tpu.memory_space<vmem>>, vector<2x1568xf32>
    tpu.vector_store %arg6[%c0_15, %c0_16], %30 {strides = array<i32>} : memref<2x1568xf32, #tpu.memory_space<vmem>>, vector<2x1568xf32>,
    return
  }
  func.func @transform_0(%arg0: i32) -> (i32, i32) {
    %c0_i32 = arith.constant 0 : i32
    %c0_i32_0 = arith.constant 0 : i32
    %c0_i32_1 = arith.constant 0 : i32
    return %c0_i32, %c0_i32_0 : i32, i32
  }
  func.func @transform_1(%arg0: i32) -> (i32, i32) {
    %c0_i32 = arith.constant 0 : i32
    %c0_i32_0 = arith.constant 0 : i32
    %c0_i32_1 = arith.constant 0 : i32
    return %c0_i32, %c0_i32_0 : i32, i32
  }
  func.func @transform_2(%arg0: i32) -> (i32, i32) {
    %c0_i32 = arith.constant 0 : i32
    %c0_i32_0 = arith.constant 0 : i32
    %c0_i32_1 = arith.constant 0 : i32
    return %c0_i32, %c0_i32_0 : i32, i32
  }
  func.func @transform_3(%arg0: i32) -> (i32, i32) {
    %c0_i32 = arith.constant 0 : i32
    %c0_i32_0 = arith.constant 0 : i32
    %c0_i32_1 = arith.constant 0 : i32
    return %c0_i32, %c0_i32_0 : i32, i32
  }
  func.func @transform_4(%arg0: i32) -> (i32, i32) {
    %c0_i32 = arith.constant 0 : i32
    %c0_i32_0 = arith.constant 0 : i32
    %c0_i32_1 = arith.constant 0 : i32
    return %c0_i32, %c0_i32_0 : i32, i32
  }
  func.func @transform_5(%arg0: i32) -> (i32, i32) {
    %c0_i32 = arith.constant 0 : i32
    %c0_i32_0 = arith.constant 0 : i32
    %c0_i32_1 = arith.constant 0 : i32
    return %c0_i32, %c0_i32_0 : i32, i32
  }
}

module attributes {stable_mosaic.version = 11 : i64} {
  func.func @_dec_final_kernel(%arg0: i32, %arg1: memref<2x1568xf32, #tpu.memory_space<vmem>>, %arg2: memref<1568x1024xbf16, #tpu.memory_space<vmem>>, %arg3: memref<1x1024xf32, #tpu.memory_space<vmem>>, %arg4: memref<2x1024xf32, #tpu.memory_space<vmem>>) attributes {dimension_semantics = [#tpu.dimension_semantics<parallel>], iteration_bounds = array<i64: 1>, scalar_prefetch = 0 : i64, scratch_operands = 0 : i64, tpu.core_type = #tpu.core_type<tc>, window_params = [{pipeline_mode = #tpu.pipeline_mode<synchronous>, transform_indices = @transform_0, window_bounds = array<i64: 2, 1568>}, {pipeline_mode = #tpu.pipeline_mode<synchronous>, transform_indices = @transform_1, window_bounds = array<i64: 1568, 1024>}, {pipeline_mode = #tpu.pipeline_mode<synchronous>, transform_indices = @transform_2, window_bounds = array<i64: 1, 1024>}, {pipeline_mode = #tpu.pipeline_mode<synchronous>, transform_indices = @transform_3, window_bounds = array<i64: 2, 1024>}]} {
    %c0 = arith.constant 0 : index
    %c0_0 = arith.constant 0 : index
    %0 = vector.load %arg1[%c0, %c0_0] : memref<2x1568xf32, #tpu.memory_space<vmem>>, vector<2x1568xf32>
    %1 = arith.truncf %0 : vector<2x1568xf32> to vector<2x1568xbf16>
    %c0_1 = arith.constant 0 : index
    %c0_2 = arith.constant 0 : index
    %2 = vector.load %arg2[%c0_1, %c0_2] : memref<1568x1024xbf16, #tpu.memory_space<vmem>>, vector<1568x1024xbf16>
    %cst = arith.constant dense<0.000000e+00> : vector<2x1024xf32>
    %3 = tpu.matmul %1, %2, %cst {dimension_numbers = #tpu.dot_dimension_numbers<[1], [0], [0], [1], [0, 0, 1, 1], [], []>} : vector<2x1568xbf16>, vector<1568x1024xbf16>, vector<2x1024xf32> -> vector<2x1024xf32>
    %c0_3 = arith.constant 0 : index
    %c0_4 = arith.constant 0 : index
    %4 = vector.load %arg3[%c0_3, %c0_4] : memref<1x1024xf32, #tpu.memory_space<vmem>>, vector<1x1024xf32>
    %5 = vector.broadcast %4 : vector<1x1024xf32> to vector<2x1024xf32>
    %6 = arith.addf %3, %5 : vector<2x1024xf32>
    %7 = arith.negf %6 : vector<2x1024xf32>
    %8 = math.exp %7 : vector<2x1024xf32>
    %cst_5 = arith.constant 1.000000e+00 : f32
    %9 = vector.broadcast %cst_5 : f32 to vector<2x1024xf32>
    %10 = arith.addf %9, %8 : vector<2x1024xf32>
    %11 = arith.divf %9, %10 : vector<2x1024xf32>
    %c0_6 = arith.constant 0 : index
    %c0_7 = arith.constant 0 : index
    %12 = vector.load %arg4[%c0_6, %c0_7] : memref<2x1024xf32, #tpu.memory_space<vmem>>, vector<2x1024xf32>
    tpu.vector_store %arg4[%c0_6, %c0_7], %11 {strides = array<i32>} : memref<2x1024xf32, #tpu.memory_space<vmem>>, vector<2x1024xf32>,
    return
  }
  func.func @transform_0(%arg0: i32) -> (i32, i32) {
    %c0_i32 = arith.constant 0 : i32
    %c0_i32_0 = arith.constant 0 : i32
    %c0_i32_1 = arith.constant 0 : i32
    return %c0_i32, %c0_i32_0 : i32, i32
  }
  func.func @transform_1(%arg0: i32) -> (i32, i32) {
    %c0_i32 = arith.constant 0 : i32
    %c0_i32_0 = arith.constant 0 : i32
    %c0_i32_1 = arith.constant 0 : i32
    return %c0_i32, %c0_i32_0 : i32, i32
  }
  func.func @transform_2(%arg0: i32) -> (i32, i32) {
    %c0_i32 = arith.constant 0 : i32
    %c0_i32_0 = arith.constant 0 : i32
    %c0_i32_1 = arith.constant 0 : i32
    return %c0_i32, %c0_i32_0 : i32, i32
  }
  func.func @transform_3(%arg0: i32) -> (i32, i32) {
    %c0_i32 = arith.constant 0 : i32
    %c0_i32_0 = arith.constant 0 : i32
    %c0_i32_1 = arith.constant 0 : i32
    return %c0_i32, %c0_i32_0 : i32, i32
  }
}

</mosaic_0001>

<llo_original>
// kernel: _lambda_.5
$region0: #{_lambda_.5}
  #allocation0 [shape = 'u32[]', space=smem, size = 0x4, offset = 0x4, fixed_abs, tag = 'smem constant byte address 0x4 - core index']
  #allocation1 [shape = 'u32[144,128]{1,0:T(1,128)}', space=vmem, size = 0x12000, scoped, tag = 'internal scratch']
  %s0 = inlined_call_operand.vmem [shape: f32[112,36], index: 0, kind: input, shape index: {}]
  %s1 = inlined_call_operand.hbm [shape: bf16[36,32], index: 1, kind: input, shape index: {}]
  %s2 = inlined_call_operand.vmem [shape: f32[1,32], index: 2, kind: input, shape index: {}]
  %s3 = inlined_call_operand.vmem [shape: f32[56,32], index: 3, kind: input, shape index: {}]
  %s4 = inlined_call_operand.vmem [shape: f32[56,32], index: 4, kind: input, shape index: {}]
  %s5 = inlined_call_operand.vmem [shape: f32[2,56,32], index: 5, kind: output, shape index: {}]
  %s6 = sld [smem:[#allocation0]]
  $region34: #{_lambda_.5} parent=0
    _
  %s8 = ssub.s32 1, %s6
  %s9 = scalar_select 0, %s8, %s6
  $region1: #{_lambda_.5} parent=0
    #allocation2 [shape = 'u8[10240]{0}', space=vmem, size = 0x2800, scoped, tag = 'input window, operand 1, single buffered']
    #allocation3 [shape = 's32[1]{0}', space=sflag, size = 0x4, scoped, tag = 'scoped memory for _lambda_.5']
    %10 = vsyncpa [#allocation3], 0
    // Predicated region
    $region2: #{_lambda_.5} parent=1 // pred_check
      _
    $region3: #{_lambda_.5} parent=1 // pred_check_branch
      %12 = sbr.rel (0) target = $region5
    $region4: #{_lambda_.5} parent=1 // pred_region
      _
    $region5: #{_lambda_.5} parent=1 // pred_fallthru
      _
    // Predicated region
    $region6: #{_lambda_.5} parent=1 // pred_check
      _
    $region7: #{_lambda_.5} parent=1 // pred_check_branch
      %14 = sbr.rel (0) target = $region9
    $region8: #{_lambda_.5} parent=1 // pred_region
      %s16 = ssub.s32 320, 320
      %17 = vsyncadd [#allocation3], %s16
      %s18 = sshll.u32 [#allocation2], 4
      %s19 = int_to_ptr.vmem [resolvable:$true] %s18
      %24 = dma.hbm_to_vmem [thread:$0]  %s1, 320, %s19, [#allocation3], 64, 64, 4
    $region9: #{_lambda_.5} parent=1 // pred_fallthru
      _
    // Predicated region
    $region10: #{_lambda_.5} parent=1 // pred_check
      _
    $region11: #{_lambda_.5} parent=1 // pred_check_branch
      %26 = sbr.rel (0) target = $region13
    $region12: #{_lambda_.5} parent=1 // pred_region
      _
    $region13: #{_lambda_.5} parent=1 // pred_fallthru
      _
    // Predicated region
    $region14: #{_lambda_.5} parent=1 // pred_check
      _
    $region15: #{_lambda_.5} parent=1 // pred_check_branch
      %28 = sbr.rel (0) target = $region17
    $region16: #{_lambda_.5} parent=1 // pred_region
      _
    $region17: #{_lambda_.5} parent=1 // pred_fallthru
      _
    // Predicated region
    $region18: #{_lambda_.5} parent=1 // pred_check
      _
    $region19: #{_lambda_.5} parent=1 // pred_check_branch
      %30 = sbr.rel (0) target = $region21
    $region20: #{_lambda_.5} parent=1 // pred_region
      _
    $region21: #{_lambda_.5} parent=1 // pred_fallthru
      _
    // Predicated region
    $region22: #{_lambda_.5} parent=1 // pred_check
      _
    $region23: #{_lambda_.5} parent=1 // pred_check_branch
      %32 = sbr.rel (0) target = $region25
    $region24: #{_lambda_.5} parent=1 // pred_region
      %33 = dma.done [#allocation3], 320
    $region25: #{_lambda_.5} parent=1 // pred_fallthru
      _
    %v35 = vld [vmem:[%s0] sm:$0xff]
    %v36 = vld [vmem:[%s0 + $0x8] sm:$0xff]
    %v37 = vld [vmem:[%s0 + $0x10] sm:$0xff]
    %v38 = vld [vmem:[%s0 + $0x18] sm:$0xff]
    %v39 = vld [vmem:[%s0 + $0x20] sm:$0xff]
    %v40 = vld [vmem:[%s0 + $0x28] sm:$0xff]
    %v41 = vld [vmem:[%s0 + $0x30] sm:$0xff]
    %v42 = vld [vmem:[%s0 + $0x38] sm:$0xff]
    %v43 = vld [vmem:[%s0 + $0x40] sm:$0xff]
    %v44 = vld [vmem:[%s0 + $0x48] sm:$0xff]
    %v45 = vld [vmem:[%s0 + $0x50] sm:$0xff]
    %v46 = vld [vmem:[%s0 + $0x58] sm:$0xff]
    %v47 = vld [vmem:[%s0 + $0x60] sm:$0xff]
    %v48 = vld [vmem:[%s0 + $0x68] sm:$0xff]
    %v49 = vpack.c.bf16 %v36, %v35
    %v50 = vpack.c.bf16 %v38, %v37
    %v51 = vpack.c.bf16 %v40, %v39
    %v52 = vpack.c.bf16 %v42, %v41
    %v53 = vpack.c.bf16 %v44, %v43
    %v54 = vpack.c.bf16 %v46, %v45
    %v55 = vpack.c.bf16 %v48, %v47
    %v56 = vld [vmem:[#allocation2] sm:$0xf]
    %v57 = vld [vmem:[#allocation2 + $0x4] sm:$0xf]
    %v58 = vld [vmem:[#allocation2 + $0x8] sm:$0xf]
    %v59 = vld [vmem:[#allocation2 + $0xc] sm:$0xf]
    %v60 = vld [vmem:[#allocation2 + $0x10] sm:$0x3]
    %v61 = vld [vmem:[%s2] sm:$0x1]
    %v63 = vlaneseq
    %v64 = vshrl.u32 %v63, 7
    %v65 = vsub.s32 0, %v64
    %v66 = vrot.slane %v61, %v65
    %v73 = vunpack.c.l.b16 %v56
    %v74 = vunpack.c.l.b16 %v57
    %v75 = vunpack.c.l.b16 %v58
    %v76 = vunpack.c.l.b16 %v59
    %v77 = vunpack.c.l.b16 %v60
    %v78 = vpack.c.b16 %v74, %v73
    %v79 = vpack.c.b16 %v76, %v75
    %v80 = vpack.c.b16 %v77, %v77
    %vm83 = vcmask 293888
    %v85 = vsel %vm83, %v49, 0
    %v88 = vsel %vm83, %v50, 0
    %v91 = vsel %vm83, %v51, 0
    %v94 = vsel %vm83, %v52, 0
    %v97 = vsel %vm83, %v53, 0
    %v100 = vsel %vm83, %v54, 0
    %v103 = vsel %vm83, %v55, 0
    %vm105 = vcmask 1041408
    %v107 = vsel %vm105, %v80, 0
    %109 = vmatprep.subr.bf16.mxu0 0
    %110 = vmatpush1.bf16.msra.mxu0 0
    %111 = vmatprep.subr.bf16.mxu0 0
    %112 = vmatpush1.bf16.msra.mxu0 0
    %113 = vmatprep.subr.bf16.mxu0 0
    %114 = vmatpush1.bf16.msra.mxu0 0
    %115 = vmatprep.subr.bf16.mxu0 0
    %116 = vmatpush1.bf16.msra.mxu0 0
    %117 = vmatprep.subr.bf16.mxu0 0
    %118 = vmatpush1.bf16.msra.mxu0 0
    %119 = vmatprep.subr.bf16.mxu0 0
    %120 = vmatpush1.bf16.msra.mxu0 %v107
    %121 = vmatprep.subr.bf16.mxu0 0
    %122 = vmatpush1.bf16.msra.mxu0 %v79
    %123 = vmatprep.subr.bf16.mxu0 0
    %124 = vmatpush1.bf16.msra.mxu0 %v78
    %125 = vmatprep.subr.bf16.mxu0 0
    %126 = vmatpush2.bf16.msra.mxu0 0
    %127 = vmatprep.subr.bf16.mxu0 0
    %128 = vmatpush2.bf16.msra.mxu0 0
    %129 = vmatprep.subr.bf16.mxu0 0
    %130 = vmatpush2.bf16.msra.mxu0 0
    %131 = vmatprep.subr.bf16.mxu0 0
    %132 = vmatpush2.bf16.msra.mxu0 0
    %133 = vmatprep.subr.bf16.mxu0 0
    %134 = vmatpush2.bf16.msra.mxu0 0
    %135 = vmatprep.subr.bf16.mxu0 0
    %136 = vmatpush2.bf16.msra.mxu0 0
    %137 = vmatprep.subr.bf16.mxu0 0
    %138 = vmatpush2.bf16.msra.mxu0 0
    %139 = vmatprep.subr.bf16.mxu0 0
    %140 = vmatpush2.bf16.msra.mxu0 0
    %141 = vmatprep.mubr.bf16.mxu0 0
    %142 = vmatmul.mubr.bf16.gmra.mxu0 %v85
    %v143 = vpop.f32.mrf.mxu0
    %v144 = vadd.f32 %v66, %v143
    %v145 = vpop.f32.mrf.mxu0
    %v146 = vpop.f32.mrf.mxu0
    %v147 = vadd.f32 %v66, %v146
    %v148 = vpop.f32.mrf.mxu0
    %149 = vmatprep.mubr.bf16.mxu0 0
    %150 = vmatmul.mubr.bf16.gmra.mxu0 %v88
    %v151 = vpop.f32.mrf.mxu0
    %v152 = vadd.f32 %v66, %v151
    %v153 = vpop.f32.mrf.mxu0
    %v154 = vpop.f32.mrf.mxu0
    %v155 = vadd.f32 %v66, %v154
    %v156 = vpop.f32.mrf.mxu0
    %157 = vmatprep.mubr.bf16.mxu0 0
    %158 = vmatmul.mubr.bf16.gmra.mxu0 %v91
    %v159 = vpop.f32.mrf.mxu0
    %v160 = vadd.f32 %v66, %v159
    %v161 = vpop.f32.mrf.mxu0
    %v162 = vpop.f32.mrf.mxu0
    %v163 = vadd.f32 %v66, %v162
    %v164 = vpop.f32.mrf.mxu0
    %165 = vmatprep.mubr.bf16.mxu0 0
    %166 = vmatmul.mubr.bf16.gmra.mxu0 %v94
    %v167 = vpop.f32.mrf.mxu0
    %v168 = vadd.f32 %v66, %v167
    %v169 = vpop.f32.mrf.mxu0
    %v170 = vpop.f32.mrf.mxu0
    %v171 = vadd.f32 %v66, %v170
    %v172 = vpop.f32.mrf.mxu0
    %173 = vmatprep.mubr.bf16.mxu0 0
    %174 = vmatmul.mubr.bf16.gmra.mxu0 %v97
    %v175 = vpop.f32.mrf.mxu0
    %v176 = vadd.f32 %v66, %v175
    %v177 = vpop.f32.mrf.mxu0
    %v178 = vpop.f32.mrf.mxu0
    %v179 = vadd.f32 %v66, %v178
    %v180 = vpop.f32.mrf.mxu0
    %181 = vmatprep.mubr.bf16.mxu0 0
    %182 = vmatmul.mubr.bf16.gmra.mxu0 %v100
    %v183 = vpop.f32.mrf.mxu0
    %v184 = vadd.f32 %v66, %v183
    %v185 = vpop.f32.mrf.mxu0
    %v186 = vpop.f32.mrf.mxu0
    %v187 = vadd.f32 %v66, %v186
    %v188 = vpop.f32.mrf.mxu0
    %189 = vmatprep.mubr.bf16.mxu0 0
    %190 = vmatmul.mubr.bf16.gmra.mxu0 %v103
    %v191 = vpop.f32.mrf.mxu0
    %v192 = vadd.f32 %v66, %v191
    %v193 = vpop.f32.mrf.mxu0
    %v194 = vpop.f32.mrf.mxu0
    %v195 = vadd.f32 %v66, %v194
    %v196 = vpop.f32.mrf.mxu0
    %197 = vdwg.mxu0
    %v198 = vlaneseq
    %v199 = vshrl.u32 %v198, 7
    %v200 = vadd.s32 %v199, 8
    %v201 = vadd.s32 %v199, 16
    %v202 = vadd.s32 %v199, 24
    %v203 = vadd.s32 %v199, 32
    %v204 = vadd.s32 %v199, 40
    %v205 = vadd.s32 %v199, 48
    %vm206 = vcmp.lt.s32.totalorder %v199, 49
    %vm207 = vcmp.lt.s32.totalorder %v200, 49
    %vm208 = vcmp.lt.s32.totalorder %v201, 49
    %vm209 = vcmp.lt.s32.totalorder %v202, 49
    %vm210 = vcmp.lt.s32.totalorder %v203, 49
    %vm211 = vcmp.lt.s32.totalorder %v204, 49
    %vm212 = vcmp.lt.s32.totalorder %v205, 49
    %v213 = vsel %vm206, 1, 0
    %v214 = vsel %vm207, 1, 0
    %v215 = vsel %vm208, 1, 0
    %v216 = vsel %vm209, 1, 0
    %v217 = vsel %vm210, 1, 0
    %v218 = vsel %vm211, 1, 0
    %v219 = vsel %vm212, 1, 0
    %v220 = vcvt.s32.f32 %v213
    %v221 = vcvt.s32.f32 %v214
    %v222 = vcvt.s32.f32 %v215
    %v223 = vcvt.s32.f32 %v216
    %v224 = vcvt.s32.f32 %v217
    %v225 = vcvt.s32.f32 %v218
    %v226 = vcvt.s32.f32 %v219
    %v227 = vld [vmem:[%s3] sm:$0xff]
    %v228 = vld [vmem:[%s3 + $0x8] sm:$0xff]
    %v229 = vld [vmem:[%s3 + $0x10] sm:$0xff]
    %v230 = vld [vmem:[%s3 + $0x18] sm:$0xff]
    %v231 = vld [vmem:[%s3 + $0x20] sm:$0xff]
    %v232 = vld [vmem:[%s3 + $0x28] sm:$0xff]
    %v233 = vld [vmem:[%s3 + $0x30] sm:$0xff]
    %v234 = vld [vmem:[%s4] sm:$0xff]
    %v235 = vld [vmem:[%s4 + $0x8] sm:$0xff]
    %v236 = vld [vmem:[%s4 + $0x10] sm:$0xff]
    %v237 = vld [vmem:[%s4 + $0x18] sm:$0xff]
    %v238 = vld [vmem:[%s4 + $0x20] sm:$0xff]
    %v239 = vld [vmem:[%s4 + $0x28] sm:$0xff]
    %v240 = vld [vmem:[%s4 + $0x30] sm:$0xff]
    %v241 = vmul.f32 %v144, %v220
    %v242 = vmul.f32 %v147, %v221
    %v243 = vmul.f32 %v152, %v222
    %v244 = vmul.f32 %v155, %v223
    %v245 = vmul.f32 %v160, %v224
    %v246 = vmul.f32 %v163, %v225
    %v247 = vmul.f32 %v168, %v226
    %vm248 = vcmask 261120
    %v249 = vsel %vm248, %v241, 0.0
    %250 = vadd.xlane.f32.xlu0 %v249
    %v251 = vpop.xlane.xlu0 %250
    %v252 = vsel %vm248, %v242, 0.0
    %253 = vadd.xlane.f32.xlu0 %v252
    %v254 = vpop.xlane.xlu0 %253
    %v255 = vsel %vm248, %v243, 0.0
    %256 = vadd.xlane.f32.xlu0 %v255
    %v257 = vpop.xlane.xlu0 %256
    %v258 = vsel %vm248, %v244, 0.0
    %259 = vadd.xlane.f32.xlu0 %v258
    %v260 = vpop.xlane.xlu0 %259
    %v261 = vsel %vm248, %v245, 0.0
    %262 = vadd.xlane.f32.xlu0 %v261
    %v263 = vpop.xlane.xlu0 %262
    %v264 = vsel %vm248, %v246, 0.0
    %265 = vadd.xlane.f32.xlu0 %v264
    %v266 = vpop.xlane.xlu0 %265
    %v267 = vsel %vm248, %v247, 0.0
    %268 = vadd.xlane.f32.xlu0 %v267
    %v269 = vpop.xlane.xlu0 %268
    %v270 = vadd.f32 %v251, %v254
    %v271 = vadd.f32 %v270, %v257
    %v272 = vadd.f32 %v271, %v260
    %v273 = vadd.f32 %v272, %v263
    %v274 = vadd.f32 %v273, %v266
    %v275 = vadd.f32 %v274, %v269
    %v276 = vrot.slane %v275, 4
    %v277 = vadd.f32 %v275, %v276
    %v278 = vrot.slane %v277, 2
    %v279 = vadd.f32 %v277, %v278
    %v280 = vrot.slane %v279, 1
    %v281 = vadd.f32 %v279, %v280
    %v282 = vmul.f32 %v281, 0.0006377551
    %v283 = vsub.f32 %v144, %v282
    %v284 = vsub.f32 %v147, %v282
    %v285 = vsub.f32 %v152, %v282
    %v286 = vsub.f32 %v155, %v282
    %v287 = vsub.f32 %v160, %v282
    %v288 = vsub.f32 %v163, %v282
    %v289 = vsub.f32 %v168, %v282
    %v290 = vmul.f32 %v283, %v220
    %v291 = vmul.f32 %v284, %v221
    %v292 = vmul.f32 %v285, %v222
    %v293 = vmul.f32 %v286, %v223
    %v294 = vmul.f32 %v287, %v224
    %v295 = vmul.f32 %v288, %v225
    %v296 = vmul.f32 %v289, %v226
    %v297 = vmul.f32 %v290, %v290
    %v298 = vmul.f32 %v291, %v291
    %v299 = vmul.f32 %v292, %v292
    %v300 = vmul.f32 %v293, %v293
    %v301 = vmul.f32 %v294, %v294
    %v302 = vmul.f32 %v295, %v295
    %v303 = vmul.f32 %v296, %v296
    %v304 = vsel %vm248, %v297, 0.0
    %305 = vadd.xlane.f32.xlu0 %v304
    %v306 = vpop.xlane.xlu0 %305
    %v307 = vsel %vm248, %v298, 0.0
    %308 = vadd.xlane.f32.xlu0 %v307
    %v309 = vpop.xlane.xlu0 %308
    %v310 = vsel %vm248, %v299, 0.0
    %311 = vadd.xlane.f32.xlu0 %v310
    %v312 = vpop.xlane.xlu0 %311
    %v313 = vsel %vm248, %v300, 0.0
    %314 = vadd.xlane.f32.xlu0 %v313
    %v315 = vpop.xlane.xlu0 %314
    %v316 = vsel %vm248, %v301, 0.0
    %317 = vadd.xlane.f32.xlu0 %v316
    %v318 = vpop.xlane.xlu0 %317
    %v319 = vsel %vm248, %v302, 0.0
    %320 = vadd.xlane.f32.xlu0 %v319
    %v321 = vpop.xlane.xlu0 %320
    %v322 = vsel %vm248, %v303, 0.0
    %323 = vadd.xlane.f32.xlu0 %v322
    %v324 = vpop.xlane.xlu0 %323
    %v325 = vadd.f32 %v306, %v309
    %v326 = vadd.f32 %v325, %v312
    %v327 = vadd.f32 %v326, %v315
    %v328 = vadd.f32 %v327, %v318
    %v329 = vadd.f32 %v328, %v321
    %v330 = vadd.f32 %v329, %v324
    %v331 = vrot.slane %v330, 4
    %v332 = vadd.f32 %v330, %v331
    %v333 = vrot.slane %v332, 2
    %v334 = vadd.f32 %v332, %v333
    %v335 = vrot.slane %v334, 1
    %v336 = vadd.f32 %v334, %v335
    %v337 = vmul.f32 %v336, 0.0006377551
    %v338 = vadd.f32 %v337, 1e-05
    %v339 = vrsqrt.pop %v338
    %v340 = vmul.f32 %v283, %v339
    %v341 = vmul.f32 %v284, %v339
    %v342 = vmul.f32 %v285, %v339
    %v343 = vmul.f32 %v286, %v339
    %v344 = vmul.f32 %v287, %v339
    %v345 = vmul.f32 %v288, %v339
    %v346 = vmul.f32 %v289, %v339
    %v347 = vmul.f32 %v340, %v227
    %v348 = vmul.f32 %v341, %v228
    %v349 = vmul.f32 %v342, %v229
    %v350 = vmul.f32 %v343, %v230
    %v351 = vmul.f32 %v344, %v231
    %v352 = vmul.f32 %v345, %v232
    %v353 = vmul.f32 %v346, %v233
    %v354 = vadd.f32 %v347, %v234
    %v355 = vadd.f32 %v348, %v235
    %v356 = vadd.f32 %v349, %v236
    %v357 = vadd.f32 %v350, %v237
    %v358 = vadd.f32 %v351, %v238
    %v359 = vadd.f32 %v352, %v239
    %v360 = vadd.f32 %v353, %v240
    %v361 = vmax.f32 %v354, 0.0
    %v362 = vmax.f32 %v355, 0.0
    %v363 = vmax.f32 %v356, 0.0
    %v364 = vmax.f32 %v357, 0.0
    %v365 = vmax.f32 %v358, 0.0
    %v366 = vmax.f32 %v359, 0.0
    %v367 = vmax.f32 %v360, 0.0
    %368 = vst.msk [vmem:[%s5] sm:$0xff] %vm248, %v361
    %369 = vst.msk [vmem:[%s5 + $0x8] sm:$0xff] %vm248, %v362
    %370 = vst.msk [vmem:[%s5 + $0x10] sm:$0xff] %vm248, %v363
    %371 = vst.msk [vmem:[%s5 + $0x18] sm:$0xff] %vm248, %v364
    %372 = vst.msk [vmem:[%s5 + $0x20] sm:$0xff] %vm248, %v365
    %373 = vst.msk [vmem:[%s5 + $0x28] sm:$0xff] %vm248, %v366
    %374 = vst.msk [vmem:[%s5 + $0x30] sm:$0xff] %vm248, %v367
    %v375 = vmul.f32 %v171, %v220
    %v376 = vmul.f32 %v176, %v221
    %v377 = vmul.f32 %v179, %v222
    %v378 = vmul.f32 %v184, %v223
    %v379 = vmul.f32 %v187, %v224
    %v380 = vmul.f32 %v192, %v225
    %v381 = vmul.f32 %v195, %v226
    %v382 = vsel %vm248, %v375, 0.0
    %383 = vadd.xlane.f32.xlu0 %v382
    %v384 = vpop.xlane.xlu0 %383
    %v385 = vsel %vm248, %v376, 0.0
    %386 = vadd.xlane.f32.xlu0 %v385
    %v387 = vpop.xlane.xlu0 %386
    %v388 = vsel %vm248, %v377, 0.0
    %389 = vadd.xlane.f32.xlu0 %v388
    %v390 = vpop.xlane.xlu0 %389
    %v391 = vsel %vm248, %v378, 0.0
    %392 = vadd.xlane.f32.xlu0 %v391
    %v393 = vpop.xlane.xlu0 %392
    %v394 = vsel %vm248, %v379, 0.0
    %395 = vadd.xlane.f32.xlu0 %v394
    %v396 = vpop.xlane.xlu0 %395
    %v397 = vsel %vm248, %v380, 0.0
    %398 = vadd.xlane.f32.xlu0 %v397
    %v399 = vpop.xlane.xlu0 %398
    %v400 = vsel %vm248, %v381, 0.0
    %401 = vadd.xlane.f32.xlu0 %v400
    %v402 = vpop.xlane.xlu0 %401
    %v403 = vadd.f32 %v384, %v387
    %v404 = vadd.f32 %v403, %v390
    %v405 = vadd.f32 %v404, %v393
    %v406 = vadd.f32 %v405, %v396
    %v407 = vadd.f32 %v406, %v399
    %v408 = vadd.f32 %v407, %v402
    %v409 = vrot.slane %v408, 4
    %v410 = vadd.f32 %v408, %v409
    %v411 = vrot.slane %v410, 2
    %v412 = vadd.f32 %v410, %v411
    %v413 = vrot.slane %v412, 1
    %v414 = vadd.f32 %v412, %v413
    %v415 = vmul.f32 %v414, 0.0006377551
    %v416 = vsub.f32 %v171, %v415
    %v417 = vsub.f32 %v176, %v415
    %v418 = vsub.f32 %v179, %v415
    %v419 = vsub.f32 %v184, %v415
    %v420 = vsub.f32 %v187, %v415
    %v421 = vsub.f32 %v192, %v415
    %v422 = vsub.f32 %v195, %v415
    %v423 = vmul.f32 %v416, %v220
    %v424 = vmul.f32 %v417, %v221
    %v425 = vmul.f32 %v418, %v222
    %v426 = vmul.f32 %v419, %v223
    %v427 = vmul.f32 %v420, %v224
    %v428 = vmul.f32 %v421, %v225
    %v429 = vmul.f32 %v422, %v226
    %v430 = vmul.f32 %v423, %v423
    %v431 = vmul.f32 %v424, %v424
    %v432 = vmul.f32 %v425, %v425
    %v433 = vmul.f32 %v426, %v426
    %v434 = vmul.f32 %v427, %v427
    %v435 = vmul.f32 %v428, %v428
    %v436 = vmul.f32 %v429, %v429
    %v437 = vsel %vm248, %v430, 0.0
    %438 = vadd.xlane.f32.xlu0 %v437
    %v439 = vpop.xlane.xlu0 %438
    %v440 = vsel %vm248, %v431, 0.0
    %441 = vadd.xlane.f32.xlu0 %v440
    %v442 = vpop.xlane.xlu0 %441
    %v443 = vsel %vm248, %v432, 0.0
    %444 = vadd.xlane.f32.xlu0 %v443
    %v445 = vpop.xlane.xlu0 %444
    %v446 = vsel %vm248, %v433, 0.0
    %447 = vadd.xlane.f32.xlu0 %v446
    %v448 = vpop.xlane.xlu0 %447
    %v449 = vsel %vm248, %v434, 0.0
    %450 = vadd.xlane.f32.xlu0 %v449
    %v451 = vpop.xlane.xlu0 %450
    %v452 = vsel %vm248, %v435, 0.0
    %453 = vadd.xlane.f32.xlu0 %v452
    %v454 = vpop.xlane.xlu0 %453
    %v455 = vsel %vm248, %v436, 0.0
    %456 = vadd.xlane.f32.xlu0 %v455
    %v457 = vpop.xlane.xlu0 %456
    %v458 = vadd.f32 %v439, %v442
    %v459 = vadd.f32 %v458, %v445
    %v460 = vadd.f32 %v459, %v448
    %v461 = vadd.f32 %v460, %v451
    %v462 = vadd.f32 %v461, %v454
    %v463 = vadd.f32 %v462, %v457
    %v464 = vrot.slane %v463, 4
    %v465 = vadd.f32 %v463, %v464
    %v466 = vrot.slane %v465, 2
    %v467 = vadd.f32 %v465, %v466
    %v468 = vrot.slane %v467, 1
    %v469 = vadd.f32 %v467, %v468
    %v470 = vmul.f32 %v469, 0.0006377551
    %v471 = vadd.f32 %v470, 1e-05
    %v472 = vrsqrt.pop %v471
    %v473 = vmul.f32 %v416, %v472
    %v474 = vmul.f32 %v417, %v472
    %v475 = vmul.f32 %v418, %v472
    %v476 = vmul.f32 %v419, %v472
    %v477 = vmul.f32 %v420, %v472
    %v478 = vmul.f32 %v421, %v472
    %v479 = vmul.f32 %v422, %v472
    %v480 = vmul.f32 %v473, %v227
    %v481 = vmul.f32 %v474, %v228
    %v482 = vmul.f32 %v475, %v229
    %v483 = vmul.f32 %v476, %v230
    %v484 = vmul.f32 %v477, %v231
    %v485 = vmul.f32 %v478, %v232
    %v486 = vmul.f32 %v479, %v233
    %v487 = vadd.f32 %v480, %v234
    %v488 = vadd.f32 %v481, %v235
    %v489 = vadd.f32 %v482, %v236
    %v490 = vadd.f32 %v483, %v237
    %v491 = vadd.f32 %v484, %v238
    %v492 = vadd.f32 %v485, %v239
    %v493 = vadd.f32 %v486, %v240
    %v494 = vmax.f32 %v487, 0.0
    %v495 = vmax.f32 %v488, 0.0
    %v496 = vmax.f32 %v489, 0.0
    %v497 = vmax.f32 %v490, 0.0
    %v498 = vmax.f32 %v491, 0.0
    %v499 = vmax.f32 %v492, 0.0
    %v500 = vmax.f32 %v493, 0.0
    %s501 = scalar_lea.vmem %s5, 56
    %502 = vst.msk [vmem:[%s501] sm:$0xff] %vm248, %v494
    %503 = vst.msk [vmem:[%s501 + $0x8] sm:$0xff] %vm248, %v495
    %504 = vst.msk [vmem:[%s501 + $0x10] sm:$0xff] %vm248, %v496
    %505 = vst.msk [vmem:[%s501 + $0x18] sm:$0xff] %vm248, %v497
    %506 = vst.msk [vmem:[%s501 + $0x20] sm:$0xff] %vm248, %v498
    %507 = vst.msk [vmem:[%s501 + $0x28] sm:$0xff] %vm248, %v499
    %508 = vst.msk [vmem:[%s501 + $0x30] sm:$0xff] %vm248, %v500
    // Predicated region
    $region26: #{_lambda_.5} parent=1 // pred_check
      _
    $region27: #{_lambda_.5} parent=1 // pred_check_branch
      %510 = sbr.rel (0) target = $region29
    $region28: #{_lambda_.5} parent=1 // pred_region
      _
    $region29: #{_lambda_.5} parent=1 // pred_fallthru
      _
    // Predicated region
    $region30: #{_lambda_.5} parent=1 // pred_check
      _
    $region31: #{_lambda_.5} parent=1 // pred_check_branch
      %512 = sbr.rel (0) target = $region33
    $region32: #{_lambda_.5} parent=1 // pred_region
      _
    $region33: #{_lambda_.5} parent=1 // pred_fallthru
      _
    %513 = vsyncpa [#allocation3], 1

// kernel: _lambda_.6
$region0: #{_lambda_.6}
  #allocation0 [shape = 'u32[]', space=smem, size = 0x4, offset = 0x4, fixed_abs, tag = 'smem constant byte address 0x4 - core index']
  #allocation1 [shape = 'u32[144,128]{1,0:T(1,128)}', space=vmem, size = 0x12000, scoped, tag = 'internal scratch']
  %s0 = inlined_call_operand.vmem [shape: f32[32,288], index: 0, kind: input, shape index: {}]
  %s1 = inlined_call_operand.hbm [shape: bf16[288,32], index: 1, kind: input, shape index: {}]
  %s2 = inlined_call_operand.vmem [shape: f32[1,32], index: 2, kind: input, shape index: {}]
  %s3 = inlined_call_operand.vmem [shape: f32[16,32], index: 3, kind: input, shape index: {}]
  %s4 = inlined_call_operand.vmem [shape: f32[16,32], index: 4, kind: input, shape index: {}]
  %s5 = inlined_call_operand.vmem [shape: f32[2,16,32], index: 5, kind: output, shape index: {}]
  %s6 = sld [smem:[#allocation0]]
  $region34: #{_lambda_.6} parent=0
    _
  %s8 = ssub.s32 1, %s6
  %s9 = scalar_select 0, %s8, %s6
  $region1: #{_lambda_.6} parent=0
    #allocation2 [shape = 'u8[73728]{0}', space=vmem, size = 0x12000, scoped, tag = 'input window, operand 1, single buffered']
    #allocation3 [shape = 's32[1]{0}', space=sflag, size = 0x4, scoped, tag = 'scoped memory for _lambda_.6']
    %10 = vsyncpa [#allocation3], 0
    // Predicated region
    $region2: #{_lambda_.6} parent=1 // pred_check
      _
    $region3: #{_lambda_.6} parent=1 // pred_check_branch
      %12 = sbr.rel (0) target = $region5
    $region4: #{_lambda_.6} parent=1 // pred_region
      _
    $region5: #{_lambda_.6} parent=1 // pred_fallthru
      _
    // Predicated region
    $region6: #{_lambda_.6} parent=1 // pred_check
      _
    $region7: #{_lambda_.6} parent=1 // pred_check_branch
      %14 = sbr.rel (0) target = $region9
    $region8: #{_lambda_.6} parent=1 // pred_region
      %s16 = ssub.s32 2304, 2304
      %17 = vsyncadd [#allocation3], %s16
      %s18 = sshll.u32 [#allocation2], 4
      %s19 = int_to_ptr.vmem [resolvable:$true] %s18
      %24 = dma.hbm_to_vmem [thread:$0]  %s1, 2304, %s19, [#allocation3], 64, 64, 4
    $region9: #{_lambda_.6} parent=1 // pred_fallthru
      _
    // Predicated region
    $region10: #{_lambda_.6} parent=1 // pred_check
      _
    $region11: #{_lambda_.6} parent=1 // pred_check_branch
      %26 = sbr.rel (0) target = $region13
    $region12: #{_lambda_.6} parent=1 // pred_region
      _
    $region13: #{_lambda_.6} parent=1 // pred_fallthru
      _
    // Predicated region
    $region14: #{_lambda_.6} parent=1 // pred_check
      _
    $region15: #{_lambda_.6} parent=1 // pred_check_branch
      %28 = sbr.rel (0) target = $region17
    $region16: #{_lambda_.6} parent=1 // pred_region
      _
    $region17: #{_lambda_.6} parent=1 // pred_fallthru
      _
    // Predicated region
    $region18: #{_lambda_.6} parent=1 // pred_check
      _
    $region19: #{_lambda_.6} parent=1 // pred_check_branch
      %30 = sbr.rel (0) target = $region21
    $region20: #{_lambda_.6} parent=1 // pred_region
      _
    $region21: #{_lambda_.6} parent=1 // pred_fallthru
      _
    // Predicated region
    $region22: #{_lambda_.6} parent=1 // pred_check
      _
    $region23: #{_lambda_.6} parent=1 // pred_check_branch
      %32 = sbr.rel (0) target = $region25
    $region24: #{_lambda_.6} parent=1 // pred_region
      %33 = dma.done [#allocation3], 2304
    $region25: #{_lambda_.6} parent=1 // pred_fallthru
      _
    %v35 = vld [vmem:[%s0] sm:$0xff]
    %v36 = vld [vmem:[%s0 + $0x8] sm:$0xff]
    %v37 = vld [vmem:[%s0 + $0x10] sm:$0xff]
    %v38 = vld [vmem:[%s0 + $0x18] sm:$0xff]
    %v39 = vld [vmem:[%s0 + $0x20] sm:$0xff]
    %v40 = vld [vmem:[%s0 + $0x28] sm:$0xff]
    %v41 = vld [vmem:[%s0 + $0x30] sm:$0xff]
    %v42 = vld [vmem:[%s0 + $0x38] sm:$0xff]
    %v43 = vld [vmem:[%s0 + $0x40] sm:$0xff]
    %v44 = vld [vmem:[%s0 + $0x48] sm:$0xff]
    %v45 = vld [vmem:[%s0 + $0x50] sm:$0xff]
    %v46 = vld [vmem:[%s0 + $0x58] sm:$0xff]
    %v47 = vpack.c.bf16 %v38, %v35
    %v48 = vpack.c.bf16 %v39, %v36
    %v49 = vpack.c.bf16 %v40, %v37
    %v50 = vpack.c.bf16 %v44, %v41
    %v51 = vpack.c.bf16 %v45, %v42
    %v52 = vpack.c.bf16 %v46, %v43
    %v53 = vld [vmem:[#allocation2] sm:$0xf]
    %v54 = vld [vmem:[#allocation2 + $0x4] sm:$0xf]
    %v55 = vld [vmem:[#allocation2 + $0x8] sm:$0xf]
    %v56 = vld [vmem:[#allocation2 + $0xc] sm:$0xf]
    %v57 = vld [vmem:[#allocation2 + $0x10] sm:$0xf]
    %v58 = vld [vmem:[#allocation2 + $0x14] sm:$0xf]
    %v59 = vld [vmem:[#allocation2 + $0x18] sm:$0xf]
    %v60 = vld [vmem:[#allocation2 + $0x1c] sm:$0xf]
    %v61 = vld [vmem:[#allocation2 + $0x20] sm:$0xf]
    %v62 = vld [vmem:[#allocation2 + $0x24] sm:$0xf]
    %v63 = vld [vmem:[#allocation2 + $0x28] sm:$0xf]
    %v64 = vld [vmem:[#allocation2 + $0x2c] sm:$0xf]
    %v65 = vld [vmem:[#allocation2 + $0x30] sm:$0xf]
    %v66 = vld [vmem:[#allocation2 + $0x34] sm:$0xf]
    %v67 = vld [vmem:[#allocation2 + $0x38] sm:$0xf]
    %v68 = vld [vmem:[#allocation2 + $0x3c] sm:$0xf]
    %v69 = vld [vmem:[#allocation2 + $0x40] sm:$0xf]
    %v70 = vld [vmem:[#allocation2 + $0x44] sm:$0xf]
    %v71 = vld [vmem:[#allocation2 + $0x48] sm:$0xf]
    %v72 = vld [vmem:[#allocation2 + $0x4c] sm:$0xf]
    %v73 = vld [vmem:[#allocation2 + $0x50] sm:$0xf]
    %v74 = vld [vmem:[#allocation2 + $0x54] sm:$0xf]
    %v75 = vld [vmem:[#allocation2 + $0x58] sm:$0xf]
    %v76 = vld [vmem:[#allocation2 + $0x5c] sm:$0xf]
    %v77 = vld [vmem:[#allocation2 + $0x60] sm:$0xf]
    %v78 = vld [vmem:[#allocation2 + $0x64] sm:$0xf]
    %v79 = vld [vmem:[#allocation2 + $0x68] sm:$0xf]
    %v80 = vld [vmem:[#allocation2 + $0x6c] sm:$0xf]
    %v81 = vld [vmem:[#allocation2 + $0x70] sm:$0xf]
    %v82 = vld [vmem:[#allocation2 + $0x74] sm:$0xf]
    %v83 = vld [vmem:[#allocation2 + $0x78] sm:$0xf]
    %v84 = vld [vmem:[#allocation2 + $0x7c] sm:$0xf]
    %v85 = vld [vmem:[#allocation2 + $0x80] sm:$0xf]
    %v86 = vld [vmem:[#allocation2 + $0x84] sm:$0xf]
    %v87 = vld [vmem:[#allocation2 + $0x88] sm:$0xf]
    %v88 = vld [vmem:[#allocation2 + $0x8c] sm:$0xf]
    %v89 = vld [vmem:[%s2] sm:$0x1]
    %v91 = vlaneseq
    %v92 = vshrl.u32 %v91, 7
    %v93 = vsub.s32 0, %v92
    %v94 = vrot.slane %v89, %v93
    %v132 = vunpack.c.l.b16 %v53
    %v133 = vunpack.c.l.b16 %v54
    %v134 = vunpack.c.l.b16 %v55
    %v135 = vunpack.c.l.b16 %v56
    %v136 = vunpack.c.l.b16 %v57
    %v137 = vunpack.c.l.b16 %v58
    %v138 = vunpack.c.l.b16 %v59
    %v139 = vunpack.c.l.b16 %v60
    %v140 = vunpack.c.l.b16 %v61
    %v141 = vunpack.c.l.b16 %v62
    %v142 = vunpack.c.l.b16 %v63
    %v143 = vunpack.c.l.b16 %v64
    %v144 = vunpack.c.l.b16 %v65
    %v145 = vunpack.c.l.b16 %v66
    %v146 = vunpack.c.l.b16 %v67
    %v147 = vunpack.c.l.b16 %v68
    %v148 = vunpack.c.l.b16 %v69
    %v149 = vunpack.c.l.b16 %v70
    %v150 = vunpack.c.l.b16 %v71
    %v151 = vunpack.c.l.b16 %v72
    %v152 = vunpack.c.l.b16 %v73
    %v153 = vunpack.c.l.b16 %v74
    %v154 = vunpack.c.l.b16 %v75
    %v155 = vunpack.c.l.b16 %v76
    %v156 = vunpack.c.l.b16 %v77
    %v157 = vunpack.c.l.b16 %v78
    %v158 = vunpack.c.l.b16 %v79
    %v159 = vunpack.c.l.b16 %v80
    %v160 = vunpack.c.l.b16 %v81
    %v161 = vunpack.c.l.b16 %v82
    %v162 = vunpack.c.l.b16 %v83
    %v163 = vunpack.c.l.b16 %v84
    %v164 = vunpack.c.l.b16 %v85
    %v165 = vunpack.c.l.b16 %v86
    %v166 = vunpack.c.l.b16 %v87
    %v167 = vunpack.c.l.b16 %v88
    %v168 = vpack.c.b16 %v133, %v132
    %v169 = vpack.c.b16 %v135, %v134
    %v170 = vpack.c.b16 %v137, %v136
    %v171 = vpack.c.b16 %v139, %v138
    %v172 = vpack.c.b16 %v141, %v140
    %v173 = vpack.c.b16 %v143, %v142
    %v174 = vpack.c.b16 %v145, %v144
    %v175 = vpack.c.b16 %v147, %v146
    %v176 = vpack.c.b16 %v149, %v148
    %v177 = vpack.c.b16 %v151, %v150
    %v178 = vpack.c.b16 %v153, %v152
    %v179 = vpack.c.b16 %v155, %v154
    %v180 = vpack.c.b16 %v157, %v156
    %v181 = vpack.c.b16 %v159, %v158
    %v182 = vpack.c.b16 %v161, %v160
    %v183 = vpack.c.b16 %v163, %v162
    %v184 = vpack.c.b16 %v165, %v164
    %v185 = vpack.c.b16 %v167, %v166
    %vm204 = vcmask 261120
    %v206 = vsel %vm204, %v49, 0
    %v209 = vsel %vm204, %v52, 0
    %211 = vmatprep.subr.bf16.mxu0 0
    %212 = vmatpush1.bf16.msra.mxu0 %v175
    %213 = vmatprep.subr.bf16.mxu0 0
    %214 = vmatpush1.bf16.msra.mxu0 %v174
    %215 = vmatprep.subr.bf16.mxu0 0
    %216 = vmatpush1.bf16.msra.mxu0 %v173
    %217 = vmatprep.subr.bf16.mxu0 0
    %218 = vmatpush1.bf16.msra.mxu0 %v172
    %219 = vmatprep.subr.bf16.mxu0 0
    %220 = vmatpush1.bf16.msra.mxu0 %v171
    %221 = vmatprep.subr.bf16.mxu0 0
    %222 = vmatpush1.bf16.msra.mxu0 %v170
    %223 = vmatprep.subr.bf16.mxu0 0
    %224 = vmatpush1.bf16.msra.mxu0 %v169
    %225 = vmatprep.subr.bf16.mxu0 0
    %226 = vmatpush1.bf16.msra.mxu0 %v168
    %227 = vmatprep.subr.bf16.mxu0 0
    %228 = vmatpush2.bf16.msra.mxu0 %v183
    %229 = vmatprep.subr.bf16.mxu0 0
    %230 = vmatpush2.bf16.msra.mxu0 %v182
    %231 = vmatprep.subr.bf16.mxu0 0
    %232 = vmatpush2.bf16.msra.mxu0 %v181
    %233 = vmatprep.subr.bf16.mxu0 0
    %234 = vmatpush2.bf16.msra.mxu0 %v180
    %235 = vmatprep.subr.bf16.mxu0 0
    %236 = vmatpush2.bf16.msra.mxu0 %v179
    %237 = vmatprep.subr.bf16.mxu0 0
    %238 = vmatpush2.bf16.msra.mxu0 %v178
    %239 = vmatprep.subr.bf16.mxu0 0
    %240 = vmatpush2.bf16.msra.mxu0 %v177
    %241 = vmatprep.subr.bf16.mxu0 0
    %242 = vmatpush2.bf16.msra.mxu0 %v176
    %243 = vmatprep.mubr.bf16.mxu0 %v48
    %244 = vmatmul.mubr.bf16.gmra.mxu0 %v47
    %v245 = vpop.f32.mrf.mxu0
    %v246 = vadd.f32 %v94, %v245
    %v247 = vpop.f32.mrf.mxu0
    %v248 = vpop.f32.mrf.mxu0
    %v249 = vadd.f32 %v94, %v248
    %v250 = vpop.f32.mrf.mxu0
    %251 = vmatprep.mubr.bf16.mxu0 %v51
    %252 = vmatmul.mubr.bf16.gmra.mxu0 %v50
    %v253 = vpop.f32.mrf.mxu0
    %v254 = vadd.f32 %v94, %v253
    %v255 = vpop.f32.mrf.mxu0
    %v256 = vpop.f32.mrf.mxu0
    %v257 = vadd.f32 %v94, %v256
    %v258 = vpop.f32.mrf.mxu0
    %259 = vdwg.mxu0
    %260 = vmatprep.subr.bf16.mxu0 0
    %261 = vmatpush1.bf16.msra.mxu0 0
    %262 = vmatprep.subr.bf16.mxu0 0
    %263 = vmatpush1.bf16.msra.mxu0 0
    %264 = vmatprep.subr.bf16.mxu0 0
    %265 = vmatpush1.bf16.msra.mxu0 0
    %266 = vmatprep.subr.bf16.mxu0 0
    %267 = vmatpush1.bf16.msra.mxu0 0
    %268 = vmatprep.subr.bf16.mxu0 0
    %269 = vmatpush1.bf16.msra.mxu0 0
    %270 = vmatprep.subr.bf16.mxu0 0
    %271 = vmatpush1.bf16.msra.mxu0 0
    %272 = vmatprep.subr.bf16.mxu0 0
    %273 = vmatpush1.bf16.msra.mxu0 %v185
    %274 = vmatprep.subr.bf16.mxu0 0
    %275 = vmatpush1.bf16.msra.mxu0 %v184
    %276 = vmatprep.subr.bf16.mxu0 0
    %277 = vmatpush2.bf16.msra.mxu0 0
    %278 = vmatprep.subr.bf16.mxu0 0
    %279 = vmatpush2.bf16.msra.mxu0 0
    %280 = vmatprep.subr.bf16.mxu0 0
    %281 = vmatpush2.bf16.msra.mxu0 0
    %282 = vmatprep.subr.bf16.mxu0 0
    %283 = vmatpush2.bf16.msra.mxu0 0
    %284 = vmatprep.subr.bf16.mxu0 0
    %285 = vmatpush2.bf16.msra.mxu0 0
    %286 = vmatprep.subr.bf16.mxu0 0
    %287 = vmatpush2.bf16.msra.mxu0 0
    %288 = vmatprep.subr.bf16.mxu0 0
    %289 = vmatpush2.bf16.msra.mxu0 0
    %290 = vmatprep.subr.bf16.mxu0 0
    %291 = vmatpush2.bf16.msra.mxu0 0
    %292 = vmatprep.mubr.bf16.mxu0 0
    %293 = vmatmul.mubr.bf16.gmra.mxu0 %v206
    %v294 = vpop.f32.mrf.mxu0
    %v295 = vadd.f32 %v246, %v294
    %v296 = vpop.f32.mrf.mxu0
    %v297 = vpop.f32.mrf.mxu0
    %v298 = vadd.f32 %v249, %v297
    %v299 = vpop.f32.mrf.mxu0
    %300 = vmatprep.mubr.bf16.mxu0 0
    %301 = vmatmul.mubr.bf16.gmra.mxu0 %v209
    %v302 = vpop.f32.mrf.mxu0
    %v303 = vadd.f32 %v254, %v302
    %v304 = vpop.f32.mrf.mxu0
    %v305 = vpop.f32.mrf.mxu0
    %v306 = vadd.f32 %v257, %v305
    %v307 = vpop.f32.mrf.mxu0
    %308 = vdwg.mxu0
    %v309 = vlaneseq
    %v310 = vshrl.u32 %v309, 7
    %v311 = vadd.s32 %v310, 8
    %vm312 = vcmp.lt.s32.totalorder %v310, 9
    %vm313 = vcmp.lt.s32.totalorder %v311, 9
    %v314 = vsel %vm312, 1, 0
    %v315 = vsel %vm313, 1, 0
    %v316 = vcvt.s32.f32 %v314
    %v317 = vcvt.s32.f32 %v315
    %v318 = vld [vmem:[%s3] sm:$0xff]
    %v319 = vld [vmem:[%s3 + $0x8] sm:$0xff]
    %v320 = vld [vmem:[%s4] sm:$0xff]
    %v321 = vld [vmem:[%s4 + $0x8] sm:$0xff]
    %v322 = vmul.f32 %v295, %v316
    %v323 = vmul.f32 %v298, %v317
    %v324 = vsel %vm204, %v322, 0.0
    %325 = vadd.xlane.f32.xlu0 %v324
    %v326 = vpop.xlane.xlu0 %325
    %v327 = vsel %vm204, %v323, 0.0
    %328 = vadd.xlane.f32.xlu0 %v327
    %v329 = vpop.xlane.xlu0 %328
    %v330 = vadd.f32 %v326, %v329
    %v331 = vrot.slane %v330, 4
    %v332 = vadd.f32 %v330, %v331
    %v333 = vrot.slane %v332, 2
    %v334 = vadd.f32 %v332, %v333
    %v335 = vrot.slane %v334, 1
    %v336 = vadd.f32 %v334, %v335
    %v337 = vmul.f32 %v336, 0.0034722222
    %v338 = vsub.f32 %v295, %v337
    %v339 = vsub.f32 %v298, %v337
    %v340 = vmul.f32 %v338, %v316
    %v341 = vmul.f32 %v339, %v317
    %v342 = vmul.f32 %v340, %v340
    %v343 = vmul.f32 %v341, %v341
    %v344 = vsel %vm204, %v342, 0.0
    %345 = vadd.xlane.f32.xlu0 %v344
    %v346 = vpop.xlane.xlu0 %345
    %v347 = vsel %vm204, %v343, 0.0
    %348 = vadd.xlane.f32.xlu0 %v347
    %v349 = vpop.xlane.xlu0 %348
    %v350 = vadd.f32 %v346, %v349
    %v351 = vrot.slane %v350, 4
    %v352 = vadd.f32 %v350, %v351
    %v353 = vrot.slane %v352, 2
    %v354 = vadd.f32 %v352, %v353
    %v355 = vrot.slane %v354, 1
    %v356 = vadd.f32 %v354, %v355
    %v357 = vmul.f32 %v356, 0.0034722222
    %v358 = vadd.f32 %v357, 1e-05
    %v359 = vrsqrt.pop %v358
    %v360 = vmul.f32 %v338, %v359
    %v361 = vmul.f32 %v339, %v359
    %v362 = vmul.f32 %v360, %v318
    %v363 = vmul.f32 %v361, %v319
    %v364 = vadd.f32 %v362, %v320
    %v365 = vadd.f32 %v363, %v321
    %v366 = vmax.f32 %v364, 0.0
    %v367 = vmax.f32 %v365, 0.0
    %368 = vst.msk [vmem:[%s5] sm:$0xff] %vm204, %v366
    %369 = vst.msk [vmem:[%s5 + $0x8] sm:$0xff] %vm204, %v367
    %v370 = vmul.f32 %v303, %v316
    %v371 = vmul.f32 %v306, %v317
    %v372 = vsel %vm204, %v370, 0.0
    %373 = vadd.xlane.f32.xlu0 %v372
    %v374 = vpop.xlane.xlu0 %373
    %v375 = vsel %vm204, %v371, 0.0
    %376 = vadd.xlane.f32.xlu0 %v375
    %v377 = vpop.xlane.xlu0 %376
    %v378 = vadd.f32 %v374, %v377
    %v379 = vrot.slane %v378, 4
    %v380 = vadd.f32 %v378, %v379
    %v381 = vrot.slane %v380, 2
    %v382 = vadd.f32 %v380, %v381
    %v383 = vrot.slane %v382, 1
    %v384 = vadd.f32 %v382, %v383
    %v385 = vmul.f32 %v384, 0.0034722222
    %v386 = vsub.f32 %v303, %v385
    %v387 = vsub.f32 %v306, %v385
    %v388 = vmul.f32 %v386, %v316
    %v389 = vmul.f32 %v387, %v317
    %v390 = vmul.f32 %v388, %v388
    %v391 = vmul.f32 %v389, %v389
    %v392 = vsel %vm204, %v390, 0.0
    %393 = vadd.xlane.f32.xlu0 %v392
    %v394 = vpop.xlane.xlu0 %393
    %v395 = vsel %vm204, %v391, 0.0
    %396 = vadd.xlane.f32.xlu0 %v395
    %v397 = vpop.xlane.xlu0 %396
    %v398 = vadd.f32 %v394, %v397
    %v399 = vrot.slane %v398, 4
    %v400 = vadd.f32 %v398, %v399
    %v401 = vrot.slane %v400, 2
    %v402 = vadd.f32 %v400, %v401
    %v403 = vrot.slane %v402, 1
    %v404 = vadd.f32 %v402, %v403
    %v405 = vmul.f32 %v404, 0.0034722222
    %v406 = vadd.f32 %v405, 1e-05
    %v407 = vrsqrt.pop %v406
    %v408 = vmul.f32 %v386, %v407
    %v409 = vmul.f32 %v387, %v407
    %v410 = vmul.f32 %v408, %v318
    %v411 = vmul.f32 %v409, %v319
    %v412 = vadd.f32 %v410, %v320
    %v413 = vadd.f32 %v411, %v321
    %v414 = vmax.f32 %v412, 0.0
    %v415 = vmax.f32 %v413, 0.0
    %s416 = scalar_lea.vmem %s5, 16
    %417 = vst.msk [vmem:[%s416] sm:$0xff] %vm204, %v414
    %418 = vst.msk [vmem:[%s416 + $0x8] sm:$0xff] %vm204, %v415
    // Predicated region
    $region26: #{_lambda_.6} parent=1 // pred_check
      _
    $region27: #{_lambda_.6} parent=1 // pred_check_branch
      %420 = sbr.rel (0) target = $region29
    $region28: #{_lambda_.6} parent=1 // pred_region
      _
    $region29: #{_lambda_.6} parent=1 // pred_fallthru
      _
    // Predicated region
    $region30: #{_lambda_.6} parent=1 // pred_check
      _
    $region31: #{_lambda_.6} parent=1 // pred_check_branch
      %422 = sbr.rel (0) target = $region33
    $region32: #{_lambda_.6} parent=1 // pred_region
      _
    $region33: #{_lambda_.6} parent=1 // pred_fallthru
      _
    %423 = vsyncpa [#allocation3], 1

// kernel: _lambda_.7
$region0: #{_lambda_.7}
  #allocation0 [shape = 'u32[]', space=smem, size = 0x4, offset = 0x4, fixed_abs, tag = 'smem constant byte address 0x4 - core index']
  #allocation1 [shape = 'u32[144,128]{1,0:T(1,128)}', space=vmem, size = 0x12000, scoped, tag = 'internal scratch']
  %s0 = inlined_call_operand.vmem [shape: f32[2,288], index: 0, kind: input, shape index: {}]
  %s1 = inlined_call_operand.hbm [shape: f32[288,32], index: 1, kind: input, shape index: {}]
  %s2 = inlined_call_operand.vmem [shape: f32[1,32], index: 2, kind: input, shape index: {}]
  %s3 = inlined_call_operand.hbm [shape: f32[2,16], index: 3, kind: input, shape index: {}]
  %s4 = inlined_call_operand.hbm [shape: f32[16,288], index: 4, kind: input, shape index: {}]
  %s5 = inlined_call_operand.vmem [shape: f32[1,288], index: 5, kind: input, shape index: {}]
  %s6 = inlined_call_operand.hbm [shape: f32[2,16], index: 6, kind: output, shape index: {0}]
  %s7 = inlined_call_operand.hbm [shape: f32[2,16], index: 7, kind: output, shape index: {1}]
  %s8 = inlined_call_operand.vmem [shape: f32[2,288], index: 8, kind: output, shape index: {2}]
  %9 = xla_tuple %s6, %s7, %s8
  %s10 = sld [smem:[#allocation0]]
  $region62: #{_lambda_.7} parent=0
    _
  %s12 = ssub.s32 1, %s10
  %s13 = scalar_select 0, %s12, %s10
  $region1: #{_lambda_.7} parent=0
    #allocation2 [shape = 'u8[147456]{0}', space=vmem, size = 0x24000, scoped, tag = 'input window, operand 1, single buffered']
    #allocation3 [shape = 's32[1]{0}', space=sflag, size = 0x4, scoped, tag = 'scoped memory for _lambda_.7']
    #allocation4 [shape = 's32[1]{0}', space=sflag, size = 0x4, scoped, tag = 'scoped memory for _lambda_.7']
    #allocation5 [shape = 'u8[1024]{0}', space=vmem, size = 0x400, scoped, tag = 'input window, operand 3, single buffered']
    #allocation6 [shape = 's32[1]{0}', space=sflag, size = 0x4, scoped, tag = 'scoped memory for _lambda_.7']
    #allocation7 [shape = 'u8[24576]{0}', space=vmem, size = 0x6000, scoped, tag = 'input window, operand 4, single buffered']
    #allocation8 [shape = 'u8[1024]{0}', space=vmem, size = 0x400, scoped, tag = 'output window, operand 0, single buffered']
    #allocation9 [shape = 'u8[1024]{0}', space=vmem, size = 0x400, scoped, tag = 'output window, operand 1, single buffered']
    #allocation10 [shape = 's32[1]{0}', space=sflag, size = 0x4, scoped, tag = 'scoped memory for _lambda_.7']
    %14 = vsyncpa [#allocation3], 0
    %15 = vsyncpa [#allocation6], 0
    %16 = vsyncpa [#allocation4], 0
    %17 = vsyncpa [#allocation10], 0
    // Predicated region
    $region2: #{_lambda_.7} parent=1 // pred_check
      _
    $region3: #{_lambda_.7} parent=1 // pred_check_branch
      %19 = sbr.rel (0) target = $region5
    $region4: #{_lambda_.7} parent=1 // pred_region
      _
    $region5: #{_lambda_.7} parent=1 // pred_fallthru
      _
    // Predicated region
    $region6: #{_lambda_.7} parent=1 // pred_check
      _
    $region7: #{_lambda_.7} parent=1 // pred_check_branch
      %21 = sbr.rel (0) target = $region9
    $region8: #{_lambda_.7} parent=1 // pred_region
      %s23 = ssub.s32 4608, 4608
      %24 = vsyncadd [#allocation3], %s23
      %s25 = sshll.u32 [#allocation2], 4
      %s26 = int_to_ptr.vmem [resolvable:$true] %s25
      %31 = dma.hbm_to_vmem [thread:$0]  %s1, 4608, %s26, [#allocation3], 128, 128, 8
    $region9: #{_lambda_.7} parent=1 // pred_fallthru
      _
    // Predicated region
    $region10: #{_lambda_.7} parent=1 // pred_check
      _
    $region11: #{_lambda_.7} parent=1 // pred_check_branch
      %33 = sbr.rel (0) target = $region13
    $region12: #{_lambda_.7} parent=1 // pred_region
      _
    $region13: #{_lambda_.7} parent=1 // pred_fallthru
      _
    // Predicated region
    $region14: #{_lambda_.7} parent=1 // pred_check
      _
    $region15: #{_lambda_.7} parent=1 // pred_check_branch
      %35 = sbr.rel (0) target = $region17
    $region16: #{_lambda_.7} parent=1 // pred_region
      %s37 = ssub.s32 32, 32
      %38 = vsyncadd [#allocation6], %s37
      %s40 = sshll.u32 [#allocation5], 4
      %s41 = int_to_ptr.vmem [resolvable:$true] %s40
      %43 = dma.hbm_to_vmem [thread:$0]  %s3, 32, %s41, [#allocation6]
    $region17: #{_lambda_.7} parent=1 // pred_fallthru
      _
    // Predicated region
    $region18: #{_lambda_.7} parent=1 // pred_check
      _
    $region19: #{_lambda_.7} parent=1 // pred_check_branch
      %45 = sbr.rel (0) target = $region21
    $region20: #{_lambda_.7} parent=1 // pred_region
      %s47 = ssub.s32 768, 768
      %48 = vsyncadd [#allocation6], %s47
      %s49 = sshll.u32 [#allocation7], 4
      %s50 = int_to_ptr.vmem [resolvable:$true] %s49
      %55 = dma.hbm_to_vmem [thread:$0]  %s4, 768, %s50, [#allocation6], 384, 384, 24
    $region21: #{_lambda_.7} parent=1 // pred_fallthru
      _
    // Predicated region
    $region22: #{_lambda_.7} parent=1 // pred_check
      _
    $region23: #{_lambda_.7} parent=1 // pred_check_branch
      %57 = sbr.rel (0) target = $region25
    $region24: #{_lambda_.7} parent=1 // pred_region
      _
    $region25: #{_lambda_.7} parent=1 // pred_fallthru
      _
    // Predicated region
    $region26: #{_lambda_.7} parent=1 // pred_check
      _
    $region27: #{_lambda_.7} parent=1 // pred_check_branch
      %59 = sbr.rel (0) target = $region29
    $region28: #{_lambda_.7} parent=1 // pred_region
      %60 = dma.done [#allocation3], 4608
    $region29: #{_lambda_.7} parent=1 // pred_fallthru
      _
    // Predicated region
    $region30: #{_lambda_.7} parent=1 // pred_check
      _
    $region31: #{_lambda_.7} parent=1 // pred_check_branch
      %62 = sbr.rel (0) target = $region33
    $region32: #{_lambda_.7} parent=1 // pred_region
      %63 = dma.done [#allocation6], 32
    $region33: #{_lambda_.7} parent=1 // pred_fallthru
      _
    // Predicated region
    $region34: #{_lambda_.7} parent=1 // pred_check
      _
    $region35: #{_lambda_.7} parent=1 // pred_check_branch
      %65 = sbr.rel (0) target = $region37
    $region36: #{_lambda_.7} parent=1 // pred_region
      %66 = dma.done [#allocation6], 768
    $region37: #{_lambda_.7} parent=1 // pred_fallthru
      _
    %v67 = vld [vmem:[%s0] sm:$0x3f]
    %v68 = vld [vmem:[#allocation2] sm:$0xff]
    %v69 = vld [vmem:[#allocation2 + $0x8] sm:$0xff]
    %v70 = vld [vmem:[#allocation2 + $0x10] sm:$0xff]
    %v71 = vld [vmem:[#allocation2 + $0x18] sm:$0xff]
    %v72 = vld [vmem:[#allocation2 + $0x20] sm:$0xff]
    %v73 = vld [vmem:[#allocation2 + $0x28] sm:$0xff]
    %v74 = vld [vmem:[#allocation2 + $0x30] sm:$0xff]
    %v75 = vld [vmem:[#allocation2 + $0x38] sm:$0xff]
    %v76 = vld [vmem:[#allocation2 + $0x40] sm:$0xff]
    %v77 = vld [vmem:[#allocation2 + $0x48] sm:$0xff]
    %v78 = vld [vmem:[#allocation2 + $0x50] sm:$0xff]
    %v79 = vld [vmem:[#allocation2 + $0x58] sm:$0xff]
    %v80 = vld [vmem:[#allocation2 + $0x60] sm:$0xff]
    %v81 = vld [vmem:[#allocation2 + $0x68] sm:$0xff]
    %v82 = vld [vmem:[#allocation2 + $0x70] sm:$0xff]
    %v83 = vld [vmem:[#allocation2 + $0x78] sm:$0xff]
    %v84 = vld [vmem:[#allocation2 + $0x80] sm:$0xff]
    %v85 = vld [vmem:[#allocation2 + $0x88] sm:$0xff]
    %v86 = vld [vmem:[#allocation2 + $0x90] sm:$0xff]
    %v87 = vld [vmem:[#allocation2 + $0x98] sm:$0xff]
    %v88 = vld [vmem:[#allocation2 + $0xa0] sm:$0xff]
    %v89 = vld [vmem:[#allocation2 + $0xa8] sm:$0xff]
    %v90 = vld [vmem:[#allocation2 + $0xb0] sm:$0xff]
    %v91 = vld [vmem:[#allocation2 + $0xb8] sm:$0xff]
    %v92 = vld [vmem:[#allocation2 + $0xc0] sm:$0xff]
    %v93 = vld [vmem:[#allocation2 + $0xc8] sm:$0xff]
    %v94 = vld [vmem:[#allocation2 + $0xd0] sm:$0xff]
    %v95 = vld [vmem:[#allocation2 + $0xd8] sm:$0xff]
    %v96 = vld [vmem:[#allocation2 + $0xe0] sm:$0xff]
    %v97 = vld [vmem:[#allocation2 + $0xe8] sm:$0xff]
    %v98 = vld [vmem:[#allocation2 + $0xf0] sm:$0xff]
    %v99 = vld [vmem:[#allocation2 + $0xf8] sm:$0xff]
    %v100 = vld [vmem:[#allocation2 + $0x100] sm:$0xff]
    %v101 = vld [vmem:[#allocation2 + $0x108] sm:$0xff]
    %v102 = vld [vmem:[#allocation2 + $0x110] sm:$0xff]
    %v103 = vld [vmem:[#allocation2 + $0x118] sm:$0xff]
    %v104 = vld [vmem:[%s2] sm:$0x1]
    %v106 = vlaneseq
    %v107 = vshrl.u32 %v106, 7
    %v108 = vsub.s32 0, %v107
    %v109 = vrot.slane %v104, %v108
    %v112 = vcombine.high %v67, %v67
    %v114 = vunpack.c.l.s4 1983009808
    %v115 = vunpack.c.0.s8 %v114
    %v116 = vlaneseq
    %v117 = vshrl.u32 %v116, 7
    %v118 = vsub.s32 %v115, %v117
    %v119 = vrot.slane %v67, %v118
    %v121 = vunpack.c.l.s4 1983009808
    %v122 = vunpack.c.0.s8 %v121
    %v123 = vlaneseq
    %v124 = vshrl.u32 %v123, 7
    %v125 = vsub.s32 %v122, %v124
    %v126 = vrot.slane %v112, %v125
    %v127 = vcombine.high %v119, %v119
    %vm130 = vcmask 261120
    %v131 = vsel %vm130, %v126, 0
    %133 = vmatprep.subr.mxu0 0.0
    %134 = vmatpush1.msra.mxu0 %v83
    %135 = vmatprep.subr.mxu0 0.0
    %136 = vmatpush1.msra.mxu0 %v82
    %137 = vmatprep.subr.mxu0 0.0
    %138 = vmatpush1.msra.mxu0 %v81
    %139 = vmatprep.subr.mxu0 0.0
    %140 = vmatpush1.msra.mxu0 %v80
    %141 = vmatprep.subr.mxu0 0.0
    %142 = vmatpush1.msra.mxu0 %v79
    %143 = vmatprep.subr.mxu0 0.0
    %144 = vmatpush1.msra.mxu0 %v78
    %145 = vmatprep.subr.mxu0 0.0
    %146 = vmatpush1.msra.mxu0 %v77
    %147 = vmatprep.subr.mxu0 0.0
    %148 = vmatpush1.msra.mxu0 %v76
    %149 = vmatprep.subr.mxu0 0.0
    %150 = vmatpush1.msra.mxu0 %v75
    %151 = vmatprep.subr.mxu0 0.0
    %152 = vmatpush1.msra.mxu0 %v74
    %153 = vmatprep.subr.mxu0 0.0
    %154 = vmatpush1.msra.mxu0 %v73
    %155 = vmatprep.subr.mxu0 0.0
    %156 = vmatpush1.msra.mxu0 %v72
    %157 = vmatprep.subr.mxu0 0.0
    %158 = vmatpush1.msra.mxu0 %v71
    %159 = vmatprep.subr.mxu0 0.0
    %160 = vmatpush1.msra.mxu0 %v70
    %161 = vmatprep.subr.mxu0 0.0
    %162 = vmatpush1.msra.mxu0 %v69
    %163 = vmatprep.subr.mxu0 0.0
    %164 = vmatpush1.msra.mxu0 %v68
    %165 = vmatprep.subr.mxu0 0.0
    %166 = vmatpush2.msra.mxu0 %v99
    %167 = vmatprep.subr.mxu0 0.0
    %168 = vmatpush2.msra.mxu0 %v98
    %169 = vmatprep.subr.mxu0 0.0
    %170 = vmatpush2.msra.mxu0 %v97
    %171 = vmatprep.subr.mxu0 0.0
    %172 = vmatpush2.msra.mxu0 %v96
    %173 = vmatprep.subr.mxu0 0.0
    %174 = vmatpush2.msra.mxu0 %v95
    %175 = vmatprep.subr.mxu0 0.0
    %176 = vmatpush2.msra.mxu0 %v94
    %177 = vmatprep.subr.mxu0 0.0
    %178 = vmatpush2.msra.mxu0 %v93
    %179 = vmatprep.subr.mxu0 0.0
    %180 = vmatpush2.msra.mxu0 %v92
    %181 = vmatprep.subr.mxu0 0.0
    %182 = vmatpush2.msra.mxu0 %v91
    %183 = vmatprep.subr.mxu0 0.0
    %184 = vmatpush2.msra.mxu0 %v90
    %185 = vmatprep.subr.mxu0 0.0
    %186 = vmatpush2.msra.mxu0 %v89
    %187 = vmatprep.subr.mxu0 0.0
    %188 = vmatpush2.msra.mxu0 %v88
    %189 = vmatprep.subr.mxu0 0.0
    %190 = vmatpush2.msra.mxu0 %v87
    %191 = vmatprep.subr.mxu0 0.0
    %192 = vmatpush2.msra.mxu0 %v86
    %193 = vmatprep.subr.mxu0 0.0
    %194 = vmatpush2.msra.mxu0 %v85
    %195 = vmatprep.subr.mxu0 0.0
    %196 = vmatpush2.msra.mxu0 %v84
    %197 = vmatprep.mubr.f32.mxu0 %v127
    %198 = vmatmul.mubr.f32.gmra.mxu0 %v119
    %v199 = vpop.f32.mrf.mxu0
    %v200 = vadd.f32 %v109, %v199
    %v201 = vpop.f32.mrf.mxu0
    %202 = vdwg.mxu0
    %203 = vmatprep.subr.mxu0 0.0
    %204 = vmatpush1.msra.mxu0 0.0
    %205 = vmatprep.subr.mxu0 0.0
    %206 = vmatpush1.msra.mxu0 0.0
    %207 = vmatprep.subr.mxu0 0.0
    %208 = vmatpush1.msra.mxu0 0.0
    %209 = vmatprep.subr.mxu0 0.0
    %210 = vmatpush1.msra.mxu0 0.0
    %211 = vmatprep.subr.mxu0 0.0
    %212 = vmatpush1.msra.mxu0 0.0
    %213 = vmatprep.subr.mxu0 0.0
    %214 = vmatpush1.msra.mxu0 0.0
    %215 = vmatprep.subr.mxu0 0.0
    %216 = vmatpush1.msra.mxu0 0.0
    %217 = vmatprep.subr.mxu0 0.0
    %218 = vmatpush1.msra.mxu0 0.0
    %219 = vmatprep.subr.mxu0 0.0
    %220 = vmatpush1.msra.mxu0 0.0
    %221 = vmatprep.subr.mxu0 0.0
    %222 = vmatpush1.msra.mxu0 0.0
    %223 = vmatprep.subr.mxu0 0.0
    %224 = vmatpush1.msra.mxu0 0.0
    %225 = vmatprep.subr.mxu0 0.0
    %226 = vmatpush1.msra.mxu0 0.0
    %227 = vmatprep.subr.mxu0 0.0
    %228 = vmatpush1.msra.mxu0 %v103
    %229 = vmatprep.subr.mxu0 0.0
    %230 = vmatpush1.msra.mxu0 %v102
    %231 = vmatprep.subr.mxu0 0.0
    %232 = vmatpush1.msra.mxu0 %v101
    %233 = vmatprep.subr.mxu0 0.0
    %234 = vmatpush1.msra.mxu0 %v100
    %235 = vmatprep.subr.mxu0 0.0
    %236 = vmatpush2.msra.mxu0 0.0
    %237 = vmatprep.subr.mxu0 0.0
    %238 = vmatpush2.msra.mxu0 0.0
    %239 = vmatprep.subr.mxu0 0.0
    %240 = vmatpush2.msra.mxu0 0.0
    %241 = vmatprep.subr.mxu0 0.0
    %242 = vmatpush2.msra.mxu0 0.0
    %243 = vmatprep.subr.mxu0 0.0
    %244 = vmatpush2.msra.mxu0 0.0
    %245 = vmatprep.subr.mxu0 0.0
    %246 = vmatpush2.msra.mxu0 0.0
    %247 = vmatprep.subr.mxu0 0.0
    %248 = vmatpush2.msra.mxu0 0.0
    %249 = vmatprep.subr.mxu0 0.0
    %250 = vmatpush2.msra.mxu0 0.0
    %251 = vmatprep.subr.mxu0 0.0
    %252 = vmatpush2.msra.mxu0 0.0
    %253 = vmatprep.subr.mxu0 0.0
    %254 = vmatpush2.msra.mxu0 0.0
    %255 = vmatprep.subr.mxu0 0.0
    %256 = vmatpush2.msra.mxu0 0.0
    %257 = vmatprep.subr.mxu0 0.0
    %258 = vmatpush2.msra.mxu0 0.0
    %259 = vmatprep.subr.mxu0 0.0
    %260 = vmatpush2.msra.mxu0 0.0
    %261 = vmatprep.subr.mxu0 0.0
    %262 = vmatpush2.msra.mxu0 0.0
    %263 = vmatprep.subr.mxu0 0.0
    %264 = vmatpush2.msra.mxu0 0.0
    %265 = vmatprep.subr.mxu0 0.0
    %266 = vmatpush2.msra.mxu0 0.0
    %267 = vmatprep.mubr.f32.mxu0 0.0
    %268 = vmatmul.mubr.f32.gmra.mxu0 %v131
    %v269 = vpop.f32.mrf.mxu0
    %v270 = vadd.f32 %v200, %v269
    %v271 = vpop.f32.mrf.mxu0
    %272 = vdwg.mxu0
    %vm273 = vcmask 123904
    %274 = vst.msk [vmem:[#allocation8] sm:$0x3] %vm273, %v270
    %276 = vrot.lane.b32.xlu0 %v270, 112
    %v277 = vpop.permute.xlu0 %276
    %279 = vst.msk [vmem:[#allocation9] sm:$0x3] %vm273, %v277
    %v280 = vld [vmem:[#allocation5] sm:$0x3]
    %v281 = vmul.f32 %v270, 0.5
    %v282 = vmul.f32 %v281, 1.442695
    %v283 = vpow.pop %v282
    %285 = vrot.lane.b32.xlu0 %v283, 112
    %v286 = vpop.permute.xlu0 %285
    %v288 = vmul.f32 %v280, %v286
    %v289 = vadd.f32 %v270, %v288
    %v290 = vld [vmem:[#allocation7] sm:$0xff]
    %v291 = vld [vmem:[#allocation7 + $0x8] sm:$0xff]
    %v292 = vld [vmem:[#allocation7 + $0x10] sm:$0xff]
    %v293 = vld [vmem:[#allocation7 + $0x18] sm:$0xff]
    %v294 = vld [vmem:[#allocation7 + $0x20] sm:$0xff]
    %v295 = vld [vmem:[#allocation7 + $0x28] sm:$0xff]
    %v296 = vld [vmem:[%s5] sm:$0x7]
    %v298 = vlaneseq
    %v299 = vshrl.u32 %v298, 7
    %v300 = vsub.s32 0, %v299
    %v301 = vrot.slane %v296, %v300
    %v302 = vlaneseq
    %v303 = vshrl.u32 %v302, 7
    %v304 = vsub.s32 1, %v303
    %v305 = vrot.slane %v296, %v304
    %v306 = vlaneseq
    %v307 = vshrl.u32 %v306, 7
    %v308 = vsub.s32 2, %v307
    %v309 = vrot.slane %v296, %v308
    %vm313 = vcmask 130048
    %v315 = vsel %vm313, %v289, 0
    %317 = vmatprep.subr.mxu0 0.0
    %318 = vmatpush1.msra.mxu0 0.0
    %319 = vmatprep.subr.mxu0 0.0
    %320 = vmatpush1.msra.mxu0 0.0
    %321 = vmatprep.subr.mxu0 0.0
    %322 = vmatpush1.msra.mxu0 0.0
    %323 = vmatprep.subr.mxu0 0.0
    %324 = vmatpush1.msra.mxu0 0.0
    %325 = vmatprep.subr.mxu0 0.0
    %326 = vmatpush1.msra.mxu0 0.0
    %327 = vmatprep.subr.mxu0 0.0
    %328 = vmatpush1.msra.mxu0 0.0
    %329 = vmatprep.subr.mxu0 0.0
    %330 = vmatpush1.msra.mxu0 0.0
    %331 = vmatprep.subr.mxu0 0.0
    %332 = vmatpush1.msra.mxu0 0.0
    %333 = vmatprep.subr.mxu0 0.0
    %334 = vmatpush1.msra.mxu0 0.0
    %335 = vmatprep.subr.mxu0 0.0
    %336 = vmatpush1.msra.mxu0 0.0
    %337 = vmatprep.subr.mxu0 0.0
    %338 = vmatpush1.msra.mxu0 0.0
    %339 = vmatprep.subr.mxu0 0.0
    %340 = vmatpush1.msra.mxu0 0.0
    %341 = vmatprep.subr.mxu0 0.0
    %342 = vmatpush1.msra.mxu0 0.0
    %343 = vmatprep.subr.mxu0 0.0
    %344 = vmatpush1.msra.mxu0 0.0
    %345 = vmatprep.subr.mxu0 %v294
    %346 = vmatpush1.msra.mxu0 %v293
    %347 = vmatprep.subr.mxu0 %v291
    %348 = vmatpush1.msra.mxu0 %v290
    %349 = vmatprep.subr.mxu0 0.0
    %350 = vmatpush2.msra.mxu0 0.0
    %351 = vmatprep.subr.mxu0 0.0
    %352 = vmatpush2.msra.mxu0 0.0
    %353 = vmatprep.subr.mxu0 0.0
    %354 = vmatpush2.msra.mxu0 0.0
    %355 = vmatprep.subr.mxu0 0.0
    %356 = vmatpush2.msra.mxu0 0.0
    %357 = vmatprep.subr.mxu0 0.0
    %358 = vmatpush2.msra.mxu0 0.0
    %359 = vmatprep.subr.mxu0 0.0
    %360 = vmatpush2.msra.mxu0 0.0
    %361 = vmatprep.subr.mxu0 0.0
    %362 = vmatpush2.msra.mxu0 0.0
    %363 = vmatprep.subr.mxu0 0.0
    %364 = vmatpush2.msra.mxu0 0.0
    %365 = vmatprep.subr.mxu0 0.0
    %366 = vmatpush2.msra.mxu0 0.0
    %367 = vmatprep.subr.mxu0 0.0
    %368 = vmatpush2.msra.mxu0 0.0
    %369 = vmatprep.subr.mxu0 0.0
    %370 = vmatpush2.msra.mxu0 0.0
    %371 = vmatprep.subr.mxu0 0.0
    %372 = vmatpush2.msra.mxu0 0.0
    %373 = vmatprep.subr.mxu0 0.0
    %374 = vmatpush2.msra.mxu0 0.0
    %375 = vmatprep.subr.mxu0 0.0
    %376 = vmatpush2.msra.mxu0 0.0
    %377 = vmatprep.subr.mxu0 0.0
    %378 = vmatpush2.msra.mxu0 0.0
    %379 = vmatprep.subr.mxu0 0.0
    %380 = vmatpush2.msra.mxu0 0.0
    %381 = vmatprep.mubr.f32.mxu0 0.0
    %382 = vmatmul.mubr.f32.gmra.mxu0 %v315
    %v383 = vpop.f32.mrf.mxu0
    %v384 = vadd.f32 %v301, %v383
    %v385 = vpop.f32.mrf.mxu0
    %v386 = vadd.f32 %v305, %v385
    %387 = vdwg.mxu0
    %388 = vmatprep.subr.mxu0 0.0
    %389 = vmatpush1.msra.mxu0 0.0
    %390 = vmatprep.subr.mxu0 0.0
    %391 = vmatpush1.msra.mxu0 0.0
    %392 = vmatprep.subr.mxu0 0.0
    %393 = vmatpush1.msra.mxu0 0.0
    %394 = vmatprep.subr.mxu0 0.0
    %395 = vmatpush1.msra.mxu0 0.0
    %396 = vmatprep.subr.mxu0 0.0
    %397 = vmatpush1.msra.mxu0 0.0
    %398 = vmatprep.subr.mxu0 0.0
    %399 = vmatpush1.msra.mxu0 0.0
    %400 = vmatprep.subr.mxu0 0.0
    %401 = vmatpush1.msra.mxu0 0.0
    %402 = vmatprep.subr.mxu0 0.0
    %403 = vmatpush1.msra.mxu0 0.0
    %404 = vmatprep.subr.mxu0 0.0
    %405 = vmatpush1.msra.mxu0 0.0
    %406 = vmatprep.subr.mxu0 0.0
    %407 = vmatpush1.msra.mxu0 0.0
    %408 = vmatprep.subr.mxu0 0.0
    %409 = vmatpush1.msra.mxu0 0.0
    %410 = vmatprep.subr.mxu0 0.0
    %411 = vmatpush1.msra.mxu0 0.0
    %412 = vmatprep.subr.mxu0 0.0
    %413 = vmatpush1.msra.mxu0 0.0
    %414 = vmatprep.subr.mxu0 0.0
    %415 = vmatpush1.msra.mxu0 0.0
    %416 = vmatprep.subr.mxu0 0.0
    %417 = vmatpush1.msra.mxu0 %v295
    %418 = vmatprep.subr.mxu0 0.0
    %419 = vmatpush1.msra.mxu0 %v292
    %420 = vmatprep.subr.mxu0 0.0
    %421 = vmatpush2.msra.mxu0 0.0
    %422 = vmatprep.subr.mxu0 0.0
    %423 = vmatpush2.msra.mxu0 0.0
    %424 = vmatprep.subr.mxu0 0.0
    %425 = vmatpush2.msra.mxu0 0.0
    %426 = vmatprep.subr.mxu0 0.0
    %427 = vmatpush2.msra.mxu0 0.0
    %428 = vmatprep.subr.mxu0 0.0
    %429 = vmatpush2.msra.mxu0 0.0
    %430 = vmatprep.subr.mxu0 0.0
    %431 = vmatpush2.msra.mxu0 0.0
    %432 = vmatprep.subr.mxu0 0.0
    %433 = vmatpush2.msra.mxu0 0.0
    %434 = vmatprep.subr.mxu0 0.0
    %435 = vmatpush2.msra.mxu0 0.0
    %436 = vmatprep.subr.mxu0 0.0
    %437 = vmatpush2.msra.mxu0 0.0
    %438 = vmatprep.subr.mxu0 0.0
    %439 = vmatpush2.msra.mxu0 0.0
    %440 = vmatprep.subr.mxu0 0.0
    %441 = vmatpush2.msra.mxu0 0.0
    %442 = vmatprep.subr.mxu0 0.0
    %443 = vmatpush2.msra.mxu0 0.0
    %444 = vmatprep.subr.mxu0 0.0
    %445 = vmatpush2.msra.mxu0 0.0
    %446 = vmatprep.subr.mxu0 0.0
    %447 = vmatpush2.msra.mxu0 0.0
    %448 = vmatprep.subr.mxu0 0.0
    %449 = vmatpush2.msra.mxu0 0.0
    %450 = vmatprep.subr.mxu0 0.0
    %451 = vmatpush2.msra.mxu0 0.0
    %452 = vmatprep.mubr.f32.mxu0 0.0
    %453 = vmatmul.mubr.f32.gmra.mxu0 %v315
    %v454 = vpop.f32.mrf.mxu0
    %v455 = vadd.f32 %v309, %v454
    %v456 = vpop.f32.mrf.mxu0
    %457 = vdwg.mxu0
    %v461 = vcombine.low %v384, %v386
    %v463 = vunpack.c.l.s4 1983009808
    %v464 = vunpack.c.0.s8 %v463
    %v465 = vlaneseq
    %v466 = vshrl.u32 %v465, 7
    %v467 = vsub.s32 %v464, %v466
    %v468 = vrot.slane %v461, %v467
    %v470 = vunpack.c.l.s4 1983009808
    %v471 = vunpack.c.0.s8 %v470
    %v472 = vlaneseq
    %v473 = vshrl.u32 %v472, 7
    %v474 = vsub.s32 %v471, %v473
    %v475 = vrot.slane %v455, %v474
    %v476 = vcombine.low %v468, %v475
    %vm478 = vcmask 1041408
    %vm479 = vcmask 1043458
    %vm480 = vmor %vm479, %vm478
    %vm481 = vcmask 259076
    %vm482 = vmor %vm481, %vm480
    %483 = vst.msk [vmem:[%s8] sm:$0x3f] %vm482, %v476
    // Predicated region
    $region38: #{_lambda_.7} parent=1 // pred_check
      _
    $region39: #{_lambda_.7} parent=1 // pred_check_branch
      %485 = sbr.rel (0) target = $region41
    $region40: #{_lambda_.7} parent=1 // pred_region
      %s487 = ssub.s32 32, 32
      %488 = vsyncadd [#allocation4], %s487
      %s490 = sshll.u32 [#allocation8], 4
      %s491 = int_to_ptr.vmem [resolvable:$true] %s490
      %493 = dma.vmem_to_hbm [thread:$0]  %s491, 32, %s6, [#allocation4]
    $region41: #{_lambda_.7} parent=1 // pred_fallthru
      _
    // Predicated region
    $region42: #{_lambda_.7} parent=1 // pred_check
      _
    $region43: #{_lambda_.7} parent=1 // pred_check_branch
      %495 = sbr.rel (0) target = $region45
    $region44: #{_lambda_.7} parent=1 // pred_region
      %s497 = ssub.s32 32, 32
      %498 = vsyncadd [#allocation10], %s497
      %s500 = sshll.u32 [#allocation9], 4
      %s501 = int_to_ptr.vmem [resolvable:$true] %s500
      %503 = dma.vmem_to_hbm [thread:$0]  %s501, 32, %s7, [#allocation10]
    $region45: #{_lambda_.7} parent=1 // pred_fallthru
      _
    // Predicated region
    $region46: #{_lambda_.7} parent=1 // pred_check
      _
    $region47: #{_lambda_.7} parent=1 // pred_check_branch
      %505 = sbr.rel (0) target = $region49
    $region48: #{_lambda_.7} parent=1 // pred_region
      _
    $region49: #{_lambda_.7} parent=1 // pred_fallthru
      _
    // Predicated region
    $region50: #{_lambda_.7} parent=1 // pred_check
      _
    $region51: #{_lambda_.7} parent=1 // pred_check_branch
      %507 = sbr.rel (0) target = $region53
    $region52: #{_lambda_.7} parent=1 // pred_region
      %508 = dma.done [#allocation4], 32
    $region53: #{_lambda_.7} parent=1 // pred_fallthru
      _
    // Predicated region
    $region54: #{_lambda_.7} parent=1 // pred_check
      _
    $region55: #{_lambda_.7} parent=1 // pred_check_branch
      %510 = sbr.rel (0) target = $region57
    $region56: #{_lambda_.7} parent=1 // pred_region
      %511 = dma.done [#allocation10], 32
    $region57: #{_lambda_.7} parent=1 // pred_fallthru
      _
    // Predicated region
    $region58: #{_lambda_.7} parent=1 // pred_check
      _
    $region59: #{_lambda_.7} parent=1 // pred_check_branch
      %513 = sbr.rel (0) target = $region61
    $region60: #{_lambda_.7} parent=1 // pred_region
      _
    $region61: #{_lambda_.7} parent=1 // pred_fallthru
      _
    %514 = vsyncpa [#allocation3], 1
    %515 = vsyncpa [#allocation6], 1
    %516 = vsyncpa [#allocation4], 1
    %517 = vsyncpa [#allocation10], 1

// kernel: _lambda_.8
$region0: #{_lambda_.8}
  #allocation0 [shape = 'u32[]', space=smem, size = 0x4, offset = 0x4, fixed_abs, tag = 'smem constant byte address 0x4 - core index']
  #allocation1 [shape = 'u32[144,128]{1,0:T(1,128)}', space=vmem, size = 0x12000, scoped, tag = 'internal scratch']
  %s0 = inlined_call_operand.vmem [shape: f32[2,288], index: 0, kind: input, shape index: {}]
  %s1 = inlined_call_operand.vmem [shape: bf16[288,1568], index: 1, kind: input, shape index: {}]
  %s2 = inlined_call_operand.vmem [shape: f32[1,1568], index: 2, kind: input, shape index: {}, may-alias: {2,4}]
  %s3 = inlined_call_operand.vmem [shape: f32[1,1568], index: 3, kind: input, shape index: {}]
  %s4 = inlined_call_operand.vmem [shape: f32[1,1568], index: 4, kind: input, shape index: {}, may-alias: {2,4}]
  %s5 = inlined_call_operand.vmem [shape: f32[2,1568], index: 5, kind: output, shape index: {}]
  %s6 = sld [smem:[#allocation0]]
  $region30: #{_lambda_.8} parent=0
    _
  %s8 = ssub.s32 1, %s6
  %s9 = scalar_select 0, %s8, %s6
  // Predicated region
  $region2: #{_lambda_.8} parent=0 // pred_check
    _
  $region3: #{_lambda_.8} parent=0 // pred_check_branch
    %11 = sbr.rel (0) target = $region5
  $region4: #{_lambda_.8} parent=0 // pred_region
    _
  $region5: #{_lambda_.8} parent=0 // pred_fallthru
    _
  // Predicated region
  $region6: #{_lambda_.8} parent=0 // pred_check
    _
  $region7: #{_lambda_.8} parent=0 // pred_check_branch
    %13 = sbr.rel (0) target = $region9
  $region8: #{_lambda_.8} parent=0 // pred_region
    _
  $region9: #{_lambda_.8} parent=0 // pred_fallthru
    _
  // Predicated region
  $region10: #{_lambda_.8} parent=0 // pred_check
    _
  $region11: #{_lambda_.8} parent=0 // pred_check_branch
    %15 = sbr.rel (0) target = $region13
  $region12: #{_lambda_.8} parent=0 // pred_region
    _
  $region13: #{_lambda_.8} parent=0 // pred_fallthru
    _
  // Predicated region
  $region14: #{_lambda_.8} parent=0 // pred_check
    _
  $region15: #{_lambda_.8} parent=0 // pred_check_branch
    %17 = sbr.rel (0) target = $region17
  $region16: #{_lambda_.8} parent=0 // pred_region
    _
  $region17: #{_lambda_.8} parent=0 // pred_fallthru
    _
  // Predicated region
  $region18: #{_lambda_.8} parent=0 // pred_check
    _
  $region19: #{_lambda_.8} parent=0 // pred_check_branch
    %19 = sbr.rel (0) target = $region21
  $region20: #{_lambda_.8} parent=0 // pred_region
    _
  $region21: #{_lambda_.8} parent=0 // pred_fallthru
    _
  %v21 = vld [vmem:[%s0] sm:$0x3f]
  %v23 = vcombine.high %v21, %v21
  %v25 = vunpack.c.l.s4 1983009808
  %v26 = vunpack.c.0.s8 %v25
  %v27 = vlaneseq
  %v28 = vshrl.u32 %v27, 7
  %v29 = vsub.s32 %v26, %v28
  %v30 = vrot.slane %v21, %v29
  %v32 = vunpack.c.l.s4 1983009808
  %v33 = vunpack.c.0.s8 %v32
  %v34 = vlaneseq
  %v35 = vshrl.u32 %v34, 7
  %v36 = vsub.s32 %v33, %v35
  %v37 = vrot.slane %v23, %v36
  %v38 = vcombine.high %v30, %v30
  %v42 = vpack.c.bf16 %v30, %v30
  %v43 = vpack.c.bf16 %v38, %v38
  %v44 = vpack.c.bf16 %v37, %v37
  %v45 = vld [vmem:[%s1] sm:$0xff]
  %v46 = vld [vmem:[%s1 + $0x8] sm:$0xff]
  %v47 = vld [vmem:[%s1 + $0x10] sm:$0xff]
  %v48 = vld [vmem:[%s1 + $0x18] sm:$0xff]
  %v49 = vld [vmem:[%s1 + $0x20] sm:$0xff]
  %v50 = vld [vmem:[%s1 + $0x28] sm:$0xff]
  %v51 = vld [vmem:[%s1 + $0x30] sm:$0xf]
  %v52 = vld [vmem:[%s1 + $0x34] sm:$0xff]
  %v53 = vld [vmem:[%s1 + $0x3c] sm:$0xff]
  %v54 = vld [vmem:[%s1 + $0x44] sm:$0xff]
  %v55 = vld [vmem:[%s1 + $0x4c] sm:$0xff]
  %v56 = vld [vmem:[%s1 + $0x54] sm:$0xff]
  %v57 = vld [vmem:[%s1 + $0x5c] sm:$0xff]
  %v58 = vld [vmem:[%s1 + $0x64] sm:$0xf]
  %v59 = vld [vmem:[%s1 + $0x68] sm:$0xff]
  %v60 = vld [vmem:[%s1 + $0x70] sm:$0xff]
  %v61 = vld [vmem:[%s1 + $0x78] sm:$0xff]
  %v62 = vld [vmem:[%s1 + $0x80] sm:$0xff]
  %v63 = vld [vmem:[%s1 + $0x88] sm:$0xff]
  %v64 = vld [vmem:[%s1 + $0x90] sm:$0xff]
  %v65 = vld [vmem:[%s1 + $0x98] sm:$0xf]
  %v66 = vld [vmem:[%s1 + $0x9c] sm:$0xff]
  %v67 = vld [vmem:[%s1 + $0xa4] sm:$0xff]
  %v68 = vld [vmem:[%s1 + $0xac] sm:$0xff]
  %v69 = vld [vmem:[%s1 + $0xb4] sm:$0xff]
  %v70 = vld [vmem:[%s1 + $0xbc] sm:$0xff]
  %v71 = vld [vmem:[%s1 + $0xc4] sm:$0xff]
  %v72 = vld [vmem:[%s1 + $0xcc] sm:$0xf]
  %v73 = vld [vmem:[%s1 + $0xd0] sm:$0xff]
  %v74 = vld [vmem:[%s1 + $0xd8] sm:$0xff]
  %v75 = vld [vmem:[%s1 + $0xe0] sm:$0xff]
  %v76 = vld [vmem:[%s1 + $0xe8] sm:$0xff]
  %v77 = vld [vmem:[%s1 + $0xf0] sm:$0xff]
  %v78 = vld [vmem:[%s1 + $0xf8] sm:$0xff]
  %v79 = vld [vmem:[%s1 + $0x100] sm:$0xf]
  %v80 = vld [vmem:[%s1 + $0x104] sm:$0xff]
  %v81 = vld [vmem:[%s1 + $0x10c] sm:$0xff]
  %v82 = vld [vmem:[%s1 + $0x114] sm:$0xff]
  %v83 = vld [vmem:[%s1 + $0x11c] sm:$0xff]
  %v84 = vld [vmem:[%s1 + $0x124] sm:$0xff]
  %v85 = vld [vmem:[%s1 + $0x12c] sm:$0xff]
  %v86 = vld [vmem:[%s1 + $0x134] sm:$0xf]
  %v87 = vld [vmem:[%s1 + $0x138] sm:$0xff]
  %v88 = vld [vmem:[%s1 + $0x140] sm:$0xff]
  %v89 = vld [vmem:[%s1 + $0x148] sm:$0xff]
  %v90 = vld [vmem:[%s1 + $0x150] sm:$0xff]
  %v91 = vld [vmem:[%s1 + $0x158] sm:$0xff]
  %v92 = vld [vmem:[%s1 + $0x160] sm:$0xff]
  %v93 = vld [vmem:[%s1 + $0x168] sm:$0xf]
  %v94 = vld [vmem:[%s1 + $0x16c] sm:$0xff]
  %v95 = vld [vmem:[%s1 + $0x174] sm:$0xff]
  %v96 = vld [vmem:[%s1 + $0x17c] sm:$0xff]
  %v97 = vld [vmem:[%s1 + $0x184] sm:$0xff]
  %v98 = vld [vmem:[%s1 + $0x18c] sm:$0xff]
  %v99 = vld [vmem:[%s1 + $0x194] sm:$0xff]
  %v100 = vld [vmem:[%s1 + $0x19c] sm:$0xf]
  %v101 = vld [vmem:[%s1 + $0x1a0] sm:$0xff]
  %v102 = vld [vmem:[%s1 + $0x1a8] sm:$0xff]
  %v103 = vld [vmem:[%s1 + $0x1b0] sm:$0xff]
  %v104 = vld [vmem:[%s1 + $0x1b8] sm:$0xff]
  %v105 = vld [vmem:[%s1 + $0x1c0] sm:$0xff]
  %v106 = vld [vmem:[%s1 + $0x1c8] sm:$0xff]
  %v107 = vld [vmem:[%s1 + $0x1d0] sm:$0xf]
  %v108 = vld [vmem:[%s1 + $0x1d4] sm:$0xff]
  %v109 = vld [vmem:[%s1 + $0x1dc] sm:$0xff]
  %v110 = vld [vmem:[%s1 + $0x1e4] sm:$0xff]
  %v111 = vld [vmem:[%s1 + $0x1ec] sm:$0xff]
  %v112 = vld [vmem:[%s1 + $0x1f4] sm:$0xff]
  %v113 = vld [vmem:[%s1 + $0x1fc] sm:$0xff]
  %v114 = vld [vmem:[%s1 + $0x204] sm:$0xf]
  %v115 = vld [vmem:[%s1 + $0x208] sm:$0xff]
  %v116 = vld [vmem:[%s1 + $0x210] sm:$0xff]
  %v117 = vld [vmem:[%s1 + $0x218] sm:$0xff]
  %v118 = vld [vmem:[%s1 + $0x220] sm:$0xff]
  %v119 = vld [vmem:[%s1 + $0x228] sm:$0xff]
  %v120 = vld [vmem:[%s1 + $0x230] sm:$0xff]
  %v121 = vld [vmem:[%s1 + $0x238] sm:$0xf]
  %v122 = vld [vmem:[%s1 + $0x23c] sm:$0xff]
  %v123 = vld [vmem:[%s1 + $0x244] sm:$0xff]
  %v124 = vld [vmem:[%s1 + $0x24c] sm:$0xff]
  %v125 = vld [vmem:[%s1 + $0x254] sm:$0xff]
  %v126 = vld [vmem:[%s1 + $0x25c] sm:$0xff]
  %v127 = vld [vmem:[%s1 + $0x264] sm:$0xff]
  %v128 = vld [vmem:[%s1 + $0x26c] sm:$0xf]
  %v129 = vld [vmem:[%s1 + $0x270] sm:$0xff]
  %v130 = vld [vmem:[%s1 + $0x278] sm:$0xff]
  %v131 = vld [vmem:[%s1 + $0x280] sm:$0xff]
  %v132 = vld [vmem:[%s1 + $0x288] sm:$0xff]
  %v133 = vld [vmem:[%s1 + $0x290] sm:$0xff]
  %v134 = vld [vmem:[%s1 + $0x298] sm:$0xff]
  %v135 = vld [vmem:[%s1 + $0x2a0] sm:$0xf]
  %v136 = vld [vmem:[%s1 + $0x2a4] sm:$0xff]
  %v137 = vld [vmem:[%s1 + $0x2ac] sm:$0xff]
  %v138 = vld [vmem:[%s1 + $0x2b4] sm:$0xff]
  %v139 = vld [vmem:[%s1 + $0x2bc] sm:$0xff]
  %v140 = vld [vmem:[%s1 + $0x2c4] sm:$0xff]
  %v141 = vld [vmem:[%s1 + $0x2cc] sm:$0xff]
  %v142 = vld [vmem:[%s1 + $0x2d4] sm:$0xf]
  %v143 = vld [vmem:[%s1 + $0x2d8] sm:$0xff]
  %v144 = vld [vmem:[%s1 + $0x2e0] sm:$0xff]
  %v145 = vld [vmem:[%s1 + $0x2e8] sm:$0xff]
  %v146 = vld [vmem:[%s1 + $0x2f0] sm:$0xff]
  %v147 = vld [vmem:[%s1 + $0x2f8] sm:$0xff]
  %v148 = vld [vmem:[%s1 + $0x300] sm:$0xff]
  %v149 = vld [vmem:[%s1 + $0x308] sm:$0xf]
  %v150 = vld [vmem:[%s1 + $0x30c] sm:$0xff]
  %v151 = vld [vmem:[%s1 + $0x314] sm:$0xff]
  %v152 = vld [vmem:[%s1 + $0x31c] sm:$0xff]
  %v153 = vld [vmem:[%s1 + $0x324] sm:$0xff]
  %v154 = vld [vmem:[%s1 + $0x32c] sm:$0xff]
  %v155 = vld [vmem:[%s1 + $0x334] sm:$0xff]
  %v156 = vld [vmem:[%s1 + $0x33c] sm:$0xf]
  %v157 = vld [vmem:[%s1 + $0x340] sm:$0xff]
  %v158 = vld [vmem:[%s1 + $0x348] sm:$0xff]
  %v159 = vld [vmem:[%s1 + $0x350] sm:$0xff]
  %v160 = vld [vmem:[%s1 + $0x358] sm:$0xff]
  %v161 = vld [vmem:[%s1 + $0x360] sm:$0xff]
  %v162 = vld [vmem:[%s1 + $0x368] sm:$0xff]
  %v163 = vld [vmem:[%s1 + $0x370] sm:$0xf]
  %v164 = vld [vmem:[%s1 + $0x374] sm:$0xff]
  %v165 = vld [vmem:[%s1 + $0x37c] sm:$0xff]
  %v166 = vld [vmem:[%s1 + $0x384] sm:$0xff]
  %v167 = vld [vmem:[%s1 + $0x38c] sm:$0xff]
  %v168 = vld [vmem:[%s1 + $0x394] sm:$0xff]
  %v169 = vld [vmem:[%s1 + $0x39c] sm:$0xff]
  %v170 = vld [vmem:[%s1 + $0x3a4] sm:$0xf]
  %v171 = vld [vmem:[%s1 + $0x3a8] sm:$0xff]
  %v172 = vld [vmem:[%s1 + $0x3b0] sm:$0xff]
  %v173 = vld [vmem:[%s1 + $0x3b8] sm:$0xff]
  %v174 = vld [vmem:[%s1 + $0x3c0] sm:$0xff]
  %v175 = vld [vmem:[%s1 + $0x3c8] sm:$0xff]
  %v176 = vld [vmem:[%s1 + $0x3d0] sm:$0xff]
  %v177 = vld [vmem:[%s1 + $0x3d8] sm:$0xf]
  %v178 = vld [vmem:[%s1 + $0x3dc] sm:$0xff]
  %v179 = vld [vmem:[%s1 + $0x3e4] sm:$0xff]
  %v180 = vld [vmem:[%s1 + $0x3ec] sm:$0xff]
  %v181 = vld [vmem:[%s1 + $0x3f4] sm:$0xff]
  %v182 = vld [vmem:[%s1 + $0x3fc] sm:$0xff]
  %v183 = vld [vmem:[%s1 + $0x404] sm:$0xff]
  %v184 = vld [vmem:[%s1 + $0x40c] sm:$0xf]
  %v185 = vld [vmem:[%s1 + $0x410] sm:$0xff]
  %v186 = vld [vmem:[%s1 + $0x418] sm:$0xff]
  %v187 = vld [vmem:[%s1 + $0x420] sm:$0xff]
  %v188 = vld [vmem:[%s1 + $0x428] sm:$0xff]
  %v189 = vld [vmem:[%s1 + $0x430] sm:$0xff]
  %v190 = vld [vmem:[%s1 + $0x438] sm:$0xff]
  %v191 = vld [vmem:[%s1 + $0x440] sm:$0xf]
  %v192 = vld [vmem:[%s1 + $0x444] sm:$0xff]
  %v193 = vld [vmem:[%s1 + $0x44c] sm:$0xff]
  %v194 = vld [vmem:[%s1 + $0x454] sm:$0xff]
  %v195 = vld [vmem:[%s1 + $0x45c] sm:$0xff]
  %v196 = vld [vmem:[%s1 + $0x464] sm:$0xff]
  %v197 = vld [vmem:[%s1 + $0x46c] sm:$0xff]
  %v198 = vld [vmem:[%s1 + $0x474] sm:$0xf]
  %v199 = vld [vmem:[%s1 + $0x478] sm:$0xff]
  %v200 = vld [vmem:[%s1 + $0x480] sm:$0xff]
  %v201 = vld [vmem:[%s1 + $0x488] sm:$0xff]
  %v202 = vld [vmem:[%s1 + $0x490] sm:$0xff]
  %v203 = vld [vmem:[%s1 + $0x498] sm:$0xff]
  %v204 = vld [vmem:[%s1 + $0x4a0] sm:$0xff]
  %v205 = vld [vmem:[%s1 + $0x4a8] sm:$0xf]
  %v206 = vld [vmem:[%s1 + $0x4ac] sm:$0xff]
  %v207 = vld [vmem:[%s1 + $0x4b4] sm:$0xff]
  %v208 = vld [vmem:[%s1 + $0x4bc] sm:$0xff]
  %v209 = vld [vmem:[%s1 + $0x4c4] sm:$0xff]
  %v210 = vld [vmem:[%s1 + $0x4cc] sm:$0xff]
  %v211 = vld [vmem:[%s1 + $0x4d4] sm:$0xff]
  %v212 = vld [vmem:[%s1 + $0x4dc] sm:$0xf]
  %v213 = vld [vmem:[%s1 + $0x4e0] sm:$0xff]
  %v214 = vld [vmem:[%s1 + $0x4e8] sm:$0xff]
  %v215 = vld [vmem:[%s1 + $0x4f0] sm:$0xff]
  %v216 = vld [vmem:[%s1 + $0x4f8] sm:$0xff]
  %v217 = vld [vmem:[%s1 + $0x500] sm:$0xff]
  %v218 = vld [vmem:[%s1 + $0x508] sm:$0xff]
  %v219 = vld [vmem:[%s1 + $0x510] sm:$0xf]
  %v220 = vld [vmem:[%s1 + $0x514] sm:$0xff]
  %v221 = vld [vmem:[%s1 + $0x51c] sm:$0xff]
  %v222 = vld [vmem:[%s1 + $0x524] sm:$0xff]
  %v223 = vld [vmem:[%s1 + $0x52c] sm:$0xff]
  %v224 = vld [vmem:[%s1 + $0x534] sm:$0xff]
  %v225 = vld [vmem:[%s1 + $0x53c] sm:$0xff]
  %v226 = vld [vmem:[%s1 + $0x544] sm:$0xf]
  %v227 = vld [vmem:[%s1 + $0x548] sm:$0xff]
  %v228 = vld [vmem:[%s1 + $0x550] sm:$0xff]
  %v229 = vld [vmem:[%s1 + $0x558] sm:$0xff]
  %v230 = vld [vmem:[%s1 + $0x560] sm:$0xff]
  %v231 = vld [vmem:[%s1 + $0x568] sm:$0xff]
  %v232 = vld [vmem:[%s1 + $0x570] sm:$0xff]
  %v233 = vld [vmem:[%s1 + $0x578] sm:$0xf]
  %v234 = vld [vmem:[%s1 + $0x57c] sm:$0xff]
  %v235 = vld [vmem:[%s1 + $0x584] sm:$0xff]
  %v236 = vld [vmem:[%s1 + $0x58c] sm:$0xff]
  %v237 = vld [vmem:[%s1 + $0x594] sm:$0xff]
  %v238 = vld [vmem:[%s1 + $0x59c] sm:$0xff]
  %v239 = vld [vmem:[%s1 + $0x5a4] sm:$0xff]
  %v240 = vld [vmem:[%s1 + $0x5ac] sm:$0xf]
  %v241 = vld [vmem:[%s1 + $0x5b0] sm:$0xff]
  %v242 = vld [vmem:[%s1 + $0x5b8] sm:$0xff]
  %v243 = vld [vmem:[%s1 + $0x5c0] sm:$0xff]
  %v244 = vld [vmem:[%s1 + $0x5c8] sm:$0xff]
  %v245 = vld [vmem:[%s1 + $0x5d0] sm:$0xff]
  %v246 = vld [vmem:[%s1 + $0x5d8] sm:$0xff]
  %v247 = vld [vmem:[%s1 + $0x5e0] sm:$0xf]
  %v248 = vld [vmem:[%s1 + $0x5e4] sm:$0xff]
  %v249 = vld [vmem:[%s1 + $0x5ec] sm:$0xff]
  %v250 = vld [vmem:[%s1 + $0x5f4] sm:$0xff]
  %v251 = vld [vmem:[%s1 + $0x5fc] sm:$0xff]
  %v252 = vld [vmem:[%s1 + $0x604] sm:$0xff]
  %v253 = vld [vmem:[%s1 + $0x60c] sm:$0xff]
  %v254 = vld [vmem:[%s1 + $0x614] sm:$0xf]
  %v255 = vld [vmem:[%s1 + $0x618] sm:$0xff]
  %v256 = vld [vmem:[%s1 + $0x620] sm:$0xff]
  %v257 = vld [vmem:[%s1 + $0x628] sm:$0xff]
  %v258 = vld [vmem:[%s1 + $0x630] sm:$0xff]
  %v259 = vld [vmem:[%s1 + $0x638] sm:$0xff]
  %v260 = vld [vmem:[%s1 + $0x640] sm:$0xff]
  %v261 = vld [vmem:[%s1 + $0x648] sm:$0xf]
  %v262 = vld [vmem:[%s1 + $0x64c] sm:$0xff]
  %v263 = vld [vmem:[%s1 + $0x654] sm:$0xff]
  %v264 = vld [vmem:[%s1 + $0x65c] sm:$0xff]
  %v265 = vld [vmem:[%s1 + $0x664] sm:$0xff]
  %v266 = vld [vmem:[%s1 + $0x66c] sm:$0xff]
  %v267 = vld [vmem:[%s1 + $0x674] sm:$0xff]
  %v268 = vld [vmem:[%s1 + $0x67c] sm:$0xf]
  %v269 = vld [vmem:[%s1 + $0x680] sm:$0xff]
  %v270 = vld [vmem:[%s1 + $0x688] sm:$0xff]
  %v271 = vld [vmem:[%s1 + $0x690] sm:$0xff]
  %v272 = vld [vmem:[%s1 + $0x698] sm:$0xff]
  %v273 = vld [vmem:[%s1 + $0x6a0] sm:$0xff]
  %v274 = vld [vmem:[%s1 + $0x6a8] sm:$0xff]
  %v275 = vld [vmem:[%s1 + $0x6b0] sm:$0xf]
  %v276 = vld [vmem:[%s1 + $0x6b4] sm:$0xff]
  %v277 = vld [vmem:[%s1 + $0x6bc] sm:$0xff]
  %v278 = vld [vmem:[%s1 + $0x6c4] sm:$0xff]
  %v279 = vld [vmem:[%s1 + $0x6cc] sm:$0xff]
  %v280 = vld [vmem:[%s1 + $0x6d4] sm:$0xff]
  %v281 = vld [vmem:[%s1 + $0x6dc] sm:$0xff]
  %v282 = vld [vmem:[%s1 + $0x6e4] sm:$0xf]
  %v283 = vld [vmem:[%s1 + $0x6e8] sm:$0xff]
  %v284 = vld [vmem:[%s1 + $0x6f0] sm:$0xff]
  %v285 = vld [vmem:[%s1 + $0x6f8] sm:$0xff]
  %v286 = vld [vmem:[%s1 + $0x700] sm:$0xff]
  %v287 = vld [vmem:[%s1 + $0x708] sm:$0xff]
  %v288 = vld [vmem:[%s1 + $0x710] sm:$0xff]
  %v289 = vld [vmem:[%s1 + $0x718] sm:$0xf]
  %v290 = vld [vmem:[%s1 + $0x71c] sm:$0xff]
  %v291 = vld [vmem:[%s1 + $0x724] sm:$0xff]
  %v292 = vld [vmem:[%s1 + $0x72c] sm:$0xff]
  %v293 = vld [vmem:[%s1 + $0x734] sm:$0xff]
  %v294 = vld [vmem:[%s1 + $0x73c] sm:$0xff]
  %v295 = vld [vmem:[%s1 + $0x744] sm:$0xff]
  %v296 = vld [vmem:[%s1 + $0x74c] sm:$0xf]
  %v297 = vld [vmem:[%s2] sm:$0xff]
  %v298 = vld [vmem:[%s2 + $0x8] sm:$0x1f]
  %v301 = vlaneseq
  %v302 = vshrl.u32 %v301, 7
  %v303 = vsub.s32 0, %v302
  %v304 = vrot.slane %v297, %v303
  %v305 = vlaneseq
  %v306 = vshrl.u32 %v305, 7
  %v307 = vsub.s32 1, %v306
  %v308 = vrot.slane %v297, %v307
  %v309 = vlaneseq
  %v310 = vshrl.u32 %v309, 7
  %v311 = vsub.s32 2, %v310
  %v312 = vrot.slane %v297, %v311
  %v313 = vlaneseq
  %v314 = vshrl.u32 %v313, 7
  %v315 = vsub.s32 3, %v314
  %v316 = vrot.slane %v297, %v315
  %v317 = vlaneseq
  %v318 = vshrl.u32 %v317, 7
  %v319 = vsub.s32 4, %v318
  %v320 = vrot.slane %v297, %v319
  %v321 = vlaneseq
  %v322 = vshrl.u32 %v321, 7
  %v323 = vsub.s32 5, %v322
  %v324 = vrot.slane %v297, %v323
  %v325 = vlaneseq
  %v326 = vshrl.u32 %v325, 7
  %v327 = vsub.s32 6, %v326
  %v328 = vrot.slane %v297, %v327
  %v329 = vlaneseq
  %v330 = vshrl.u32 %v329, 7
  %v331 = vsub.s32 7, %v330
  %v332 = vrot.slane %v297, %v331
  %v333 = vlaneseq
  %v334 = vshrl.u32 %v333, 7
  %v335 = vsub.s32 0, %v334
  %v336 = vrot.slane %v298, %v335
  %v337 = vlaneseq
  %v338 = vshrl.u32 %v337, 7
  %v339 = vsub.s32 1, %v338
  %v340 = vrot.slane %v298, %v339
  %v341 = vlaneseq
  %v342 = vshrl.u32 %v341, 7
  %v343 = vsub.s32 2, %v342
  %v344 = vrot.slane %v298, %v343
  %v345 = vlaneseq
  %v346 = vshrl.u32 %v345, 7
  %v347 = vsub.s32 3, %v346
  %v348 = vrot.slane %v298, %v347
  %v349 = vlaneseq
  %v350 = vshrl.u32 %v349, 7
  %v351 = vsub.s32 4, %v350
  %v352 = vrot.slane %v298, %v351
  %v618 = vunpack.c.l.b16 %v45
  %v619 = vunpack.c.h.b16 %v45
  %v620 = vunpack.c.l.b16 %v46
  %v621 = vunpack.c.h.b16 %v46
  %v622 = vunpack.c.l.b16 %v47
  %v623 = vunpack.c.h.b16 %v47
  %v624 = vunpack.c.l.b16 %v48
  %v625 = vunpack.c.h.b16 %v48
  %v626 = vunpack.c.l.b16 %v49
  %v627 = vunpack.c.h.b16 %v49
  %v628 = vunpack.c.l.b16 %v50
  %v629 = vunpack.c.h.b16 %v50
  %v630 = vunpack.c.l.b16 %v51
  %v631 = vunpack.c.l.b16 %v52
  %v632 = vunpack.c.h.b16 %v52
  %v633 = vunpack.c.l.b16 %v53
  %v634 = vunpack.c.h.b16 %v53
  %v635 = vunpack.c.l.b16 %v54
  %v636 = vunpack.c.h.b16 %v54
  %v637 = vunpack.c.l.b16 %v55
  %v638 = vunpack.c.h.b16 %v55
  %v639 = vunpack.c.l.b16 %v56
  %v640 = vunpack.c.h.b16 %v56
  %v641 = vunpack.c.l.b16 %v57
  %v642 = vunpack.c.h.b16 %v57
  %v643 = vunpack.c.l.b16 %v58
  %v644 = vunpack.c.l.b16 %v59
  %v645 = vunpack.c.h.b16 %v59
  %v646 = vunpack.c.l.b16 %v60
  %v647 = vunpack.c.h.b16 %v60
  %v648 = vunpack.c.l.b16 %v61
  %v649 = vunpack.c.h.b16 %v61
  %v650 = vunpack.c.l.b16 %v62
  %v651 = vunpack.c.h.b16 %v62
  %v652 = vunpack.c.l.b16 %v63
  %v653 = vunpack.c.h.b16 %v63
  %v654 = vunpack.c.l.b16 %v64
  %v655 = vunpack.c.h.b16 %v64
  %v656 = vunpack.c.l.b16 %v65
  %v657 = vunpack.c.l.b16 %v66
  %v658 = vunpack.c.h.b16 %v66
  %v659 = vunpack.c.l.b16 %v67
  %v660 = vunpack.c.h.b16 %v67
  %v661 = vunpack.c.l.b16 %v68
  %v662 = vunpack.c.h.b16 %v68
  %v663 = vunpack.c.l.b16 %v69
  %v664 = vunpack.c.h.b16 %v69
  %v665 = vunpack.c.l.b16 %v70
  %v666 = vunpack.c.h.b16 %v70
  %v667 = vunpack.c.l.b16 %v71
  %v668 = vunpack.c.h.b16 %v71
  %v669 = vunpack.c.l.b16 %v72
  %v670 = vunpack.c.l.b16 %v73
  %v671 = vunpack.c.h.b16 %v73
  %v672 = vunpack.c.l.b16 %v74
  %v673 = vunpack.c.h.b16 %v74
  %v674 = vunpack.c.l.b16 %v75
  %v675 = vunpack.c.h.b16 %v75
  %v676 = vunpack.c.l.b16 %v76
  %v677 = vunpack.c.h.b16 %v76
  %v678 = vunpack.c.l.b16 %v77
  %v679 = vunpack.c.h.b16 %v77
  %v680 = vunpack.c.l.b16 %v78
  %v681 = vunpack.c.h.b16 %v78
  %v682 = vunpack.c.l.b16 %v79
  %v683 = vunpack.c.l.b16 %v80
  %v684 = vunpack.c.h.b16 %v80
  %v685 = vunpack.c.l.b16 %v81
  %v686 = vunpack.c.h.b16 %v81
  %v687 = vunpack.c.l.b16 %v82
  %v688 = vunpack.c.h.b16 %v82
  %v689 = vunpack.c.l.b16 %v83
  %v690 = vunpack.c.h.b16 %v83
  %v691 = vunpack.c.l.b16 %v84
  %v692 = vunpack.c.h.b16 %v84
  %v693 = vunpack.c.l.b16 %v85
  %v694 = vunpack.c.h.b16 %v85
  %v695 = vunpack.c.l.b16 %v86
  %v696 = vunpack.c.l.b16 %v87
  %v697 = vunpack.c.h.b16 %v87
  %v698 = vunpack.c.l.b16 %v88
  %v699 = vunpack.c.h.b16 %v88
  %v700 = vunpack.c.l.b16 %v89
  %v701 = vunpack.c.h.b16 %v89
  %v702 = vunpack.c.l.b16 %v90
  %v703 = vunpack.c.h.b16 %v90
  %v704 = vunpack.c.l.b16 %v91
  %v705 = vunpack.c.h.b16 %v91
  %v706 = vunpack.c.l.b16 %v92
  %v707 = vunpack.c.h.b16 %v92
  %v708 = vunpack.c.l.b16 %v93
  %v709 = vunpack.c.l.b16 %v94
  %v710 = vunpack.c.h.b16 %v94
  %v711 = vunpack.c.l.b16 %v95
  %v712 = vunpack.c.h.b16 %v95
  %v713 = vunpack.c.l.b16 %v96
  %v714 = vunpack.c.h.b16 %v96
  %v715 = vunpack.c.l.b16 %v97
  %v716 = vunpack.c.h.b16 %v97
  %v717 = vunpack.c.l.b16 %v98
  %v718 = vunpack.c.h.b16 %v98
  %v719 = vunpack.c.l.b16 %v99
  %v720 = vunpack.c.h.b16 %v99
  %v721 = vunpack.c.l.b16 %v100
  %v722 = vunpack.c.l.b16 %v101
  %v723 = vunpack.c.h.b16 %v101
  %v724 = vunpack.c.l.b16 %v102
  %v725 = vunpack.c.h.b16 %v102
  %v726 = vunpack.c.l.b16 %v103
  %v727 = vunpack.c.h.b16 %v103
  %v728 = vunpack.c.l.b16 %v104
  %v729 = vunpack.c.h.b16 %v104
  %v730 = vunpack.c.l.b16 %v105
  %v731 = vunpack.c.h.b16 %v105
  %v732 = vunpack.c.l.b16 %v106
  %v733 = vunpack.c.h.b16 %v106
  %v734 = vunpack.c.l.b16 %v107
  %v735 = vunpack.c.l.b16 %v108
  %v736 = vunpack.c.h.b16 %v108
  %v737 = vunpack.c.l.b16 %v109
  %v738 = vunpack.c.h.b16 %v109
  %v739 = vunpack.c.l.b16 %v110
  %v740 = vunpack.c.h.b16 %v110
  %v741 = vunpack.c.l.b16 %v111
  %v742 = vunpack.c.h.b16 %v111
  %v743 = vunpack.c.l.b16 %v112
  %v744 = vunpack.c.h.b16 %v112
  %v745 = vunpack.c.l.b16 %v113
  %v746 = vunpack.c.h.b16 %v113
  %v747 = vunpack.c.l.b16 %v114
  %v748 = vunpack.c.l.b16 %v115
  %v749 = vunpack.c.h.b16 %v115
  %v750 = vunpack.c.l.b16 %v116
  %v751 = vunpack.c.h.b16 %v116
  %v752 = vunpack.c.l.b16 %v117
  %v753 = vunpack.c.h.b16 %v117
  %v754 = vunpack.c.l.b16 %v118
  %v755 = vunpack.c.h.b16 %v118
  %v756 = vunpack.c.l.b16 %v119
  %v757 = vunpack.c.h.b16 %v119
  %v758 = vunpack.c.l.b16 %v120
  %v759 = vunpack.c.h.b16 %v120
  %v760 = vunpack.c.l.b16 %v121
  %v761 = vunpack.c.l.b16 %v122
  %v762 = vunpack.c.h.b16 %v122
  %v763 = vunpack.c.l.b16 %v123
  %v764 = vunpack.c.h.b16 %v123
  %v765 = vunpack.c.l.b16 %v124
  %v766 = vunpack.c.h.b16 %v124
  %v767 = vunpack.c.l.b16 %v125
  %v768 = vunpack.c.h.b16 %v125
  %v769 = vunpack.c.l.b16 %v126
  %v770 = vunpack.c.h.b16 %v126
  %v771 = vunpack.c.l.b16 %v127
  %v772 = vunpack.c.h.b16 %v127
  %v773 = vunpack.c.l.b16 %v128
  %v774 = vunpack.c.l.b16 %v129
  %v775 = vunpack.c.h.b16 %v129
  %v776 = vunpack.c.l.b16 %v130
  %v777 = vunpack.c.h.b16 %v130
  %v778 = vunpack.c.l.b16 %v131
  %v779 = vunpack.c.h.b16 %v131
  %v780 = vunpack.c.l.b16 %v132
  %v781 = vunpack.c.h.b16 %v132
  %v782 = vunpack.c.l.b16 %v133
  %v783 = vunpack.c.h.b16 %v133
  %v784 = vunpack.c.l.b16 %v134
  %v785 = vunpack.c.h.b16 %v134
  %v786 = vunpack.c.l.b16 %v135
  %v787 = vunpack.c.l.b16 %v136
  %v788 = vunpack.c.h.b16 %v136
  %v789 = vunpack.c.l.b16 %v137
  %v790 = vunpack.c.h.b16 %v137
  %v791 = vunpack.c.l.b16 %v138
  %v792 = vunpack.c.h.b16 %v138
  %v793 = vunpack.c.l.b16 %v139
  %v794 = vunpack.c.h.b16 %v139
  %v795 = vunpack.c.l.b16 %v140
  %v796 = vunpack.c.h.b16 %v140
  %v797 = vunpack.c.l.b16 %v141
  %v798 = vunpack.c.h.b16 %v141
  %v799 = vunpack.c.l.b16 %v142
  %v800 = vunpack.c.l.b16 %v143
  %v801 = vunpack.c.h.b16 %v143
  %v802 = vunpack.c.l.b16 %v144
  %v803 = vunpack.c.h.b16 %v144
  %v804 = vunpack.c.l.b16 %v145
  %v805 = vunpack.c.h.b16 %v145
  %v806 = vunpack.c.l.b16 %v146
  %v807 = vunpack.c.h.b16 %v146
  %v808 = vunpack.c.l.b16 %v147
  %v809 = vunpack.c.h.b16 %v147
  %v810 = vunpack.c.l.b16 %v148
  %v811 = vunpack.c.h.b16 %v148
  %v812 = vunpack.c.l.b16 %v149
  %v813 = vunpack.c.l.b16 %v150
  %v814 = vunpack.c.h.b16 %v150
  %v815 = vunpack.c.l.b16 %v151
  %v816 = vunpack.c.h.b16 %v151
  %v817 = vunpack.c.l.b16 %v152
  %v818 = vunpack.c.h.b16 %v152
  %v819 = vunpack.c.l.b16 %v153
  %v820 = vunpack.c.h.b16 %v153
  %v821 = vunpack.c.l.b16 %v154
  %v822 = vunpack.c.h.b16 %v154
  %v823 = vunpack.c.l.b16 %v155
  %v824 = vunpack.c.h.b16 %v155
  %v825 = vunpack.c.l.b16 %v156
  %v826 = vunpack.c.l.b16 %v157
  %v827 = vunpack.c.h.b16 %v157
  %v828 = vunpack.c.l.b16 %v158
  %v829 = vunpack.c.h.b16 %v158
  %v830 = vunpack.c.l.b16 %v159
  %v831 = vunpack.c.h.b16 %v159
  %v832 = vunpack.c.l.b16 %v160
  %v833 = vunpack.c.h.b16 %v160
  %v834 = vunpack.c.l.b16 %v161
  %v835 = vunpack.c.h.b16 %v161
  %v836 = vunpack.c.l.b16 %v162
  %v837 = vunpack.c.h.b16 %v162
  %v838 = vunpack.c.l.b16 %v163
  %v839 = vunpack.c.l.b16 %v164
  %v840 = vunpack.c.h.b16 %v164
  %v841 = vunpack.c.l.b16 %v165
  %v842 = vunpack.c.h.b16 %v165
  %v843 = vunpack.c.l.b16 %v166
  %v844 = vunpack.c.h.b16 %v166
  %v845 = vunpack.c.l.b16 %v167
  %v846 = vunpack.c.h.b16 %v167
  %v847 = vunpack.c.l.b16 %v168
  %v848 = vunpack.c.h.b16 %v168
  %v849 = vunpack.c.l.b16 %v169
  %v850 = vunpack.c.h.b16 %v169
  %v851 = vunpack.c.l.b16 %v170
  %v852 = vunpack.c.l.b16 %v171
  %v853 = vunpack.c.h.b16 %v171
  %v854 = vunpack.c.l.b16 %v172
  %v855 = vunpack.c.h.b16 %v172
  %v856 = vunpack.c.l.b16 %v173
  %v857 = vunpack.c.h.b16 %v173
  %v858 = vunpack.c.l.b16 %v174
  %v859 = vunpack.c.h.b16 %v174
  %v860 = vunpack.c.l.b16 %v175
  %v861 = vunpack.c.h.b16 %v175
  %v862 = vunpack.c.l.b16 %v176
  %v863 = vunpack.c.h.b16 %v176
  %v864 = vunpack.c.l.b16 %v177
  %v865 = vunpack.c.l.b16 %v178
  %v866 = vunpack.c.h.b16 %v178
  %v867 = vunpack.c.l.b16 %v179
  %v868 = vunpack.c.h.b16 %v179
  %v869 = vunpack.c.l.b16 %v180
  %v870 = vunpack.c.h.b16 %v180
  %v871 = vunpack.c.l.b16 %v181
  %v872 = vunpack.c.h.b16 %v181
  %v873 = vunpack.c.l.b16 %v182
  %v874 = vunpack.c.h.b16 %v182
  %v875 = vunpack.c.l.b16 %v183
  %v876 = vunpack.c.h.b16 %v183
  %v877 = vunpack.c.l.b16 %v184
  %v878 = vunpack.c.l.b16 %v185
  %v879 = vunpack.c.h.b16 %v185
  %v880 = vunpack.c.l.b16 %v186
  %v881 = vunpack.c.h.b16 %v186
  %v882 = vunpack.c.l.b16 %v187
  %v883 = vunpack.c.h.b16 %v187
  %v884 = vunpack.c.l.b16 %v188
  %v885 = vunpack.c.h.b16 %v188
  %v886 = vunpack.c.l.b16 %v189
  %v887 = vunpack.c.h.b16 %v189
  %v888 = vunpack.c.l.b16 %v190
  %v889 = vunpack.c.h.b16 %v190
  %v890 = vunpack.c.l.b16 %v191
  %v891 = vunpack.c.l.b16 %v192
  %v892 = vunpack.c.h.b16 %v192
  %v893 = vunpack.c.l.b16 %v193
  %v894 = vunpack.c.h.b16 %v193
  %v895 = vunpack.c.l.b16 %v194
  %v896 = vunpack.c.h.b16 %v194
  %v897 = vunpack.c.l.b16 %v195
  %v898 = vunpack.c.h.b16 %v195
  %v899 = vunpack.c.l.b16 %v196
  %v900 = vunpack.c.h.b16 %v196
  %v901 = vunpack.c.l.b16 %v197
  %v902 = vunpack.c.h.b16 %v197
  %v903 = vunpack.c.l.b16 %v198
  %v904 = vunpack.c.l.b16 %v199
  %v905 = vunpack.c.h.b16 %v199
  %v906 = vunpack.c.l.b16 %v200
  %v907 = vunpack.c.h.b16 %v200
  %v908 = vunpack.c.l.b16 %v201
  %v909 = vunpack.c.h.b16 %v201
  %v910 = vunpack.c.l.b16 %v202
  %v911 = vunpack.c.h.b16 %v202
  %v912 = vunpack.c.l.b16 %v203
  %v913 = vunpack.c.h.b16 %v203
  %v914 = vunpack.c.l.b16 %v204
  %v915 = vunpack.c.h.b16 %v204
  %v916 = vunpack.c.l.b16 %v205
  %v917 = vunpack.c.l.b16 %v206
  %v918 = vunpack.c.h.b16 %v206
  %v919 = vunpack.c.l.b16 %v207
  %v920 = vunpack.c.h.b16 %v207
  %v921 = vunpack.c.l.b16 %v208
  %v922 = vunpack.c.h.b16 %v208
  %v923 = vunpack.c.l.b16 %v209
  %v924 = vunpack.c.h.b16 %v209
  %v925 = vunpack.c.l.b16 %v210
  %v926 = vunpack.c.h.b16 %v210
  %v927 = vunpack.c.l.b16 %v211
  %v928 = vunpack.c.h.b16 %v211
  %v929 = vunpack.c.l.b16 %v212
  %v930 = vunpack.c.l.b16 %v213
  %v931 = vunpack.c.h.b16 %v213
  %v932 = vunpack.c.l.b16 %v214
  %v933 = vunpack.c.h.b16 %v214
  %v934 = vunpack.c.l.b16 %v215
  %v935 = vunpack.c.h.b16 %v215
  %v936 = vunpack.c.l.b16 %v216
  %v937 = vunpack.c.h.b16 %v216
  %v938 = vunpack.c.l.b16 %v217
  %v939 = vunpack.c.h.b16 %v217
  %v940 = vunpack.c.l.b16 %v218
  %v941 = vunpack.c.h.b16 %v218
  %v942 = vunpack.c.l.b16 %v219
  %v943 = vunpack.c.l.b16 %v220
  %v944 = vunpack.c.h.b16 %v220
  %v945 = vunpack.c.l.b16 %v221
  %v946 = vunpack.c.h.b16 %v221
  %v947 = vunpack.c.l.b16 %v222
  %v948 = vunpack.c.h.b16 %v222
  %v949 = vunpack.c.l.b16 %v223
  %v950 = vunpack.c.h.b16 %v223
  %v951 = vunpack.c.l.b16 %v224
  %v952 = vunpack.c.h.b16 %v224
  %v953 = vunpack.c.l.b16 %v225
  %v954 = vunpack.c.h.b16 %v225
  %v955 = vunpack.c.l.b16 %v226
  %v956 = vunpack.c.l.b16 %v227
  %v957 = vunpack.c.h.b16 %v227
  %v958 = vunpack.c.l.b16 %v228
  %v959 = vunpack.c.h.b16 %v228
  %v960 = vunpack.c.l.b16 %v229
  %v961 = vunpack.c.h.b16 %v229
  %v962 = vunpack.c.l.b16 %v230
  %v963 = vunpack.c.h.b16 %v230
  %v964 = vunpack.c.l.b16 %v231
  %v965 = vunpack.c.h.b16 %v231
  %v966 = vunpack.c.l.b16 %v232
  %v967 = vunpack.c.h.b16 %v232
  %v968 = vunpack.c.l.b16 %v233
  %v969 = vunpack.c.l.b16 %v234
  %v970 = vunpack.c.h.b16 %v234
  %v971 = vunpack.c.l.b16 %v235
  %v972 = vunpack.c.h.b16 %v235
  %v973 = vunpack.c.l.b16 %v236
  %v974 = vunpack.c.h.b16 %v236
  %v975 = vunpack.c.l.b16 %v237
  %v976 = vunpack.c.h.b16 %v237
  %v977 = vunpack.c.l.b16 %v238
  %v978 = vunpack.c.h.b16 %v238
  %v979 = vunpack.c.l.b16 %v239
  %v980 = vunpack.c.h.b16 %v239
  %v981 = vunpack.c.l.b16 %v240
  %v982 = vunpack.c.l.b16 %v241
  %v983 = vunpack.c.h.b16 %v241
  %v984 = vunpack.c.l.b16 %v242
  %v985 = vunpack.c.h.b16 %v242
  %v986 = vunpack.c.l.b16 %v243
  %v987 = vunpack.c.h.b16 %v243
  %v988 = vunpack.c.l.b16 %v244
  %v989 = vunpack.c.h.b16 %v244
  %v990 = vunpack.c.l.b16 %v245
  %v991 = vunpack.c.h.b16 %v245
  %v992 = vunpack.c.l.b16 %v246
  %v993 = vunpack.c.h.b16 %v246
  %v994 = vunpack.c.l.b16 %v247
  %v995 = vunpack.c.l.b16 %v248
  %v996 = vunpack.c.h.b16 %v248
  %v997 = vunpack.c.l.b16 %v249
  %v998 = vunpack.c.h.b16 %v249
  %v999 = vunpack.c.l.b16 %v250
  %v1000 = vunpack.c.h.b16 %v250
  %v1001 = vunpack.c.l.b16 %v251
  %v1002 = vunpack.c.h.b16 %v251
  %v1003 = vunpack.c.l.b16 %v252
  %v1004 = vunpack.c.h.b16 %v252
  %v1005 = vunpack.c.l.b16 %v253
  %v1006 = vunpack.c.h.b16 %v253
  %v1007 = vunpack.c.l.b16 %v254
  %v1008 = vunpack.c.l.b16 %v255
  %v1009 = vunpack.c.h.b16 %v255
  %v1010 = vunpack.c.l.b16 %v256
  %v1011 = vunpack.c.h.b16 %v256
  %v1012 = vunpack.c.l.b16 %v257
  %v1013 = vunpack.c.h.b16 %v257
  %v1014 = vunpack.c.l.b16 %v258
  %v1015 = vunpack.c.h.b16 %v258
  %v1016 = vunpack.c.l.b16 %v259
  %v1017 = vunpack.c.h.b16 %v259
  %v1018 = vunpack.c.l.b16 %v260
  %v1019 = vunpack.c.h.b16 %v260
  %v1020 = vunpack.c.l.b16 %v261
  %v1021 = vunpack.c.l.b16 %v262
  %v1022 = vunpack.c.h.b16 %v262
  %v1023 = vunpack.c.l.b16 %v263
  %v1024 = vunpack.c.h.b16 %v263
  %v1025 = vunpack.c.l.b16 %v264
  %v1026 = vunpack.c.h.b16 %v264
  %v1027 = vunpack.c.l.b16 %v265
  %v1028 = vunpack.c.h.b16 %v265
  %v1029 = vunpack.c.l.b16 %v266
  %v1030 = vunpack.c.h.b16 %v266
  %v1031 = vunpack.c.l.b16 %v267
  %v1032 = vunpack.c.h.b16 %v267
  %v1033 = vunpack.c.l.b16 %v268
  %v1034 = vunpack.c.l.b16 %v269
  %v1035 = vunpack.c.h.b16 %v269
  %v1036 = vunpack.c.l.b16 %v270
  %v1037 = vunpack.c.h.b16 %v270
  %v1038 = vunpack.c.l.b16 %v271
  %v1039 = vunpack.c.h.b16 %v271
  %v1040 = vunpack.c.l.b16 %v272
  %v1041 = vunpack.c.h.b16 %v272
  %v1042 = vunpack.c.l.b16 %v273
  %v1043 = vunpack.c.h.b16 %v273
  %v1044 = vunpack.c.l.b16 %v274
  %v1045 = vunpack.c.h.b16 %v274
  %v1046 = vunpack.c.l.b16 %v275
  %v1047 = vunpack.c.l.b16 %v276
  %v1048 = vunpack.c.h.b16 %v276
  %v1049 = vunpack.c.l.b16 %v277
  %v1050 = vunpack.c.h.b16 %v277
  %v1051 = vunpack.c.l.b16 %v278
  %v1052 = vunpack.c.h.b16 %v278
  %v1053 = vunpack.c.l.b16 %v279
  %v1054 = vunpack.c.h.b16 %v279
  %v1055 = vunpack.c.l.b16 %v280
  %v1056 = vunpack.c.h.b16 %v280
  %v1057 = vunpack.c.l.b16 %v281
  %v1058 = vunpack.c.h.b16 %v281
  %v1059 = vunpack.c.l.b16 %v282
  %v1060 = vunpack.c.l.b16 %v283
  %v1061 = vunpack.c.h.b16 %v283
  %v1062 = vunpack.c.l.b16 %v284
  %v1063 = vunpack.c.h.b16 %v284
  %v1064 = vunpack.c.l.b16 %v285
  %v1065 = vunpack.c.h.b16 %v285
  %v1066 = vunpack.c.l.b16 %v286
  %v1067 = vunpack.c.h.b16 %v286
  %v1068 = vunpack.c.l.b16 %v287
  %v1069 = vunpack.c.h.b16 %v287
  %v1070 = vunpack.c.l.b16 %v288
  %v1071 = vunpack.c.h.b16 %v288
  %v1072 = vunpack.c.l.b16 %v289
  %v1073 = vunpack.c.l.b16 %v290
  %v1074 = vunpack.c.h.b16 %v290
  %v1075 = vunpack.c.l.b16 %v291
  %v1076 = vunpack.c.h.b16 %v291
  %v1077 = vunpack.c.l.b16 %v292
  %v1078 = vunpack.c.h.b16 %v292
  %v1079 = vunpack.c.l.b16 %v293
  %v1080 = vunpack.c.h.b16 %v293
  %v1081 = vunpack.c.l.b16 %v294
  %v1082 = vunpack.c.h.b16 %v294
  %v1083 = vunpack.c.l.b16 %v295
  %v1084 = vunpack.c.h.b16 %v295
  %v1085 = vunpack.c.l.b16 %v296
  %v1086 = vpack.c.b16 %v631, %v618
  %v1087 = vpack.c.b16 %v632, %v619
  %v1088 = vpack.c.b16 %v633, %v620
  %v1089 = vpack.c.b16 %v634, %v621
  %v1090 = vpack.c.b16 %v635, %v622
  %v1091 = vpack.c.b16 %v636, %v623
  %v1092 = vpack.c.b16 %v637, %v624
  %v1093 = vpack.c.b16 %v638, %v625
  %v1094 = vpack.c.b16 %v639, %v626
  %v1095 = vpack.c.b16 %v640, %v627
  %v1096 = vpack.c.b16 %v641, %v628
  %v1097 = vpack.c.b16 %v642, %v629
  %v1098 = vpack.c.b16 %v643, %v630
  %v1099 = vpack.c.b16 %v657, %v644
  %v1100 = vpack.c.b16 %v658, %v645
  %v1101 = vpack.c.b16 %v659, %v646
  %v1102 = vpack.c.b16 %v660, %v647
  %v1103 = vpack.c.b16 %v661, %v648
  %v1104 = vpack.c.b16 %v662, %v649
  %v1105 = vpack.c.b16 %v663, %v650
  %v1106 = vpack.c.b16 %v664, %v651
  %v1107 = vpack.c.b16 %v665, %v652
  %v1108 = vpack.c.b16 %v666, %v653
  %v1109 = vpack.c.b16 %v667, %v654
  %v1110 = vpack.c.b16 %v668, %v655
  %v1111 = vpack.c.b16 %v669, %v656
  %v1112 = vpack.c.b16 %v683, %v670
  %v1113 = vpack.c.b16 %v684, %v671
  %v1114 = vpack.c.b16 %v685, %v672
  %v1115 = vpack.c.b16 %v686, %v673
  %v1116 = vpack.c.b16 %v687, %v674
  %v1117 = vpack.c.b16 %v688, %v675
  %v1118 = vpack.c.b16 %v689, %v676
  %v1119 = vpack.c.b16 %v690, %v677
  %v1120 = vpack.c.b16 %v691, %v678
  %v1121 = vpack.c.b16 %v692, %v679
  %v1122 = vpack.c.b16 %v693, %v680
  %v1123 = vpack.c.b16 %v694, %v681
  %v1124 = vpack.c.b16 %v695, %v682
  %v1125 = vpack.c.b16 %v709, %v696
  %v1126 = vpack.c.b16 %v710, %v697
  %v1127 = vpack.c.b16 %v711, %v698
  %v1128 = vpack.c.b16 %v712, %v699
  %v1129 = vpack.c.b16 %v713, %v700
  %v1130 = vpack.c.b16 %v714, %v701
  %v1131 = vpack.c.b16 %v715, %v702
  %v1132 = vpack.c.b16 %v716, %v703
  %v1133 = vpack.c.b16 %v717, %v704
  %v1134 = vpack.c.b16 %v718, %v705
  %v1135 = vpack.c.b16 %v719, %v706
  %v1136 = vpack.c.b16 %v720, %v707
  %v1137 = vpack.c.b16 %v721, %v708
  %v1138 = vpack.c.b16 %v735, %v722
  %v1139 = vpack.c.b16 %v736, %v723
  %v1140 = vpack.c.b16 %v737, %v724
  %v1141 = vpack.c.b16 %v738, %v725
  %v1142 = vpack.c.b16 %v739, %v726
  %v1143 = vpack.c.b16 %v740, %v727
  %v1144 = vpack.c.b16 %v741, %v728
  %v1145 = vpack.c.b16 %v742, %v729
  %v1146 = vpack.c.b16 %v743, %v730
  %v1147 = vpack.c.b16 %v744, %v731
  %v1148 = vpack.c.b16 %v745, %v732
  %v1149 = vpack.c.b16 %v746, %v733
  %v1150 = vpack.c.b16 %v747, %v734
  %v1151 = vpack.c.b16 %v761, %v748
  %v1152 = vpack.c.b16 %v762, %v749
  %v1153 = vpack.c.b16 %v763, %v750
  %v1154 = vpack.c.b16 %v764, %v751
  %v1155 = vpack.c.b16 %v765, %v752
  %v1156 = vpack.c.b16 %v766, %v753
  %v1157 = vpack.c.b16 %v767, %v754
  %v1158 = vpack.c.b16 %v768, %v755
  %v1159 = vpack.c.b16 %v769, %v756
  %v1160 = vpack.c.b16 %v770, %v757
  %v1161 = vpack.c.b16 %v771, %v758
  %v1162 = vpack.c.b16 %v772, %v759
  %v1163 = vpack.c.b16 %v773, %v760
  %v1164 = vpack.c.b16 %v787, %v774
  %v1165 = vpack.c.b16 %v788, %v775
  %v1166 = vpack.c.b16 %v789, %v776
  %v1167 = vpack.c.b16 %v790, %v777
  %v1168 = vpack.c.b16 %v791, %v778
  %v1169 = vpack.c.b16 %v792, %v779
  %v1170 = vpack.c.b16 %v793, %v780
  %v1171 = vpack.c.b16 %v794, %v781
  %v1172 = vpack.c.b16 %v795, %v782
  %v1173 = vpack.c.b16 %v796, %v783
  %v1174 = vpack.c.b16 %v797, %v784
  %v1175 = vpack.c.b16 %v798, %v785
  %v1176 = vpack.c.b16 %v799, %v786
  %v1177 = vpack.c.b16 %v813, %v800
  %v1178 = vpack.c.b16 %v814, %v801
  %v1179 = vpack.c.b16 %v815, %v802
  %v1180 = vpack.c.b16 %v816, %v803
  %v1181 = vpack.c.b16 %v817, %v804
  %v1182 = vpack.c.b16 %v818, %v805
  %v1183 = vpack.c.b16 %v819, %v806
  %v1184 = vpack.c.b16 %v820, %v807
  %v1185 = vpack.c.b16 %v821, %v808
  %v1186 = vpack.c.b16 %v822, %v809
  %v1187 = vpack.c.b16 %v823, %v810
  %v1188 = vpack.c.b16 %v824, %v811
  %v1189 = vpack.c.b16 %v825, %v812
  %v1190 = vpack.c.b16 %v839, %v826
  %v1191 = vpack.c.b16 %v840, %v827
  %v1192 = vpack.c.b16 %v841, %v828
  %v1193 = vpack.c.b16 %v842, %v829
  %v1194 = vpack.c.b16 %v843, %v830
  %v1195 = vpack.c.b16 %v844, %v831
  %v1196 = vpack.c.b16 %v845, %v832
  %v1197 = vpack.c.b16 %v846, %v833
  %v1198 = vpack.c.b16 %v847, %v834
  %v1199 = vpack.c.b16 %v848, %v835
  %v1200 = vpack.c.b16 %v849, %v836
  %v1201 = vpack.c.b16 %v850, %v837
  %v1202 = vpack.c.b16 %v851, %v838
  %v1203 = vpack.c.b16 %v865, %v852
  %v1204 = vpack.c.b16 %v866, %v853
  %v1205 = vpack.c.b16 %v867, %v854
  %v1206 = vpack.c.b16 %v868, %v855
  %v1207 = vpack.c.b16 %v869, %v856
  %v1208 = vpack.c.b16 %v870, %v857
  %v1209 = vpack.c.b16 %v871, %v858
  %v1210 = vpack.c.b16 %v872, %v859
  %v1211 = vpack.c.b16 %v873, %v860
  %v1212 = vpack.c.b16 %v874, %v861
  %v1213 = vpack.c.b16 %v875, %v862
  %v1214 = vpack.c.b16 %v876, %v863
  %v1215 = vpack.c.b16 %v877, %v864
  %v1216 = vpack.c.b16 %v891, %v878
  %v1217 = vpack.c.b16 %v892, %v879
  %v1218 = vpack.c.b16 %v893, %v880
  %v1219 = vpack.c.b16 %v894, %v881
  %v1220 = vpack.c.b16 %v895, %v882
  %v1221 = vpack.c.b16 %v896, %v883
  %v1222 = vpack.c.b16 %v897, %v884
  %v1223 = vpack.c.b16 %v898, %v885
  %v1224 = vpack.c.b16 %v899, %v886
  %v1225 = vpack.c.b16 %v900, %v887
  %v1226 = vpack.c.b16 %v901, %v888
  %v1227 = vpack.c.b16 %v902, %v889
  %v1228 = vpack.c.b16 %v903, %v890
  %v1229 = vpack.c.b16 %v917, %v904
  %v1230 = vpack.c.b16 %v918, %v905
  %v1231 = vpack.c.b16 %v919, %v906
  %v1232 = vpack.c.b16 %v920, %v907
  %v1233 = vpack.c.b16 %v921, %v908
  %v1234 = vpack.c.b16 %v922, %v909
  %v1235 = vpack.c.b16 %v923, %v910
  %v1236 = vpack.c.b16 %v924, %v911
  %v1237 = vpack.c.b16 %v925, %v912
  %v1238 = vpack.c.b16 %v926, %v913
  %v1239 = vpack.c.b16 %v927, %v914
  %v1240 = vpack.c.b16 %v928, %v915
  %v1241 = vpack.c.b16 %v929, %v916
  %v1242 = vpack.c.b16 %v943, %v930
  %v1243 = vpack.c.b16 %v944, %v931
  %v1244 = vpack.c.b16 %v945, %v932
  %v1245 = vpack.c.b16 %v946, %v933
  %v1246 = vpack.c.b16 %v947, %v934
  %v1247 = vpack.c.b16 %v948, %v935
  %v1248 = vpack.c.b16 %v949, %v936
  %v1249 = vpack.c.b16 %v950, %v937
  %v1250 = vpack.c.b16 %v951, %v938
  %v1251 = vpack.c.b16 %v952, %v939
  %v1252 = vpack.c.b16 %v953, %v940
  %v1253 = vpack.c.b16 %v954, %v941
  %v1254 = vpack.c.b16 %v955, %v942
  %v1255 = vpack.c.b16 %v969, %v956
  %v1256 = vpack.c.b16 %v970, %v957
  %v1257 = vpack.c.b16 %v971, %v958
  %v1258 = vpack.c.b16 %v972, %v959
  %v1259 = vpack.c.b16 %v973, %v960
  %v1260 = vpack.c.b16 %v974, %v961
  %v1261 = vpack.c.b16 %v975, %v962
  %v1262 = vpack.c.b16 %v976, %v963
  %v1263 = vpack.c.b16 %v977, %v964
  %v1264 = vpack.c.b16 %v978, %v965
  %v1265 = vpack.c.b16 %v979, %v966
  %v1266 = vpack.c.b16 %v980, %v967
  %v1267 = vpack.c.b16 %v981, %v968
  %v1268 = vpack.c.b16 %v995, %v982
  %v1269 = vpack.c.b16 %v996, %v983
  %v1270 = vpack.c.b16 %v997, %v984
  %v1271 = vpack.c.b16 %v998, %v985
  %v1272 = vpack.c.b16 %v999, %v986
  %v1273 = vpack.c.b16 %v1000, %v987
  %v1274 = vpack.c.b16 %v1001, %v988
  %v1275 = vpack.c.b16 %v1002, %v989
  %v1276 = vpack.c.b16 %v1003, %v990
  %v1277 = vpack.c.b16 %v1004, %v991
  %v1278 = vpack.c.b16 %v1005, %v992
  %v1279 = vpack.c.b16 %v1006, %v993
  %v1280 = vpack.c.b16 %v1007, %v994
  %v1281 = vpack.c.b16 %v1021, %v1008
  %v1282 = vpack.c.b16 %v1022, %v1009
  %v1283 = vpack.c.b16 %v1023, %v1010
  %v1284 = vpack.c.b16 %v1024, %v1011
  %v1285 = vpack.c.b16 %v1025, %v1012
  %v1286 = vpack.c.b16 %v1026, %v1013
  %v1287 = vpack.c.b16 %v1027, %v1014
  %v1288 = vpack.c.b16 %v1028, %v1015
  %v1289 = vpack.c.b16 %v1029, %v1016
  %v1290 = vpack.c.b16 %v1030, %v1017
  %v1291 = vpack.c.b16 %v1031, %v1018
  %v1292 = vpack.c.b16 %v1032, %v1019
  %v1293 = vpack.c.b16 %v1033, %v1020
  %v1294 = vpack.c.b16 %v1047, %v1034
  %v1295 = vpack.c.b16 %v1048, %v1035
  %v1296 = vpack.c.b16 %v1049, %v1036
  %v1297 = vpack.c.b16 %v1050, %v1037
  %v1298 = vpack.c.b16 %v1051, %v1038
  %v1299 = vpack.c.b16 %v1052, %v1039
  %v1300 = vpack.c.b16 %v1053, %v1040
  %v1301 = vpack.c.b16 %v1054, %v1041
  %v1302 = vpack.c.b16 %v1055, %v1042
  %v1303 = vpack.c.b16 %v1056, %v1043
  %v1304 = vpack.c.b16 %v1057, %v1044
  %v1305 = vpack.c.b16 %v1058, %v1045
  %v1306 = vpack.c.b16 %v1059, %v1046
  %v1307 = vpack.c.b16 %v1073, %v1060
  %v1308 = vpack.c.b16 %v1074, %v1061
  %v1309 = vpack.c.b16 %v1075, %v1062
  %v1310 = vpack.c.b16 %v1076, %v1063
  %v1311 = vpack.c.b16 %v1077, %v1064
  %v1312 = vpack.c.b16 %v1078, %v1065
  %v1313 = vpack.c.b16 %v1079, %v1066
  %v1314 = vpack.c.b16 %v1080, %v1067
  %v1315 = vpack.c.b16 %v1081, %v1068
  %v1316 = vpack.c.b16 %v1082, %v1069
  %v1317 = vpack.c.b16 %v1083, %v1070
  %v1318 = vpack.c.b16 %v1084, %v1071
  %v1319 = vpack.c.b16 %v1085, %v1072
  %vm1554 = vcmask 261120
  %v1556 = vsel %vm1554, %v44, 0
  %1558 = vmatprep.subr.bf16.mxu0 %v1178
  %1559 = vmatpush1.bf16.msra.mxu0 %v1177
  %1560 = vmatprep.subr.bf16.mxu0 %v1165
  %1561 = vmatpush1.bf16.msra.mxu0 %v1164
  %1562 = vmatprep.subr.bf16.mxu0 %v1152
  %1563 = vmatpush1.bf16.msra.mxu0 %v1151
  %1564 = vmatprep.subr.bf16.mxu0 %v1139
  %1565 = vmatpush1.bf16.msra.mxu0 %v1138
  %1566 = vmatprep.subr.bf16.mxu0 %v1126
  %1567 = vmatpush1.bf16.msra.mxu0 %v1125
  %1568 = vmatprep.subr.bf16.mxu0 %v1113
  %1569 = vmatpush1.bf16.msra.mxu0 %v1112
  %1570 = vmatprep.subr.bf16.mxu0 %v1100
  %1571 = vmatpush1.bf16.msra.mxu0 %v1099
  %1572 = vmatprep.subr.bf16.mxu0 %v1087
  %1573 = vmatpush1.bf16.msra.mxu0 %v1086
  %1574 = vmatprep.subr.bf16.mxu0 %v1282
  %1575 = vmatpush2.bf16.msra.mxu0 %v1281
  %1576 = vmatprep.subr.bf16.mxu0 %v1269
  %1577 = vmatpush2.bf16.msra.mxu0 %v1268
  %1578 = vmatprep.subr.bf16.mxu0 %v1256
  %1579 = vmatpush2.bf16.msra.mxu0 %v1255
  %1580 = vmatprep.subr.bf16.mxu0 %v1243
  %1581 = vmatpush2.bf16.msra.mxu0 %v1242
  %1582 = vmatprep.subr.bf16.mxu0 %v1230
  %1583 = vmatpush2.bf16.msra.mxu0 %v1229
  %1584 = vmatprep.subr.bf16.mxu0 %v1217
  %1585 = vmatpush2.bf16.msra.mxu0 %v1216
  %1586 = vmatprep.subr.bf16.mxu0 %v1204
  %1587 = vmatpush2.bf16.msra.mxu0 %v1203
  %1588 = vmatprep.subr.bf16.mxu0 %v1191
  %1589 = vmatpush2.bf16.msra.mxu0 %v1190
  %1590 = vmatprep.mubr.bf16.mxu0 %v43
  %1591 = vmatmul.mubr.bf16.gmra.mxu0 %v42
  %v1592 = vpop.f32.mrf.mxu0
  %v1593 = vadd.f32 %v304, %v1592
  %v1594 = vpop.f32.mrf.mxu0
  %v1595 = vadd.f32 %v308, %v1594
  %v1596 = vpop.f32.mrf.mxu0
  %v1597 = vpop.f32.mrf.mxu0
  %1598 = vdwg.mxu0
  %1599 = vmatprep.subr.bf16.mxu0 0
  %1600 = vmatpush1.bf16.msra.mxu0 0
  %1601 = vmatprep.subr.bf16.mxu0 0
  %1602 = vmatpush1.bf16.msra.mxu0 0
  %1603 = vmatprep.subr.bf16.mxu0 0
  %1604 = vmatpush1.bf16.msra.mxu0 0
  %1605 = vmatprep.subr.bf16.mxu0 0
  %1606 = vmatpush1.bf16.msra.mxu0 0
  %1607 = vmatprep.subr.bf16.mxu0 0
  %1608 = vmatpush1.bf16.msra.mxu0 0
  %1609 = vmatprep.subr.bf16.mxu0 0
  %1610 = vmatpush1.bf16.msra.mxu0 0
  %1611 = vmatprep.subr.bf16.mxu0 %v1308
  %1612 = vmatpush1.bf16.msra.mxu0 %v1307
  %1613 = vmatprep.subr.bf16.mxu0 %v1295
  %1614 = vmatpush1.bf16.msra.mxu0 %v1294
  %1615 = vmatprep.subr.bf16.mxu0 0
  %1616 = vmatpush2.bf16.msra.mxu0 0
  %1617 = vmatprep.subr.bf16.mxu0 0
  %1618 = vmatpush2.bf16.msra.mxu0 0
  %1619 = vmatprep.subr.bf16.mxu0 0
  %1620 = vmatpush2.bf16.msra.mxu0 0
  %1621 = vmatprep.subr.bf16.mxu0 0
  %1622 = vmatpush2.bf16.msra.mxu0 0
  %1623 = vmatprep.subr.bf16.mxu0 0
  %1624 = vmatpush2.bf16.msra.mxu0 0
  %1625 = vmatprep.subr.bf16.mxu0 0
  %1626 = vmatpush2.bf16.msra.mxu0 0
  %1627 = vmatprep.subr.bf16.mxu0 0
  %1628 = vmatpush2.bf16.msra.mxu0 0
  %1629 = vmatprep.subr.bf16.mxu0 0
  %1630 = vmatpush2.bf16.msra.mxu0 0
  %1631 = vmatprep.mubr.bf16.mxu0 0
  %1632 = vmatmul.mubr.bf16.gmra.mxu0 %v1556
  %v1633 = vpop.f32.mrf.mxu0
  %v1634 = vadd.f32 %v1593, %v1633
  %v1635 = vpop.f32.mrf.mxu0
  %v1636 = vadd.f32 %v1595, %v1635
  %v1637 = vpop.f32.mrf.mxu0
  %v1638 = vpop.f32.mrf.mxu0
  %1639 = vdwg.mxu0
  %1640 = vmatprep.subr.bf16.mxu0 %v1180
  %1641 = vmatpush1.bf16.msra.mxu0 %v1179
  %1642 = vmatprep.subr.bf16.mxu0 %v1167
  %1643 = vmatpush1.bf16.msra.mxu0 %v1166
  %1644 = vmatprep.subr.bf16.mxu0 %v1154
  %1645 = vmatpush1.bf16.msra.mxu0 %v1153
  %1646 = vmatprep.subr.bf16.mxu0 %v1141
  %1647 = vmatpush1.bf16.msra.mxu0 %v1140
  %1648 = vmatprep.subr.bf16.mxu0 %v1128
  %1649 = vmatpush1.bf16.msra.mxu0 %v1127
  %1650 = vmatprep.subr.bf16.mxu0 %v1115
  %1651 = vmatpush1.bf16.msra.mxu0 %v1114
  %1652 = vmatprep.subr.bf16.mxu0 %v1102
  %1653 = vmatpush1.bf16.msra.mxu0 %v1101
  %1654 = vmatprep.subr.bf16.mxu0 %v1089
  %1655 = vmatpush1.bf16.msra.mxu0 %v1088
  %1656 = vmatprep.subr.bf16.mxu0 %v1284
  %1657 = vmatpush2.bf16.msra.mxu0 %v1283
  %1658 = vmatprep.subr.bf16.mxu0 %v1271
  %1659 = vmatpush2.bf16.msra.mxu0 %v1270
  %1660 = vmatprep.subr.bf16.mxu0 %v1258
  %1661 = vmatpush2.bf16.msra.mxu0 %v1257
  %1662 = vmatprep.subr.bf16.mxu0 %v1245
  %1663 = vmatpush2.bf16.msra.mxu0 %v1244
  %1664 = vmatprep.subr.bf16.mxu0 %v1232
  %1665 = vmatpush2.bf16.msra.mxu0 %v1231
  %1666 = vmatprep.subr.bf16.mxu0 %v1219
  %1667 = vmatpush2.bf16.msra.mxu0 %v1218
  %1668 = vmatprep.subr.bf16.mxu0 %v1206
  %1669 = vmatpush2.bf16.msra.mxu0 %v1205
  %1670 = vmatprep.subr.bf16.mxu0 %v1193
  %1671 = vmatpush2.bf16.msra.mxu0 %v1192
  %1672 = vmatprep.mubr.bf16.mxu0 %v43
  %1673 = vmatmul.mubr.bf16.gmra.mxu0 %v42
  %v1674 = vpop.f32.mrf.mxu0
  %v1675 = vadd.f32 %v312, %v1674
  %v1676 = vpop.f32.mrf.mxu0
  %v1677 = vadd.f32 %v316, %v1676
  %v1678 = vpop.f32.mrf.mxu0
  %v1679 = vpop.f32.mrf.mxu0
  %1680 = vdwg.mxu0
  %1681 = vmatprep.subr.bf16.mxu0 0
  %1682 = vmatpush1.bf16.msra.mxu0 0
  %1683 = vmatprep.subr.bf16.mxu0 0
  %1684 = vmatpush1.bf16.msra.mxu0 0
  %1685 = vmatprep.subr.bf16.mxu0 0
  %1686 = vmatpush1.bf16.msra.mxu0 0
  %1687 = vmatprep.subr.bf16.mxu0 0
  %1688 = vmatpush1.bf16.msra.mxu0 0
  %1689 = vmatprep.subr.bf16.mxu0 0
  %1690 = vmatpush1.bf16.msra.mxu0 0
  %1691 = vmatprep.subr.bf16.mxu0 0
  %1692 = vmatpush1.bf16.msra.mxu0 0
  %1693 = vmatprep.subr.bf16.mxu0 %v1310
  %1694 = vmatpush1.bf16.msra.mxu0 %v1309
  %1695 = vmatprep.subr.bf16.mxu0 %v1297
  %1696 = vmatpush1.bf16.msra.mxu0 %v1296
  %1697 = vmatprep.subr.bf16.mxu0 0
  %1698 = vmatpush2.bf16.msra.mxu0 0
  %1699 = vmatprep.subr.bf16.mxu0 0
  %1700 = vmatpush2.bf16.msra.mxu0 0
  %1701 = vmatprep.subr.bf16.mxu0 0
  %1702 = vmatpush2.bf16.msra.mxu0 0
  %1703 = vmatprep.subr.bf16.mxu0 0
  %1704 = vmatpush2.bf16.msra.mxu0 0
  %1705 = vmatprep.subr.bf16.mxu0 0
  %1706 = vmatpush2.bf16.msra.mxu0 0
  %1707 = vmatprep.subr.bf16.mxu0 0
  %1708 = vmatpush2.bf16.msra.mxu0 0
  %1709 = vmatprep.subr.bf16.mxu0 0
  %1710 = vmatpush2.bf16.msra.mxu0 0
  %1711 = vmatprep.subr.bf16.mxu0 0
  %1712 = vmatpush2.bf16.msra.mxu0 0
  %1713 = vmatprep.mubr.bf16.mxu0 0
  %1714 = vmatmul.mubr.bf16.gmra.mxu0 %v1556
  %v1715 = vpop.f32.mrf.mxu0
  %v1716 = vadd.f32 %v1675, %v1715
  %v1717 = vpop.f32.mrf.mxu0
  %v1718 = vadd.f32 %v1677, %v1717
  %v1719 = vpop.f32.mrf.mxu0
  %v1720 = vpop.f32.mrf.mxu0
  %1721 = vdwg.mxu0
  %1722 = vmatprep.subr.bf16.mxu0 %v1182
  %1723 = vmatpush1.bf16.msra.mxu0 %v1181
  %1724 = vmatprep.subr.bf16.mxu0 %v1169
  %1725 = vmatpush1.bf16.msra.mxu0 %v1168
  %1726 = vmatprep.subr.bf16.mxu0 %v1156
  %1727 = vmatpush1.bf16.msra.mxu0 %v1155
  %1728 = vmatprep.subr.bf16.mxu0 %v1143
  %1729 = vmatpush1.bf16.msra.mxu0 %v1142
  %1730 = vmatprep.subr.bf16.mxu0 %v1130
  %1731 = vmatpush1.bf16.msra.mxu0 %v1129
  %1732 = vmatprep.subr.bf16.mxu0 %v1117
  %1733 = vmatpush1.bf16.msra.mxu0 %v1116
  %1734 = vmatprep.subr.bf16.mxu0 %v1104
  %1735 = vmatpush1.bf16.msra.mxu0 %v1103
  %1736 = vmatprep.subr.bf16.mxu0 %v1091
  %1737 = vmatpush1.bf16.msra.mxu0 %v1090
  %1738 = vmatprep.subr.bf16.mxu0 %v1286
  %1739 = vmatpush2.bf16.msra.mxu0 %v1285
  %1740 = vmatprep.subr.bf16.mxu0 %v1273
  %1741 = vmatpush2.bf16.msra.mxu0 %v1272
  %1742 = vmatprep.subr.bf16.mxu0 %v1260
  %1743 = vmatpush2.bf16.msra.mxu0 %v1259
  %1744 = vmatprep.subr.bf16.mxu0 %v1247
  %1745 = vmatpush2.bf16.msra.mxu0 %v1246
  %1746 = vmatprep.subr.bf16.mxu0 %v1234
  %1747 = vmatpush2.bf16.msra.mxu0 %v1233
  %1748 = vmatprep.subr.bf16.mxu0 %v1221
  %1749 = vmatpush2.bf16.msra.mxu0 %v1220
  %1750 = vmatprep.subr.bf16.mxu0 %v1208
  %1751 = vmatpush2.bf16.msra.mxu0 %v1207
  %1752 = vmatprep.subr.bf16.mxu0 %v1195
  %1753 = vmatpush2.bf16.msra.mxu0 %v1194
  %1754 = vmatprep.mubr.bf16.mxu0 %v43
  %1755 = vmatmul.mubr.bf16.gmra.mxu0 %v42
  %v1756 = vpop.f32.mrf.mxu0
  %v1757 = vadd.f32 %v320, %v1756
  %v1758 = vpop.f32.mrf.mxu0
  %v1759 = vadd.f32 %v324, %v1758
  %v1760 = vpop.f32.mrf.mxu0
  %v1761 = vpop.f32.mrf.mxu0
  %1762 = vdwg.mxu0
  %1763 = vmatprep.subr.bf16.mxu0 0
  %1764 = vmatpush1.bf16.msra.mxu0 0
  %1765 = vmatprep.subr.bf16.mxu0 0
  %1766 = vmatpush1.bf16.msra.mxu0 0
  %1767 = vmatprep.subr.bf16.mxu0 0
  %1768 = vmatpush1.bf16.msra.mxu0 0
  %1769 = vmatprep.subr.bf16.mxu0 0
  %1770 = vmatpush1.bf16.msra.mxu0 0
  %1771 = vmatprep.subr.bf16.mxu0 0
  %1772 = vmatpush1.bf16.msra.mxu0 0
  %1773 = vmatprep.subr.bf16.mxu0 0
  %1774 = vmatpush1.bf16.msra.mxu0 0
  %1775 = vmatprep.subr.bf16.mxu0 %v1312
  %1776 = vmatpush1.bf16.msra.mxu0 %v1311
  %1777 = vmatprep.subr.bf16.mxu0 %v1299
  %1778 = vmatpush1.bf16.msra.mxu0 %v1298
  %1779 = vmatprep.subr.bf16.mxu0 0
  %1780 = vmatpush2.bf16.msra.mxu0 0
  %1781 = vmatprep.subr.bf16.mxu0 0
  %1782 = vmatpush2.bf16.msra.mxu0 0
  %1783 = vmatprep.subr.bf16.mxu0 0
  %1784 = vmatpush2.bf16.msra.mxu0 0
  %1785 = vmatprep.subr.bf16.mxu0 0
  %1786 = vmatpush2.bf16.msra.mxu0 0
  %1787 = vmatprep.subr.bf16.mxu0 0
  %1788 = vmatpush2.bf16.msra.mxu0 0
  %1789 = vmatprep.subr.bf16.mxu0 0
  %1790 = vmatpush2.bf16.msra.mxu0 0
  %1791 = vmatprep.subr.bf16.mxu0 0
  %1792 = vmatpush2.bf16.msra.mxu0 0
  %1793 = vmatprep.subr.bf16.mxu0 0
  %1794 = vmatpush2.bf16.msra.mxu0 0
  %1795 = vmatprep.mubr.bf16.mxu0 0
  %1796 = vmatmul.mubr.bf16.gmra.mxu0 %v1556
  %v1797 = vpop.f32.mrf.mxu0
  %v1798 = vadd.f32 %v1757, %v1797
  %v1799 = vpop.f32.mrf.mxu0
  %v1800 = vadd.f32 %v1759, %v1799
  %v1801 = vpop.f32.mrf.mxu0
  %v1802 = vpop.f32.mrf.mxu0
  %1803 = vdwg.mxu0
  %1804 = vmatprep.subr.bf16.mxu0 %v1184
  %1805 = vmatpush1.bf16.msra.mxu0 %v1183
  %1806 = vmatprep.subr.bf16.mxu0 %v1171
  %1807 = vmatpush1.bf16.msra.mxu0 %v1170
  %1808 = vmatprep.subr.bf16.mxu0 %v1158
  %1809 = vmatpush1.bf16.msra.mxu0 %v1157
  %1810 = vmatprep.subr.bf16.mxu0 %v1145
  %1811 = vmatpush1.bf16.msra.mxu0 %v1144
  %1812 = vmatprep.subr.bf16.mxu0 %v1132
  %1813 = vmatpush1.bf16.msra.mxu0 %v1131
  %1814 = vmatprep.subr.bf16.mxu0 %v1119
  %1815 = vmatpush1.bf16.msra.mxu0 %v1118
  %1816 = vmatprep.subr.bf16.mxu0 %v1106
  %1817 = vmatpush1.bf16.msra.mxu0 %v1105
  %1818 = vmatprep.subr.bf16.mxu0 %v1093
  %1819 = vmatpush1.bf16.msra.mxu0 %v1092
  %1820 = vmatprep.subr.bf16.mxu0 %v1288
  %1821 = vmatpush2.bf16.msra.mxu0 %v1287
  %1822 = vmatprep.subr.bf16.mxu0 %v1275
  %1823 = vmatpush2.bf16.msra.mxu0 %v1274
  %1824 = vmatprep.subr.bf16.mxu0 %v1262
  %1825 = vmatpush2.bf16.msra.mxu0 %v1261
  %1826 = vmatprep.subr.bf16.mxu0 %v1249
  %1827 = vmatpush2.bf16.msra.mxu0 %v1248
  %1828 = vmatprep.subr.bf16.mxu0 %v1236
  %1829 = vmatpush2.bf16.msra.mxu0 %v1235
  %1830 = vmatprep.subr.bf16.mxu0 %v1223
  %1831 = vmatpush2.bf16.msra.mxu0 %v1222
  %1832 = vmatprep.subr.bf16.mxu0 %v1210
  %1833 = vmatpush2.bf16.msra.mxu0 %v1209
  %1834 = vmatprep.subr.bf16.mxu0 %v1197
  %1835 = vmatpush2.bf16.msra.mxu0 %v1196
  %1836 = vmatprep.mubr.bf16.mxu0 %v43
  %1837 = vmatmul.mubr.bf16.gmra.mxu0 %v42
  %v1838 = vpop.f32.mrf.mxu0
  %v1839 = vadd.f32 %v328, %v1838
  %v1840 = vpop.f32.mrf.mxu0
  %v1841 = vadd.f32 %v332, %v1840
  %v1842 = vpop.f32.mrf.mxu0
  %v1843 = vpop.f32.mrf.mxu0
  %1844 = vdwg.mxu0
  %1845 = vmatprep.subr.bf16.mxu0 0
  %1846 = vmatpush1.bf16.msra.mxu0 0
  %1847 = vmatprep.subr.bf16.mxu0 0
  %1848 = vmatpush1.bf16.msra.mxu0 0
  %1849 = vmatprep.subr.bf16.mxu0 0
  %1850 = vmatpush1.bf16.msra.mxu0 0
  %1851 = vmatprep.subr.bf16.mxu0 0
  %1852 = vmatpush1.bf16.msra.mxu0 0
  %1853 = vmatprep.subr.bf16.mxu0 0
  %1854 = vmatpush1.bf16.msra.mxu0 0
  %1855 = vmatprep.subr.bf16.mxu0 0
  %1856 = vmatpush1.bf16.msra.mxu0 0
  %1857 = vmatprep.subr.bf16.mxu0 %v1314
  %1858 = vmatpush1.bf16.msra.mxu0 %v1313
  %1859 = vmatprep.subr.bf16.mxu0 %v1301
  %1860 = vmatpush1.bf16.msra.mxu0 %v1300
  %1861 = vmatprep.subr.bf16.mxu0 0
  %1862 = vmatpush2.bf16.msra.mxu0 0
  %1863 = vmatprep.subr.bf16.mxu0 0
  %1864 = vmatpush2.bf16.msra.mxu0 0
  %1865 = vmatprep.subr.bf16.mxu0 0
  %1866 = vmatpush2.bf16.msra.mxu0 0
  %1867 = vmatprep.subr.bf16.mxu0 0
  %1868 = vmatpush2.bf16.msra.mxu0 0
  %1869 = vmatprep.subr.bf16.mxu0 0
  %1870 = vmatpush2.bf16.msra.mxu0 0
  %1871 = vmatprep.subr.bf16.mxu0 0
  %1872 = vmatpush2.bf16.msra.mxu0 0
  %1873 = vmatprep.subr.bf16.mxu0 0
  %1874 = vmatpush2.bf16.msra.mxu0 0
  %1875 = vmatprep.subr.bf16.mxu0 0
  %1876 = vmatpush2.bf16.msra.mxu0 0
  %1877 = vmatprep.mubr.bf16.mxu0 0
  %1878 = vmatmul.mubr.bf16.gmra.mxu0 %v1556
  %v1879 = vpop.f32.mrf.mxu0
  %v1880 = vadd.f32 %v1839, %v1879
  %v1881 = vpop.f32.mrf.mxu0
  %v1882 = vadd.f32 %v1841, %v1881
  %v1883 = vpop.f32.mrf.mxu0
  %v1884 = vpop.f32.mrf.mxu0
  %1885 = vdwg.mxu0
  %1886 = vmatprep.subr.bf16.mxu0 %v1186
  %1887 = vmatpush1.bf16.msra.mxu0 %v1185
  %1888 = vmatprep.subr.bf16.mxu0 %v1173
  %1889 = vmatpush1.bf16.msra.mxu0 %v1172
  %1890 = vmatprep.subr.bf16.mxu0 %v1160
  %1891 = vmatpush1.bf16.msra.mxu0 %v1159
  %1892 = vmatprep.subr.bf16.mxu0 %v1147
  %1893 = vmatpush1.bf16.msra.mxu0 %v1146
  %1894 = vmatprep.subr.bf16.mxu0 %v1134
  %1895 = vmatpush1.bf16.msra.mxu0 %v1133
  %1896 = vmatprep.subr.bf16.mxu0 %v1121
  %1897 = vmatpush1.bf16.msra.mxu0 %v1120
  %1898 = vmatprep.subr.bf16.mxu0 %v1108
  %1899 = vmatpush1.bf16.msra.mxu0 %v1107
  %1900 = vmatprep.subr.bf16.mxu0 %v1095
  %1901 = vmatpush1.bf16.msra.mxu0 %v1094
  %1902 = vmatprep.subr.bf16.mxu0 %v1290
  %1903 = vmatpush2.bf16.msra.mxu0 %v1289
  %1904 = vmatprep.subr.bf16.mxu0 %v1277
  %1905 = vmatpush2.bf16.msra.mxu0 %v1276
  %1906 = vmatprep.subr.bf16.mxu0 %v1264
  %1907 = vmatpush2.bf16.msra.mxu0 %v1263
  %1908 = vmatprep.subr.bf16.mxu0 %v1251
  %1909 = vmatpush2.bf16.msra.mxu0 %v1250
  %1910 = vmatprep.subr.bf16.mxu0 %v1238
  %1911 = vmatpush2.bf16.msra.mxu0 %v1237
  %1912 = vmatprep.subr.bf16.mxu0 %v1225
  %1913 = vmatpush2.bf16.msra.mxu0 %v1224
  %1914 = vmatprep.subr.bf16.mxu0 %v1212
  %1915 = vmatpush2.bf16.msra.mxu0 %v1211
  %1916 = vmatprep.subr.bf16.mxu0 %v1199
  %1917 = vmatpush2.bf16.msra.mxu0 %v1198
  %1918 = vmatprep.mubr.bf16.mxu0 %v43
  %1919 = vmatmul.mubr.bf16.gmra.mxu0 %v42
  %v1920 = vpop.f32.mrf.mxu0
  %v1921 = vadd.f32 %v336, %v1920
  %v1922 = vpop.f32.mrf.mxu0
  %v1923 = vadd.f32 %v340, %v1922
  %v1924 = vpop.f32.mrf.mxu0
  %v1925 = vpop.f32.mrf.mxu0
  %1926 = vdwg.mxu0
  %1927 = vmatprep.subr.bf16.mxu0 0
  %1928 = vmatpush1.bf16.msra.mxu0 0
  %1929 = vmatprep.subr.bf16.mxu0 0
  %1930 = vmatpush1.bf16.msra.mxu0 0
  %1931 = vmatprep.subr.bf16.mxu0 0
  %1932 = vmatpush1.bf16.msra.mxu0 0
  %1933 = vmatprep.subr.bf16.mxu0 0
  %1934 = vmatpush1.bf16.msra.mxu0 0
  %1935 = vmatprep.subr.bf16.mxu0 0
  %1936 = vmatpush1.bf16.msra.mxu0 0
  %1937 = vmatprep.subr.bf16.mxu0 0
  %1938 = vmatpush1.bf16.msra.mxu0 0
  %1939 = vmatprep.subr.bf16.mxu0 %v1316
  %1940 = vmatpush1.bf16.msra.mxu0 %v1315
  %1941 = vmatprep.subr.bf16.mxu0 %v1303
  %1942 = vmatpush1.bf16.msra.mxu0 %v1302
  %1943 = vmatprep.subr.bf16.mxu0 0
  %1944 = vmatpush2.bf16.msra.mxu0 0
  %1945 = vmatprep.subr.bf16.mxu0 0
  %1946 = vmatpush2.bf16.msra.mxu0 0
  %1947 = vmatprep.subr.bf16.mxu0 0
  %1948 = vmatpush2.bf16.msra.mxu0 0
  %1949 = vmatprep.subr.bf16.mxu0 0
  %1950 = vmatpush2.bf16.msra.mxu0 0
  %1951 = vmatprep.subr.bf16.mxu0 0
  %1952 = vmatpush2.bf16.msra.mxu0 0
  %1953 = vmatprep.subr.bf16.mxu0 0
  %1954 = vmatpush2.bf16.msra.mxu0 0
  %1955 = vmatprep.subr.bf16.mxu0 0
  %1956 = vmatpush2.bf16.msra.mxu0 0
  %1957 = vmatprep.subr.bf16.mxu0 0
  %1958 = vmatpush2.bf16.msra.mxu0 0
  %1959 = vmatprep.mubr.bf16.mxu0 0
  %1960 = vmatmul.mubr.bf16.gmra.mxu0 %v1556
  %v1961 = vpop.f32.mrf.mxu0
  %v1962 = vadd.f32 %v1921, %v1961
  %v1963 = vpop.f32.mrf.mxu0
  %v1964 = vadd.f32 %v1923, %v1963
  %v1965 = vpop.f32.mrf.mxu0
  %v1966 = vpop.f32.mrf.mxu0
  %1967 = vdwg.mxu0
  %1968 = vmatprep.subr.bf16.mxu0 %v1188
  %1969 = vmatpush1.bf16.msra.mxu0 %v1187
  %1970 = vmatprep.subr.bf16.mxu0 %v1175
  %1971 = vmatpush1.bf16.msra.mxu0 %v1174
  %1972 = vmatprep.subr.bf16.mxu0 %v1162
  %1973 = vmatpush1.bf16.msra.mxu0 %v1161
  %1974 = vmatprep.subr.bf16.mxu0 %v1149
  %1975 = vmatpush1.bf16.msra.mxu0 %v1148
  %1976 = vmatprep.subr.bf16.mxu0 %v1136
  %1977 = vmatpush1.bf16.msra.mxu0 %v1135
  %1978 = vmatprep.subr.bf16.mxu0 %v1123
  %1979 = vmatpush1.bf16.msra.mxu0 %v1122
  %1980 = vmatprep.subr.bf16.mxu0 %v1110
  %1981 = vmatpush1.bf16.msra.mxu0 %v1109
  %1982 = vmatprep.subr.bf16.mxu0 %v1097
  %1983 = vmatpush1.bf16.msra.mxu0 %v1096
  %1984 = vmatprep.subr.bf16.mxu0 %v1292
  %1985 = vmatpush2.bf16.msra.mxu0 %v1291
  %1986 = vmatprep.subr.bf16.mxu0 %v1279
  %1987 = vmatpush2.bf16.msra.mxu0 %v1278
  %1988 = vmatprep.subr.bf16.mxu0 %v1266
  %1989 = vmatpush2.bf16.msra.mxu0 %v1265
  %1990 = vmatprep.subr.bf16.mxu0 %v1253
  %1991 = vmatpush2.bf16.msra.mxu0 %v1252
  %1992 = vmatprep.subr.bf16.mxu0 %v1240
  %1993 = vmatpush2.bf16.msra.mxu0 %v1239
  %1994 = vmatprep.subr.bf16.mxu0 %v1227
  %1995 = vmatpush2.bf16.msra.mxu0 %v1226
  %1996 = vmatprep.subr.bf16.mxu0 %v1214
  %1997 = vmatpush2.bf16.msra.mxu0 %v1213
  %1998 = vmatprep.subr.bf16.mxu0 %v1201
  %1999 = vmatpush2.bf16.msra.mxu0 %v1200
  %2000 = vmatprep.mubr.bf16.mxu0 %v43
  %2001 = vmatmul.mubr.bf16.gmra.mxu0 %v42
  %v2002 = vpop.f32.mrf.mxu0
  %v2003 = vadd.f32 %v344, %v2002
  %v2004 = vpop.f32.mrf.mxu0
  %v2005 = vadd.f32 %v348, %v2004
  %v2006 = vpop.f32.mrf.mxu0
  %v2007 = vpop.f32.mrf.mxu0
  %2008 = vdwg.mxu0
  %2009 = vmatprep.subr.bf16.mxu0 0
  %2010 = vmatpush1.bf16.msra.mxu0 0
  %2011 = vmatprep.subr.bf16.mxu0 0
  %2012 = vmatpush1.bf16.msra.mxu0 0
  %2013 = vmatprep.subr.bf16.mxu0 0
  %2014 = vmatpush1.bf16.msra.mxu0 0
  %2015 = vmatprep.subr.bf16.mxu0 0
  %2016 = vmatpush1.bf16.msra.mxu0 0
  %2017 = vmatprep.subr.bf16.mxu0 0
  %2018 = vmatpush1.bf16.msra.mxu0 0
  %2019 = vmatprep.subr.bf16.mxu0 0
  %2020 = vmatpush1.bf16.msra.mxu0 0
  %2021 = vmatprep.subr.bf16.mxu0 %v1318
  %2022 = vmatpush1.bf16.msra.mxu0 %v1317
  %2023 = vmatprep.subr.bf16.mxu0 %v1305
  %2024 = vmatpush1.bf16.msra.mxu0 %v1304
  %2025 = vmatprep.subr.bf16.mxu0 0
  %2026 = vmatpush2.bf16.msra.mxu0 0
  %2027 = vmatprep.subr.bf16.mxu0 0
  %2028 = vmatpush2.bf16.msra.mxu0 0
  %2029 = vmatprep.subr.bf16.mxu0 0
  %2030 = vmatpush2.bf16.msra.mxu0 0
  %2031 = vmatprep.subr.bf16.mxu0 0
  %2032 = vmatpush2.bf16.msra.mxu0 0
  %2033 = vmatprep.subr.bf16.mxu0 0
  %2034 = vmatpush2.bf16.msra.mxu0 0
  %2035 = vmatprep.subr.bf16.mxu0 0
  %2036 = vmatpush2.bf16.msra.mxu0 0
  %2037 = vmatprep.subr.bf16.mxu0 0
  %2038 = vmatpush2.bf16.msra.mxu0 0
  %2039 = vmatprep.subr.bf16.mxu0 0
  %2040 = vmatpush2.bf16.msra.mxu0 0
  %2041 = vmatprep.mubr.bf16.mxu0 0
  %2042 = vmatmul.mubr.bf16.gmra.mxu0 %v1556
  %v2043 = vpop.f32.mrf.mxu0
  %v2044 = vadd.f32 %v2003, %v2043
  %v2045 = vpop.f32.mrf.mxu0
  %v2046 = vadd.f32 %v2005, %v2045
  %v2047 = vpop.f32.mrf.mxu0
  %v2048 = vpop.f32.mrf.mxu0
  %2049 = vdwg.mxu0
  %2050 = vmatprep.subr.bf16.mxu0 0
  %2051 = vmatpush1.bf16.msra.mxu0 %v1189
  %2052 = vmatprep.subr.bf16.mxu0 0
  %2053 = vmatpush1.bf16.msra.mxu0 %v1176
  %2054 = vmatprep.subr.bf16.mxu0 0
  %2055 = vmatpush1.bf16.msra.mxu0 %v1163
  %2056 = vmatprep.subr.bf16.mxu0 0
  %2057 = vmatpush1.bf16.msra.mxu0 %v1150
  %2058 = vmatprep.subr.bf16.mxu0 0
  %2059 = vmatpush1.bf16.msra.mxu0 %v1137
  %2060 = vmatprep.subr.bf16.mxu0 0
  %2061 = vmatpush1.bf16.msra.mxu0 %v1124
  %2062 = vmatprep.subr.bf16.mxu0 0
  %2063 = vmatpush1.bf16.msra.mxu0 %v1111
  %2064 = vmatprep.subr.bf16.mxu0 0
  %2065 = vmatpush1.bf16.msra.mxu0 %v1098
  %2066 = vmatprep.subr.bf16.mxu0 0
  %2067 = vmatpush2.bf16.msra.mxu0 %v1293
  %2068 = vmatprep.subr.bf16.mxu0 0
  %2069 = vmatpush2.bf16.msra.mxu0 %v1280
  %2070 = vmatprep.subr.bf16.mxu0 0
  %2071 = vmatpush2.bf16.msra.mxu0 %v1267
  %2072 = vmatprep.subr.bf16.mxu0 0
  %2073 = vmatpush2.bf16.msra.mxu0 %v1254
  %2074 = vmatprep.subr.bf16.mxu0 0
  %2075 = vmatpush2.bf16.msra.mxu0 %v1241
  %2076 = vmatprep.subr.bf16.mxu0 0
  %2077 = vmatpush2.bf16.msra.mxu0 %v1228
  %2078 = vmatprep.subr.bf16.mxu0 0
  %2079 = vmatpush2.bf16.msra.mxu0 %v1215
  %2080 = vmatprep.subr.bf16.mxu0 0
  %2081 = vmatpush2.bf16.msra.mxu0 %v1202
  %2082 = vmatprep.mubr.bf16.mxu0 %v43
  %2083 = vmatmul.mubr.bf16.gmra.mxu0 %v42
  %v2084 = vpop.f32.mrf.mxu0
  %v2085 = vadd.f32 %v352, %v2084
  %v2086 = vpop.f32.mrf.mxu0
  %v2087 = vpop.f32.mrf.mxu0
  %v2088 = vpop.f32.mrf.mxu0
  %2089 = vdwg.mxu0
  %2090 = vmatprep.subr.bf16.mxu0 0
  %2091 = vmatpush1.bf16.msra.mxu0 0
  %2092 = vmatprep.subr.bf16.mxu0 0
  %2093 = vmatpush1.bf16.msra.mxu0 0
  %2094 = vmatprep.subr.bf16.mxu0 0
  %2095 = vmatpush1.bf16.msra.mxu0 0
  %2096 = vmatprep.subr.bf16.mxu0 0
  %2097 = vmatpush1.bf16.msra.mxu0 0
  %2098 = vmatprep.subr.bf16.mxu0 0
  %2099 = vmatpush1.bf16.msra.mxu0 0
  %2100 = vmatprep.subr.bf16.mxu0 0
  %2101 = vmatpush1.bf16.msra.mxu0 0
  %2102 = vmatprep.subr.bf16.mxu0 0
  %2103 = vmatpush1.bf16.msra.mxu0 %v1319
  %2104 = vmatprep.subr.bf16.mxu0 0
  %2105 = vmatpush1.bf16.msra.mxu0 %v1306
  %2106 = vmatprep.subr.bf16.mxu0 0
  %2107 = vmatpush2.bf16.msra.mxu0 0
  %2108 = vmatprep.subr.bf16.mxu0 0
  %2109 = vmatpush2.bf16.msra.mxu0 0
  %2110 = vmatprep.subr.bf16.mxu0 0
  %2111 = vmatpush2.bf16.msra.mxu0 0
  %2112 = vmatprep.subr.bf16.mxu0 0
  %2113 = vmatpush2.bf16.msra.mxu0 0
  %2114 = vmatprep.subr.bf16.mxu0 0
  %2115 = vmatpush2.bf16.msra.mxu0 0
  %2116 = vmatprep.subr.bf16.mxu0 0
  %2117 = vmatpush2.bf16.msra.mxu0 0
  %2118 = vmatprep.subr.bf16.mxu0 0
  %2119 = vmatpush2.bf16.msra.mxu0 0
  %2120 = vmatprep.subr.bf16.mxu0 0
  %2121 = vmatpush2.bf16.msra.mxu0 0
  %2122 = vmatprep.mubr.bf16.mxu0 0
  %2123 = vmatmul.mubr.bf16.gmra.mxu0 %v1556
  %v2124 = vpop.f32.mrf.mxu0
  %v2125 = vadd.f32 %v2085, %v2124
  %v2126 = vpop.f32.mrf.mxu0
  %v2127 = vpop.f32.mrf.mxu0
  %v2128 = vpop.f32.mrf.mxu0
  %2129 = vdwg.mxu0
  %vm2130 = vcmask 1041408
  %v2131 = vsel %vm2130, %v1634, 0.0
  %v2132 = vsel %vm2130, %v1636, 0.0
  %v2133 = vadd.f32 %v2131, %v2132
  %v2134 = vsel %vm2130, %v1716, 0.0
  %v2135 = vadd.f32 %v2133, %v2134
  %v2136 = vsel %vm2130, %v1718, 0.0
  %v2137 = vadd.f32 %v2135, %v2136
  %v2138 = vsel %vm2130, %v1798, 0.0
  %v2139 = vadd.f32 %v2137, %v2138
  %v2140 = vsel %vm2130, %v1800, 0.0
  %v2141 = vadd.f32 %v2139, %v2140
  %v2142 = vsel %vm2130, %v1880, 0.0
  %v2143 = vadd.f32 %v2141, %v2142
  %v2144 = vsel %vm2130, %v1882, 0.0
  %v2145 = vadd.f32 %v2143, %v2144
  %v2146 = vsel %vm2130, %v1962, 0.0
  %v2147 = vadd.f32 %v2145, %v2146
  %v2148 = vsel %vm2130, %v1964, 0.0
  %v2149 = vadd.f32 %v2147, %v2148
  %v2150 = vsel %vm2130, %v2044, 0.0
  %v2151 = vadd.f32 %v2149, %v2150
  %v2152 = vsel %vm2130, %v2046, 0.0
  %v2153 = vadd.f32 %v2151, %v2152
  %vm2154 = vcmask 254976
  %v2155 = vsel %vm2154, %v2125, 0.0
  %v2156 = vadd.f32 %v2153, %v2155
  %2157 = vadd.xlane.f32.xlu0 %v2156
  %v2158 = vpop.xlane.xlu0 %2157
  %v2159 = vrcp.pop 1568.0
  %v2160 = vmul.f32 %v2158, %v2159
  %v2161 = vsub.f32 %v1634, %v2160
  %v2162 = vsub.f32 %v1636, %v2160
  %v2163 = vsub.f32 %v1716, %v2160
  %v2164 = vsub.f32 %v1718, %v2160
  %v2165 = vsub.f32 %v1798, %v2160
  %v2166 = vsub.f32 %v1800, %v2160
  %v2167 = vsub.f32 %v1880, %v2160
  %v2168 = vsub.f32 %v1882, %v2160
  %v2169 = vsub.f32 %v1962, %v2160
  %v2170 = vsub.f32 %v1964, %v2160
  %v2171 = vsub.f32 %v2044, %v2160
  %v2172 = vsub.f32 %v2046, %v2160
  %v2173 = vsub.f32 %v2125, %v2160
  %v2174 = vmul.f32 %v2161, %v2161
  %v2175 = vmul.f32 %v2162, %v2162
  %v2176 = vmul.f32 %v2163, %v2163
  %v2177 = vmul.f32 %v2164, %v2164
  %v2178 = vmul.f32 %v2165, %v2165
  %v2179 = vmul.f32 %v2166, %v2166
  %v2180 = vmul.f32 %v2167, %v2167
  %v2181 = vmul.f32 %v2168, %v2168
  %v2182 = vmul.f32 %v2169, %v2169
  %v2183 = vmul.f32 %v2170, %v2170
  %v2184 = vmul.f32 %v2171, %v2171
  %v2185 = vmul.f32 %v2172, %v2172
  %v2186 = vmul.f32 %v2173, %v2173
  %v2187 = vsel %vm2130, %v2174, 0.0
  %v2188 = vsel %vm2130, %v2175, 0.0
  %v2189 = vadd.f32 %v2187, %v2188
  %v2190 = vsel %vm2130, %v2176, 0.0
  %v2191 = vadd.f32 %v2189, %v2190
  %v2192 = vsel %vm2130, %v2177, 0.0
  %v2193 = vadd.f32 %v2191, %v2192
  %v2194 = vsel %vm2130, %v2178, 0.0
  %v2195 = vadd.f32 %v2193, %v2194
  %v2196 = vsel %vm2130, %v2179, 0.0
  %v2197 = vadd.f32 %v2195, %v2196
  %v2198 = vsel %vm2130, %v2180, 0.0
  %v2199 = vadd.f32 %v2197, %v2198
  %v2200 = vsel %vm2130, %v2181, 0.0
  %v2201 = vadd.f32 %v2199, %v2200
  %v2202 = vsel %vm2130, %v2182, 0.0
  %v2203 = vadd.f32 %v2201, %v2202
  %v2204 = vsel %vm2130, %v2183, 0.0
  %v2205 = vadd.f32 %v2203, %v2204
  %v2206 = vsel %vm2130, %v2184, 0.0
  %v2207 = vadd.f32 %v2205, %v2206
  %v2208 = vsel %vm2130, %v2185, 0.0
  %v2209 = vadd.f32 %v2207, %v2208
  %v2210 = vsel %vm2154, %v2186, 0.0
  %v2211 = vadd.f32 %v2209, %v2210
  %2212 = vadd.xlane.f32.xlu0 %v2211
  %v2213 = vpop.xlane.xlu0 %2212
  %v2214 = vmul.f32 %v2213, %v2159
  %v2215 = vadd.f32 %v2214, 1e-05
  %v2216 = vrsqrt.pop %v2215
  %v2217 = vmul.f32 %v2161, %v2216
  %v2218 = vmul.f32 %v2162, %v2216
  %v2219 = vmul.f32 %v2163, %v2216
  %v2220 = vmul.f32 %v2164, %v2216
  %v2221 = vmul.f32 %v2165, %v2216
  %v2222 = vmul.f32 %v2166, %v2216
  %v2223 = vmul.f32 %v2167, %v2216
  %v2224 = vmul.f32 %v2168, %v2216
  %v2225 = vmul.f32 %v2169, %v2216
  %v2226 = vmul.f32 %v2170, %v2216
  %v2227 = vmul.f32 %v2171, %v2216
  %v2228 = vmul.f32 %v2172, %v2216
  %v2229 = vmul.f32 %v2173, %v2216
  %v2230 = vld [vmem:[%s3] sm:$0xff]
  %v2231 = vld [vmem:[%s3 + $0x8] sm:$0x1f]
  %v2234 = vlaneseq
  %v2235 = vshrl.u32 %v2234, 7
  %v2236 = vsub.s32 0, %v2235
  %v2237 = vrot.slane %v2230, %v2236
  %v2238 = vlaneseq
  %v2239 = vshrl.u32 %v2238, 7
  %v2240 = vsub.s32 1, %v2239
  %v2241 = vrot.slane %v2230, %v2240
  %v2242 = vlaneseq
  %v2243 = vshrl.u32 %v2242, 7
  %v2244 = vsub.s32 2, %v2243
  %v2245 = vrot.slane %v2230, %v2244
  %v2246 = vlaneseq
  %v2247 = vshrl.u32 %v2246, 7
  %v2248 = vsub.s32 3, %v2247
  %v2249 = vrot.slane %v2230, %v2248
  %v2250 = vlaneseq
  %v2251 = vshrl.u32 %v2250, 7
  %v2252 = vsub.s32 4, %v2251
  %v2253 = vrot.slane %v2230, %v2252
  %v2254 = vlaneseq
  %v2255 = vshrl.u32 %v2254, 7
  %v2256 = vsub.s32 5, %v2255
  %v2257 = vrot.slane %v2230, %v2256
  %v2258 = vlaneseq
  %v2259 = vshrl.u32 %v2258, 7
  %v2260 = vsub.s32 6, %v2259
  %v2261 = vrot.slane %v2230, %v2260
  %v2262 = vlaneseq
  %v2263 = vshrl.u32 %v2262, 7
  %v2264 = vsub.s32 7, %v2263
  %v2265 = vrot.slane %v2230, %v2264
  %v2266 = vlaneseq
  %v2267 = vshrl.u32 %v2266, 7
  %v2268 = vsub.s32 0, %v2267
  %v2269 = vrot.slane %v2231, %v2268
  %v2270 = vlaneseq
  %v2271 = vshrl.u32 %v2270, 7
  %v2272 = vsub.s32 1, %v2271
  %v2273 = vrot.slane %v2231, %v2272
  %v2274 = vlaneseq
  %v2275 = vshrl.u32 %v2274, 7
  %v2276 = vsub.s32 2, %v2275
  %v2277 = vrot.slane %v2231, %v2276
  %v2278 = vlaneseq
  %v2279 = vshrl.u32 %v2278, 7
  %v2280 = vsub.s32 3, %v2279
  %v2281 = vrot.slane %v2231, %v2280
  %v2282 = vlaneseq
  %v2283 = vshrl.u32 %v2282, 7
  %v2284 = vsub.s32 4, %v2283
  %v2285 = vrot.slane %v2231, %v2284
  %v2299 = vmul.f32 %v2217, %v2237
  %v2300 = vmul.f32 %v2218, %v2241
  %v2301 = vmul.f32 %v2219, %v2245
  %v2302 = vmul.f32 %v2220, %v2249
  %v2303 = vmul.f32 %v2221, %v2253
  %v2304 = vmul.f32 %v2222, %v2257
  %v2305 = vmul.f32 %v2223, %v2261
  %v2306 = vmul.f32 %v2224, %v2265
  %v2307 = vmul.f32 %v2225, %v2269
  %v2308 = vmul.f32 %v2226, %v2273
  %v2309 = vmul.f32 %v2227, %v2277
  %v2310 = vmul.f32 %v2228, %v2281
  %v2311 = vmul.f32 %v2229, %v2285
  %v2312 = vld [vmem:[%s4] sm:$0xff]
  %v2313 = vld [vmem:[%s4 + $0x8] sm:$0x1f]
  %v2316 = vlaneseq
  %v2317 = vshrl.u32 %v2316, 7
  %v2318 = vsub.s32 0, %v2317
  %v2319 = vrot.slane %v2312, %v2318
  %v2320 = vlaneseq
  %v2321 = vshrl.u32 %v2320, 7
  %v2322 = vsub.s32 1, %v2321
  %v2323 = vrot.slane %v2312, %v2322
  %v2324 = vlaneseq
  %v2325 = vshrl.u32 %v2324, 7
  %v2326 = vsub.s32 2, %v2325
  %v2327 = vrot.slane %v2312, %v2326
  %v2328 = vlaneseq
  %v2329 = vshrl.u32 %v2328, 7
  %v2330 = vsub.s32 3, %v2329
  %v2331 = vrot.slane %v2312, %v2330
  %v2332 = vlaneseq
  %v2333 = vshrl.u32 %v2332, 7
  %v2334 = vsub.s32 4, %v2333
  %v2335 = vrot.slane %v2312, %v2334
  %v2336 = vlaneseq
  %v2337 = vshrl.u32 %v2336, 7
  %v2338 = vsub.s32 5, %v2337
  %v2339 = vrot.slane %v2312, %v2338
  %v2340 = vlaneseq
  %v2341 = vshrl.u32 %v2340, 7
  %v2342 = vsub.s32 6, %v2341
  %v2343 = vrot.slane %v2312, %v2342
  %v2344 = vlaneseq
  %v2345 = vshrl.u32 %v2344, 7
  %v2346 = vsub.s32 7, %v2345
  %v2347 = vrot.slane %v2312, %v2346
  %v2348 = vlaneseq
  %v2349 = vshrl.u32 %v2348, 7
  %v2350 = vsub.s32 0, %v2349
  %v2351 = vrot.slane %v2313, %v2350
  %v2352 = vlaneseq
  %v2353 = vshrl.u32 %v2352, 7
  %v2354 = vsub.s32 1, %v2353
  %v2355 = vrot.slane %v2313, %v2354
  %v2356 = vlaneseq
  %v2357 = vshrl.u32 %v2356, 7
  %v2358 = vsub.s32 2, %v2357
  %v2359 = vrot.slane %v2313, %v2358
  %v2360 = vlaneseq
  %v2361 = vshrl.u32 %v2360, 7
  %v2362 = vsub.s32 3, %v2361
  %v2363 = vrot.slane %v2313, %v2362
  %v2364 = vlaneseq
  %v2365 = vshrl.u32 %v2364, 7
  %v2366 = vsub.s32 4, %v2365
  %v2367 = vrot.slane %v2313, %v2366
  %v2381 = vadd.f32 %v2299, %v2319
  %v2382 = vadd.f32 %v2300, %v2323
  %v2383 = vadd.f32 %v2301, %v2327
  %v2384 = vadd.f32 %v2302, %v2331
  %v2385 = vadd.f32 %v2303, %v2335
  %v2386 = vadd.f32 %v2304, %v2339
  %v2387 = vadd.f32 %v2305, %v2343
  %v2388 = vadd.f32 %v2306, %v2347
  %v2389 = vadd.f32 %v2307, %v2351
  %v2390 = vadd.f32 %v2308, %v2355
  %v2391 = vadd.f32 %v2309, %v2359
  %v2392 = vadd.f32 %v2310, %v2363
  %v2393 = vadd.f32 %v2311, %v2367
  %v2394 = vmax.f32 %v2381, 0.0
  %v2395 = vmax.f32 %v2382, 0.0
  %v2396 = vmax.f32 %v2383, 0.0
  %v2397 = vmax.f32 %v2384, 0.0
  %v2398 = vmax.f32 %v2385, 0.0
  %v2399 = vmax.f32 %v2386, 0.0
  %v2400 = vmax.f32 %v2387, 0.0
  %v2401 = vmax.f32 %v2388, 0.0
  %v2402 = vmax.f32 %v2389, 0.0
  %v2403 = vmax.f32 %v2390, 0.0
  %v2404 = vmax.f32 %v2391, 0.0
  %v2405 = vmax.f32 %v2392, 0.0
  %v2406 = vmax.f32 %v2393, 0.0
  %v2420 = vcombine.low %v2394, %v2395
  %v2421 = vcombine.low %v2396, %v2397
  %v2423 = vunpack.c.l.s4 1983009808
  %v2424 = vunpack.c.0.s8 %v2423
  %v2425 = vlaneseq
  %v2426 = vshrl.u32 %v2425, 7
  %v2427 = vsub.s32 %v2424, %v2426
  %v2428 = vrot.slane %v2420, %v2427
  %v2430 = vunpack.c.l.s4 1983009808
  %v2431 = vunpack.c.0.s8 %v2430
  %v2432 = vlaneseq
  %v2433 = vshrl.u32 %v2432, 7
  %v2434 = vsub.s32 %v2431, %v2433
  %v2435 = vrot.slane %v2421, %v2434
  %v2436 = vcombine.low %v2428, %v2435
  %v2437 = vcombine.low %v2398, %v2399
  %v2438 = vcombine.low %v2400, %v2401
  %v2440 = vunpack.c.l.s4 1983009808
  %v2441 = vunpack.c.0.s8 %v2440
  %v2442 = vlaneseq
  %v2443 = vshrl.u32 %v2442, 7
  %v2444 = vsub.s32 %v2441, %v2443
  %v2445 = vrot.slane %v2437, %v2444
  %v2447 = vunpack.c.l.s4 1983009808
  %v2448 = vunpack.c.0.s8 %v2447
  %v2449 = vlaneseq
  %v2450 = vshrl.u32 %v2449, 7
  %v2451 = vsub.s32 %v2448, %v2450
  %v2452 = vrot.slane %v2438, %v2451
  %v2453 = vcombine.low %v2445, %v2452
  %v2454 = vcombine.low %v2402, %v2403
  %v2455 = vcombine.low %v2404, %v2405
  %v2457 = vunpack.c.l.s4 1983009808
  %v2458 = vunpack.c.0.s8 %v2457
  %v2459 = vlaneseq
  %v2460 = vshrl.u32 %v2459, 7
  %v2461 = vsub.s32 %v2458, %v2460
  %v2462 = vrot.slane %v2454, %v2461
  %v2464 = vunpack.c.l.s4 1983009808
  %v2465 = vunpack.c.0.s8 %v2464
  %v2466 = vlaneseq
  %v2467 = vshrl.u32 %v2466, 7
  %v2468 = vsub.s32 %v2465, %v2467
  %v2469 = vrot.slane %v2455, %v2468
  %v2470 = vcombine.low %v2462, %v2469
  %v2472 = vunpack.c.l.s4 1983009808
  %v2473 = vunpack.c.0.s8 %v2472
  %v2474 = vlaneseq
  %v2475 = vshrl.u32 %v2474, 7
  %v2476 = vsub.s32 %v2473, %v2475
  %v2477 = vrot.slane %v2406, %v2476
  %2482 = vst [vmem:[%s5] sm:$0xff] %v2436
  %2483 = vst [vmem:[%s5 + $0x8] sm:$0xff] %v2453
  %2484 = vst [vmem:[%s5 + $0x10] sm:$0xff] %v2470
  %2485 = vst.msk [vmem:[%s5 + $0x18] sm:$0x3] %vm2154, %v2477
  // Predicated region
  $region22: #{_lambda_.8} parent=0 // pred_check
    _
  $region23: #{_lambda_.8} parent=0 // pred_check_branch
    %2487 = sbr.rel (0) target = $region25
  $region24: #{_lambda_.8} parent=0 // pred_region
    _
  $region25: #{_lambda_.8} parent=0 // pred_fallthru
    _
  // Predicated region
  $region26: #{_lambda_.8} parent=0 // pred_check
    _
  $region27: #{_lambda_.8} parent=0 // pred_check_branch
    %2489 = sbr.rel (0) target = $region29
  $region28: #{_lambda_.8} parent=0 // pred_region
    _
  $region29: #{_lambda_.8} parent=0 // pred_fallthru
    _

// kernel: _lambda_.9
$region0: #{_lambda_.9}
  #allocation0 [shape = 'u32[]', space=smem, size = 0x4, offset = 0x4, fixed_abs, tag = 'smem constant byte address 0x4 - core index']
  #allocation1 [shape = 'u32[144,128]{1,0:T(1,128)}', space=vmem, size = 0x12000, scoped, tag = 'internal scratch']
  %s0 = inlined_call_operand.vmem [shape: f32[2,1568], index: 0, kind: input, shape index: {}]
  %s1 = inlined_call_operand.vmem [shape: bf16[1568,1024], index: 1, kind: input, shape index: {}]
  %s2 = inlined_call_operand.vmem [shape: f32[1,1024], index: 2, kind: input, shape index: {}]
  %s3 = inlined_call_operand.vmem [shape: f32[2,1024], index: 3, kind: output, shape index: {}]
  %s4 = sld [smem:[#allocation0]]
  $region22: #{_lambda_.9} parent=0
    _
  %s6 = ssub.s32 1, %s4
  %s7 = scalar_select 0, %s6, %s4
  // Predicated region
  $region2: #{_lambda_.9} parent=0 // pred_check
    _
  $region3: #{_lambda_.9} parent=0 // pred_check_branch
    %9 = sbr.rel (0) target = $region5
  $region4: #{_lambda_.9} parent=0 // pred_region
    _
  $region5: #{_lambda_.9} parent=0 // pred_fallthru
    _
  // Predicated region
  $region6: #{_lambda_.9} parent=0 // pred_check
    _
  $region7: #{_lambda_.9} parent=0 // pred_check_branch
    %11 = sbr.rel (0) target = $region9
  $region8: #{_lambda_.9} parent=0 // pred_region
    _
  $region9: #{_lambda_.9} parent=0 // pred_fallthru
    _
  // Predicated region
  $region10: #{_lambda_.9} parent=0 // pred_check
    _
  $region11: #{_lambda_.9} parent=0 // pred_check_branch
    %13 = sbr.rel (0) target = $region13
  $region12: #{_lambda_.9} parent=0 // pred_region
    _
  $region13: #{_lambda_.9} parent=0 // pred_fallthru
    _
  %v15 = vld [vmem:[%s0] sm:$0xff]
  %v16 = vld [vmem:[%s0 + $0x8] sm:$0xff]
  %v17 = vld [vmem:[%s0 + $0x10] sm:$0xff]
  %v18 = vld [vmem:[%s0 + $0x18] sm:$0x3]
  %v23 = vcombine.high %v15, %v15
  %v25 = vunpack.c.l.s4 1983009808
  %v26 = vunpack.c.0.s8 %v25
  %v27 = vlaneseq
  %v28 = vshrl.u32 %v27, 7
  %v29 = vsub.s32 %v26, %v28
  %v30 = vrot.slane %v15, %v29
  %v32 = vunpack.c.l.s4 1983009808
  %v33 = vunpack.c.0.s8 %v32
  %v34 = vlaneseq
  %v35 = vshrl.u32 %v34, 7
  %v36 = vsub.s32 %v33, %v35
  %v37 = vrot.slane %v23, %v36
  %v38 = vcombine.high %v30, %v30
  %v39 = vcombine.high %v37, %v37
  %v40 = vcombine.high %v16, %v16
  %v42 = vunpack.c.l.s4 1983009808
  %v43 = vunpack.c.0.s8 %v42
  %v44 = vlaneseq
  %v45 = vshrl.u32 %v44, 7
  %v46 = vsub.s32 %v43, %v45
  %v47 = vrot.slane %v16, %v46
  %v49 = vunpack.c.l.s4 1983009808
  %v50 = vunpack.c.0.s8 %v49
  %v51 = vlaneseq
  %v52 = vshrl.u32 %v51, 7
  %v53 = vsub.s32 %v50, %v52
  %v54 = vrot.slane %v40, %v53
  %v55 = vcombine.high %v47, %v47
  %v56 = vcombine.high %v54, %v54
  %v57 = vcombine.high %v17, %v17
  %v59 = vunpack.c.l.s4 1983009808
  %v60 = vunpack.c.0.s8 %v59
  %v61 = vlaneseq
  %v62 = vshrl.u32 %v61, 7
  %v63 = vsub.s32 %v60, %v62
  %v64 = vrot.slane %v17, %v63
  %v66 = vunpack.c.l.s4 1983009808
  %v67 = vunpack.c.0.s8 %v66
  %v68 = vlaneseq
  %v69 = vshrl.u32 %v68, 7
  %v70 = vsub.s32 %v67, %v69
  %v71 = vrot.slane %v57, %v70
  %v72 = vcombine.high %v64, %v64
  %v73 = vcombine.high %v71, %v71
  %v75 = vunpack.c.l.s4 1983009808
  %v76 = vunpack.c.0.s8 %v75
  %v77 = vlaneseq
  %v78 = vshrl.u32 %v77, 7
  %v79 = vsub.s32 %v76, %v78
  %v80 = vrot.slane %v18, %v79
  %v94 = vpack.c.bf16 %v30, %v30
  %v95 = vpack.c.bf16 %v38, %v38
  %v96 = vpack.c.bf16 %v37, %v37
  %v97 = vpack.c.bf16 %v39, %v39
  %v98 = vpack.c.bf16 %v47, %v47
  %v99 = vpack.c.bf16 %v55, %v55
  %v100 = vpack.c.bf16 %v54, %v54
  %v101 = vpack.c.bf16 %v56, %v56
  %v102 = vpack.c.bf16 %v64, %v64
  %v103 = vpack.c.bf16 %v72, %v72
  %v104 = vpack.c.bf16 %v71, %v71
  %v105 = vpack.c.bf16 %v73, %v73
  %v106 = vpack.c.bf16 %v80, %v80
  %v107 = vld [vmem:[%s1] sm:$0xff]
  %v108 = vld [vmem:[%s1 + $0x8] sm:$0xff]
  %v109 = vld [vmem:[%s1 + $0x10] sm:$0xff]
  %v110 = vld [vmem:[%s1 + $0x18] sm:$0xff]
  %v111 = vld [vmem:[%s1 + $0x20] sm:$0xff]
  %v112 = vld [vmem:[%s1 + $0x28] sm:$0xff]
  %v113 = vld [vmem:[%s1 + $0x30] sm:$0xff]
  %v114 = vld [vmem:[%s1 + $0x38] sm:$0xff]
  %v115 = vld [vmem:[%s1 + $0x40] sm:$0xff]
  %v116 = vld [vmem:[%s1 + $0x48] sm:$0xff]
  %v117 = vld [vmem:[%s1 + $0x50] sm:$0xff]
  %v118 = vld [vmem:[%s1 + $0x58] sm:$0xff]
  %v119 = vld [vmem:[%s1 + $0x60] sm:$0xff]
  %v120 = vld [vmem:[%s1 + $0x68] sm:$0xff]
  %v121 = vld [vmem:[%s1 + $0x70] sm:$0xff]
  %v122 = vld [vmem:[%s1 + $0x78] sm:$0xff]
  %v123 = vld [vmem:[%s1 + $0x80] sm:$0xff]
  %v124 = vld [vmem:[%s1 + $0x88] sm:$0xff]
  %v125 = vld [vmem:[%s1 + $0x90] sm:$0xff]
  %v126 = vld [vmem:[%s1 + $0x98] sm:$0xff]
  %v127 = vld [vmem:[%s1 + $0xa0] sm:$0xff]
  %v128 = vld [vmem:[%s1 + $0xa8] sm:$0xff]
  %v129 = vld [vmem:[%s1 + $0xb0] sm:$0xff]
  %v130 = vld [vmem:[%s1 + $0xb8] sm:$0xff]
  %v131 = vld [vmem:[%s1 + $0xc0] sm:$0xff]
  %v132 = vld [vmem:[%s1 + $0xc8] sm:$0xff]
  %v133 = vld [vmem:[%s1 + $0xd0] sm:$0xff]
  %v134 = vld [vmem:[%s1 + $0xd8] sm:$0xff]
  %v135 = vld [vmem:[%s1 + $0xe0] sm:$0xff]
  %v136 = vld [vmem:[%s1 + $0xe8] sm:$0xff]
  %v137 = vld [vmem:[%s1 + $0xf0] sm:$0xff]
  %v138 = vld [vmem:[%s1 + $0xf8] sm:$0xff]
  %v139 = vld [vmem:[%s1 + $0x100] sm:$0xff]
  %v140 = vld [vmem:[%s1 + $0x108] sm:$0xff]
  %v141 = vld [vmem:[%s1 + $0x110] sm:$0xff]
  %v142 = vld [vmem:[%s1 + $0x118] sm:$0xff]
  %v143 = vld [vmem:[%s1 + $0x120] sm:$0xff]
  %v144 = vld [vmem:[%s1 + $0x128] sm:$0xff]
  %v145 = vld [vmem:[%s1 + $0x130] sm:$0xff]
  %v146 = vld [vmem:[%s1 + $0x138] sm:$0xff]
  %v147 = vld [vmem:[%s1 + $0x140] sm:$0xff]
  %v148 = vld [vmem:[%s1 + $0x148] sm:$0xff]
  %v149 = vld [vmem:[%s1 + $0x150] sm:$0xff]
  %v150 = vld [vmem:[%s1 + $0x158] sm:$0xff]
  %v151 = vld [vmem:[%s1 + $0x160] sm:$0xff]
  %v152 = vld [vmem:[%s1 + $0x168] sm:$0xff]
  %v153 = vld [vmem:[%s1 + $0x170] sm:$0xff]
  %v154 = vld [vmem:[%s1 + $0x178] sm:$0xff]
  %v155 = vld [vmem:[%s1 + $0x180] sm:$0xff]
  %v156 = vld [vmem:[%s1 + $0x188] sm:$0xff]
  %v157 = vld [vmem:[%s1 + $0x190] sm:$0xff]
  %v158 = vld [vmem:[%s1 + $0x198] sm:$0xff]
  %v159 = vld [vmem:[%s1 + $0x1a0] sm:$0xff]
  %v160 = vld [vmem:[%s1 + $0x1a8] sm:$0xff]
  %v161 = vld [vmem:[%s1 + $0x1b0] sm:$0xff]
  %v162 = vld [vmem:[%s1 + $0x1b8] sm:$0xff]
  %v163 = vld [vmem:[%s1 + $0x1c0] sm:$0xff]
  %v164 = vld [vmem:[%s1 + $0x1c8] sm:$0xff]
  %v165 = vld [vmem:[%s1 + $0x1d0] sm:$0xff]
  %v166 = vld [vmem:[%s1 + $0x1d8] sm:$0xff]
  %v167 = vld [vmem:[%s1 + $0x1e0] sm:$0xff]
  %v168 = vld [vmem:[%s1 + $0x1e8] sm:$0xff]
  %v169 = vld [vmem:[%s1 + $0x1f0] sm:$0xff]
  %v170 = vld [vmem:[%s1 + $0x1f8] sm:$0xff]
  %v171 = vld [vmem:[%s1 + $0x200] sm:$0xff]
  %v172 = vld [vmem:[%s1 + $0x208] sm:$0xff]
  %v173 = vld [vmem:[%s1 + $0x210] sm:$0xff]
  %v174 = vld [vmem:[%s1 + $0x218] sm:$0xff]
  %v175 = vld [vmem:[%s1 + $0x220] sm:$0xff]
  %v176 = vld [vmem:[%s1 + $0x228] sm:$0xff]
  %v177 = vld [vmem:[%s1 + $0x230] sm:$0xff]
  %v178 = vld [vmem:[%s1 + $0x238] sm:$0xff]
  %v179 = vld [vmem:[%s1 + $0x240] sm:$0xff]
  %v180 = vld [vmem:[%s1 + $0x248] sm:$0xff]
  %v181 = vld [vmem:[%s1 + $0x250] sm:$0xff]
  %v182 = vld [vmem:[%s1 + $0x258] sm:$0xff]
  %v183 = vld [vmem:[%s1 + $0x260] sm:$0xff]
  %v184 = vld [vmem:[%s1 + $0x268] sm:$0xff]
  %v185 = vld [vmem:[%s1 + $0x270] sm:$0xff]
  %v186 = vld [vmem:[%s1 + $0x278] sm:$0xff]
  %v187 = vld [vmem:[%s1 + $0x280] sm:$0xff]
  %v188 = vld [vmem:[%s1 + $0x288] sm:$0xff]
  %v189 = vld [vmem:[%s1 + $0x290] sm:$0xff]
  %v190 = vld [vmem:[%s1 + $0x298] sm:$0xff]
  %v191 = vld [vmem:[%s1 + $0x2a0] sm:$0xff]
  %v192 = vld [vmem:[%s1 + $0x2a8] sm:$0xff]
  %v193 = vld [vmem:[%s1 + $0x2b0] sm:$0xff]
  %v194 = vld [vmem:[%s1 + $0x2b8] sm:$0xff]
  %v195 = vld [vmem:[%s1 + $0x2c0] sm:$0xff]
  %v196 = vld [vmem:[%s1 + $0x2c8] sm:$0xff]
  %v197 = vld [vmem:[%s1 + $0x2d0] sm:$0xff]
  %v198 = vld [vmem:[%s1 + $0x2d8] sm:$0xff]
  %v199 = vld [vmem:[%s1 + $0x2e0] sm:$0xff]
  %v200 = vld [vmem:[%s1 + $0x2e8] sm:$0xff]
  %v201 = vld [vmem:[%s1 + $0x2f0] sm:$0xff]
  %v202 = vld [vmem:[%s1 + $0x2f8] sm:$0xff]
  %v203 = vld [vmem:[%s1 + $0x300] sm:$0xff]
  %v204 = vld [vmem:[%s1 + $0x308] sm:$0xff]
  %v205 = vld [vmem:[%s1 + $0x310] sm:$0xff]
  %v206 = vld [vmem:[%s1 + $0x318] sm:$0xff]
  %v207 = vld [vmem:[%s1 + $0x320] sm:$0xff]
  %v208 = vld [vmem:[%s1 + $0x328] sm:$0xff]
  %v209 = vld [vmem:[%s1 + $0x330] sm:$0xff]
  %v210 = vld [vmem:[%s1 + $0x338] sm:$0xff]
  %v211 = vld [vmem:[%s1 + $0x340] sm:$0xff]
  %v212 = vld [vmem:[%s1 + $0x348] sm:$0xff]
  %v213 = vld [vmem:[%s1 + $0x350] sm:$0xff]
  %v214 = vld [vmem:[%s1 + $0x358] sm:$0xff]
  %v215 = vld [vmem:[%s1 + $0x360] sm:$0xff]
  %v216 = vld [vmem:[%s1 + $0x368] sm:$0xff]
  %v217 = vld [vmem:[%s1 + $0x370] sm:$0xff]
  %v218 = vld [vmem:[%s1 + $0x378] sm:$0xff]
  %v219 = vld [vmem:[%s1 + $0x380] sm:$0xff]
  %v220 = vld [vmem:[%s1 + $0x388] sm:$0xff]
  %v221 = vld [vmem:[%s1 + $0x390] sm:$0xff]
  %v222 = vld [vmem:[%s1 + $0x398] sm:$0xff]
  %v223 = vld [vmem:[%s1 + $0x3a0] sm:$0xff]
  %v224 = vld [vmem:[%s1 + $0x3a8] sm:$0xff]
  %v225 = vld [vmem:[%s1 + $0x3b0] sm:$0xff]
  %v226 = vld [vmem:[%s1 + $0x3b8] sm:$0xff]
  %v227 = vld [vmem:[%s1 + $0x3c0] sm:$0xff]
  %v228 = vld [vmem:[%s1 + $0x3c8] sm:$0xff]
  %v229 = vld [vmem:[%s1 + $0x3d0] sm:$0xff]
  %v230 = vld [vmem:[%s1 + $0x3d8] sm:$0xff]
  %v231 = vld [vmem:[%s1 + $0x3e0] sm:$0xff]
  %v232 = vld [vmem:[%s1 + $0x3e8] sm:$0xff]
  %v233 = vld [vmem:[%s1 + $0x3f0] sm:$0xff]
  %v234 = vld [vmem:[%s1 + $0x3f8] sm:$0xff]
  %v235 = vld [vmem:[%s1 + $0x400] sm:$0xff]
  %v236 = vld [vmem:[%s1 + $0x408] sm:$0xff]
  %v237 = vld [vmem:[%s1 + $0x410] sm:$0xff]
  %v238 = vld [vmem:[%s1 + $0x418] sm:$0xff]
  %v239 = vld [vmem:[%s1 + $0x420] sm:$0xff]
  %v240 = vld [vmem:[%s1 + $0x428] sm:$0xff]
  %v241 = vld [vmem:[%s1 + $0x430] sm:$0xff]
  %v242 = vld [vmem:[%s1 + $0x438] sm:$0xff]
  %v243 = vld [vmem:[%s1 + $0x440] sm:$0xff]
  %v244 = vld [vmem:[%s1 + $0x448] sm:$0xff]
  %v245 = vld [vmem:[%s1 + $0x450] sm:$0xff]
  %v246 = vld [vmem:[%s1 + $0x458] sm:$0xff]
  %v247 = vld [vmem:[%s1 + $0x460] sm:$0xff]
  %v248 = vld [vmem:[%s1 + $0x468] sm:$0xff]
  %v249 = vld [vmem:[%s1 + $0x470] sm:$0xff]
  %v250 = vld [vmem:[%s1 + $0x478] sm:$0xff]
  %v251 = vld [vmem:[%s1 + $0x480] sm:$0xff]
  %v252 = vld [vmem:[%s1 + $0x488] sm:$0xff]
  %v253 = vld [vmem:[%s1 + $0x490] sm:$0xff]
  %v254 = vld [vmem:[%s1 + $0x498] sm:$0xff]
  %v255 = vld [vmem:[%s1 + $0x4a0] sm:$0xff]
  %v256 = vld [vmem:[%s1 + $0x4a8] sm:$0xff]
  %v257 = vld [vmem:[%s1 + $0x4b0] sm:$0xff]
  %v258 = vld [vmem:[%s1 + $0x4b8] sm:$0xff]
  %v259 = vld [vmem:[%s1 + $0x4c0] sm:$0xff]
  %v260 = vld [vmem:[%s1 + $0x4c8] sm:$0xff]
  %v261 = vld [vmem:[%s1 + $0x4d0] sm:$0xff]
  %v262 = vld [vmem:[%s1 + $0x4d8] sm:$0xff]
  %v263 = vld [vmem:[%s1 + $0x4e0] sm:$0xff]
  %v264 = vld [vmem:[%s1 + $0x4e8] sm:$0xff]
  %v265 = vld [vmem:[%s1 + $0x4f0] sm:$0xff]
  %v266 = vld [vmem:[%s1 + $0x4f8] sm:$0xff]
  %v267 = vld [vmem:[%s1 + $0x500] sm:$0xff]
  %v268 = vld [vmem:[%s1 + $0x508] sm:$0xff]
  %v269 = vld [vmem:[%s1 + $0x510] sm:$0xff]
  %v270 = vld [vmem:[%s1 + $0x518] sm:$0xff]
  %v271 = vld [vmem:[%s1 + $0x520] sm:$0xff]
  %v272 = vld [vmem:[%s1 + $0x528] sm:$0xff]
  %v273 = vld [vmem:[%s1 + $0x530] sm:$0xff]
  %v274 = vld [vmem:[%s1 + $0x538] sm:$0xff]
  %v275 = vld [vmem:[%s1 + $0x540] sm:$0xff]
  %v276 = vld [vmem:[%s1 + $0x548] sm:$0xff]
  %v277 = vld [vmem:[%s1 + $0x550] sm:$0xff]
  %v278 = vld [vmem:[%s1 + $0x558] sm:$0xff]
  %v279 = vld [vmem:[%s1 + $0x560] sm:$0xff]
  %v280 = vld [vmem:[%s1 + $0x568] sm:$0xff]
  %v281 = vld [vmem:[%s1 + $0x570] sm:$0xff]
  %v282 = vld [vmem:[%s1 + $0x578] sm:$0xff]
  %v283 = vld [vmem:[%s1 + $0x580] sm:$0xff]
  %v284 = vld [vmem:[%s1 + $0x588] sm:$0xff]
  %v285 = vld [vmem:[%s1 + $0x590] sm:$0xff]
  %v286 = vld [vmem:[%s1 + $0x598] sm:$0xff]
  %v287 = vld [vmem:[%s1 + $0x5a0] sm:$0xff]
  %v288 = vld [vmem:[%s1 + $0x5a8] sm:$0xff]
  %v289 = vld [vmem:[%s1 + $0x5b0] sm:$0xff]
  %v290 = vld [vmem:[%s1 + $0x5b8] sm:$0xff]
  %v291 = vld [vmem:[%s1 + $0x5c0] sm:$0xff]
  %v292 = vld [vmem:[%s1 + $0x5c8] sm:$0xff]
  %v293 = vld [vmem:[%s1 + $0x5d0] sm:$0xff]
  %v294 = vld [vmem:[%s1 + $0x5d8] sm:$0xff]
  %v295 = vld [vmem:[%s1 + $0x5e0] sm:$0xff]
  %v296 = vld [vmem:[%s1 + $0x5e8] sm:$0xff]
  %v297 = vld [vmem:[%s1 + $0x5f0] sm:$0xff]
  %v298 = vld [vmem:[%s1 + $0x5f8] sm:$0xff]
  %v299 = vld [vmem:[%s1 + $0x600] sm:$0xff]
  %v300 = vld [vmem:[%s1 + $0x608] sm:$0xff]
  %v301 = vld [vmem:[%s1 + $0x610] sm:$0xff]
  %v302 = vld [vmem:[%s1 + $0x618] sm:$0xff]
  %v303 = vld [vmem:[%s1 + $0x620] sm:$0xff]
  %v304 = vld [vmem:[%s1 + $0x628] sm:$0xff]
  %v305 = vld [vmem:[%s1 + $0x630] sm:$0xff]
  %v306 = vld [vmem:[%s1 + $0x638] sm:$0xff]
  %v307 = vld [vmem:[%s1 + $0x640] sm:$0xff]
  %v308 = vld [vmem:[%s1 + $0x648] sm:$0xff]
  %v309 = vld [vmem:[%s1 + $0x650] sm:$0xff]
  %v310 = vld [vmem:[%s1 + $0x658] sm:$0xff]
  %v311 = vld [vmem:[%s1 + $0x660] sm:$0xff]
  %v312 = vld [vmem:[%s1 + $0x668] sm:$0xff]
  %v313 = vld [vmem:[%s1 + $0x670] sm:$0xff]
  %v314 = vld [vmem:[%s1 + $0x678] sm:$0xff]
  %v315 = vld [vmem:[%s1 + $0x680] sm:$0xff]
  %v316 = vld [vmem:[%s1 + $0x688] sm:$0xff]
  %v317 = vld [vmem:[%s1 + $0x690] sm:$0xff]
  %v318 = vld [vmem:[%s1 + $0x698] sm:$0xff]
  %v319 = vld [vmem:[%s1 + $0x6a0] sm:$0xff]
  %v320 = vld [vmem:[%s1 + $0x6a8] sm:$0xff]
  %v321 = vld [vmem:[%s1 + $0x6b0] sm:$0xff]
  %v322 = vld [vmem:[%s1 + $0x6b8] sm:$0xff]
  %v323 = vld [vmem:[%s1 + $0x6c0] sm:$0xff]
  %v324 = vld [vmem:[%s1 + $0x6c8] sm:$0xff]
  %v325 = vld [vmem:[%s1 + $0x6d0] sm:$0xff]
  %v326 = vld [vmem:[%s1 + $0x6d8] sm:$0xff]
  %v327 = vld [vmem:[%s1 + $0x6e0] sm:$0xff]
  %v328 = vld [vmem:[%s1 + $0x6e8] sm:$0xff]
  %v329 = vld [vmem:[%s1 + $0x6f0] sm:$0xff]
  %v330 = vld [vmem:[%s1 + $0x6f8] sm:$0xff]
  %v331 = vld [vmem:[%s1 + $0x700] sm:$0xff]
  %v332 = vld [vmem:[%s1 + $0x708] sm:$0xff]
  %v333 = vld [vmem:[%s1 + $0x710] sm:$0xff]
  %v334 = vld [vmem:[%s1 + $0x718] sm:$0xff]
  %v335 = vld [vmem:[%s1 + $0x720] sm:$0xff]
  %v336 = vld [vmem:[%s1 + $0x728] sm:$0xff]
  %v337 = vld [vmem:[%s1 + $0x730] sm:$0xff]
  %v338 = vld [vmem:[%s1 + $0x738] sm:$0xff]
  %v339 = vld [vmem:[%s1 + $0x740] sm:$0xff]
  %v340 = vld [vmem:[%s1 + $0x748] sm:$0xff]
  %v341 = vld [vmem:[%s1 + $0x750] sm:$0xff]
  %v342 = vld [vmem:[%s1 + $0x758] sm:$0xff]
  %v343 = vld [vmem:[%s1 + $0x760] sm:$0xff]
  %v344 = vld [vmem:[%s1 + $0x768] sm:$0xff]
  %v345 = vld [vmem:[%s1 + $0x770] sm:$0xff]
  %v346 = vld [vmem:[%s1 + $0x778] sm:$0xff]
  %v347 = vld [vmem:[%s1 + $0x780] sm:$0xff]
  %v348 = vld [vmem:[%s1 + $0x788] sm:$0xff]
  %v349 = vld [vmem:[%s1 + $0x790] sm:$0xff]
  %v350 = vld [vmem:[%s1 + $0x798] sm:$0xff]
  %v351 = vld [vmem:[%s1 + $0x7a0] sm:$0xff]
  %v352 = vld [vmem:[%s1 + $0x7a8] sm:$0xff]
  %v353 = vld [vmem:[%s1 + $0x7b0] sm:$0xff]
  %v354 = vld [vmem:[%s1 + $0x7b8] sm:$0xff]
  %v355 = vld [vmem:[%s1 + $0x7c0] sm:$0xff]
  %v356 = vld [vmem:[%s1 + $0x7c8] sm:$0xff]
  %v357 = vld [vmem:[%s1 + $0x7d0] sm:$0xff]
  %v358 = vld [vmem:[%s1 + $0x7d8] sm:$0xff]
  %v359 = vld [vmem:[%s1 + $0x7e0] sm:$0xff]
  %v360 = vld [vmem:[%s1 + $0x7e8] sm:$0xff]
  %v361 = vld [vmem:[%s1 + $0x7f0] sm:$0xff]
  %v362 = vld [vmem:[%s1 + $0x7f8] sm:$0xff]
  %v363 = vld [vmem:[%s1 + $0x800] sm:$0xff]
  %v364 = vld [vmem:[%s1 + $0x808] sm:$0xff]
  %v365 = vld [vmem:[%s1 + $0x810] sm:$0xff]
  %v366 = vld [vmem:[%s1 + $0x818] sm:$0xff]
  %v367 = vld [vmem:[%s1 + $0x820] sm:$0xff]
  %v368 = vld [vmem:[%s1 + $0x828] sm:$0xff]
  %v369 = vld [vmem:[%s1 + $0x830] sm:$0xff]
  %v370 = vld [vmem:[%s1 + $0x838] sm:$0xff]
  %v371 = vld [vmem:[%s1 + $0x840] sm:$0xff]
  %v372 = vld [vmem:[%s1 + $0x848] sm:$0xff]
  %v373 = vld [vmem:[%s1 + $0x850] sm:$0xff]
  %v374 = vld [vmem:[%s1 + $0x858] sm:$0xff]
  %v375 = vld [vmem:[%s1 + $0x860] sm:$0xff]
  %v376 = vld [vmem:[%s1 + $0x868] sm:$0xff]
  %v377 = vld [vmem:[%s1 + $0x870] sm:$0xff]
  %v378 = vld [vmem:[%s1 + $0x878] sm:$0xff]
  %v379 = vld [vmem:[%s1 + $0x880] sm:$0xff]
  %v380 = vld [vmem:[%s1 + $0x888] sm:$0xff]
  %v381 = vld [vmem:[%s1 + $0x890] sm:$0xff]
  %v382 = vld [vmem:[%s1 + $0x898] sm:$0xff]
  %v383 = vld [vmem:[%s1 + $0x8a0] sm:$0xff]
  %v384 = vld [vmem:[%s1 + $0x8a8] sm:$0xff]
  %v385 = vld [vmem:[%s1 + $0x8b0] sm:$0xff]
  %v386 = vld [vmem:[%s1 + $0x8b8] sm:$0xff]
  %v387 = vld [vmem:[%s1 + $0x8c0] sm:$0xff]
  %v388 = vld [vmem:[%s1 + $0x8c8] sm:$0xff]
  %v389 = vld [vmem:[%s1 + $0x8d0] sm:$0xff]
  %v390 = vld [vmem:[%s1 + $0x8d8] sm:$0xff]
  %v391 = vld [vmem:[%s1 + $0x8e0] sm:$0xff]
  %v392 = vld [vmem:[%s1 + $0x8e8] sm:$0xff]
  %v393 = vld [vmem:[%s1 + $0x8f0] sm:$0xff]
  %v394 = vld [vmem:[%s1 + $0x8f8] sm:$0xff]
  %v395 = vld [vmem:[%s1 + $0x900] sm:$0xff]
  %v396 = vld [vmem:[%s1 + $0x908] sm:$0xff]
  %v397 = vld [vmem:[%s1 + $0x910] sm:$0xff]
  %v398 = vld [vmem:[%s1 + $0x918] sm:$0xff]
  %v399 = vld [vmem:[%s1 + $0x920] sm:$0xff]
  %v400 = vld [vmem:[%s1 + $0x928] sm:$0xff]
  %v401 = vld [vmem:[%s1 + $0x930] sm:$0xff]
  %v402 = vld [vmem:[%s1 + $0x938] sm:$0xff]
  %v403 = vld [vmem:[%s1 + $0x940] sm:$0xff]
  %v404 = vld [vmem:[%s1 + $0x948] sm:$0xff]
  %v405 = vld [vmem:[%s1 + $0x950] sm:$0xff]
  %v406 = vld [vmem:[%s1 + $0x958] sm:$0xff]
  %v407 = vld [vmem:[%s1 + $0x960] sm:$0xff]
  %v408 = vld [vmem:[%s1 + $0x968] sm:$0xff]
  %v409 = vld [vmem:[%s1 + $0x970] sm:$0xff]
  %v410 = vld [vmem:[%s1 + $0x978] sm:$0xff]
  %v411 = vld [vmem:[%s1 + $0x980] sm:$0xff]
  %v412 = vld [vmem:[%s1 + $0x988] sm:$0xff]
  %v413 = vld [vmem:[%s1 + $0x990] sm:$0xff]
  %v414 = vld [vmem:[%s1 + $0x998] sm:$0xff]
  %v415 = vld [vmem:[%s1 + $0x9a0] sm:$0xff]
  %v416 = vld [vmem:[%s1 + $0x9a8] sm:$0xff]
  %v417 = vld [vmem:[%s1 + $0x9b0] sm:$0xff]
  %v418 = vld [vmem:[%s1 + $0x9b8] sm:$0xff]
  %v419 = vld [vmem:[%s1 + $0x9c0] sm:$0xff]
  %v420 = vld [vmem:[%s1 + $0x9c8] sm:$0xff]
  %v421 = vld [vmem:[%s1 + $0x9d0] sm:$0xff]
  %v422 = vld [vmem:[%s1 + $0x9d8] sm:$0xff]
  %v423 = vld [vmem:[%s1 + $0x9e0] sm:$0xff]
  %v424 = vld [vmem:[%s1 + $0x9e8] sm:$0xff]
  %v425 = vld [vmem:[%s1 + $0x9f0] sm:$0xff]
  %v426 = vld [vmem:[%s1 + $0x9f8] sm:$0xff]
  %v427 = vld [vmem:[%s1 + $0xa00] sm:$0xff]
  %v428 = vld [vmem:[%s1 + $0xa08] sm:$0xff]
  %v429 = vld [vmem:[%s1 + $0xa10] sm:$0xff]
  %v430 = vld [vmem:[%s1 + $0xa18] sm:$0xff]
  %v431 = vld [vmem:[%s1 + $0xa20] sm:$0xff]
  %v432 = vld [vmem:[%s1 + $0xa28] sm:$0xff]
  %v433 = vld [vmem:[%s1 + $0xa30] sm:$0xff]
  %v434 = vld [vmem:[%s1 + $0xa38] sm:$0xff]
  %v435 = vld [vmem:[%s1 + $0xa40] sm:$0xff]
  %v436 = vld [vmem:[%s1 + $0xa48] sm:$0xff]
  %v437 = vld [vmem:[%s1 + $0xa50] sm:$0xff]
  %v438 = vld [vmem:[%s1 + $0xa58] sm:$0xff]
  %v439 = vld [vmem:[%s1 + $0xa60] sm:$0xff]
  %v440 = vld [vmem:[%s1 + $0xa68] sm:$0xff]
  %v441 = vld [vmem:[%s1 + $0xa70] sm:$0xff]
  %v442 = vld [vmem:[%s1 + $0xa78] sm:$0xff]
  %v443 = vld [vmem:[%s1 + $0xa80] sm:$0xff]
  %v444 = vld [vmem:[%s1 + $0xa88] sm:$0xff]
  %v445 = vld [vmem:[%s1 + $0xa90] sm:$0xff]
  %v446 = vld [vmem:[%s1 + $0xa98] sm:$0xff]
  %v447 = vld [vmem:[%s1 + $0xaa0] sm:$0xff]
  %v448 = vld [vmem:[%s1 + $0xaa8] sm:$0xff]
  %v449 = vld [vmem:[%s1 + $0xab0] sm:$0xff]
  %v450 = vld [vmem:[%s1 + $0xab8] sm:$0xff]
  %v451 = vld [vmem:[%s1 + $0xac0] sm:$0xff]
  %v452 = vld [vmem:[%s1 + $0xac8] sm:$0xff]
  %v453 = vld [vmem:[%s1 + $0xad0] sm:$0xff]
  %v454 = vld [vmem:[%s1 + $0xad8] sm:$0xff]
  %v455 = vld [vmem:[%s1 + $0xae0] sm:$0xff]
  %v456 = vld [vmem:[%s1 + $0xae8] sm:$0xff]
  %v457 = vld [vmem:[%s1 + $0xaf0] sm:$0xff]
  %v458 = vld [vmem:[%s1 + $0xaf8] sm:$0xff]
  %v459 = vld [vmem:[%s1 + $0xb00] sm:$0xff]
  %v460 = vld [vmem:[%s1 + $0xb08] sm:$0xff]
  %v461 = vld [vmem:[%s1 + $0xb10] sm:$0xff]
  %v462 = vld [vmem:[%s1 + $0xb18] sm:$0xff]
  %v463 = vld [vmem:[%s1 + $0xb20] sm:$0xff]
  %v464 = vld [vmem:[%s1 + $0xb28] sm:$0xff]
  %v465 = vld [vmem:[%s1 + $0xb30] sm:$0xff]
  %v466 = vld [vmem:[%s1 + $0xb38] sm:$0xff]
  %v467 = vld [vmem:[%s1 + $0xb40] sm:$0xff]
  %v468 = vld [vmem:[%s1 + $0xb48] sm:$0xff]
  %v469 = vld [vmem:[%s1 + $0xb50] sm:$0xff]
  %v470 = vld [vmem:[%s1 + $0xb58] sm:$0xff]
  %v471 = vld [vmem:[%s1 + $0xb60] sm:$0xff]
  %v472 = vld [vmem:[%s1 + $0xb68] sm:$0xff]
  %v473 = vld [vmem:[%s1 + $0xb70] sm:$0xff]
  %v474 = vld [vmem:[%s1 + $0xb78] sm:$0xff]
  %v475 = vld [vmem:[%s1 + $0xb80] sm:$0xff]
  %v476 = vld [vmem:[%s1 + $0xb88] sm:$0xff]
  %v477 = vld [vmem:[%s1 + $0xb90] sm:$0xff]
  %v478 = vld [vmem:[%s1 + $0xb98] sm:$0xff]
  %v479 = vld [vmem:[%s1 + $0xba0] sm:$0xff]
  %v480 = vld [vmem:[%s1 + $0xba8] sm:$0xff]
  %v481 = vld [vmem:[%s1 + $0xbb0] sm:$0xff]
  %v482 = vld [vmem:[%s1 + $0xbb8] sm:$0xff]
  %v483 = vld [vmem:[%s1 + $0xbc0] sm:$0xff]
  %v484 = vld [vmem:[%s1 + $0xbc8] sm:$0xff]
  %v485 = vld [vmem:[%s1 + $0xbd0] sm:$0xff]
  %v486 = vld [vmem:[%s1 + $0xbd8] sm:$0xff]
  %v487 = vld [vmem:[%s1 + $0xbe0] sm:$0xff]
  %v488 = vld [vmem:[%s1 + $0xbe8] sm:$0xff]
  %v489 = vld [vmem:[%s1 + $0xbf0] sm:$0xff]
  %v490 = vld [vmem:[%s1 + $0xbf8] sm:$0xff]
  %v491 = vld [vmem:[%s1 + $0xc00] sm:$0xff]
  %v492 = vld [vmem:[%s1 + $0xc08] sm:$0xff]
  %v493 = vld [vmem:[%s1 + $0xc10] sm:$0xff]
  %v494 = vld [vmem:[%s1 + $0xc18] sm:$0xff]
  %v495 = vld [vmem:[%s1 + $0xc20] sm:$0xff]
  %v496 = vld [vmem:[%s1 + $0xc28] sm:$0xff]
  %v497 = vld [vmem:[%s1 + $0xc30] sm:$0xff]
  %v498 = vld [vmem:[%s1 + $0xc38] sm:$0xff]
  %v499 = vld [vmem:[%s1 + $0xc40] sm:$0xff]
  %v500 = vld [vmem:[%s1 + $0xc48] sm:$0xff]
  %v501 = vld [vmem:[%s1 + $0xc50] sm:$0xff]
  %v502 = vld [vmem:[%s1 + $0xc58] sm:$0xff]
  %v503 = vld [vmem:[%s1 + $0xc60] sm:$0xff]
  %v504 = vld [vmem:[%s1 + $0xc68] sm:$0xff]
  %v505 = vld [vmem:[%s1 + $0xc70] sm:$0xff]
  %v506 = vld [vmem:[%s1 + $0xc78] sm:$0xff]
  %v507 = vld [vmem:[%s1 + $0xc80] sm:$0xff]
  %v508 = vld [vmem:[%s1 + $0xc88] sm:$0xff]
  %v509 = vld [vmem:[%s1 + $0xc90] sm:$0xff]
  %v510 = vld [vmem:[%s1 + $0xc98] sm:$0xff]
  %v511 = vld [vmem:[%s1 + $0xca0] sm:$0xff]
  %v512 = vld [vmem:[%s1 + $0xca8] sm:$0xff]
  %v513 = vld [vmem:[%s1 + $0xcb0] sm:$0xff]
  %v514 = vld [vmem:[%s1 + $0xcb8] sm:$0xff]
  %v515 = vld [vmem:[%s1 + $0xcc0] sm:$0xff]
  %v516 = vld [vmem:[%s1 + $0xcc8] sm:$0xff]
  %v517 = vld [vmem:[%s1 + $0xcd0] sm:$0xff]
  %v518 = vld [vmem:[%s1 + $0xcd8] sm:$0xff]
  %v519 = vld [vmem:[%s1 + $0xce0] sm:$0xff]
  %v520 = vld [vmem:[%s1 + $0xce8] sm:$0xff]
  %v521 = vld [vmem:[%s1 + $0xcf0] sm:$0xff]
  %v522 = vld [vmem:[%s1 + $0xcf8] sm:$0xff]
  %v523 = vld [vmem:[%s1 + $0xd00] sm:$0xff]
  %v524 = vld [vmem:[%s1 + $0xd08] sm:$0xff]
  %v525 = vld [vmem:[%s1 + $0xd10] sm:$0xff]
  %v526 = vld [vmem:[%s1 + $0xd18] sm:$0xff]
  %v527 = vld [vmem:[%s1 + $0xd20] sm:$0xff]
  %v528 = vld [vmem:[%s1 + $0xd28] sm:$0xff]
  %v529 = vld [vmem:[%s1 + $0xd30] sm:$0xff]
  %v530 = vld [vmem:[%s1 + $0xd38] sm:$0xff]
  %v531 = vld [vmem:[%s1 + $0xd40] sm:$0xff]
  %v532 = vld [vmem:[%s1 + $0xd48] sm:$0xff]
  %v533 = vld [vmem:[%s1 + $0xd50] sm:$0xff]
  %v534 = vld [vmem:[%s1 + $0xd58] sm:$0xff]
  %v535 = vld [vmem:[%s1 + $0xd60] sm:$0xff]
  %v536 = vld [vmem:[%s1 + $0xd68] sm:$0xff]
  %v537 = vld [vmem:[%s1 + $0xd70] sm:$0xff]
  %v538 = vld [vmem:[%s1 + $0xd78] sm:$0xff]
  %v539 = vld [vmem:[%s1 + $0xd80] sm:$0xff]
  %v540 = vld [vmem:[%s1 + $0xd88] sm:$0xff]
  %v541 = vld [vmem:[%s1 + $0xd90] sm:$0xff]
  %v542 = vld [vmem:[%s1 + $0xd98] sm:$0xff]
  %v543 = vld [vmem:[%s1 + $0xda0] sm:$0xff]
  %v544 = vld [vmem:[%s1 + $0xda8] sm:$0xff]
  %v545 = vld [vmem:[%s1 + $0xdb0] sm:$0xff]
  %v546 = vld [vmem:[%s1 + $0xdb8] sm:$0xff]
  %v547 = vld [vmem:[%s1 + $0xdc0] sm:$0xff]
  %v548 = vld [vmem:[%s1 + $0xdc8] sm:$0xff]
  %v549 = vld [vmem:[%s1 + $0xdd0] sm:$0xff]
  %v550 = vld [vmem:[%s1 + $0xdd8] sm:$0xff]
  %v551 = vld [vmem:[%s1 + $0xde0] sm:$0xff]
  %v552 = vld [vmem:[%s1 + $0xde8] sm:$0xff]
  %v553 = vld [vmem:[%s1 + $0xdf0] sm:$0xff]
  %v554 = vld [vmem:[%s1 + $0xdf8] sm:$0xff]
  %v555 = vld [vmem:[%s1 + $0xe00] sm:$0xff]
  %v556 = vld [vmem:[%s1 + $0xe08] sm:$0xff]
  %v557 = vld [vmem:[%s1 + $0xe10] sm:$0xff]
  %v558 = vld [vmem:[%s1 + $0xe18] sm:$0xff]
  %v559 = vld [vmem:[%s1 + $0xe20] sm:$0xff]
  %v560 = vld [vmem:[%s1 + $0xe28] sm:$0xff]
  %v561 = vld [vmem:[%s1 + $0xe30] sm:$0xff]
  %v562 = vld [vmem:[%s1 + $0xe38] sm:$0xff]
  %v563 = vld [vmem:[%s1 + $0xe40] sm:$0xff]
  %v564 = vld [vmem:[%s1 + $0xe48] sm:$0xff]
  %v565 = vld [vmem:[%s1 + $0xe50] sm:$0xff]
  %v566 = vld [vmem:[%s1 + $0xe58] sm:$0xff]
  %v567 = vld [vmem:[%s1 + $0xe60] sm:$0xff]
  %v568 = vld [vmem:[%s1 + $0xe68] sm:$0xff]
  %v569 = vld [vmem:[%s1 + $0xe70] sm:$0xff]
  %v570 = vld [vmem:[%s1 + $0xe78] sm:$0xff]
  %v571 = vld [vmem:[%s1 + $0xe80] sm:$0xff]
  %v572 = vld [vmem:[%s1 + $0xe88] sm:$0xff]
  %v573 = vld [vmem:[%s1 + $0xe90] sm:$0xff]
  %v574 = vld [vmem:[%s1 + $0xe98] sm:$0xff]
  %v575 = vld [vmem:[%s1 + $0xea0] sm:$0xff]
  %v576 = vld [vmem:[%s1 + $0xea8] sm:$0xff]
  %v577 = vld [vmem:[%s1 + $0xeb0] sm:$0xff]
  %v578 = vld [vmem:[%s1 + $0xeb8] sm:$0xff]
  %v579 = vld [vmem:[%s1 + $0xec0] sm:$0xff]
  %v580 = vld [vmem:[%s1 + $0xec8] sm:$0xff]
  %v581 = vld [vmem:[%s1 + $0xed0] sm:$0xff]
  %v582 = vld [vmem:[%s1 + $0xed8] sm:$0xff]
  %v583 = vld [vmem:[%s1 + $0xee0] sm:$0xff]
  %v584 = vld [vmem:[%s1 + $0xee8] sm:$0xff]
  %v585 = vld [vmem:[%s1 + $0xef0] sm:$0xff]
  %v586 = vld [vmem:[%s1 + $0xef8] sm:$0xff]
  %v587 = vld [vmem:[%s1 + $0xf00] sm:$0xff]
  %v588 = vld [vmem:[%s1 + $0xf08] sm:$0xff]
  %v589 = vld [vmem:[%s1 + $0xf10] sm:$0xff]
  %v590 = vld [vmem:[%s1 + $0xf18] sm:$0xff]
  %v591 = vld [vmem:[%s1 + $0xf20] sm:$0xff]
  %v592 = vld [vmem:[%s1 + $0xf28] sm:$0xff]
  %v593 = vld [vmem:[%s1 + $0xf30] sm:$0xff]
  %v594 = vld [vmem:[%s1 + $0xf38] sm:$0xff]
  %v595 = vld [vmem:[%s1 + $0xf40] sm:$0xff]
  %v596 = vld [vmem:[%s1 + $0xf48] sm:$0xff]
  %v597 = vld [vmem:[%s1 + $0xf50] sm:$0xff]
  %v598 = vld [vmem:[%s1 + $0xf58] sm:$0xff]
  %v599 = vld [vmem:[%s1 + $0xf60] sm:$0xff]
  %v600 = vld [vmem:[%s1 + $0xf68] sm:$0xff]
  %v601 = vld [vmem:[%s1 + $0xf70] sm:$0xff]
  %v602 = vld [vmem:[%s1 + $0xf78] sm:$0xff]
  %v603 = vld [vmem:[%s1 + $0xf80] sm:$0xff]
  %v604 = vld [vmem:[%s1 + $0xf88] sm:$0xff]
  %v605 = vld [vmem:[%s1 + $0xf90] sm:$0xff]
  %v606 = vld [vmem:[%s1 + $0xf98] sm:$0xff]
  %v607 = vld [vmem:[%s1 + $0xfa0] sm:$0xff]
  %v608 = vld [vmem:[%s1 + $0xfa8] sm:$0xff]
  %v609 = vld [vmem:[%s1 + $0xfb0] sm:$0xff]
  %v610 = vld [vmem:[%s1 + $0xfb8] sm:$0xff]
  %v611 = vld [vmem:[%s1 + $0xfc0] sm:$0xff]
  %v612 = vld [vmem:[%s1 + $0xfc8] sm:$0xff]
  %v613 = vld [vmem:[%s1 + $0xfd0] sm:$0xff]
  %v614 = vld [vmem:[%s1 + $0xfd8] sm:$0xff]
  %v615 = vld [vmem:[%s1 + $0xfe0] sm:$0xff]
  %v616 = vld [vmem:[%s1 + $0xfe8] sm:$0xff]
  %v617 = vld [vmem:[%s1 + $0xff0] sm:$0xff]
  %v618 = vld [vmem:[%s1 + $0xff8] sm:$0xff]
  %v619 = vld [vmem:[%s1 + $0x1000] sm:$0xff]
  %v620 = vld [vmem:[%s1 + $0x1008] sm:$0xff]
  %v621 = vld [vmem:[%s1 + $0x1010] sm:$0xff]
  %v622 = vld [vmem:[%s1 + $0x1018] sm:$0xff]
  %v623 = vld [vmem:[%s1 + $0x1020] sm:$0xff]
  %v624 = vld [vmem:[%s1 + $0x1028] sm:$0xff]
  %v625 = vld [vmem:[%s1 + $0x1030] sm:$0xff]
  %v626 = vld [vmem:[%s1 + $0x1038] sm:$0xff]
  %v627 = vld [vmem:[%s1 + $0x1040] sm:$0xff]
  %v628 = vld [vmem:[%s1 + $0x1048] sm:$0xff]
  %v629 = vld [vmem:[%s1 + $0x1050] sm:$0xff]
  %v630 = vld [vmem:[%s1 + $0x1058] sm:$0xff]
  %v631 = vld [vmem:[%s1 + $0x1060] sm:$0xff]
  %v632 = vld [vmem:[%s1 + $0x1068] sm:$0xff]
  %v633 = vld [vmem:[%s1 + $0x1070] sm:$0xff]
  %v634 = vld [vmem:[%s1 + $0x1078] sm:$0xff]
  %v635 = vld [vmem:[%s1 + $0x1080] sm:$0xff]
  %v636 = vld [vmem:[%s1 + $0x1088] sm:$0xff]
  %v637 = vld [vmem:[%s1 + $0x1090] sm:$0xff]
  %v638 = vld [vmem:[%s1 + $0x1098] sm:$0xff]
  %v639 = vld [vmem:[%s1 + $0x10a0] sm:$0xff]
  %v640 = vld [vmem:[%s1 + $0x10a8] sm:$0xff]
  %v641 = vld [vmem:[%s1 + $0x10b0] sm:$0xff]
  %v642 = vld [vmem:[%s1 + $0x10b8] sm:$0xff]
  %v643 = vld [vmem:[%s1 + $0x10c0] sm:$0xff]
  %v644 = vld [vmem:[%s1 + $0x10c8] sm:$0xff]
  %v645 = vld [vmem:[%s1 + $0x10d0] sm:$0xff]
  %v646 = vld [vmem:[%s1 + $0x10d8] sm:$0xff]
  %v647 = vld [vmem:[%s1 + $0x10e0] sm:$0xff]
  %v648 = vld [vmem:[%s1 + $0x10e8] sm:$0xff]
  %v649 = vld [vmem:[%s1 + $0x10f0] sm:$0xff]
  %v650 = vld [vmem:[%s1 + $0x10f8] sm:$0xff]
  %v651 = vld [vmem:[%s1 + $0x1100] sm:$0xff]
  %v652 = vld [vmem:[%s1 + $0x1108] sm:$0xff]
  %v653 = vld [vmem:[%s1 + $0x1110] sm:$0xff]
  %v654 = vld [vmem:[%s1 + $0x1118] sm:$0xff]
  %v655 = vld [vmem:[%s1 + $0x1120] sm:$0xff]
  %v656 = vld [vmem:[%s1 + $0x1128] sm:$0xff]
  %v657 = vld [vmem:[%s1 + $0x1130] sm:$0xff]
  %v658 = vld [vmem:[%s1 + $0x1138] sm:$0xff]
  %v659 = vld [vmem:[%s1 + $0x1140] sm:$0xff]
  %v660 = vld [vmem:[%s1 + $0x1148] sm:$0xff]
  %v661 = vld [vmem:[%s1 + $0x1150] sm:$0xff]
  %v662 = vld [vmem:[%s1 + $0x1158] sm:$0xff]
  %v663 = vld [vmem:[%s1 + $0x1160] sm:$0xff]
  %v664 = vld [vmem:[%s1 + $0x1168] sm:$0xff]
  %v665 = vld [vmem:[%s1 + $0x1170] sm:$0xff]
  %v666 = vld [vmem:[%s1 + $0x1178] sm:$0xff]
  %v667 = vld [vmem:[%s1 + $0x1180] sm:$0xff]
  %v668 = vld [vmem:[%s1 + $0x1188] sm:$0xff]
  %v669 = vld [vmem:[%s1 + $0x1190] sm:$0xff]
  %v670 = vld [vmem:[%s1 + $0x1198] sm:$0xff]
  %v671 = vld [vmem:[%s1 + $0x11a0] sm:$0xff]
  %v672 = vld [vmem:[%s1 + $0x11a8] sm:$0xff]
  %v673 = vld [vmem:[%s1 + $0x11b0] sm:$0xff]
  %v674 = vld [vmem:[%s1 + $0x11b8] sm:$0xff]
  %v675 = vld [vmem:[%s1 + $0x11c0] sm:$0xff]
  %v676 = vld [vmem:[%s1 + $0x11c8] sm:$0xff]
  %v677 = vld [vmem:[%s1 + $0x11d0] sm:$0xff]
  %v678 = vld [vmem:[%s1 + $0x11d8] sm:$0xff]
  %v679 = vld [vmem:[%s1 + $0x11e0] sm:$0xff]
  %v680 = vld [vmem:[%s1 + $0x11e8] sm:$0xff]
  %v681 = vld [vmem:[%s1 + $0x11f0] sm:$0xff]
  %v682 = vld [vmem:[%s1 + $0x11f8] sm:$0xff]
  %v683 = vld [vmem:[%s1 + $0x1200] sm:$0xff]
  %v684 = vld [vmem:[%s1 + $0x1208] sm:$0xff]
  %v685 = vld [vmem:[%s1 + $0x1210] sm:$0xff]
  %v686 = vld [vmem:[%s1 + $0x1218] sm:$0xff]
  %v687 = vld [vmem:[%s1 + $0x1220] sm:$0xff]
  %v688 = vld [vmem:[%s1 + $0x1228] sm:$0xff]
  %v689 = vld [vmem:[%s1 + $0x1230] sm:$0xff]
  %v690 = vld [vmem:[%s1 + $0x1238] sm:$0xff]
  %v691 = vld [vmem:[%s1 + $0x1240] sm:$0xff]
  %v692 = vld [vmem:[%s1 + $0x1248] sm:$0xff]
  %v693 = vld [vmem:[%s1 + $0x1250] sm:$0xff]
  %v694 = vld [vmem:[%s1 + $0x1258] sm:$0xff]
  %v695 = vld [vmem:[%s1 + $0x1260] sm:$0xff]
  %v696 = vld [vmem:[%s1 + $0x1268] sm:$0xff]
  %v697 = vld [vmem:[%s1 + $0x1270] sm:$0xff]
  %v698 = vld [vmem:[%s1 + $0x1278] sm:$0xff]
  %v699 = vld [vmem:[%s1 + $0x1280] sm:$0xff]
  %v700 = vld [vmem:[%s1 + $0x1288] sm:$0xff]
  %v701 = vld [vmem:[%s1 + $0x1290] sm:$0xff]
  %v702 = vld [vmem:[%s1 + $0x1298] sm:$0xff]
  %v703 = vld [vmem:[%s1 + $0x12a0] sm:$0xff]
  %v704 = vld [vmem:[%s1 + $0x12a8] sm:$0xff]
  %v705 = vld [vmem:[%s1 + $0x12b0] sm:$0xff]
  %v706 = vld [vmem:[%s1 + $0x12b8] sm:$0xff]
  %v707 = vld [vmem:[%s1 + $0x12c0] sm:$0xff]
  %v708 = vld [vmem:[%s1 + $0x12c8] sm:$0xff]
  %v709 = vld [vmem:[%s1 + $0x12d0] sm:$0xff]
  %v710 = vld [vmem:[%s1 + $0x12d8] sm:$0xff]
  %v711 = vld [vmem:[%s1 + $0x12e0] sm:$0xff]
  %v712 = vld [vmem:[%s1 + $0x12e8] sm:$0xff]
  %v713 = vld [vmem:[%s1 + $0x12f0] sm:$0xff]
  %v714 = vld [vmem:[%s1 + $0x12f8] sm:$0xff]
  %v715 = vld [vmem:[%s1 + $0x1300] sm:$0xff]
  %v716 = vld [vmem:[%s1 + $0x1308] sm:$0xff]
  %v717 = vld [vmem:[%s1 + $0x1310] sm:$0xff]
  %v718 = vld [vmem:[%s1 + $0x1318] sm:$0xff]
  %v719 = vld [vmem:[%s1 + $0x1320] sm:$0xff]
  %v720 = vld [vmem:[%s1 + $0x1328] sm:$0xff]
  %v721 = vld [vmem:[%s1 + $0x1330] sm:$0xff]
  %v722 = vld [vmem:[%s1 + $0x1338] sm:$0xff]
  %v723 = vld [vmem:[%s1 + $0x1340] sm:$0xff]
  %v724 = vld [vmem:[%s1 + $0x1348] sm:$0xff]
  %v725 = vld [vmem:[%s1 + $0x1350] sm:$0xff]
  %v726 = vld [vmem:[%s1 + $0x1358] sm:$0xff]
  %v727 = vld [vmem:[%s1 + $0x1360] sm:$0xff]
  %v728 = vld [vmem:[%s1 + $0x1368] sm:$0xff]
  %v729 = vld [vmem:[%s1 + $0x1370] sm:$0xff]
  %v730 = vld [vmem:[%s1 + $0x1378] sm:$0xff]
  %v731 = vld [vmem:[%s1 + $0x1380] sm:$0xff]
  %v732 = vld [vmem:[%s1 + $0x1388] sm:$0xff]
  %v733 = vld [vmem:[%s1 + $0x1390] sm:$0xff]
  %v734 = vld [vmem:[%s1 + $0x1398] sm:$0xff]
  %v735 = vld [vmem:[%s1 + $0x13a0] sm:$0xff]
  %v736 = vld [vmem:[%s1 + $0x13a8] sm:$0xff]
  %v737 = vld [vmem:[%s1 + $0x13b0] sm:$0xff]
  %v738 = vld [vmem:[%s1 + $0x13b8] sm:$0xff]
  %v739 = vld [vmem:[%s1 + $0x13c0] sm:$0xff]
  %v740 = vld [vmem:[%s1 + $0x13c8] sm:$0xff]
  %v741 = vld [vmem:[%s1 + $0x13d0] sm:$0xff]
  %v742 = vld [vmem:[%s1 + $0x13d8] sm:$0xff]
  %v743 = vld [vmem:[%s1 + $0x13e0] sm:$0xff]
  %v744 = vld [vmem:[%s1 + $0x13e8] sm:$0xff]
  %v745 = vld [vmem:[%s1 + $0x13f0] sm:$0xff]
  %v746 = vld [vmem:[%s1 + $0x13f8] sm:$0xff]
  %v747 = vld [vmem:[%s1 + $0x1400] sm:$0xff]
  %v748 = vld [vmem:[%s1 + $0x1408] sm:$0xff]
  %v749 = vld [vmem:[%s1 + $0x1410] sm:$0xff]
  %v750 = vld [vmem:[%s1 + $0x1418] sm:$0xff]
  %v751 = vld [vmem:[%s1 + $0x1420] sm:$0xff]
  %v752 = vld [vmem:[%s1 + $0x1428] sm:$0xff]
  %v753 = vld [vmem:[%s1 + $0x1430] sm:$0xff]
  %v754 = vld [vmem:[%s1 + $0x1438] sm:$0xff]
  %v755 = vld [vmem:[%s1 + $0x1440] sm:$0xff]
  %v756 = vld [vmem:[%s1 + $0x1448] sm:$0xff]
  %v757 = vld [vmem:[%s1 + $0x1450] sm:$0xff]
  %v758 = vld [vmem:[%s1 + $0x1458] sm:$0xff]
  %v759 = vld [vmem:[%s1 + $0x1460] sm:$0xff]
  %v760 = vld [vmem:[%s1 + $0x1468] sm:$0xff]
  %v761 = vld [vmem:[%s1 + $0x1470] sm:$0xff]
  %v762 = vld [vmem:[%s1 + $0x1478] sm:$0xff]
  %v763 = vld [vmem:[%s1 + $0x1480] sm:$0xff]
  %v764 = vld [vmem:[%s1 + $0x1488] sm:$0xff]
  %v765 = vld [vmem:[%s1 + $0x1490] sm:$0xff]
  %v766 = vld [vmem:[%s1 + $0x1498] sm:$0xff]
  %v767 = vld [vmem:[%s1 + $0x14a0] sm:$0xff]
  %v768 = vld [vmem:[%s1 + $0x14a8] sm:$0xff]
  %v769 = vld [vmem:[%s1 + $0x14b0] sm:$0xff]
  %v770 = vld [vmem:[%s1 + $0x14b8] sm:$0xff]
  %v771 = vld [vmem:[%s1 + $0x14c0] sm:$0xff]
  %v772 = vld [vmem:[%s1 + $0x14c8] sm:$0xff]
  %v773 = vld [vmem:[%s1 + $0x14d0] sm:$0xff]
  %v774 = vld [vmem:[%s1 + $0x14d8] sm:$0xff]
  %v775 = vld [vmem:[%s1 + $0x14e0] sm:$0xff]
  %v776 = vld [vmem:[%s1 + $0x14e8] sm:$0xff]
  %v777 = vld [vmem:[%s1 + $0x14f0] sm:$0xff]
  %v778 = vld [vmem:[%s1 + $0x14f8] sm:$0xff]
  %v779 = vld [vmem:[%s1 + $0x1500] sm:$0xff]
  %v780 = vld [vmem:[%s1 + $0x1508] sm:$0xff]
  %v781 = vld [vmem:[%s1 + $0x1510] sm:$0xff]
  %v782 = vld [vmem:[%s1 + $0x1518] sm:$0xff]
  %v783 = vld [vmem:[%s1 + $0x1520] sm:$0xff]
  %v784 = vld [vmem:[%s1 + $0x1528] sm:$0xff]
  %v785 = vld [vmem:[%s1 + $0x1530] sm:$0xff]
  %v786 = vld [vmem:[%s1 + $0x1538] sm:$0xff]
  %v787 = vld [vmem:[%s1 + $0x1540] sm:$0xff]
  %v788 = vld [vmem:[%s1 + $0x1548] sm:$0xff]
  %v789 = vld [vmem:[%s1 + $0x1550] sm:$0xff]
  %v790 = vld [vmem:[%s1 + $0x1558] sm:$0xff]
  %v791 = vld [vmem:[%s1 + $0x1560] sm:$0xff]
  %v792 = vld [vmem:[%s1 + $0x1568] sm:$0xff]
  %v793 = vld [vmem:[%s1 + $0x1570] sm:$0xff]
  %v794 = vld [vmem:[%s1 + $0x1578] sm:$0xff]
  %v795 = vld [vmem:[%s1 + $0x1580] sm:$0xff]
  %v796 = vld [vmem:[%s1 + $0x1588] sm:$0xff]
  %v797 = vld [vmem:[%s1 + $0x1590] sm:$0xff]
  %v798 = vld [vmem:[%s1 + $0x1598] sm:$0xff]
  %v799 = vld [vmem:[%s1 + $0x15a0] sm:$0xff]
  %v800 = vld [vmem:[%s1 + $0x15a8] sm:$0xff]
  %v801 = vld [vmem:[%s1 + $0x15b0] sm:$0xff]
  %v802 = vld [vmem:[%s1 + $0x15b8] sm:$0xff]
  %v803 = vld [vmem:[%s1 + $0x15c0] sm:$0xff]
  %v804 = vld [vmem:[%s1 + $0x15c8] sm:$0xff]
  %v805 = vld [vmem:[%s1 + $0x15d0] sm:$0xff]
  %v806 = vld [vmem:[%s1 + $0x15d8] sm:$0xff]
  %v807 = vld [vmem:[%s1 + $0x15e0] sm:$0xff]
  %v808 = vld [vmem:[%s1 + $0x15e8] sm:$0xff]
  %v809 = vld [vmem:[%s1 + $0x15f0] sm:$0xff]
  %v810 = vld [vmem:[%s1 + $0x15f8] sm:$0xff]
  %v811 = vld [vmem:[%s1 + $0x1600] sm:$0xff]
  %v812 = vld [vmem:[%s1 + $0x1608] sm:$0xff]
  %v813 = vld [vmem:[%s1 + $0x1610] sm:$0xff]
  %v814 = vld [vmem:[%s1 + $0x1618] sm:$0xff]
  %v815 = vld [vmem:[%s1 + $0x1620] sm:$0xff]
  %v816 = vld [vmem:[%s1 + $0x1628] sm:$0xff]
  %v817 = vld [vmem:[%s1 + $0x1630] sm:$0xff]
  %v818 = vld [vmem:[%s1 + $0x1638] sm:$0xff]
  %v819 = vld [vmem:[%s1 + $0x1640] sm:$0xff]
  %v820 = vld [vmem:[%s1 + $0x1648] sm:$0xff]
  %v821 = vld [vmem:[%s1 + $0x1650] sm:$0xff]
  %v822 = vld [vmem:[%s1 + $0x1658] sm:$0xff]
  %v823 = vld [vmem:[%s1 + $0x1660] sm:$0xff]
  %v824 = vld [vmem:[%s1 + $0x1668] sm:$0xff]
  %v825 = vld [vmem:[%s1 + $0x1670] sm:$0xff]
  %v826 = vld [vmem:[%s1 + $0x1678] sm:$0xff]
  %v827 = vld [vmem:[%s1 + $0x1680] sm:$0xff]
  %v828 = vld [vmem:[%s1 + $0x1688] sm:$0xff]
  %v829 = vld [vmem:[%s1 + $0x1690] sm:$0xff]
  %v830 = vld [vmem:[%s1 + $0x1698] sm:$0xff]
  %v831 = vld [vmem:[%s1 + $0x16a0] sm:$0xff]
  %v832 = vld [vmem:[%s1 + $0x16a8] sm:$0xff]
  %v833 = vld [vmem:[%s1 + $0x16b0] sm:$0xff]
  %v834 = vld [vmem:[%s1 + $0x16b8] sm:$0xff]
  %v835 = vld [vmem:[%s1 + $0x16c0] sm:$0xff]
  %v836 = vld [vmem:[%s1 + $0x16c8] sm:$0xff]
  %v837 = vld [vmem:[%s1 + $0x16d0] sm:$0xff]
  %v838 = vld [vmem:[%s1 + $0x16d8] sm:$0xff]
  %v839 = vld [vmem:[%s1 + $0x16e0] sm:$0xff]
  %v840 = vld [vmem:[%s1 + $0x16e8] sm:$0xff]
  %v841 = vld [vmem:[%s1 + $0x16f0] sm:$0xff]
  %v842 = vld [vmem:[%s1 + $0x16f8] sm:$0xff]
  %v843 = vld [vmem:[%s1 + $0x1700] sm:$0xff]
  %v844 = vld [vmem:[%s1 + $0x1708] sm:$0xff]
  %v845 = vld [vmem:[%s1 + $0x1710] sm:$0xff]
  %v846 = vld [vmem:[%s1 + $0x1718] sm:$0xff]
  %v847 = vld [vmem:[%s1 + $0x1720] sm:$0xff]
  %v848 = vld [vmem:[%s1 + $0x1728] sm:$0xff]
  %v849 = vld [vmem:[%s1 + $0x1730] sm:$0xff]
  %v850 = vld [vmem:[%s1 + $0x1738] sm:$0xff]
  %v851 = vld [vmem:[%s1 + $0x1740] sm:$0xff]
  %v852 = vld [vmem:[%s1 + $0x1748] sm:$0xff]
  %v853 = vld [vmem:[%s1 + $0x1750] sm:$0xff]
  %v854 = vld [vmem:[%s1 + $0x1758] sm:$0xff]
  %v855 = vld [vmem:[%s1 + $0x1760] sm:$0xff]
  %v856 = vld [vmem:[%s1 + $0x1768] sm:$0xff]
  %v857 = vld [vmem:[%s1 + $0x1770] sm:$0xff]
  %v858 = vld [vmem:[%s1 + $0x1778] sm:$0xff]
  %v859 = vld [vmem:[%s1 + $0x1780] sm:$0xff]
  %v860 = vld [vmem:[%s1 + $0x1788] sm:$0xff]
  %v861 = vld [vmem:[%s1 + $0x1790] sm:$0xff]
  %v862 = vld [vmem:[%s1 + $0x1798] sm:$0xff]
  %v863 = vld [vmem:[%s1 + $0x17a0] sm:$0xff]
  %v864 = vld [vmem:[%s1 + $0x17a8] sm:$0xff]
  %v865 = vld [vmem:[%s1 + $0x17b0] sm:$0xff]
  %v866 = vld [vmem:[%s1 + $0x17b8] sm:$0xff]
  %v867 = vld [vmem:[%s1 + $0x17c0] sm:$0xff]
  %v868 = vld [vmem:[%s1 + $0x17c8] sm:$0xff]
  %v869 = vld [vmem:[%s1 + $0x17d0] sm:$0xff]
  %v870 = vld [vmem:[%s1 + $0x17d8] sm:$0xff]
  %v871 = vld [vmem:[%s1 + $0x17e0] sm:$0xff]
  %v872 = vld [vmem:[%s1 + $0x17e8] sm:$0xff]
  %v873 = vld [vmem:[%s1 + $0x17f0] sm:$0xff]
  %v874 = vld [vmem:[%s1 + $0x17f8] sm:$0xff]
  %v875 = vld [vmem:[%s1 + $0x1800] sm:$0xff]
  %v876 = vld [vmem:[%s1 + $0x1808] sm:$0xff]
  %v877 = vld [vmem:[%s1 + $0x1810] sm:$0xff]
  %v878 = vld [vmem:[%s1 + $0x1818] sm:$0xff]
  %v879 = vld [vmem:[%s1 + $0x1820] sm:$0xff]
  %v880 = vld [vmem:[%s1 + $0x1828] sm:$0xff]
  %v881 = vld [vmem:[%s1 + $0x1830] sm:$0xff]
  %v882 = vld [vmem:[%s1 + $0x1838] sm:$0xff]
  %v883 = vld [vmem:[%s1 + $0x1840] sm:$0xff]
  %v884 = vld [vmem:[%s1 + $0x1848] sm:$0xff]
  %v885 = vld [vmem:[%s1 + $0x1850] sm:$0xff]
  %v886 = vld [vmem:[%s1 + $0x1858] sm:$0xff]
  %v887 = vld [vmem:[%s1 + $0x1860] sm:$0xff]
  %v888 = vld [vmem:[%s1 + $0x1868] sm:$0xff]
  %v889 = vld [vmem:[%s1 + $0x1870] sm:$0xff]
  %v890 = vld [vmem:[%s1 + $0x1878] sm:$0xff]
  %v891 = vld [vmem:[%s2] sm:$0xff]
  %v893 = vlaneseq
  %v894 = vshrl.u32 %v893, 7
  %v895 = vsub.s32 0, %v894
  %v896 = vrot.slane %v891, %v895
  %v897 = vlaneseq
  %v898 = vshrl.u32 %v897, 7
  %v899 = vsub.s32 1, %v898
  %v900 = vrot.slane %v891, %v899
  %v901 = vlaneseq
  %v902 = vshrl.u32 %v901, 7
  %v903 = vsub.s32 2, %v902
  %v904 = vrot.slane %v891, %v903
  %v905 = vlaneseq
  %v906 = vshrl.u32 %v905, 7
  %v907 = vsub.s32 3, %v906
  %v908 = vrot.slane %v891, %v907
  %v909 = vlaneseq
  %v910 = vshrl.u32 %v909, 7
  %v911 = vsub.s32 4, %v910
  %v912 = vrot.slane %v891, %v911
  %v913 = vlaneseq
  %v914 = vshrl.u32 %v913, 7
  %v915 = vsub.s32 5, %v914
  %v916 = vrot.slane %v891, %v915
  %v917 = vlaneseq
  %v918 = vshrl.u32 %v917, 7
  %v919 = vsub.s32 6, %v918
  %v920 = vrot.slane %v891, %v919
  %v921 = vlaneseq
  %v922 = vshrl.u32 %v921, 7
  %v923 = vsub.s32 7, %v922
  %v924 = vrot.slane %v891, %v923
  %v1717 = vunpack.c.l.b16 %v107
  %v1718 = vunpack.c.h.b16 %v107
  %v1719 = vunpack.c.l.b16 %v108
  %v1720 = vunpack.c.h.b16 %v108
  %v1721 = vunpack.c.l.b16 %v109
  %v1722 = vunpack.c.h.b16 %v109
  %v1723 = vunpack.c.l.b16 %v110
  %v1724 = vunpack.c.h.b16 %v110
  %v1725 = vunpack.c.l.b16 %v111
  %v1726 = vunpack.c.h.b16 %v111
  %v1727 = vunpack.c.l.b16 %v112
  %v1728 = vunpack.c.h.b16 %v112
  %v1729 = vunpack.c.l.b16 %v113
  %v1730 = vunpack.c.h.b16 %v113
  %v1731 = vunpack.c.l.b16 %v114
  %v1732 = vunpack.c.h.b16 %v114
  %v1733 = vunpack.c.l.b16 %v115
  %v1734 = vunpack.c.h.b16 %v115
  %v1735 = vunpack.c.l.b16 %v116
  %v1736 = vunpack.c.h.b16 %v116
  %v1737 = vunpack.c.l.b16 %v117
  %v1738 = vunpack.c.h.b16 %v117
  %v1739 = vunpack.c.l.b16 %v118
  %v1740 = vunpack.c.h.b16 %v118
  %v1741 = vunpack.c.l.b16 %v119
  %v1742 = vunpack.c.h.b16 %v119
  %v1743 = vunpack.c.l.b16 %v120
  %v1744 = vunpack.c.h.b16 %v120
  %v1745 = vunpack.c.l.b16 %v121
  %v1746 = vunpack.c.h.b16 %v121
  %v1747 = vunpack.c.l.b16 %v122
  %v1748 = vunpack.c.h.b16 %v122
  %v1749 = vunpack.c.l.b16 %v123
  %v1750 = vunpack.c.h.b16 %v123
  %v1751 = vunpack.c.l.b16 %v124
  %v1752 = vunpack.c.h.b16 %v124
  %v1753 = vunpack.c.l.b16 %v125
  %v1754 = vunpack.c.h.b16 %v125
  %v1755 = vunpack.c.l.b16 %v126
  %v1756 = vunpack.c.h.b16 %v126
  %v1757 = vunpack.c.l.b16 %v127
  %v1758 = vunpack.c.h.b16 %v127
  %v1759 = vunpack.c.l.b16 %v128
  %v1760 = vunpack.c.h.b16 %v128
  %v1761 = vunpack.c.l.b16 %v129
  %v1762 = vunpack.c.h.b16 %v129
  %v1763 = vunpack.c.l.b16 %v130
  %v1764 = vunpack.c.h.b16 %v130
  %v1765 = vunpack.c.l.b16 %v131
  %v1766 = vunpack.c.h.b16 %v131
  %v1767 = vunpack.c.l.b16 %v132
  %v1768 = vunpack.c.h.b16 %v132
  %v1769 = vunpack.c.l.b16 %v133
  %v1770 = vunpack.c.h.b16 %v133
  %v1771 = vunpack.c.l.b16 %v134
  %v1772 = vunpack.c.h.b16 %v134
  %v1773 = vunpack.c.l.b16 %v135
  %v1774 = vunpack.c.h.b16 %v135
  %v1775 = vunpack.c.l.b16 %v136
  %v1776 = vunpack.c.h.b16 %v136
  %v1777 = vunpack.c.l.b16 %v137
  %v1778 = vunpack.c.h.b16 %v137
  %v1779 = vunpack.c.l.b16 %v138
  %v1780 = vunpack.c.h.b16 %v138
  %v1781 = vunpack.c.l.b16 %v139
  %v1782 = vunpack.c.h.b16 %v139
  %v1783 = vunpack.c.l.b16 %v140
  %v1784 = vunpack.c.h.b16 %v140
  %v1785 = vunpack.c.l.b16 %v141
  %v1786 = vunpack.c.h.b16 %v141
  %v1787 = vunpack.c.l.b16 %v142
  %v1788 = vunpack.c.h.b16 %v142
  %v1789 = vunpack.c.l.b16 %v143
  %v1790 = vunpack.c.h.b16 %v143
  %v1791 = vunpack.c.l.b16 %v144
  %v1792 = vunpack.c.h.b16 %v144
  %v1793 = vunpack.c.l.b16 %v145
  %v1794 = vunpack.c.h.b16 %v145
  %v1795 = vunpack.c.l.b16 %v146
  %v1796 = vunpack.c.h.b16 %v146
  %v1797 = vunpack.c.l.b16 %v147
  %v1798 = vunpack.c.h.b16 %v147
  %v1799 = vunpack.c.l.b16 %v148
  %v1800 = vunpack.c.h.b16 %v148
  %v1801 = vunpack.c.l.b16 %v149
  %v1802 = vunpack.c.h.b16 %v149
  %v1803 = vunpack.c.l.b16 %v150
  %v1804 = vunpack.c.h.b16 %v150
  %v1805 = vunpack.c.l.b16 %v151
  %v1806 = vunpack.c.h.b16 %v151
  %v1807 = vunpack.c.l.b16 %v152
  %v1808 = vunpack.c.h.b16 %v152
  %v1809 = vunpack.c.l.b16 %v153
  %v1810 = vunpack.c.h.b16 %v153
  %v1811 = vunpack.c.l.b16 %v154
  %v1812 = vunpack.c.h.b16 %v154
  %v1813 = vunpack.c.l.b16 %v155
  %v1814 = vunpack.c.h.b16 %v155
  %v1815 = vunpack.c.l.b16 %v156
  %v1816 = vunpack.c.h.b16 %v156
  %v1817 = vunpack.c.l.b16 %v157
  %v1818 = vunpack.c.h.b16 %v157
  %v1819 = vunpack.c.l.b16 %v158
  %v1820 = vunpack.c.h.b16 %v158
  %v1821 = vunpack.c.l.b16 %v159
  %v1822 = vunpack.c.h.b16 %v159
  %v1823 = vunpack.c.l.b16 %v160
  %v1824 = vunpack.c.h.b16 %v160
  %v1825 = vunpack.c.l.b16 %v161
  %v1826 = vunpack.c.h.b16 %v161
  %v1827 = vunpack.c.l.b16 %v162
  %v1828 = vunpack.c.h.b16 %v162
  %v1829 = vunpack.c.l.b16 %v163
  %v1830 = vunpack.c.h.b16 %v163
  %v1831 = vunpack.c.l.b16 %v164
  %v1832 = vunpack.c.h.b16 %v164
  %v1833 = vunpack.c.l.b16 %v165
  %v1834 = vunpack.c.h.b16 %v165
  %v1835 = vunpack.c.l.b16 %v166
  %v1836 = vunpack.c.h.b16 %v166
  %v1837 = vunpack.c.l.b16 %v167
  %v1838 = vunpack.c.h.b16 %v167
  %v1839 = vunpack.c.l.b16 %v168
  %v1840 = vunpack.c.h.b16 %v168
  %v1841 = vunpack.c.l.b16 %v169
  %v1842 = vunpack.c.h.b16 %v169
  %v1843 = vunpack.c.l.b16 %v170
  %v1844 = vunpack.c.h.b16 %v170
  %v1845 = vunpack.c.l.b16 %v171
  %v1846 = vunpack.c.h.b16 %v171
  %v1847 = vunpack.c.l.b16 %v172
  %v1848 = vunpack.c.h.b16 %v172
  %v1849 = vunpack.c.l.b16 %v173
  %v1850 = vunpack.c.h.b16 %v173
  %v1851 = vunpack.c.l.b16 %v174
  %v1852 = vunpack.c.h.b16 %v174
  %v1853 = vunpack.c.l.b16 %v175
  %v1854 = vunpack.c.h.b16 %v175
  %v1855 = vunpack.c.l.b16 %v176
  %v1856 = vunpack.c.h.b16 %v176
  %v1857 = vunpack.c.l.b16 %v177
  %v1858 = vunpack.c.h.b16 %v177
  %v1859 = vunpack.c.l.b16 %v178
  %v1860 = vunpack.c.h.b16 %v178
  %v1861 = vunpack.c.l.b16 %v179
  %v1862 = vunpack.c.h.b16 %v179
  %v1863 = vunpack.c.l.b16 %v180
  %v1864 = vunpack.c.h.b16 %v180
  %v1865 = vunpack.c.l.b16 %v181
  %v1866 = vunpack.c.h.b16 %v181
  %v1867 = vunpack.c.l.b16 %v182
  %v1868 = vunpack.c.h.b16 %v182
  %v1869 = vunpack.c.l.b16 %v183
  %v1870 = vunpack.c.h.b16 %v183
  %v1871 = vunpack.c.l.b16 %v184
  %v1872 = vunpack.c.h.b16 %v184
  %v1873 = vunpack.c.l.b16 %v185
  %v1874 = vunpack.c.h.b16 %v185
  %v1875 = vunpack.c.l.b16 %v186
  %v1876 = vunpack.c.h.b16 %v186
  %v1877 = vunpack.c.l.b16 %v187
  %v1878 = vunpack.c.h.b16 %v187
  %v1879 = vunpack.c.l.b16 %v188
  %v1880 = vunpack.c.h.b16 %v188
  %v1881 = vunpack.c.l.b16 %v189
  %v1882 = vunpack.c.h.b16 %v189
  %v1883 = vunpack.c.l.b16 %v190
  %v1884 = vunpack.c.h.b16 %v190
  %v1885 = vunpack.c.l.b16 %v191
  %v1886 = vunpack.c.h.b16 %v191
  %v1887 = vunpack.c.l.b16 %v192
  %v1888 = vunpack.c.h.b16 %v192
  %v1889 = vunpack.c.l.b16 %v193
  %v1890 = vunpack.c.h.b16 %v193
  %v1891 = vunpack.c.l.b16 %v194
  %v1892 = vunpack.c.h.b16 %v194
  %v1893 = vunpack.c.l.b16 %v195
  %v1894 = vunpack.c.h.b16 %v195
  %v1895 = vunpack.c.l.b16 %v196
  %v1896 = vunpack.c.h.b16 %v196
  %v1897 = vunpack.c.l.b16 %v197
  %v1898 = vunpack.c.h.b16 %v197
  %v1899 = vunpack.c.l.b16 %v198
  %v1900 = vunpack.c.h.b16 %v198
  %v1901 = vunpack.c.l.b16 %v199
  %v1902 = vunpack.c.h.b16 %v199
  %v1903 = vunpack.c.l.b16 %v200
  %v1904 = vunpack.c.h.b16 %v200
  %v1905 = vunpack.c.l.b16 %v201
  %v1906 = vunpack.c.h.b16 %v201
  %v1907 = vunpack.c.l.b16 %v202
  %v1908 = vunpack.c.h.b16 %v202
  %v1909 = vunpack.c.l.b16 %v203
  %v1910 = vunpack.c.h.b16 %v203
  %v1911 = vunpack.c.l.b16 %v204
  %v1912 = vunpack.c.h.b16 %v204
  %v1913 = vunpack.c.l.b16 %v205
  %v1914 = vunpack.c.h.b16 %v205
  %v1915 = vunpack.c.l.b16 %v206
  %v1916 = vunpack.c.h.b16 %v206
  %v1917 = vunpack.c.l.b16 %v207
  %v1918 = vunpack.c.h.b16 %v207
  %v1919 = vunpack.c.l.b16 %v208
  %v1920 = vunpack.c.h.b16 %v208
  %v1921 = vunpack.c.l.b16 %v209
  %v1922 = vunpack.c.h.b16 %v209
  %v1923 = vunpack.c.l.b16 %v210
  %v1924 = vunpack.c.h.b16 %v210
  %v1925 = vunpack.c.l.b16 %v211
  %v1926 = vunpack.c.h.b16 %v211
  %v1927 = vunpack.c.l.b16 %v212
  %v1928 = vunpack.c.h.b16 %v212
  %v1929 = vunpack.c.l.b16 %v213
  %v1930 = vunpack.c.h.b16 %v213
  %v1931 = vunpack.c.l.b16 %v214
  %v1932 = vunpack.c.h.b16 %v214
  %v1933 = vunpack.c.l.b16 %v215
  %v1934 = vunpack.c.h.b16 %v215
  %v1935 = vunpack.c.l.b16 %v216
  %v1936 = vunpack.c.h.b16 %v216
  %v1937 = vunpack.c.l.b16 %v217
  %v1938 = vunpack.c.h.b16 %v217
  %v1939 = vunpack.c.l.b16 %v218
  %v1940 = vunpack.c.h.b16 %v218
  %v1941 = vunpack.c.l.b16 %v219
  %v1942 = vunpack.c.h.b16 %v219
  %v1943 = vunpack.c.l.b16 %v220
  %v1944 = vunpack.c.h.b16 %v220
  %v1945 = vunpack.c.l.b16 %v221
  %v1946 = vunpack.c.h.b16 %v221
  %v1947 = vunpack.c.l.b16 %v222
  %v1948 = vunpack.c.h.b16 %v222
  %v1949 = vunpack.c.l.b16 %v223
  %v1950 = vunpack.c.h.b16 %v223
  %v1951 = vunpack.c.l.b16 %v224
  %v1952 = vunpack.c.h.b16 %v224
  %v1953 = vunpack.c.l.b16 %v225
  %v1954 = vunpack.c.h.b16 %v225
  %v1955 = vunpack.c.l.b16 %v226
  %v1956 = vunpack.c.h.b16 %v226
  %v1957 = vunpack.c.l.b16 %v227
  %v1958 = vunpack.c.h.b16 %v227
  %v1959 = vunpack.c.l.b16 %v228
  %v1960 = vunpack.c.h.b16 %v228
  %v1961 = vunpack.c.l.b16 %v229
  %v1962 = vunpack.c.h.b16 %v229
  %v1963 = vunpack.c.l.b16 %v230
  %v1964 = vunpack.c.h.b16 %v230
  %v1965 = vunpack.c.l.b16 %v231
  %v1966 = vunpack.c.h.b16 %v231
  %v1967 = vunpack.c.l.b16 %v232
  %v1968 = vunpack.c.h.b16 %v232
  %v1969 = vunpack.c.l.b16 %v233
  %v1970 = vunpack.c.h.b16 %v233
  %v1971 = vunpack.c.l.b16 %v234
  %v1972 = vunpack.c.h.b16 %v234
  %v1973 = vunpack.c.l.b16 %v235
  %v1974 = vunpack.c.h.b16 %v235
  %v1975 = vunpack.c.l.b16 %v236
  %v1976 = vunpack.c.h.b16 %v236
  %v1977 = vunpack.c.l.b16 %v237
  %v1978 = vunpack.c.h.b16 %v237
  %v1979 = vunpack.c.l.b16 %v238
  %v1980 = vunpack.c.h.b16 %v238
  %v1981 = vunpack.c.l.b16 %v239
  %v1982 = vunpack.c.h.b16 %v239
  %v1983 = vunpack.c.l.b16 %v240
  %v1984 = vunpack.c.h.b16 %v240
  %v1985 = vunpack.c.l.b16 %v241
  %v1986 = vunpack.c.h.b16 %v241
  %v1987 = vunpack.c.l.b16 %v242
  %v1988 = vunpack.c.h.b16 %v242
  %v1989 = vunpack.c.l.b16 %v243
  %v1990 = vunpack.c.h.b16 %v243
  %v1991 = vunpack.c.l.b16 %v244
  %v1992 = vunpack.c.h.b16 %v244
  %v1993 = vunpack.c.l.b16 %v245
  %v1994 = vunpack.c.h.b16 %v245
  %v1995 = vunpack.c.l.b16 %v246
  %v1996 = vunpack.c.h.b16 %v246
  %v1997 = vunpack.c.l.b16 %v247
  %v1998 = vunpack.c.h.b16 %v247
  %v1999 = vunpack.c.l.b16 %v248
  %v2000 = vunpack.c.h.b16 %v248
  %v2001 = vunpack.c.l.b16 %v249
  %v2002 = vunpack.c.h.b16 %v249
  %v2003 = vunpack.c.l.b16 %v250
  %v2004 = vunpack.c.h.b16 %v250
  %v2005 = vunpack.c.l.b16 %v251
  %v2006 = vunpack.c.h.b16 %v251
  %v2007 = vunpack.c.l.b16 %v252
  %v2008 = vunpack.c.h.b16 %v252
  %v2009 = vunpack.c.l.b16 %v253
  %v2010 = vunpack.c.h.b16 %v253
  %v2011 = vunpack.c.l.b16 %v254
  %v2012 = vunpack.c.h.b16 %v254
  %v2013 = vunpack.c.l.b16 %v255
  %v2014 = vunpack.c.h.b16 %v255
  %v2015 = vunpack.c.l.b16 %v256
  %v2016 = vunpack.c.h.b16 %v256
  %v2017 = vunpack.c.l.b16 %v257
  %v2018 = vunpack.c.h.b16 %v257
  %v2019 = vunpack.c.l.b16 %v258
  %v2020 = vunpack.c.h.b16 %v258
  %v2021 = vunpack.c.l.b16 %v259
  %v2022 = vunpack.c.h.b16 %v259
  %v2023 = vunpack.c.l.b16 %v260
  %v2024 = vunpack.c.h.b16 %v260
  %v2025 = vunpack.c.l.b16 %v261
  %v2026 = vunpack.c.h.b16 %v261
  %v2027 = vunpack.c.l.b16 %v262
  %v2028 = vunpack.c.h.b16 %v262
  %v2029 = vunpack.c.l.b16 %v263
  %v2030 = vunpack.c.h.b16 %v263
  %v2031 = vunpack.c.l.b16 %v264
  %v2032 = vunpack.c.h.b16 %v264
  %v2033 = vunpack.c.l.b16 %v265
  %v2034 = vunpack.c.h.b16 %v265
  %v2035 = vunpack.c.l.b16 %v266
  %v2036 = vunpack.c.h.b16 %v266
  %v2037 = vunpack.c.l.b16 %v267
  %v2038 = vunpack.c.h.b16 %v267
  %v2039 = vunpack.c.l.b16 %v268
  %v2040 = vunpack.c.h.b16 %v268
  %v2041 = vunpack.c.l.b16 %v269
  %v2042 = vunpack.c.h.b16 %v269
  %v2043 = vunpack.c.l.b16 %v270
  %v2044 = vunpack.c.h.b16 %v270
  %v2045 = vunpack.c.l.b16 %v271
  %v2046 = vunpack.c.h.b16 %v271
  %v2047 = vunpack.c.l.b16 %v272
  %v2048 = vunpack.c.h.b16 %v272
  %v2049 = vunpack.c.l.b16 %v273
  %v2050 = vunpack.c.h.b16 %v273
  %v2051 = vunpack.c.l.b16 %v274
  %v2052 = vunpack.c.h.b16 %v274
  %v2053 = vunpack.c.l.b16 %v275
  %v2054 = vunpack.c.h.b16 %v275
  %v2055 = vunpack.c.l.b16 %v276
  %v2056 = vunpack.c.h.b16 %v276
  %v2057 = vunpack.c.l.b16 %v277
  %v2058 = vunpack.c.h.b16 %v277
  %v2059 = vunpack.c.l.b16 %v278
  %v2060 = vunpack.c.h.b16 %v278
  %v2061 = vunpack.c.l.b16 %v279
  %v2062 = vunpack.c.h.b16 %v279
  %v2063 = vunpack.c.l.b16 %v280
  %v2064 = vunpack.c.h.b16 %v280
  %v2065 = vunpack.c.l.b16 %v281
  %v2066 = vunpack.c.h.b16 %v281
  %v2067 = vunpack.c.l.b16 %v282
  %v2068 = vunpack.c.h.b16 %v282
  %v2069 = vunpack.c.l.b16 %v283
  %v2070 = vunpack.c.h.b16 %v283
  %v2071 = vunpack.c.l.b16 %v284
  %v2072 = vunpack.c.h.b16 %v284
  %v2073 = vunpack.c.l.b16 %v285
  %v2074 = vunpack.c.h.b16 %v285
  %v2075 = vunpack.c.l.b16 %v286
  %v2076 = vunpack.c.h.b16 %v286
  %v2077 = vunpack.c.l.b16 %v287
  %v2078 = vunpack.c.h.b16 %v287
  %v2079 = vunpack.c.l.b16 %v288
  %v2080 = vunpack.c.h.b16 %v288
  %v2081 = vunpack.c.l.b16 %v289
  %v2082 = vunpack.c.h.b16 %v289
  %v2083 = vunpack.c.l.b16 %v290
  %v2084 = vunpack.c.h.b16 %v290
  %v2085 = vunpack.c.l.b16 %v291
  %v2086 = vunpack.c.h.b16 %v291
  %v2087 = vunpack.c.l.b16 %v292
  %v2088 = vunpack.c.h.b16 %v292
  %v2089 = vunpack.c.l.b16 %v293
  %v2090 = vunpack.c.h.b16 %v293
  %v2091 = vunpack.c.l.b16 %v294
  %v2092 = vunpack.c.h.b16 %v294
  %v2093 = vunpack.c.l.b16 %v295
  %v2094 = vunpack.c.h.b16 %v295
  %v2095 = vunpack.c.l.b16 %v296
  %v2096 = vunpack.c.h.b16 %v296
  %v2097 = vunpack.c.l.b16 %v297
  %v2098 = vunpack.c.h.b16 %v297
  %v2099 = vunpack.c.l.b16 %v298
  %v2100 = vunpack.c.h.b16 %v298
  %v2101 = vunpack.c.l.b16 %v299
  %v2102 = vunpack.c.h.b16 %v299
  %v2103 = vunpack.c.l.b16 %v300
  %v2104 = vunpack.c.h.b16 %v300
  %v2105 = vunpack.c.l.b16 %v301
  %v2106 = vunpack.c.h.b16 %v301
  %v2107 = vunpack.c.l.b16 %v302
  %v2108 = vunpack.c.h.b16 %v302
  %v2109 = vunpack.c.l.b16 %v303
  %v2110 = vunpack.c.h.b16 %v303
  %v2111 = vunpack.c.l.b16 %v304
  %v2112 = vunpack.c.h.b16 %v304
  %v2113 = vunpack.c.l.b16 %v305
  %v2114 = vunpack.c.h.b16 %v305
  %v2115 = vunpack.c.l.b16 %v306
  %v2116 = vunpack.c.h.b16 %v306
  %v2117 = vunpack.c.l.b16 %v307
  %v2118 = vunpack.c.h.b16 %v307
  %v2119 = vunpack.c.l.b16 %v308
  %v2120 = vunpack.c.h.b16 %v308
  %v2121 = vunpack.c.l.b16 %v309
  %v2122 = vunpack.c.h.b16 %v309
  %v2123 = vunpack.c.l.b16 %v310
  %v2124 = vunpack.c.h.b16 %v310
  %v2125 = vunpack.c.l.b16 %v311
  %v2126 = vunpack.c.h.b16 %v311
  %v2127 = vunpack.c.l.b16 %v312
  %v2128 = vunpack.c.h.b16 %v312
  %v2129 = vunpack.c.l.b16 %v313
  %v2130 = vunpack.c.h.b16 %v313
  %v2131 = vunpack.c.l.b16 %v314
  %v2132 = vunpack.c.h.b16 %v314
  %v2133 = vunpack.c.l.b16 %v315
  %v2134 = vunpack.c.h.b16 %v315
  %v2135 = vunpack.c.l.b16 %v316
  %v2136 = vunpack.c.h.b16 %v316
  %v2137 = vunpack.c.l.b16 %v317
  %v2138 = vunpack.c.h.b16 %v317
  %v2139 = vunpack.c.l.b16 %v318
  %v2140 = vunpack.c.h.b16 %v318
  %v2141 = vunpack.c.l.b16 %v319
  %v2142 = vunpack.c.h.b16 %v319
  %v2143 = vunpack.c.l.b16 %v320
  %v2144 = vunpack.c.h.b16 %v320
  %v2145 = vunpack.c.l.b16 %v321
  %v2146 = vunpack.c.h.b16 %v321
  %v2147 = vunpack.c.l.b16 %v322
  %v2148 = vunpack.c.h.b16 %v322
  %v2149 = vunpack.c.l.b16 %v323
  %v2150 = vunpack.c.h.b16 %v323
  %v2151 = vunpack.c.l.b16 %v324
  %v2152 = vunpack.c.h.b16 %v324
  %v2153 = vunpack.c.l.b16 %v325
  %v2154 = vunpack.c.h.b16 %v325
  %v2155 = vunpack.c.l.b16 %v326
  %v2156 = vunpack.c.h.b16 %v326
  %v2157 = vunpack.c.l.b16 %v327
  %v2158 = vunpack.c.h.b16 %v327
  %v2159 = vunpack.c.l.b16 %v328
  %v2160 = vunpack.c.h.b16 %v328
  %v2161 = vunpack.c.l.b16 %v329
  %v2162 = vunpack.c.h.b16 %v329
  %v2163 = vunpack.c.l.b16 %v330
  %v2164 = vunpack.c.h.b16 %v330
  %v2165 = vunpack.c.l.b16 %v331
  %v2166 = vunpack.c.h.b16 %v331
  %v2167 = vunpack.c.l.b16 %v332
  %v2168 = vunpack.c.h.b16 %v332
  %v2169 = vunpack.c.l.b16 %v333
  %v2170 = vunpack.c.h.b16 %v333
  %v2171 = vunpack.c.l.b16 %v334
  %v2172 = vunpack.c.h.b16 %v334
  %v2173 = vunpack.c.l.b16 %v335
  %v2174 = vunpack.c.h.b16 %v335
  %v2175 = vunpack.c.l.b16 %v336
  %v2176 = vunpack.c.h.b16 %v336
  %v2177 = vunpack.c.l.b16 %v337
  %v2178 = vunpack.c.h.b16 %v337
  %v2179 = vunpack.c.l.b16 %v338
  %v2180 = vunpack.c.h.b16 %v338
  %v2181 = vunpack.c.l.b16 %v339
  %v2182 = vunpack.c.h.b16 %v339
  %v2183 = vunpack.c.l.b16 %v340
  %v2184 = vunpack.c.h.b16 %v340
  %v2185 = vunpack.c.l.b16 %v341
  %v2186 = vunpack.c.h.b16 %v341
  %v2187 = vunpack.c.l.b16 %v342
  %v2188 = vunpack.c.h.b16 %v342
  %v2189 = vunpack.c.l.b16 %v343
  %v2190 = vunpack.c.h.b16 %v343
  %v2191 = vunpack.c.l.b16 %v344
  %v2192 = vunpack.c.h.b16 %v344
  %v2193 = vunpack.c.l.b16 %v345
  %v2194 = vunpack.c.h.b16 %v345
  %v2195 = vunpack.c.l.b16 %v346
  %v2196 = vunpack.c.h.b16 %v346
  %v2197 = vunpack.c.l.b16 %v347
  %v2198 = vunpack.c.h.b16 %v347
  %v2199 = vunpack.c.l.b16 %v348
  %v2200 = vunpack.c.h.b16 %v348
  %v2201 = vunpack.c.l.b16 %v349
  %v2202 = vunpack.c.h.b16 %v349
  %v2203 = vunpack.c.l.b16 %v350
  %v2204 = vunpack.c.h.b16 %v350
  %v2205 = vunpack.c.l.b16 %v351
  %v2206 = vunpack.c.h.b16 %v351
  %v2207 = vunpack.c.l.b16 %v352
  %v2208 = vunpack.c.h.b16 %v352
  %v2209 = vunpack.c.l.b16 %v353
  %v2210 = vunpack.c.h.b16 %v353
  %v2211 = vunpack.c.l.b16 %v354
  %v2212 = vunpack.c.h.b16 %v354
  %v2213 = vunpack.c.l.b16 %v355
  %v2214 = vunpack.c.h.b16 %v355
  %v2215 = vunpack.c.l.b16 %v356
  %v2216 = vunpack.c.h.b16 %v356
  %v2217 = vunpack.c.l.b16 %v357
  %v2218 = vunpack.c.h.b16 %v357
  %v2219 = vunpack.c.l.b16 %v358
  %v2220 = vunpack.c.h.b16 %v358
  %v2221 = vunpack.c.l.b16 %v359
  %v2222 = vunpack.c.h.b16 %v359
  %v2223 = vunpack.c.l.b16 %v360
  %v2224 = vunpack.c.h.b16 %v360
  %v2225 = vunpack.c.l.b16 %v361
  %v2226 = vunpack.c.h.b16 %v361
  %v2227 = vunpack.c.l.b16 %v362
  %v2228 = vunpack.c.h.b16 %v362
  %v2229 = vunpack.c.l.b16 %v363
  %v2230 = vunpack.c.h.b16 %v363
  %v2231 = vunpack.c.l.b16 %v364
  %v2232 = vunpack.c.h.b16 %v364
  %v2233 = vunpack.c.l.b16 %v365
  %v2234 = vunpack.c.h.b16 %v365
  %v2235 = vunpack.c.l.b16 %v366
  %v2236 = vunpack.c.h.b16 %v366
  %v2237 = vunpack.c.l.b16 %v367
  %v2238 = vunpack.c.h.b16 %v367
  %v2239 = vunpack.c.l.b16 %v368
  %v2240 = vunpack.c.h.b16 %v368
  %v2241 = vunpack.c.l.b16 %v369
  %v2242 = vunpack.c.h.b16 %v369
  %v2243 = vunpack.c.l.b16 %v370
  %v2244 = vunpack.c.h.b16 %v370
  %v2245 = vunpack.c.l.b16 %v371
  %v2246 = vunpack.c.h.b16 %v371
  %v2247 = vunpack.c.l.b16 %v372
  %v2248 = vunpack.c.h.b16 %v372
  %v2249 = vunpack.c.l.b16 %v373
  %v2250 = vunpack.c.h.b16 %v373
  %v2251 = vunpack.c.l.b16 %v374
  %v2252 = vunpack.c.h.b16 %v374
  %v2253 = vunpack.c.l.b16 %v375
  %v2254 = vunpack.c.h.b16 %v375
  %v2255 = vunpack.c.l.b16 %v376
  %v2256 = vunpack.c.h.b16 %v376
  %v2257 = vunpack.c.l.b16 %v377
  %v2258 = vunpack.c.h.b16 %v377
  %v2259 = vunpack.c.l.b16 %v378
  %v2260 = vunpack.c.h.b16 %v378
  %v2261 = vunpack.c.l.b16 %v379
  %v2262 = vunpack.c.h.b16 %v379
  %v2263 = vunpack.c.l.b16 %v380
  %v2264 = vunpack.c.h.b16 %v380
  %v2265 = vunpack.c.l.b16 %v381
  %v2266 = vunpack.c.h.b16 %v381
  %v2267 = vunpack.c.l.b16 %v382
  %v2268 = vunpack.c.h.b16 %v382
  %v2269 = vunpack.c.l.b16 %v383
  %v2270 = vunpack.c.h.b16 %v383
  %v2271 = vunpack.c.l.b16 %v384
  %v2272 = vunpack.c.h.b16 %v384
  %v2273 = vunpack.c.l.b16 %v385
  %v2274 = vunpack.c.h.b16 %v385
  %v2275 = vunpack.c.l.b16 %v386
  %v2276 = vunpack.c.h.b16 %v386
  %v2277 = vunpack.c.l.b16 %v387
  %v2278 = vunpack.c.h.b16 %v387
  %v2279 = vunpack.c.l.b16 %v388
  %v2280 = vunpack.c.h.b16 %v388
  %v2281 = vunpack.c.l.b16 %v389
  %v2282 = vunpack.c.h.b16 %v389
  %v2283 = vunpack.c.l.b16 %v390
  %v2284 = vunpack.c.h.b16 %v390
  %v2285 = vunpack.c.l.b16 %v391
  %v2286 = vunpack.c.h.b16 %v391
  %v2287 = vunpack.c.l.b16 %v392
  %v2288 = vunpack.c.h.b16 %v392
  %v2289 = vunpack.c.l.b16 %v393
  %v2290 = vunpack.c.h.b16 %v393
  %v2291 = vunpack.c.l.b16 %v394
  %v2292 = vunpack.c.h.b16 %v394
  %v2293 = vunpack.c.l.b16 %v395
  %v2294 = vunpack.c.h.b16 %v395
  %v2295 = vunpack.c.l.b16 %v396
  %v2296 = vunpack.c.h.b16 %v396
  %v2297 = vunpack.c.l.b16 %v397
  %v2298 = vunpack.c.h.b16 %v397
  %v2299 = vunpack.c.l.b16 %v398
  %v2300 = vunpack.c.h.b16 %v398
  %v2301 = vunpack.c.l.b16 %v399
  %v2302 = vunpack.c.h.b16 %v399
  %v2303 = vunpack.c.l.b16 %v400
  %v2304 = vunpack.c.h.b16 %v400
  %v2305 = vunpack.c.l.b16 %v401
  %v2306 = vunpack.c.h.b16 %v401
  %v2307 = vunpack.c.l.b16 %v402
  %v2308 = vunpack.c.h.b16 %v402
  %v2309 = vunpack.c.l.b16 %v403
  %v2310 = vunpack.c.h.b16 %v403
  %v2311 = vunpack.c.l.b16 %v404
  %v2312 = vunpack.c.h.b16 %v404
  %v2313 = vunpack.c.l.b16 %v405
  %v2314 = vunpack.c.h.b16 %v405
  %v2315 = vunpack.c.l.b16 %v406
  %v2316 = vunpack.c.h.b16 %v406
  %v2317 = vunpack.c.l.b16 %v407
  %v2318 = vunpack.c.h.b16 %v407
  %v2319 = vunpack.c.l.b16 %v408
  %v2320 = vunpack.c.h.b16 %v408
  %v2321 = vunpack.c.l.b16 %v409
  %v2322 = vunpack.c.h.b16 %v409
  %v2323 = vunpack.c.l.b16 %v410
  %v2324 = vunpack.c.h.b16 %v410
  %v2325 = vunpack.c.l.b16 %v411
  %v2326 = vunpack.c.h.b16 %v411
  %v2327 = vunpack.c.l.b16 %v412
  %v2328 = vunpack.c.h.b16 %v412
  %v2329 = vunpack.c.l.b16 %v413
  %v2330 = vunpack.c.h.b16 %v413
  %v2331 = vunpack.c.l.b16 %v414
  %v2332 = vunpack.c.h.b16 %v414
  %v2333 = vunpack.c.l.b16 %v415
  %v2334 = vunpack.c.h.b16 %v415
  %v2335 = vunpack.c.l.b16 %v416
  %v2336 = vunpack.c.h.b16 %v416
  %v2337 = vunpack.c.l.b16 %v417
  %v2338 = vunpack.c.h.b16 %v417
  %v2339 = vunpack.c.l.b16 %v418
  %v2340 = vunpack.c.h.b16 %v418
  %v2341 = vunpack.c.l.b16 %v419
  %v2342 = vunpack.c.h.b16 %v419
  %v2343 = vunpack.c.l.b16 %v420
  %v2344 = vunpack.c.h.b16 %v420
  %v2345 = vunpack.c.l.b16 %v421
  %v2346 = vunpack.c.h.b16 %v421
  %v2347 = vunpack.c.l.b16 %v422
  %v2348 = vunpack.c.h.b16 %v422
  %v2349 = vunpack.c.l.b16 %v423
  %v2350 = vunpack.c.h.b16 %v423
  %v2351 = vunpack.c.l.b16 %v424
  %v2352 = vunpack.c.h.b16 %v424
  %v2353 = vunpack.c.l.b16 %v425
  %v2354 = vunpack.c.h.b16 %v425
  %v2355 = vunpack.c.l.b16 %v426
  %v2356 = vunpack.c.h.b16 %v426
  %v2357 = vunpack.c.l.b16 %v427
  %v2358 = vunpack.c.h.b16 %v427
  %v2359 = vunpack.c.l.b16 %v428
  %v2360 = vunpack.c.h.b16 %v428
  %v2361 = vunpack.c.l.b16 %v429
  %v2362 = vunpack.c.h.b16 %v429
  %v2363 = vunpack.c.l.b16 %v430
  %v2364 = vunpack.c.h.b16 %v430
  %v2365 = vunpack.c.l.b16 %v431
  %v2366 = vunpack.c.h.b16 %v431
  %v2367 = vunpack.c.l.b16 %v432
  %v2368 = vunpack.c.h.b16 %v432
  %v2369 = vunpack.c.l.b16 %v433
  %v2370 = vunpack.c.h.b16 %v433
  %v2371 = vunpack.c.l.b16 %v434
  %v2372 = vunpack.c.h.b16 %v434
  %v2373 = vunpack.c.l.b16 %v435
  %v2374 = vunpack.c.h.b16 %v435
  %v2375 = vunpack.c.l.b16 %v436
  %v2376 = vunpack.c.h.b16 %v436
  %v2377 = vunpack.c.l.b16 %v437
  %v2378 = vunpack.c.h.b16 %v437
  %v2379 = vunpack.c.l.b16 %v438
  %v2380 = vunpack.c.h.b16 %v438
  %v2381 = vunpack.c.l.b16 %v439
  %v2382 = vunpack.c.h.b16 %v439
  %v2383 = vunpack.c.l.b16 %v440
  %v2384 = vunpack.c.h.b16 %v440
  %v2385 = vunpack.c.l.b16 %v441
  %v2386 = vunpack.c.h.b16 %v441
  %v2387 = vunpack.c.l.b16 %v442
  %v2388 = vunpack.c.h.b16 %v442
  %v2389 = vunpack.c.l.b16 %v443
  %v2390 = vunpack.c.h.b16 %v443
  %v2391 = vunpack.c.l.b16 %v444
  %v2392 = vunpack.c.h.b16 %v444
  %v2393 = vunpack.c.l.b16 %v445
  %v2394 = vunpack.c.h.b16 %v445
  %v2395 = vunpack.c.l.b16 %v446
  %v2396 = vunpack.c.h.b16 %v446
  %v2397 = vunpack.c.l.b16 %v447
  %v2398 = vunpack.c.h.b16 %v447
  %v2399 = vunpack.c.l.b16 %v448
  %v2400 = vunpack.c.h.b16 %v448
  %v2401 = vunpack.c.l.b16 %v449
  %v2402 = vunpack.c.h.b16 %v449
  %v2403 = vunpack.c.l.b16 %v450
  %v2404 = vunpack.c.h.b16 %v450
  %v2405 = vunpack.c.l.b16 %v451
  %v2406 = vunpack.c.h.b16 %v451
  %v2407 = vunpack.c.l.b16 %v452
  %v2408 = vunpack.c.h.b16 %v452
  %v2409 = vunpack.c.l.b16 %v453
  %v2410 = vunpack.c.h.b16 %v453
  %v2411 = vunpack.c.l.b16 %v454
  %v2412 = vunpack.c.h.b16 %v454
  %v2413 = vunpack.c.l.b16 %v455
  %v2414 = vunpack.c.h.b16 %v455
  %v2415 = vunpack.c.l.b16 %v456
  %v2416 = vunpack.c.h.b16 %v456
  %v2417 = vunpack.c.l.b16 %v457
  %v2418 = vunpack.c.h.b16 %v457
  %v2419 = vunpack.c.l.b16 %v458
  %v2420 = vunpack.c.h.b16 %v458
  %v2421 = vunpack.c.l.b16 %v459
  %v2422 = vunpack.c.h.b16 %v459
  %v2423 = vunpack.c.l.b16 %v460
  %v2424 = vunpack.c.h.b16 %v460
  %v2425 = vunpack.c.l.b16 %v461
  %v2426 = vunpack.c.h.b16 %v461
  %v2427 = vunpack.c.l.b16 %v462
  %v2428 = vunpack.c.h.b16 %v462
  %v2429 = vunpack.c.l.b16 %v463
  %v2430 = vunpack.c.h.b16 %v463
  %v2431 = vunpack.c.l.b16 %v464
  %v2432 = vunpack.c.h.b16 %v464
  %v2433 = vunpack.c.l.b16 %v465
  %v2434 = vunpack.c.h.b16 %v465
  %v2435 = vunpack.c.l.b16 %v466
  %v2436 = vunpack.c.h.b16 %v466
  %v2437 = vunpack.c.l.b16 %v467
  %v2438 = vunpack.c.h.b16 %v467
  %v2439 = vunpack.c.l.b16 %v468
  %v2440 = vunpack.c.h.b16 %v468
  %v2441 = vunpack.c.l.b16 %v469
  %v2442 = vunpack.c.h.b16 %v469
  %v2443 = vunpack.c.l.b16 %v470
  %v2444 = vunpack.c.h.b16 %v470
  %v2445 = vunpack.c.l.b16 %v471
  %v2446 = vunpack.c.h.b16 %v471
  %v2447 = vunpack.c.l.b16 %v472
  %v2448 = vunpack.c.h.b16 %v472
  %v2449 = vunpack.c.l.b16 %v473
  %v2450 = vunpack.c.h.b16 %v473
  %v2451 = vunpack.c.l.b16 %v474
  %v2452 = vunpack.c.h.b16 %v474
  %v2453 = vunpack.c.l.b16 %v475
  %v2454 = vunpack.c.h.b16 %v475
  %v2455 = vunpack.c.l.b16 %v476
  %v2456 = vunpack.c.h.b16 %v476
  %v2457 = vunpack.c.l.b16 %v477
  %v2458 = vunpack.c.h.b16 %v477
  %v2459 = vunpack.c.l.b16 %v478
  %v2460 = vunpack.c.h.b16 %v478
  %v2461 = vunpack.c.l.b16 %v479
  %v2462 = vunpack.c.h.b16 %v479
  %v2463 = vunpack.c.l.b16 %v480
  %v2464 = vunpack.c.h.b16 %v480
  %v2465 = vunpack.c.l.b16 %v481
  %v2466 = vunpack.c.h.b16 %v481
  %v2467 = vunpack.c.l.b16 %v482
  %v2468 = vunpack.c.h.b16 %v482
  %v2469 = vunpack.c.l.b16 %v483
  %v2470 = vunpack.c.h.b16 %v483
  %v2471 = vunpack.c.l.b16 %v484
  %v2472 = vunpack.c.h.b16 %v484
  %v2473 = vunpack.c.l.b16 %v485
  %v2474 = vunpack.c.h.b16 %v485
  %v2475 = vunpack.c.l.b16 %v486
  %v2476 = vunpack.c.h.b16 %v486
  %v2477 = vunpack.c.l.b16 %v487
  %v2478 = vunpack.c.h.b16 %v487
  %v2479 = vunpack.c.l.b16 %v488
  %v2480 = vunpack.c.h.b16 %v488
  %v2481 = vunpack.c.l.b16 %v489
  %v2482 = vunpack.c.h.b16 %v489
  %v2483 = vunpack.c.l.b16 %v490
  %v2484 = vunpack.c.h.b16 %v490
  %v2485 = vunpack.c.l.b16 %v491
  %v2486 = vunpack.c.h.b16 %v491
  %v2487 = vunpack.c.l.b16 %v492
  %v2488 = vunpack.c.h.b16 %v492
  %v2489 = vunpack.c.l.b16 %v493
  %v2490 = vunpack.c.h.b16 %v493
  %v2491 = vunpack.c.l.b16 %v494
  %v2492 = vunpack.c.h.b16 %v494
  %v2493 = vunpack.c.l.b16 %v495
  %v2494 = vunpack.c.h.b16 %v495
  %v2495 = vunpack.c.l.b16 %v496
  %v2496 = vunpack.c.h.b16 %v496
  %v2497 = vunpack.c.l.b16 %v497
  %v2498 = vunpack.c.h.b16 %v497
  %v2499 = vunpack.c.l.b16 %v498
  %v2500 = vunpack.c.h.b16 %v498
  %v2501 = vunpack.c.l.b16 %v499
  %v2502 = vunpack.c.h.b16 %v499
  %v2503 = vunpack.c.l.b16 %v500
  %v2504 = vunpack.c.h.b16 %v500
  %v2505 = vunpack.c.l.b16 %v501
  %v2506 = vunpack.c.h.b16 %v501
  %v2507 = vunpack.c.l.b16 %v502
  %v2508 = vunpack.c.h.b16 %v502
  %v2509 = vunpack.c.l.b16 %v503
  %v2510 = vunpack.c.h.b16 %v503
  %v2511 = vunpack.c.l.b16 %v504
  %v2512 = vunpack.c.h.b16 %v504
  %v2513 = vunpack.c.l.b16 %v505
  %v2514 = vunpack.c.h.b16 %v505
  %v2515 = vunpack.c.l.b16 %v506
  %v2516 = vunpack.c.h.b16 %v506
  %v2517 = vunpack.c.l.b16 %v507
  %v2518 = vunpack.c.h.b16 %v507
  %v2519 = vunpack.c.l.b16 %v508
  %v2520 = vunpack.c.h.b16 %v508
  %v2521 = vunpack.c.l.b16 %v509
  %v2522 = vunpack.c.h.b16 %v509
  %v2523 = vunpack.c.l.b16 %v510
  %v2524 = vunpack.c.h.b16 %v510
  %v2525 = vunpack.c.l.b16 %v511
  %v2526 = vunpack.c.h.b16 %v511
  %v2527 = vunpack.c.l.b16 %v512
  %v2528 = vunpack.c.h.b16 %v512
  %v2529 = vunpack.c.l.b16 %v513
  %v2530 = vunpack.c.h.b16 %v513
  %v2531 = vunpack.c.l.b16 %v514
  %v2532 = vunpack.c.h.b16 %v514
  %v2533 = vunpack.c.l.b16 %v515
  %v2534 = vunpack.c.h.b16 %v515
  %v2535 = vunpack.c.l.b16 %v516
  %v2536 = vunpack.c.h.b16 %v516
  %v2537 = vunpack.c.l.b16 %v517
  %v2538 = vunpack.c.h.b16 %v517
  %v2539 = vunpack.c.l.b16 %v518
  %v2540 = vunpack.c.h.b16 %v518
  %v2541 = vunpack.c.l.b16 %v519
  %v2542 = vunpack.c.h.b16 %v519
  %v2543 = vunpack.c.l.b16 %v520
  %v2544 = vunpack.c.h.b16 %v520
  %v2545 = vunpack.c.l.b16 %v521
  %v2546 = vunpack.c.h.b16 %v521
  %v2547 = vunpack.c.l.b16 %v522
  %v2548 = vunpack.c.h.b16 %v522
  %v2549 = vunpack.c.l.b16 %v523
  %v2550 = vunpack.c.h.b16 %v523
  %v2551 = vunpack.c.l.b16 %v524
  %v2552 = vunpack.c.h.b16 %v524
  %v2553 = vunpack.c.l.b16 %v525
  %v2554 = vunpack.c.h.b16 %v525
  %v2555 = vunpack.c.l.b16 %v526
  %v2556 = vunpack.c.h.b16 %v526
  %v2557 = vunpack.c.l.b16 %v527
  %v2558 = vunpack.c.h.b16 %v527
  %v2559 = vunpack.c.l.b16 %v528
  %v2560 = vunpack.c.h.b16 %v528
  %v2561 = vunpack.c.l.b16 %v529
  %v2562 = vunpack.c.h.b16 %v529
  %v2563 = vunpack.c.l.b16 %v530
  %v2564 = vunpack.c.h.b16 %v530
  %v2565 = vunpack.c.l.b16 %v531
  %v2566 = vunpack.c.h.b16 %v531
  %v2567 = vunpack.c.l.b16 %v532
  %v2568 = vunpack.c.h.b16 %v532
  %v2569 = vunpack.c.l.b16 %v533
  %v2570 = vunpack.c.h.b16 %v533
  %v2571 = vunpack.c.l.b16 %v534
  %v2572 = vunpack.c.h.b16 %v534
  %v2573 = vunpack.c.l.b16 %v535
  %v2574 = vunpack.c.h.b16 %v535
  %v2575 = vunpack.c.l.b16 %v536
  %v2576 = vunpack.c.h.b16 %v536
  %v2577 = vunpack.c.l.b16 %v537
  %v2578 = vunpack.c.h.b16 %v537
  %v2579 = vunpack.c.l.b16 %v538
  %v2580 = vunpack.c.h.b16 %v538
  %v2581 = vunpack.c.l.b16 %v539
  %v2582 = vunpack.c.h.b16 %v539
  %v2583 = vunpack.c.l.b16 %v540
  %v2584 = vunpack.c.h.b16 %v540
  %v2585 = vunpack.c.l.b16 %v541
  %v2586 = vunpack.c.h.b16 %v541
  %v2587 = vunpack.c.l.b16 %v542
  %v2588 = vunpack.c.h.b16 %v542
  %v2589 = vunpack.c.l.b16 %v543
  %v2590 = vunpack.c.h.b16 %v543
  %v2591 = vunpack.c.l.b16 %v544
  %v2592 = vunpack.c.h.b16 %v544
  %v2593 = vunpack.c.l.b16 %v545
  %v2594 = vunpack.c.h.b16 %v545
  %v2595 = vunpack.c.l.b16 %v546
  %v2596 = vunpack.c.h.b16 %v546
  %v2597 = vunpack.c.l.b16 %v547
  %v2598 = vunpack.c.h.b16 %v547
  %v2599 = vunpack.c.l.b16 %v548
  %v2600 = vunpack.c.h.b16 %v548
  %v2601 = vunpack.c.l.b16 %v549
  %v2602 = vunpack.c.h.b16 %v549
  %v2603 = vunpack.c.l.b16 %v550
  %v2604 = vunpack.c.h.b16 %v550
  %v2605 = vunpack.c.l.b16 %v551
  %v2606 = vunpack.c.h.b16 %v551
  %v2607 = vunpack.c.l.b16 %v552
  %v2608 = vunpack.c.h.b16 %v552
  %v2609 = vunpack.c.l.b16 %v553
  %v2610 = vunpack.c.h.b16 %v553
  %v2611 = vunpack.c.l.b16 %v554
  %v2612 = vunpack.c.h.b16 %v554
  %v2613 = vunpack.c.l.b16 %v555
  %v2614 = vunpack.c.h.b16 %v555
  %v2615 = vunpack.c.l.b16 %v556
  %v2616 = vunpack.c.h.b16 %v556
  %v2617 = vunpack.c.l.b16 %v557
  %v2618 = vunpack.c.h.b16 %v557
  %v2619 = vunpack.c.l.b16 %v558
  %v2620 = vunpack.c.h.b16 %v558
  %v2621 = vunpack.c.l.b16 %v559
  %v2622 = vunpack.c.h.b16 %v559
  %v2623 = vunpack.c.l.b16 %v560
  %v2624 = vunpack.c.h.b16 %v560
  %v2625 = vunpack.c.l.b16 %v561
  %v2626 = vunpack.c.h.b16 %v561
  %v2627 = vunpack.c.l.b16 %v562
  %v2628 = vunpack.c.h.b16 %v562
  %v2629 = vunpack.c.l.b16 %v563
  %v2630 = vunpack.c.h.b16 %v563
  %v2631 = vunpack.c.l.b16 %v564
  %v2632 = vunpack.c.h.b16 %v564
  %v2633 = vunpack.c.l.b16 %v565
  %v2634 = vunpack.c.h.b16 %v565
  %v2635 = vunpack.c.l.b16 %v566
  %v2636 = vunpack.c.h.b16 %v566
  %v2637 = vunpack.c.l.b16 %v567
  %v2638 = vunpack.c.h.b16 %v567
  %v2639 = vunpack.c.l.b16 %v568
  %v2640 = vunpack.c.h.b16 %v568
  %v2641 = vunpack.c.l.b16 %v569
  %v2642 = vunpack.c.h.b16 %v569
  %v2643 = vunpack.c.l.b16 %v570
  %v2644 = vunpack.c.h.b16 %v570
  %v2645 = vunpack.c.l.b16 %v571
  %v2646 = vunpack.c.h.b16 %v571
  %v2647 = vunpack.c.l.b16 %v572
  %v2648 = vunpack.c.h.b16 %v572
  %v2649 = vunpack.c.l.b16 %v573
  %v2650 = vunpack.c.h.b16 %v573
  %v2651 = vunpack.c.l.b16 %v574
  %v2652 = vunpack.c.h.b16 %v574
  %v2653 = vunpack.c.l.b16 %v575
  %v2654 = vunpack.c.h.b16 %v575
  %v2655 = vunpack.c.l.b16 %v576
  %v2656 = vunpack.c.h.b16 %v576
  %v2657 = vunpack.c.l.b16 %v577
  %v2658 = vunpack.c.h.b16 %v577
  %v2659 = vunpack.c.l.b16 %v578
  %v2660 = vunpack.c.h.b16 %v578
  %v2661 = vunpack.c.l.b16 %v579
  %v2662 = vunpack.c.h.b16 %v579
  %v2663 = vunpack.c.l.b16 %v580
  %v2664 = vunpack.c.h.b16 %v580
  %v2665 = vunpack.c.l.b16 %v581
  %v2666 = vunpack.c.h.b16 %v581
  %v2667 = vunpack.c.l.b16 %v582
  %v2668 = vunpack.c.h.b16 %v582
  %v2669 = vunpack.c.l.b16 %v583
  %v2670 = vunpack.c.h.b16 %v583
  %v2671 = vunpack.c.l.b16 %v584
  %v2672 = vunpack.c.h.b16 %v584
  %v2673 = vunpack.c.l.b16 %v585
  %v2674 = vunpack.c.h.b16 %v585
  %v2675 = vunpack.c.l.b16 %v586
  %v2676 = vunpack.c.h.b16 %v586
  %v2677 = vunpack.c.l.b16 %v587
  %v2678 = vunpack.c.h.b16 %v587
  %v2679 = vunpack.c.l.b16 %v588
  %v2680 = vunpack.c.h.b16 %v588
  %v2681 = vunpack.c.l.b16 %v589
  %v2682 = vunpack.c.h.b16 %v589
  %v2683 = vunpack.c.l.b16 %v590
  %v2684 = vunpack.c.h.b16 %v590
  %v2685 = vunpack.c.l.b16 %v591
  %v2686 = vunpack.c.h.b16 %v591
  %v2687 = vunpack.c.l.b16 %v592
  %v2688 = vunpack.c.h.b16 %v592
  %v2689 = vunpack.c.l.b16 %v593
  %v2690 = vunpack.c.h.b16 %v593
  %v2691 = vunpack.c.l.b16 %v594
  %v2692 = vunpack.c.h.b16 %v594
  %v2693 = vunpack.c.l.b16 %v595
  %v2694 = vunpack.c.h.b16 %v595
  %v2695 = vunpack.c.l.b16 %v596
  %v2696 = vunpack.c.h.b16 %v596
  %v2697 = vunpack.c.l.b16 %v597
  %v2698 = vunpack.c.h.b16 %v597
  %v2699 = vunpack.c.l.b16 %v598
  %v2700 = vunpack.c.h.b16 %v598
  %v2701 = vunpack.c.l.b16 %v599
  %v2702 = vunpack.c.h.b16 %v599
  %v2703 = vunpack.c.l.b16 %v600
  %v2704 = vunpack.c.h.b16 %v600
  %v2705 = vunpack.c.l.b16 %v601
  %v2706 = vunpack.c.h.b16 %v601
  %v2707 = vunpack.c.l.b16 %v602
  %v2708 = vunpack.c.h.b16 %v602
  %v2709 = vunpack.c.l.b16 %v603
  %v2710 = vunpack.c.h.b16 %v603
  %v2711 = vunpack.c.l.b16 %v604
  %v2712 = vunpack.c.h.b16 %v604
  %v2713 = vunpack.c.l.b16 %v605
  %v2714 = vunpack.c.h.b16 %v605
  %v2715 = vunpack.c.l.b16 %v606
  %v2716 = vunpack.c.h.b16 %v606
  %v2717 = vunpack.c.l.b16 %v607
  %v2718 = vunpack.c.h.b16 %v607
  %v2719 = vunpack.c.l.b16 %v608
  %v2720 = vunpack.c.h.b16 %v608
  %v2721 = vunpack.c.l.b16 %v609
  %v2722 = vunpack.c.h.b16 %v609
  %v2723 = vunpack.c.l.b16 %v610
  %v2724 = vunpack.c.h.b16 %v610
  %v2725 = vunpack.c.l.b16 %v611
  %v2726 = vunpack.c.h.b16 %v611
  %v2727 = vunpack.c.l.b16 %v612
  %v2728 = vunpack.c.h.b16 %v612
  %v2729 = vunpack.c.l.b16 %v613
  %v2730 = vunpack.c.h.b16 %v613
  %v2731 = vunpack.c.l.b16 %v614
  %v2732 = vunpack.c.h.b16 %v614
  %v2733 = vunpack.c.l.b16 %v615
  %v2734 = vunpack.c.h.b16 %v615
  %v2735 = vunpack.c.l.b16 %v616
  %v2736 = vunpack.c.h.b16 %v616
  %v2737 = vunpack.c.l.b16 %v617
  %v2738 = vunpack.c.h.b16 %v617
  %v2739 = vunpack.c.l.b16 %v618
  %v2740 = vunpack.c.h.b16 %v618
  %v2741 = vunpack.c.l.b16 %v619
  %v2742 = vunpack.c.h.b16 %v619
  %v2743 = vunpack.c.l.b16 %v620
  %v2744 = vunpack.c.h.b16 %v620
  %v2745 = vunpack.c.l.b16 %v621
  %v2746 = vunpack.c.h.b16 %v621
  %v2747 = vunpack.c.l.b16 %v622
  %v2748 = vunpack.c.h.b16 %v622
  %v2749 = vunpack.c.l.b16 %v623
  %v2750 = vunpack.c.h.b16 %v623
  %v2751 = vunpack.c.l.b16 %v624
  %v2752 = vunpack.c.h.b16 %v624
  %v2753 = vunpack.c.l.b16 %v625
  %v2754 = vunpack.c.h.b16 %v625
  %v2755 = vunpack.c.l.b16 %v626
  %v2756 = vunpack.c.h.b16 %v626
  %v2757 = vunpack.c.l.b16 %v627
  %v2758 = vunpack.c.h.b16 %v627
  %v2759 = vunpack.c.l.b16 %v628
  %v2760 = vunpack.c.h.b16 %v628
  %v2761 = vunpack.c.l.b16 %v629
  %v2762 = vunpack.c.h.b16 %v629
  %v2763 = vunpack.c.l.b16 %v630
  %v2764 = vunpack.c.h.b16 %v630
  %v2765 = vunpack.c.l.b16 %v631
  %v2766 = vunpack.c.h.b16 %v631
  %v2767 = vunpack.c.l.b16 %v632
  %v2768 = vunpack.c.h.b16 %v632
  %v2769 = vunpack.c.l.b16 %v633
  %v2770 = vunpack.c.h.b16 %v633
  %v2771 = vunpack.c.l.b16 %v634
  %v2772 = vunpack.c.h.b16 %v634
  %v2773 = vunpack.c.l.b16 %v635
  %v2774 = vunpack.c.h.b16 %v635
  %v2775 = vunpack.c.l.b16 %v636
  %v2776 = vunpack.c.h.b16 %v636
  %v2777 = vunpack.c.l.b16 %v637
  %v2778 = vunpack.c.h.b16 %v637
  %v2779 = vunpack.c.l.b16 %v638
  %v2780 = vunpack.c.h.b16 %v638
  %v2781 = vunpack.c.l.b16 %v639
  %v2782 = vunpack.c.h.b16 %v639
  %v2783 = vunpack.c.l.b16 %v640
  %v2784 = vunpack.c.h.b16 %v640
  %v2785 = vunpack.c.l.b16 %v641
  %v2786 = vunpack.c.h.b16 %v641
  %v2787 = vunpack.c.l.b16 %v642
  %v2788 = vunpack.c.h.b16 %v642
  %v2789 = vunpack.c.l.b16 %v643
  %v2790 = vunpack.c.h.b16 %v643
  %v2791 = vunpack.c.l.b16 %v644
  %v2792 = vunpack.c.h.b16 %v644
  %v2793 = vunpack.c.l.b16 %v645
  %v2794 = vunpack.c.h.b16 %v645
  %v2795 = vunpack.c.l.b16 %v646
  %v2796 = vunpack.c.h.b16 %v646
  %v2797 = vunpack.c.l.b16 %v647
  %v2798 = vunpack.c.h.b16 %v647
  %v2799 = vunpack.c.l.b16 %v648
  %v2800 = vunpack.c.h.b16 %v648
  %v2801 = vunpack.c.l.b16 %v649
  %v2802 = vunpack.c.h.b16 %v649
  %v2803 = vunpack.c.l.b16 %v650
  %v2804 = vunpack.c.h.b16 %v650
  %v2805 = vunpack.c.l.b16 %v651
  %v2806 = vunpack.c.h.b16 %v651
  %v2807 = vunpack.c.l.b16 %v652
  %v2808 = vunpack.c.h.b16 %v652
  %v2809 = vunpack.c.l.b16 %v653
  %v2810 = vunpack.c.h.b16 %v653
  %v2811 = vunpack.c.l.b16 %v654
  %v2812 = vunpack.c.h.b16 %v654
  %v2813 = vunpack.c.l.b16 %v655
  %v2814 = vunpack.c.h.b16 %v655
  %v2815 = vunpack.c.l.b16 %v656
  %v2816 = vunpack.c.h.b16 %v656
  %v2817 = vunpack.c.l.b16 %v657
  %v2818 = vunpack.c.h.b16 %v657
  %v2819 = vunpack.c.l.b16 %v658
  %v2820 = vunpack.c.h.b16 %v658
  %v2821 = vunpack.c.l.b16 %v659
  %v2822 = vunpack.c.h.b16 %v659
  %v2823 = vunpack.c.l.b16 %v660
  %v2824 = vunpack.c.h.b16 %v660
  %v2825 = vunpack.c.l.b16 %v661
  %v2826 = vunpack.c.h.b16 %v661
  %v2827 = vunpack.c.l.b16 %v662
  %v2828 = vunpack.c.h.b16 %v662
  %v2829 = vunpack.c.l.b16 %v663
  %v2830 = vunpack.c.h.b16 %v663
  %v2831 = vunpack.c.l.b16 %v664
  %v2832 = vunpack.c.h.b16 %v664
  %v2833 = vunpack.c.l.b16 %v665
  %v2834 = vunpack.c.h.b16 %v665
  %v2835 = vunpack.c.l.b16 %v666
  %v2836 = vunpack.c.h.b16 %v666
  %v2837 = vunpack.c.l.b16 %v667
  %v2838 = vunpack.c.h.b16 %v667
  %v2839 = vunpack.c.l.b16 %v668
  %v2840 = vunpack.c.h.b16 %v668
  %v2841 = vunpack.c.l.b16 %v669
  %v2842 = vunpack.c.h.b16 %v669
  %v2843 = vunpack.c.l.b16 %v670
  %v2844 = vunpack.c.h.b16 %v670
  %v2845 = vunpack.c.l.b16 %v671
  %v2846 = vunpack.c.h.b16 %v671
  %v2847 = vunpack.c.l.b16 %v672
  %v2848 = vunpack.c.h.b16 %v672
  %v2849 = vunpack.c.l.b16 %v673
  %v2850 = vunpack.c.h.b16 %v673
  %v2851 = vunpack.c.l.b16 %v674
  %v2852 = vunpack.c.h.b16 %v674
  %v2853 = vunpack.c.l.b16 %v675
  %v2854 = vunpack.c.h.b16 %v675
  %v2855 = vunpack.c.l.b16 %v676
  %v2856 = vunpack.c.h.b16 %v676
  %v2857 = vunpack.c.l.b16 %v677
  %v2858 = vunpack.c.h.b16 %v677
  %v2859 = vunpack.c.l.b16 %v678
  %v2860 = vunpack.c.h.b16 %v678
  %v2861 = vunpack.c.l.b16 %v679
  %v2862 = vunpack.c.h.b16 %v679
  %v2863 = vunpack.c.l.b16 %v680
  %v2864 = vunpack.c.h.b16 %v680
  %v2865 = vunpack.c.l.b16 %v681
  %v2866 = vunpack.c.h.b16 %v681
  %v2867 = vunpack.c.l.b16 %v682
  %v2868 = vunpack.c.h.b16 %v682
  %v2869 = vunpack.c.l.b16 %v683
  %v2870 = vunpack.c.h.b16 %v683
  %v2871 = vunpack.c.l.b16 %v684
  %v2872 = vunpack.c.h.b16 %v684
  %v2873 = vunpack.c.l.b16 %v685
  %v2874 = vunpack.c.h.b16 %v685
  %v2875 = vunpack.c.l.b16 %v686
  %v2876 = vunpack.c.h.b16 %v686
  %v2877 = vunpack.c.l.b16 %v687
  %v2878 = vunpack.c.h.b16 %v687
  %v2879 = vunpack.c.l.b16 %v688
  %v2880 = vunpack.c.h.b16 %v688
  %v2881 = vunpack.c.l.b16 %v689
  %v2882 = vunpack.c.h.b16 %v689
  %v2883 = vunpack.c.l.b16 %v690
  %v2884 = vunpack.c.h.b16 %v690
  %v2885 = vunpack.c.l.b16 %v691
  %v2886 = vunpack.c.h.b16 %v691
  %v2887 = vunpack.c.l.b16 %v692
  %v2888 = vunpack.c.h.b16 %v692
  %v2889 = vunpack.c.l.b16 %v693
  %v2890 = vunpack.c.h.b16 %v693
  %v2891 = vunpack.c.l.b16 %v694
  %v2892 = vunpack.c.h.b16 %v694
  %v2893 = vunpack.c.l.b16 %v695
  %v2894 = vunpack.c.h.b16 %v695
  %v2895 = vunpack.c.l.b16 %v696
  %v2896 = vunpack.c.h.b16 %v696
  %v2897 = vunpack.c.l.b16 %v697
  %v2898 = vunpack.c.h.b16 %v697
  %v2899 = vunpack.c.l.b16 %v698
  %v2900 = vunpack.c.h.b16 %v698
  %v2901 = vunpack.c.l.b16 %v699
  %v2902 = vunpack.c.h.b16 %v699
  %v2903 = vunpack.c.l.b16 %v700
  %v2904 = vunpack.c.h.b16 %v700
  %v2905 = vunpack.c.l.b16 %v701
  %v2906 = vunpack.c.h.b16 %v701
  %v2907 = vunpack.c.l.b16 %v702
  %v2908 = vunpack.c.h.b16 %v702
  %v2909 = vunpack.c.l.b16 %v703
  %v2910 = vunpack.c.h.b16 %v703
  %v2911 = vunpack.c.l.b16 %v704
  %v2912 = vunpack.c.h.b16 %v704
  %v2913 = vunpack.c.l.b16 %v705
  %v2914 = vunpack.c.h.b16 %v705
  %v2915 = vunpack.c.l.b16 %v706
  %v2916 = vunpack.c.h.b16 %v706
  %v2917 = vunpack.c.l.b16 %v707
  %v2918 = vunpack.c.h.b16 %v707
  %v2919 = vunpack.c.l.b16 %v708
  %v2920 = vunpack.c.h.b16 %v708
  %v2921 = vunpack.c.l.b16 %v709
  %v2922 = vunpack.c.h.b16 %v709
  %v2923 = vunpack.c.l.b16 %v710
  %v2924 = vunpack.c.h.b16 %v710
  %v2925 = vunpack.c.l.b16 %v711
  %v2926 = vunpack.c.h.b16 %v711
  %v2927 = vunpack.c.l.b16 %v712
  %v2928 = vunpack.c.h.b16 %v712
  %v2929 = vunpack.c.l.b16 %v713
  %v2930 = vunpack.c.h.b16 %v713
  %v2931 = vunpack.c.l.b16 %v714
  %v2932 = vunpack.c.h.b16 %v714
  %v2933 = vunpack.c.l.b16 %v715
  %v2934 = vunpack.c.h.b16 %v715
  %v2935 = vunpack.c.l.b16 %v716
  %v2936 = vunpack.c.h.b16 %v716
  %v2937 = vunpack.c.l.b16 %v717
  %v2938 = vunpack.c.h.b16 %v717
  %v2939 = vunpack.c.l.b16 %v718
  %v2940 = vunpack.c.h.b16 %v718
  %v2941 = vunpack.c.l.b16 %v719
  %v2942 = vunpack.c.h.b16 %v719
  %v2943 = vunpack.c.l.b16 %v720
  %v2944 = vunpack.c.h.b16 %v720
  %v2945 = vunpack.c.l.b16 %v721
  %v2946 = vunpack.c.h.b16 %v721
  %v2947 = vunpack.c.l.b16 %v722
  %v2948 = vunpack.c.h.b16 %v722
  %v2949 = vunpack.c.l.b16 %v723
  %v2950 = vunpack.c.h.b16 %v723
  %v2951 = vunpack.c.l.b16 %v724
  %v2952 = vunpack.c.h.b16 %v724
  %v2953 = vunpack.c.l.b16 %v725
  %v2954 = vunpack.c.h.b16 %v725
  %v2955 = vunpack.c.l.b16 %v726
  %v2956 = vunpack.c.h.b16 %v726
  %v2957 = vunpack.c.l.b16 %v727
  %v2958 = vunpack.c.h.b16 %v727
  %v2959 = vunpack.c.l.b16 %v728
  %v2960 = vunpack.c.h.b16 %v728
  %v2961 = vunpack.c.l.b16 %v729
  %v2962 = vunpack.c.h.b16 %v729
  %v2963 = vunpack.c.l.b16 %v730
  %v2964 = vunpack.c.h.b16 %v730
  %v2965 = vunpack.c.l.b16 %v731
  %v2966 = vunpack.c.h.b16 %v731
  %v2967 = vunpack.c.l.b16 %v732
  %v2968 = vunpack.c.h.b16 %v732
  %v2969 = vunpack.c.l.b16 %v733
  %v2970 = vunpack.c.h.b16 %v733
  %v2971 = vunpack.c.l.b16 %v734
  %v2972 = vunpack.c.h.b16 %v734
  %v2973 = vunpack.c.l.b16 %v735
  %v2974 = vunpack.c.h.b16 %v735
  %v2975 = vunpack.c.l.b16 %v736
  %v2976 = vunpack.c.h.b16 %v736
  %v2977 = vunpack.c.l.b16 %v737
  %v2978 = vunpack.c.h.b16 %v737
  %v2979 = vunpack.c.l.b16 %v738
  %v2980 = vunpack.c.h.b16 %v738
  %v2981 = vunpack.c.l.b16 %v739
  %v2982 = vunpack.c.h.b16 %v739
  %v2983 = vunpack.c.l.b16 %v740
  %v2984 = vunpack.c.h.b16 %v740
  %v2985 = vunpack.c.l.b16 %v741
  %v2986 = vunpack.c.h.b16 %v741
  %v2987 = vunpack.c.l.b16 %v742
  %v2988 = vunpack.c.h.b16 %v742
  %v2989 = vunpack.c.l.b16 %v743
  %v2990 = vunpack.c.h.b16 %v743
  %v2991 = vunpack.c.l.b16 %v744
  %v2992 = vunpack.c.h.b16 %v744
  %v2993 = vunpack.c.l.b16 %v745
  %v2994 = vunpack.c.h.b16 %v745
  %v2995 = vunpack.c.l.b16 %v746
  %v2996 = vunpack.c.h.b16 %v746
  %v2997 = vunpack.c.l.b16 %v747
  %v2998 = vunpack.c.h.b16 %v747
  %v2999 = vunpack.c.l.b16 %v748
  %v3000 = vunpack.c.h.b16 %v748
  %v3001 = vunpack.c.l.b16 %v749
  %v3002 = vunpack.c.h.b16 %v749
  %v3003 = vunpack.c.l.b16 %v750
  %v3004 = vunpack.c.h.b16 %v750
  %v3005 = vunpack.c.l.b16 %v751
  %v3006 = vunpack.c.h.b16 %v751
  %v3007 = vunpack.c.l.b16 %v752
  %v3008 = vunpack.c.h.b16 %v752
  %v3009 = vunpack.c.l.b16 %v753
  %v3010 = vunpack.c.h.b16 %v753
  %v3011 = vunpack.c.l.b16 %v754
  %v3012 = vunpack.c.h.b16 %v754
  %v3013 = vunpack.c.l.b16 %v755
  %v3014 = vunpack.c.h.b16 %v755
  %v3015 = vunpack.c.l.b16 %v756
  %v3016 = vunpack.c.h.b16 %v756
  %v3017 = vunpack.c.l.b16 %v757
  %v3018 = vunpack.c.h.b16 %v757
  %v3019 = vunpack.c.l.b16 %v758
  %v3020 = vunpack.c.h.b16 %v758
  %v3021 = vunpack.c.l.b16 %v759
  %v3022 = vunpack.c.h.b16 %v759
  %v3023 = vunpack.c.l.b16 %v760
  %v3024 = vunpack.c.h.b16 %v760
  %v3025 = vunpack.c.l.b16 %v761
  %v3026 = vunpack.c.h.b16 %v761
  %v3027 = vunpack.c.l.b16 %v762
  %v3028 = vunpack.c.h.b16 %v762
  %v3029 = vunpack.c.l.b16 %v763
  %v3030 = vunpack.c.h.b16 %v763
  %v3031 = vunpack.c.l.b16 %v764
  %v3032 = vunpack.c.h.b16 %v764
  %v3033 = vunpack.c.l.b16 %v765
  %v3034 = vunpack.c.h.b16 %v765
  %v3035 = vunpack.c.l.b16 %v766
  %v3036 = vunpack.c.h.b16 %v766
  %v3037 = vunpack.c.l.b16 %v767
  %v3038 = vunpack.c.h.b16 %v767
  %v3039 = vunpack.c.l.b16 %v768
  %v3040 = vunpack.c.h.b16 %v768
  %v3041 = vunpack.c.l.b16 %v769
  %v3042 = vunpack.c.h.b16 %v769
  %v3043 = vunpack.c.l.b16 %v770
  %v3044 = vunpack.c.h.b16 %v770
  %v3045 = vunpack.c.l.b16 %v771
  %v3046 = vunpack.c.h.b16 %v771
  %v3047 = vunpack.c.l.b16 %v772
  %v3048 = vunpack.c.h.b16 %v772
  %v3049 = vunpack.c.l.b16 %v773
  %v3050 = vunpack.c.h.b16 %v773
  %v3051 = vunpack.c.l.b16 %v774
  %v3052 = vunpack.c.h.b16 %v774
  %v3053 = vunpack.c.l.b16 %v775
  %v3054 = vunpack.c.h.b16 %v775
  %v3055 = vunpack.c.l.b16 %v776
  %v3056 = vunpack.c.h.b16 %v776
  %v3057 = vunpack.c.l.b16 %v777
  %v3058 = vunpack.c.h.b16 %v777
  %v3059 = vunpack.c.l.b16 %v778
  %v3060 = vunpack.c.h.b16 %v778
  %v3061 = vunpack.c.l.b16 %v779
  %v3062 = vunpack.c.h.b16 %v779
  %v3063 = vunpack.c.l.b16 %v780
  %v3064 = vunpack.c.h.b16 %v780
  %v3065 = vunpack.c.l.b16 %v781
  %v3066 = vunpack.c.h.b16 %v781
  %v3067 = vunpack.c.l.b16 %v782
  %v3068 = vunpack.c.h.b16 %v782
  %v3069 = vunpack.c.l.b16 %v783
  %v3070 = vunpack.c.h.b16 %v783
  %v3071 = vunpack.c.l.b16 %v784
  %v3072 = vunpack.c.h.b16 %v784
  %v3073 = vunpack.c.l.b16 %v785
  %v3074 = vunpack.c.h.b16 %v785
  %v3075 = vunpack.c.l.b16 %v786
  %v3076 = vunpack.c.h.b16 %v786
  %v3077 = vunpack.c.l.b16 %v787
  %v3078 = vunpack.c.h.b16 %v787
  %v3079 = vunpack.c.l.b16 %v788
  %v3080 = vunpack.c.h.b16 %v788
  %v3081 = vunpack.c.l.b16 %v789
  %v3082 = vunpack.c.h.b16 %v789
  %v3083 = vunpack.c.l.b16 %v790
  %v3084 = vunpack.c.h.b16 %v790
  %v3085 = vunpack.c.l.b16 %v791
  %v3086 = vunpack.c.h.b16 %v791
  %v3087 = vunpack.c.l.b16 %v792
  %v3088 = vunpack.c.h.b16 %v792
  %v3089 = vunpack.c.l.b16 %v793
  %v3090 = vunpack.c.h.b16 %v793
  %v3091 = vunpack.c.l.b16 %v794
  %v3092 = vunpack.c.h.b16 %v794
  %v3093 = vunpack.c.l.b16 %v795
  %v3094 = vunpack.c.h.b16 %v795
  %v3095 = vunpack.c.l.b16 %v796
  %v3096 = vunpack.c.h.b16 %v796
  %v3097 = vunpack.c.l.b16 %v797
  %v3098 = vunpack.c.h.b16 %v797
  %v3099 = vunpack.c.l.b16 %v798
  %v3100 = vunpack.c.h.b16 %v798
  %v3101 = vunpack.c.l.b16 %v799
  %v3102 = vunpack.c.h.b16 %v799
  %v3103 = vunpack.c.l.b16 %v800
  %v3104 = vunpack.c.h.b16 %v800
  %v3105 = vunpack.c.l.b16 %v801
  %v3106 = vunpack.c.h.b16 %v801
  %v3107 = vunpack.c.l.b16 %v802
  %v3108 = vunpack.c.h.b16 %v802
  %v3109 = vunpack.c.l.b16 %v803
  %v3110 = vunpack.c.h.b16 %v803
  %v3111 = vunpack.c.l.b16 %v804
  %v3112 = vunpack.c.h.b16 %v804
  %v3113 = vunpack.c.l.b16 %v805
  %v3114 = vunpack.c.h.b16 %v805
  %v3115 = vunpack.c.l.b16 %v806
  %v3116 = vunpack.c.h.b16 %v806
  %v3117 = vunpack.c.l.b16 %v807
  %v3118 = vunpack.c.h.b16 %v807
  %v3119 = vunpack.c.l.b16 %v808
  %v3120 = vunpack.c.h.b16 %v808
  %v3121 = vunpack.c.l.b16 %v809
  %v3122 = vunpack.c.h.b16 %v809
  %v3123 = vunpack.c.l.b16 %v810
  %v3124 = vunpack.c.h.b16 %v810
  %v3125 = vunpack.c.l.b16 %v811
  %v3126 = vunpack.c.h.b16 %v811
  %v3127 = vunpack.c.l.b16 %v812
  %v3128 = vunpack.c.h.b16 %v812
  %v3129 = vunpack.c.l.b16 %v813
  %v3130 = vunpack.c.h.b16 %v813
  %v3131 = vunpack.c.l.b16 %v814
  %v3132 = vunpack.c.h.b16 %v814
  %v3133 = vunpack.c.l.b16 %v815
  %v3134 = vunpack.c.h.b16 %v815
  %v3135 = vunpack.c.l.b16 %v816
  %v3136 = vunpack.c.h.b16 %v816
  %v3137 = vunpack.c.l.b16 %v817
  %v3138 = vunpack.c.h.b16 %v817
  %v3139 = vunpack.c.l.b16 %v818
  %v3140 = vunpack.c.h.b16 %v818
  %v3141 = vunpack.c.l.b16 %v819
  %v3142 = vunpack.c.h.b16 %v819
  %v3143 = vunpack.c.l.b16 %v820
  %v3144 = vunpack.c.h.b16 %v820
  %v3145 = vunpack.c.l.b16 %v821
  %v3146 = vunpack.c.h.b16 %v821
  %v3147 = vunpack.c.l.b16 %v822
  %v3148 = vunpack.c.h.b16 %v822
  %v3149 = vunpack.c.l.b16 %v823
  %v3150 = vunpack.c.h.b16 %v823
  %v3151 = vunpack.c.l.b16 %v824
  %v3152 = vunpack.c.h.b16 %v824
  %v3153 = vunpack.c.l.b16 %v825
  %v3154 = vunpack.c.h.b16 %v825
  %v3155 = vunpack.c.l.b16 %v826
  %v3156 = vunpack.c.h.b16 %v826
  %v3157 = vunpack.c.l.b16 %v827
  %v3158 = vunpack.c.h.b16 %v827
  %v3159 = vunpack.c.l.b16 %v828
  %v3160 = vunpack.c.h.b16 %v828
  %v3161 = vunpack.c.l.b16 %v829
  %v3162 = vunpack.c.h.b16 %v829
  %v3163 = vunpack.c.l.b16 %v830
  %v3164 = vunpack.c.h.b16 %v830
  %v3165 = vunpack.c.l.b16 %v831
  %v3166 = vunpack.c.h.b16 %v831
  %v3167 = vunpack.c.l.b16 %v832
  %v3168 = vunpack.c.h.b16 %v832
  %v3169 = vunpack.c.l.b16 %v833
  %v3170 = vunpack.c.h.b16 %v833
  %v3171 = vunpack.c.l.b16 %v834
  %v3172 = vunpack.c.h.b16 %v834
  %v3173 = vunpack.c.l.b16 %v835
  %v3174 = vunpack.c.h.b16 %v835
  %v3175 = vunpack.c.l.b16 %v836
  %v3176 = vunpack.c.h.b16 %v836
  %v3177 = vunpack.c.l.b16 %v837
  %v3178 = vunpack.c.h.b16 %v837
  %v3179 = vunpack.c.l.b16 %v838
  %v3180 = vunpack.c.h.b16 %v838
  %v3181 = vunpack.c.l.b16 %v839
  %v3182 = vunpack.c.h.b16 %v839
  %v3183 = vunpack.c.l.b16 %v840
  %v3184 = vunpack.c.h.b16 %v840
  %v3185 = vunpack.c.l.b16 %v841
  %v3186 = vunpack.c.h.b16 %v841
  %v3187 = vunpack.c.l.b16 %v842
  %v3188 = vunpack.c.h.b16 %v842
  %v3189 = vunpack.c.l.b16 %v843
  %v3190 = vunpack.c.h.b16 %v843
  %v3191 = vunpack.c.l.b16 %v844
  %v3192 = vunpack.c.h.b16 %v844
  %v3193 = vunpack.c.l.b16 %v845
  %v3194 = vunpack.c.h.b16 %v845
  %v3195 = vunpack.c.l.b16 %v846
  %v3196 = vunpack.c.h.b16 %v846
  %v3197 = vunpack.c.l.b16 %v847
  %v3198 = vunpack.c.h.b16 %v847
  %v3199 = vunpack.c.l.b16 %v848
  %v3200 = vunpack.c.h.b16 %v848
  %v3201 = vunpack.c.l.b16 %v849
  %v3202 = vunpack.c.h.b16 %v849
  %v3203 = vunpack.c.l.b16 %v850
  %v3204 = vunpack.c.h.b16 %v850
  %v3205 = vunpack.c.l.b16 %v851
  %v3206 = vunpack.c.h.b16 %v851
  %v3207 = vunpack.c.l.b16 %v852
  %v3208 = vunpack.c.h.b16 %v852
  %v3209 = vunpack.c.l.b16 %v853
  %v3210 = vunpack.c.h.b16 %v853
  %v3211 = vunpack.c.l.b16 %v854
  %v3212 = vunpack.c.h.b16 %v854
  %v3213 = vunpack.c.l.b16 %v855
  %v3214 = vunpack.c.h.b16 %v855
  %v3215 = vunpack.c.l.b16 %v856
  %v3216 = vunpack.c.h.b16 %v856
  %v3217 = vunpack.c.l.b16 %v857
  %v3218 = vunpack.c.h.b16 %v857
  %v3219 = vunpack.c.l.b16 %v858
  %v3220 = vunpack.c.h.b16 %v858
  %v3221 = vunpack.c.l.b16 %v859
  %v3222 = vunpack.c.h.b16 %v859
  %v3223 = vunpack.c.l.b16 %v860
  %v3224 = vunpack.c.h.b16 %v860
  %v3225 = vunpack.c.l.b16 %v861
  %v3226 = vunpack.c.h.b16 %v861
  %v3227 = vunpack.c.l.b16 %v862
  %v3228 = vunpack.c.h.b16 %v862
  %v3229 = vunpack.c.l.b16 %v863
  %v3230 = vunpack.c.h.b16 %v863
  %v3231 = vunpack.c.l.b16 %v864
  %v3232 = vunpack.c.h.b16 %v864
  %v3233 = vunpack.c.l.b16 %v865
  %v3234 = vunpack.c.h.b16 %v865
  %v3235 = vunpack.c.l.b16 %v866
  %v3236 = vunpack.c.h.b16 %v866
  %v3237 = vunpack.c.l.b16 %v867
  %v3238 = vunpack.c.h.b16 %v867
  %v3239 = vunpack.c.l.b16 %v868
  %v3240 = vunpack.c.h.b16 %v868
  %v3241 = vunpack.c.l.b16 %v869
  %v3242 = vunpack.c.h.b16 %v869
  %v3243 = vunpack.c.l.b16 %v870
  %v3244 = vunpack.c.h.b16 %v870
  %v3245 = vunpack.c.l.b16 %v871
  %v3246 = vunpack.c.h.b16 %v871
  %v3247 = vunpack.c.l.b16 %v872
  %v3248 = vunpack.c.h.b16 %v872
  %v3249 = vunpack.c.l.b16 %v873
  %v3250 = vunpack.c.h.b16 %v873
  %v3251 = vunpack.c.l.b16 %v874
  %v3252 = vunpack.c.h.b16 %v874
  %v3253 = vunpack.c.l.b16 %v875
  %v3254 = vunpack.c.h.b16 %v875
  %v3255 = vunpack.c.l.b16 %v876
  %v3256 = vunpack.c.h.b16 %v876
  %v3257 = vunpack.c.l.b16 %v877
  %v3258 = vunpack.c.h.b16 %v877
  %v3259 = vunpack.c.l.b16 %v878
  %v3260 = vunpack.c.h.b16 %v878
  %v3261 = vunpack.c.l.b16 %v879
  %v3262 = vunpack.c.h.b16 %v879
  %v3263 = vunpack.c.l.b16 %v880
  %v3264 = vunpack.c.h.b16 %v880
  %v3265 = vunpack.c.l.b16 %v881
  %v3266 = vunpack.c.h.b16 %v881
  %v3267 = vunpack.c.l.b16 %v882
  %v3268 = vunpack.c.h.b16 %v882
  %v3269 = vunpack.c.l.b16 %v883
  %v3270 = vunpack.c.h.b16 %v883
  %v3271 = vunpack.c.l.b16 %v884
  %v3272 = vunpack.c.h.b16 %v884
  %v3273 = vunpack.c.l.b16 %v885
  %v3274 = vunpack.c.h.b16 %v885
  %v3275 = vunpack.c.l.b16 %v886
  %v3276 = vunpack.c.h.b16 %v886
  %v3277 = vunpack.c.l.b16 %v887
  %v3278 = vunpack.c.h.b16 %v887
  %v3279 = vunpack.c.l.b16 %v888
  %v3280 = vunpack.c.h.b16 %v888
  %v3281 = vunpack.c.l.b16 %v889
  %v3282 = vunpack.c.h.b16 %v889
  %v3283 = vunpack.c.l.b16 %v890
  %v3284 = vunpack.c.h.b16 %v890
  %v3285 = vpack.c.b16 %v1725, %v1717
  %v3286 = vpack.c.b16 %v1726, %v1718
  %v3287 = vpack.c.b16 %v1727, %v1719
  %v3288 = vpack.c.b16 %v1728, %v1720
  %v3289 = vpack.c.b16 %v1729, %v1721
  %v3290 = vpack.c.b16 %v1730, %v1722
  %v3291 = vpack.c.b16 %v1731, %v1723
  %v3292 = vpack.c.b16 %v1732, %v1724
  %v3293 = vpack.c.b16 %v1741, %v1733
  %v3294 = vpack.c.b16 %v1742, %v1734
  %v3295 = vpack.c.b16 %v1743, %v1735
  %v3296 = vpack.c.b16 %v1744, %v1736
  %v3297 = vpack.c.b16 %v1745, %v1737
  %v3298 = vpack.c.b16 %v1746, %v1738
  %v3299 = vpack.c.b16 %v1747, %v1739
  %v3300 = vpack.c.b16 %v1748, %v1740
  %v3301 = vpack.c.b16 %v1757, %v1749
  %v3302 = vpack.c.b16 %v1758, %v1750
  %v3303 = vpack.c.b16 %v1759, %v1751
  %v3304 = vpack.c.b16 %v1760, %v1752
  %v3305 = vpack.c.b16 %v1761, %v1753
  %v3306 = vpack.c.b16 %v1762, %v1754
  %v3307 = vpack.c.b16 %v1763, %v1755
  %v3308 = vpack.c.b16 %v1764, %v1756
  %v3309 = vpack.c.b16 %v1773, %v1765
  %v3310 = vpack.c.b16 %v1774, %v1766
  %v3311 = vpack.c.b16 %v1775, %v1767
  %v3312 = vpack.c.b16 %v1776, %v1768
  %v3313 = vpack.c.b16 %v1777, %v1769
  %v3314 = vpack.c.b16 %v1778, %v1770
  %v3315 = vpack.c.b16 %v1779, %v1771
  %v3316 = vpack.c.b16 %v1780, %v1772
  %v3317 = vpack.c.b16 %v1789, %v1781
  %v3318 = vpack.c.b16 %v1790, %v1782
  %v3319 = vpack.c.b16 %v1791, %v1783
  %v3320 = vpack.c.b16 %v1792, %v1784
  %v3321 = vpack.c.b16 %v1793, %v1785
  %v3322 = vpack.c.b16 %v1794, %v1786
  %v3323 = vpack.c.b16 %v1795, %v1787
  %v3324 = vpack.c.b16 %v1796, %v1788
  %v3325 = vpack.c.b16 %v1805, %v1797
  %v3326 = vpack.c.b16 %v1806, %v1798
  %v3327 = vpack.c.b16 %v1807, %v1799
  %v3328 = vpack.c.b16 %v1808, %v1800
  %v3329 = vpack.c.b16 %v1809, %v1801
  %v3330 = vpack.c.b16 %v1810, %v1802
  %v3331 = vpack.c.b16 %v1811, %v1803
  %v3332 = vpack.c.b16 %v1812, %v1804
  %v3333 = vpack.c.b16 %v1821, %v1813
  %v3334 = vpack.c.b16 %v1822, %v1814
  %v3335 = vpack.c.b16 %v1823, %v1815
  %v3336 = vpack.c.b16 %v1824, %v1816
  %v3337 = vpack.c.b16 %v1825, %v1817
  %v3338 = vpack.c.b16 %v1826, %v1818
  %v3339 = vpack.c.b16 %v1827, %v1819
  %v3340 = vpack.c.b16 %v1828, %v1820
  %v3341 = vpack.c.b16 %v1837, %v1829
  %v3342 = vpack.c.b16 %v1838, %v1830
  %v3343 = vpack.c.b16 %v1839, %v1831
  %v3344 = vpack.c.b16 %v1840, %v1832
  %v3345 = vpack.c.b16 %v1841, %v1833
  %v3346 = vpack.c.b16 %v1842, %v1834
  %v3347 = vpack.c.b16 %v1843, %v1835
  %v3348 = vpack.c.b16 %v1844, %v1836
  %v3349 = vpack.c.b16 %v1853, %v1845
  %v3350 = vpack.c.b16 %v1854, %v1846
  %v3351 = vpack.c.b16 %v1855, %v1847
  %v3352 = vpack.c.b16 %v1856, %v1848
  %v3353 = vpack.c.b16 %v1857, %v1849
  %v3354 = vpack.c.b16 %v1858, %v1850
  %v3355 = vpack.c.b16 %v1859, %v1851
  %v3356 = vpack.c.b16 %v1860, %v1852
  %v3357 = vpack.c.b16 %v1869, %v1861
  %v3358 = vpack.c.b16 %v1870, %v1862
  %v3359 = vpack.c.b16 %v1871, %v1863
  %v3360 = vpack.c.b16 %v1872, %v1864
  %v3361 = vpack.c.b16 %v1873, %v1865
  %v3362 = vpack.c.b16 %v1874, %v1866
  %v3363 = vpack.c.b16 %v1875, %v1867
  %v3364 = vpack.c.b16 %v1876, %v1868
  %v3365 = vpack.c.b16 %v1885, %v1877
  %v3366 = vpack.c.b16 %v1886, %v1878
  %v3367 = vpack.c.b16 %v1887, %v1879
  %v3368 = vpack.c.b16 %v1888, %v1880
  %v3369 = vpack.c.b16 %v1889, %v1881
  %v3370 = vpack.c.b16 %v1890, %v1882
  %v3371 = vpack.c.b16 %v1891, %v1883
  %v3372 = vpack.c.b16 %v1892, %v1884
  %v3373 = vpack.c.b16 %v1901, %v1893
  %v3374 = vpack.c.b16 %v1902, %v1894
  %v3375 = vpack.c.b16 %v1903, %v1895
  %v3376 = vpack.c.b16 %v1904, %v1896
  %v3377 = vpack.c.b16 %v1905, %v1897
  %v3378 = vpack.c.b16 %v1906, %v1898
  %v3379 = vpack.c.b16 %v1907, %v1899
  %v3380 = vpack.c.b16 %v1908, %v1900
  %v3381 = vpack.c.b16 %v1917, %v1909
  %v3382 = vpack.c.b16 %v1918, %v1910
  %v3383 = vpack.c.b16 %v1919, %v1911
  %v3384 = vpack.c.b16 %v1920, %v1912
  %v3385 = vpack.c.b16 %v1921, %v1913
  %v3386 = vpack.c.b16 %v1922, %v1914
  %v3387 = vpack.c.b16 %v1923, %v1915
  %v3388 = vpack.c.b16 %v1924, %v1916
  %v3389 = vpack.c.b16 %v1933, %v1925
  %v3390 = vpack.c.b16 %v1934, %v1926
  %v3391 = vpack.c.b16 %v1935, %v1927
  %v3392 = vpack.c.b16 %v1936, %v1928
  %v3393 = vpack.c.b16 %v1937, %v1929
  %v3394 = vpack.c.b16 %v1938, %v1930
  %v3395 = vpack.c.b16 %v1939, %v1931
  %v3396 = vpack.c.b16 %v1940, %v1932
  %v3397 = vpack.c.b16 %v1949, %v1941
  %v3398 = vpack.c.b16 %v1950, %v1942
  %v3399 = vpack.c.b16 %v1951, %v1943
  %v3400 = vpack.c.b16 %v1952, %v1944
  %v3401 = vpack.c.b16 %v1953, %v1945
  %v3402 = vpack.c.b16 %v1954, %v1946
  %v3403 = vpack.c.b16 %v1955, %v1947
  %v3404 = vpack.c.b16 %v1956, %v1948
  %v3405 = vpack.c.b16 %v1965, %v1957
  %v3406 = vpack.c.b16 %v1966, %v1958
  %v3407 = vpack.c.b16 %v1967, %v1959
  %v3408 = vpack.c.b16 %v1968, %v1960
  %v3409 = vpack.c.b16 %v1969, %v1961
  %v3410 = vpack.c.b16 %v1970, %v1962
  %v3411 = vpack.c.b16 %v1971, %v1963
  %v3412 = vpack.c.b16 %v1972, %v1964
  %v3413 = vpack.c.b16 %v1981, %v1973
  %v3414 = vpack.c.b16 %v1982, %v1974
  %v3415 = vpack.c.b16 %v1983, %v1975
  %v3416 = vpack.c.b16 %v1984, %v1976
  %v3417 = vpack.c.b16 %v1985, %v1977
  %v3418 = vpack.c.b16 %v1986, %v1978
  %v3419 = vpack.c.b16 %v1987, %v1979
  %v3420 = vpack.c.b16 %v1988, %v1980
  %v3421 = vpack.c.b16 %v1997, %v1989
  %v3422 = vpack.c.b16 %v1998, %v1990
  %v3423 = vpack.c.b16 %v1999, %v1991
  %v3424 = vpack.c.b16 %v2000, %v1992
  %v3425 = vpack.c.b16 %v2001, %v1993
  %v3426 = vpack.c.b16 %v2002, %v1994
  %v3427 = vpack.c.b16 %v2003, %v1995
  %v3428 = vpack.c.b16 %v2004, %v1996
  %v3429 = vpack.c.b16 %v2013, %v2005
  %v3430 = vpack.c.b16 %v2014, %v2006
  %v3431 = vpack.c.b16 %v2015, %v2007
  %v3432 = vpack.c.b16 %v2016, %v2008
  %v3433 = vpack.c.b16 %v2017, %v2009
  %v3434 = vpack.c.b16 %v2018, %v2010
  %v3435 = vpack.c.b16 %v2019, %v2011
  %v3436 = vpack.c.b16 %v2020, %v2012
  %v3437 = vpack.c.b16 %v2029, %v2021
  %v3438 = vpack.c.b16 %v2030, %v2022
  %v3439 = vpack.c.b16 %v2031, %v2023
  %v3440 = vpack.c.b16 %v2032, %v2024
  %v3441 = vpack.c.b16 %v2033, %v2025
  %v3442 = vpack.c.b16 %v2034, %v2026
  %v3443 = vpack.c.b16 %v2035, %v2027
  %v3444 = vpack.c.b16 %v2036, %v2028
  %v3445 = vpack.c.b16 %v2045, %v2037
  %v3446 = vpack.c.b16 %v2046, %v2038
  %v3447 = vpack.c.b16 %v2047, %v2039
  %v3448 = vpack.c.b16 %v2048, %v2040
  %v3449 = vpack.c.b16 %v2049, %v2041
  %v3450 = vpack.c.b16 %v2050, %v2042
  %v3451 = vpack.c.b16 %v2051, %v2043
  %v3452 = vpack.c.b16 %v2052, %v2044
  %v3453 = vpack.c.b16 %v2061, %v2053
  %v3454 = vpack.c.b16 %v2062, %v2054
  %v3455 = vpack.c.b16 %v2063, %v2055
  %v3456 = vpack.c.b16 %v2064, %v2056
  %v3457 = vpack.c.b16 %v2065, %v2057
  %v3458 = vpack.c.b16 %v2066, %v2058
  %v3459 = vpack.c.b16 %v2067, %v2059
  %v3460 = vpack.c.b16 %v2068, %v2060
  %v3461 = vpack.c.b16 %v2077, %v2069
  %v3462 = vpack.c.b16 %v2078, %v2070
  %v3463 = vpack.c.b16 %v2079, %v2071
  %v3464 = vpack.c.b16 %v2080, %v2072
  %v3465 = vpack.c.b16 %v2081, %v2073
  %v3466 = vpack.c.b16 %v2082, %v2074
  %v3467 = vpack.c.b16 %v2083, %v2075
  %v3468 = vpack.c.b16 %v2084, %v2076
  %v3469 = vpack.c.b16 %v2093, %v2085
  %v3470 = vpack.c.b16 %v2094, %v2086
  %v3471 = vpack.c.b16 %v2095, %v2087
  %v3472 = vpack.c.b16 %v2096, %v2088
  %v3473 = vpack.c.b16 %v2097, %v2089
  %v3474 = vpack.c.b16 %v2098, %v2090
  %v3475 = vpack.c.b16 %v2099, %v2091
  %v3476 = vpack.c.b16 %v2100, %v2092
  %v3477 = vpack.c.b16 %v2109, %v2101
  %v3478 = vpack.c.b16 %v2110, %v2102
  %v3479 = vpack.c.b16 %v2111, %v2103
  %v3480 = vpack.c.b16 %v2112, %v2104
  %v3481 = vpack.c.b16 %v2113, %v2105
  %v3482 = vpack.c.b16 %v2114, %v2106
  %v3483 = vpack.c.b16 %v2115, %v2107
  %v3484 = vpack.c.b16 %v2116, %v2108
  %v3485 = vpack.c.b16 %v2125, %v2117
  %v3486 = vpack.c.b16 %v2126, %v2118
  %v3487 = vpack.c.b16 %v2127, %v2119
  %v3488 = vpack.c.b16 %v2128, %v2120
  %v3489 = vpack.c.b16 %v2129, %v2121
  %v3490 = vpack.c.b16 %v2130, %v2122
  %v3491 = vpack.c.b16 %v2131, %v2123
  %v3492 = vpack.c.b16 %v2132, %v2124
  %v3493 = vpack.c.b16 %v2141, %v2133
  %v3494 = vpack.c.b16 %v2142, %v2134
  %v3495 = vpack.c.b16 %v2143, %v2135
  %v3496 = vpack.c.b16 %v2144, %v2136
  %v3497 = vpack.c.b16 %v2145, %v2137
  %v3498 = vpack.c.b16 %v2146, %v2138
  %v3499 = vpack.c.b16 %v2147, %v2139
  %v3500 = vpack.c.b16 %v2148, %v2140
  %v3501 = vpack.c.b16 %v2157, %v2149
  %v3502 = vpack.c.b16 %v2158, %v2150
  %v3503 = vpack.c.b16 %v2159, %v2151
  %v3504 = vpack.c.b16 %v2160, %v2152
  %v3505 = vpack.c.b16 %v2161, %v2153
  %v3506 = vpack.c.b16 %v2162, %v2154
  %v3507 = vpack.c.b16 %v2163, %v2155
  %v3508 = vpack.c.b16 %v2164, %v2156
  %v3509 = vpack.c.b16 %v2173, %v2165
  %v3510 = vpack.c.b16 %v2174, %v2166
  %v3511 = vpack.c.b16 %v2175, %v2167
  %v3512 = vpack.c.b16 %v2176, %v2168
  %v3513 = vpack.c.b16 %v2177, %v2169
  %v3514 = vpack.c.b16 %v2178, %v2170
  %v3515 = vpack.c.b16 %v2179, %v2171
  %v3516 = vpack.c.b16 %v2180, %v2172
  %v3517 = vpack.c.b16 %v2189, %v2181
  %v3518 = vpack.c.b16 %v2190, %v2182
  %v3519 = vpack.c.b16 %v2191, %v2183
  %v3520 = vpack.c.b16 %v2192, %v2184
  %v3521 = vpack.c.b16 %v2193, %v2185
  %v3522 = vpack.c.b16 %v2194, %v2186
  %v3523 = vpack.c.b16 %v2195, %v2187
  %v3524 = vpack.c.b16 %v2196, %v2188
  %v3525 = vpack.c.b16 %v2205, %v2197
  %v3526 = vpack.c.b16 %v2206, %v2198
  %v3527 = vpack.c.b16 %v2207, %v2199
  %v3528 = vpack.c.b16 %v2208, %v2200
  %v3529 = vpack.c.b16 %v2209, %v2201
  %v3530 = vpack.c.b16 %v2210, %v2202
  %v3531 = vpack.c.b16 %v2211, %v2203
  %v3532 = vpack.c.b16 %v2212, %v2204
  %v3533 = vpack.c.b16 %v2221, %v2213
  %v3534 = vpack.c.b16 %v2222, %v2214
  %v3535 = vpack.c.b16 %v2223, %v2215
  %v3536 = vpack.c.b16 %v2224, %v2216
  %v3537 = vpack.c.b16 %v2225, %v2217
  %v3538 = vpack.c.b16 %v2226, %v2218
  %v3539 = vpack.c.b16 %v2227, %v2219
  %v3540 = vpack.c.b16 %v2228, %v2220
  %v3541 = vpack.c.b16 %v2237, %v2229
  %v3542 = vpack.c.b16 %v2238, %v2230
  %v3543 = vpack.c.b16 %v2239, %v2231
  %v3544 = vpack.c.b16 %v2240, %v2232
  %v3545 = vpack.c.b16 %v2241, %v2233
  %v3546 = vpack.c.b16 %v2242, %v2234
  %v3547 = vpack.c.b16 %v2243, %v2235
  %v3548 = vpack.c.b16 %v2244, %v2236
  %v3549 = vpack.c.b16 %v2253, %v2245
  %v3550 = vpack.c.b16 %v2254, %v2246
  %v3551 = vpack.c.b16 %v2255, %v2247
  %v3552 = vpack.c.b16 %v2256, %v2248
  %v3553 = vpack.c.b16 %v2257, %v2249
  %v3554 = vpack.c.b16 %v2258, %v2250
  %v3555 = vpack.c.b16 %v2259, %v2251
  %v3556 = vpack.c.b16 %v2260, %v2252
  %v3557 = vpack.c.b16 %v2269, %v2261
  %v3558 = vpack.c.b16 %v2270, %v2262
  %v3559 = vpack.c.b16 %v2271, %v2263
  %v3560 = vpack.c.b16 %v2272, %v2264
  %v3561 = vpack.c.b16 %v2273, %v2265
  %v3562 = vpack.c.b16 %v2274, %v2266
  %v3563 = vpack.c.b16 %v2275, %v2267
  %v3564 = vpack.c.b16 %v2276, %v2268
  %v3565 = vpack.c.b16 %v2285, %v2277
  %v3566 = vpack.c.b16 %v2286, %v2278
  %v3567 = vpack.c.b16 %v2287, %v2279
  %v3568 = vpack.c.b16 %v2288, %v2280
  %v3569 = vpack.c.b16 %v2289, %v2281
  %v3570 = vpack.c.b16 %v2290, %v2282
  %v3571 = vpack.c.b16 %v2291, %v2283
  %v3572 = vpack.c.b16 %v2292, %v2284
  %v3573 = vpack.c.b16 %v2301, %v2293
  %v3574 = vpack.c.b16 %v2302, %v2294
  %v3575 = vpack.c.b16 %v2303, %v2295
  %v3576 = vpack.c.b16 %v2304, %v2296
  %v3577 = vpack.c.b16 %v2305, %v2297
  %v3578 = vpack.c.b16 %v2306, %v2298
  %v3579 = vpack.c.b16 %v2307, %v2299
  %v3580 = vpack.c.b16 %v2308, %v2300
  %v3581 = vpack.c.b16 %v2317, %v2309
  %v3582 = vpack.c.b16 %v2318, %v2310
  %v3583 = vpack.c.b16 %v2319, %v2311
  %v3584 = vpack.c.b16 %v2320, %v2312
  %v3585 = vpack.c.b16 %v2321, %v2313
  %v3586 = vpack.c.b16 %v2322, %v2314
  %v3587 = vpack.c.b16 %v2323, %v2315
  %v3588 = vpack.c.b16 %v2324, %v2316
  %v3589 = vpack.c.b16 %v2333, %v2325
  %v3590 = vpack.c.b16 %v2334, %v2326
  %v3591 = vpack.c.b16 %v2335, %v2327
  %v3592 = vpack.c.b16 %v2336, %v2328
  %v3593 = vpack.c.b16 %v2337, %v2329
  %v3594 = vpack.c.b16 %v2338, %v2330
  %v3595 = vpack.c.b16 %v2339, %v2331
  %v3596 = vpack.c.b16 %v2340, %v2332
  %v3597 = vpack.c.b16 %v2349, %v2341
  %v3598 = vpack.c.b16 %v2350, %v2342
  %v3599 = vpack.c.b16 %v2351, %v2343
  %v3600 = vpack.c.b16 %v2352, %v2344
  %v3601 = vpack.c.b16 %v2353, %v2345
  %v3602 = vpack.c.b16 %v2354, %v2346
  %v3603 = vpack.c.b16 %v2355, %v2347
  %v3604 = vpack.c.b16 %v2356, %v2348
  %v3605 = vpack.c.b16 %v2365, %v2357
  %v3606 = vpack.c.b16 %v2366, %v2358
  %v3607 = vpack.c.b16 %v2367, %v2359
  %v3608 = vpack.c.b16 %v2368, %v2360
  %v3609 = vpack.c.b16 %v2369, %v2361
  %v3610 = vpack.c.b16 %v2370, %v2362
  %v3611 = vpack.c.b16 %v2371, %v2363
  %v3612 = vpack.c.b16 %v2372, %v2364
  %v3613 = vpack.c.b16 %v2381, %v2373
  %v3614 = vpack.c.b16 %v2382, %v2374
  %v3615 = vpack.c.b16 %v2383, %v2375
  %v3616 = vpack.c.b16 %v2384, %v2376
  %v3617 = vpack.c.b16 %v2385, %v2377
  %v3618 = vpack.c.b16 %v2386, %v2378
  %v3619 = vpack.c.b16 %v2387, %v2379
  %v3620 = vpack.c.b16 %v2388, %v2380
  %v3621 = vpack.c.b16 %v2397, %v2389
  %v3622 = vpack.c.b16 %v2398, %v2390
  %v3623 = vpack.c.b16 %v2399, %v2391
  %v3624 = vpack.c.b16 %v2400, %v2392
  %v3625 = vpack.c.b16 %v2401, %v2393
  %v3626 = vpack.c.b16 %v2402, %v2394
  %v3627 = vpack.c.b16 %v2403, %v2395
  %v3628 = vpack.c.b16 %v2404, %v2396
  %v3629 = vpack.c.b16 %v2413, %v2405
  %v3630 = vpack.c.b16 %v2414, %v2406
  %v3631 = vpack.c.b16 %v2415, %v2407
  %v3632 = vpack.c.b16 %v2416, %v2408
  %v3633 = vpack.c.b16 %v2417, %v2409
  %v3634 = vpack.c.b16 %v2418, %v2410
  %v3635 = vpack.c.b16 %v2419, %v2411
  %v3636 = vpack.c.b16 %v2420, %v2412
  %v3637 = vpack.c.b16 %v2429, %v2421
  %v3638 = vpack.c.b16 %v2430, %v2422
  %v3639 = vpack.c.b16 %v2431, %v2423
  %v3640 = vpack.c.b16 %v2432, %v2424
  %v3641 = vpack.c.b16 %v2433, %v2425
  %v3642 = vpack.c.b16 %v2434, %v2426
  %v3643 = vpack.c.b16 %v2435, %v2427
  %v3644 = vpack.c.b16 %v2436, %v2428
  %v3645 = vpack.c.b16 %v2445, %v2437
  %v3646 = vpack.c.b16 %v2446, %v2438
  %v3647 = vpack.c.b16 %v2447, %v2439
  %v3648 = vpack.c.b16 %v2448, %v2440
  %v3649 = vpack.c.b16 %v2449, %v2441
  %v3650 = vpack.c.b16 %v2450, %v2442
  %v3651 = vpack.c.b16 %v2451, %v2443
  %v3652 = vpack.c.b16 %v2452, %v2444
  %v3653 = vpack.c.b16 %v2461, %v2453
  %v3654 = vpack.c.b16 %v2462, %v2454
  %v3655 = vpack.c.b16 %v2463, %v2455
  %v3656 = vpack.c.b16 %v2464, %v2456
  %v3657 = vpack.c.b16 %v2465, %v2457
  %v3658 = vpack.c.b16 %v2466, %v2458
  %v3659 = vpack.c.b16 %v2467, %v2459
  %v3660 = vpack.c.b16 %v2468, %v2460
  %v3661 = vpack.c.b16 %v2477, %v2469
  %v3662 = vpack.c.b16 %v2478, %v2470
  %v3663 = vpack.c.b16 %v2479, %v2471
  %v3664 = vpack.c.b16 %v2480, %v2472
  %v3665 = vpack.c.b16 %v2481, %v2473
  %v3666 = vpack.c.b16 %v2482, %v2474
  %v3667 = vpack.c.b16 %v2483, %v2475
  %v3668 = vpack.c.b16 %v2484, %v2476
  %v3669 = vpack.c.b16 %v2493, %v2485
  %v3670 = vpack.c.b16 %v2494, %v2486
  %v3671 = vpack.c.b16 %v2495, %v2487
  %v3672 = vpack.c.b16 %v2496, %v2488
  %v3673 = vpack.c.b16 %v2497, %v2489
  %v3674 = vpack.c.b16 %v2498, %v2490
  %v3675 = vpack.c.b16 %v2499, %v2491
  %v3676 = vpack.c.b16 %v2500, %v2492
  %v3677 = vpack.c.b16 %v2509, %v2501
  %v3678 = vpack.c.b16 %v2510, %v2502
  %v3679 = vpack.c.b16 %v2511, %v2503
  %v3680 = vpack.c.b16 %v2512, %v2504
  %v3681 = vpack.c.b16 %v2513, %v2505
  %v3682 = vpack.c.b16 %v2514, %v2506
  %v3683 = vpack.c.b16 %v2515, %v2507
  %v3684 = vpack.c.b16 %v2516, %v2508
  %v3685 = vpack.c.b16 %v2525, %v2517
  %v3686 = vpack.c.b16 %v2526, %v2518
  %v3687 = vpack.c.b16 %v2527, %v2519
  %v3688 = vpack.c.b16 %v2528, %v2520
  %v3689 = vpack.c.b16 %v2529, %v2521
  %v3690 = vpack.c.b16 %v2530, %v2522
  %v3691 = vpack.c.b16 %v2531, %v2523
  %v3692 = vpack.c.b16 %v2532, %v2524
  %v3693 = vpack.c.b16 %v2541, %v2533
  %v3694 = vpack.c.b16 %v2542, %v2534
  %v3695 = vpack.c.b16 %v2543, %v2535
  %v3696 = vpack.c.b16 %v2544, %v2536
  %v3697 = vpack.c.b16 %v2545, %v2537
  %v3698 = vpack.c.b16 %v2546, %v2538
  %v3699 = vpack.c.b16 %v2547, %v2539
  %v3700 = vpack.c.b16 %v2548, %v2540
  %v3701 = vpack.c.b16 %v2557, %v2549
  %v3702 = vpack.c.b16 %v2558, %v2550
  %v3703 = vpack.c.b16 %v2559, %v2551
  %v3704 = vpack.c.b16 %v2560, %v2552
  %v3705 = vpack.c.b16 %v2561, %v2553
  %v3706 = vpack.c.b16 %v2562, %v2554
  %v3707 = vpack.c.b16 %v2563, %v2555
  %v3708 = vpack.c.b16 %v2564, %v2556
  %v3709 = vpack.c.b16 %v2573, %v2565
  %v3710 = vpack.c.b16 %v2574, %v2566
  %v3711 = vpack.c.b16 %v2575, %v2567
  %v3712 = vpack.c.b16 %v2576, %v2568
  %v3713 = vpack.c.b16 %v2577, %v2569
  %v3714 = vpack.c.b16 %v2578, %v2570
  %v3715 = vpack.c.b16 %v2579, %v2571
  %v3716 = vpack.c.b16 %v2580, %v2572
  %v3717 = vpack.c.b16 %v2589, %v2581
  %v3718 = vpack.c.b16 %v2590, %v2582
  %v3719 = vpack.c.b16 %v2591, %v2583
  %v3720 = vpack.c.b16 %v2592, %v2584
  %v3721 = vpack.c.b16 %v2593, %v2585
  %v3722 = vpack.c.b16 %v2594, %v2586
  %v3723 = vpack.c.b16 %v2595, %v2587
  %v3724 = vpack.c.b16 %v2596, %v2588
  %v3725 = vpack.c.b16 %v2605, %v2597
  %v3726 = vpack.c.b16 %v2606, %v2598
  %v3727 = vpack.c.b16 %v2607, %v2599
  %v3728 = vpack.c.b16 %v2608, %v2600
  %v3729 = vpack.c.b16 %v2609, %v2601
  %v3730 = vpack.c.b16 %v2610, %v2602
  %v3731 = vpack.c.b16 %v2611, %v2603
  %v3732 = vpack.c.b16 %v2612, %v2604
  %v3733 = vpack.c.b16 %v2621, %v2613
  %v3734 = vpack.c.b16 %v2622, %v2614
  %v3735 = vpack.c.b16 %v2623, %v2615
  %v3736 = vpack.c.b16 %v2624, %v2616
  %v3737 = vpack.c.b16 %v2625, %v2617
  %v3738 = vpack.c.b16 %v2626, %v2618
  %v3739 = vpack.c.b16 %v2627, %v2619
  %v3740 = vpack.c.b16 %v2628, %v2620
  %v3741 = vpack.c.b16 %v2637, %v2629
  %v3742 = vpack.c.b16 %v2638, %v2630
  %v3743 = vpack.c.b16 %v2639, %v2631
  %v3744 = vpack.c.b16 %v2640, %v2632
  %v3745 = vpack.c.b16 %v2641, %v2633
  %v3746 = vpack.c.b16 %v2642, %v2634
  %v3747 = vpack.c.b16 %v2643, %v2635
  %v3748 = vpack.c.b16 %v2644, %v2636
  %v3749 = vpack.c.b16 %v2653, %v2645
  %v3750 = vpack.c.b16 %v2654, %v2646
  %v3751 = vpack.c.b16 %v2655, %v2647
  %v3752 = vpack.c.b16 %v2656, %v2648
  %v3753 = vpack.c.b16 %v2657, %v2649
  %v3754 = vpack.c.b16 %v2658, %v2650
  %v3755 = vpack.c.b16 %v2659, %v2651
  %v3756 = vpack.c.b16 %v2660, %v2652
  %v3757 = vpack.c.b16 %v2669, %v2661
  %v3758 = vpack.c.b16 %v2670, %v2662
  %v3759 = vpack.c.b16 %v2671, %v2663
  %v3760 = vpack.c.b16 %v2672, %v2664
  %v3761 = vpack.c.b16 %v2673, %v2665
  %v3762 = vpack.c.b16 %v2674, %v2666
  %v3763 = vpack.c.b16 %v2675, %v2667
  %v3764 = vpack.c.b16 %v2676, %v2668
  %v3765 = vpack.c.b16 %v2685, %v2677
  %v3766 = vpack.c.b16 %v2686, %v2678
  %v3767 = vpack.c.b16 %v2687, %v2679
  %v3768 = vpack.c.b16 %v2688, %v2680
  %v3769 = vpack.c.b16 %v2689, %v2681
  %v3770 = vpack.c.b16 %v2690, %v2682
  %v3771 = vpack.c.b16 %v2691, %v2683
  %v3772 = vpack.c.b16 %v2692, %v2684
  %v3773 = vpack.c.b16 %v2701, %v2693
  %v3774 = vpack.c.b16 %v2702, %v2694
  %v3775 = vpack.c.b16 %v2703, %v2695
  %v3776 = vpack.c.b16 %v2704, %v2696
  %v3777 = vpack.c.b16 %v2705, %v2697
  %v3778 = vpack.c.b16 %v2706, %v2698
  %v3779 = vpack.c.b16 %v2707, %v2699
  %v3780 = vpack.c.b16 %v2708, %v2700
  %v3781 = vpack.c.b16 %v2717, %v2709
  %v3782 = vpack.c.b16 %v2718, %v2710
  %v3783 = vpack.c.b16 %v2719, %v2711
  %v3784 = vpack.c.b16 %v2720, %v2712
  %v3785 = vpack.c.b16 %v2721, %v2713
  %v3786 = vpack.c.b16 %v2722, %v2714
  %v3787 = vpack.c.b16 %v2723, %v2715
  %v3788 = vpack.c.b16 %v2724, %v2716
  %v3789 = vpack.c.b16 %v2733, %v2725
  %v3790 = vpack.c.b16 %v2734, %v2726
  %v3791 = vpack.c.b16 %v2735, %v2727
  %v3792 = vpack.c.b16 %v2736, %v2728
  %v3793 = vpack.c.b16 %v2737, %v2729
  %v3794 = vpack.c.b16 %v2738, %v2730
  %v3795 = vpack.c.b16 %v2739, %v2731
  %v3796 = vpack.c.b16 %v2740, %v2732
  %v3797 = vpack.c.b16 %v2749, %v2741
  %v3798 = vpack.c.b16 %v2750, %v2742
  %v3799 = vpack.c.b16 %v2751, %v2743
  %v3800 = vpack.c.b16 %v2752, %v2744
  %v3801 = vpack.c.b16 %v2753, %v2745
  %v3802 = vpack.c.b16 %v2754, %v2746
  %v3803 = vpack.c.b16 %v2755, %v2747
  %v3804 = vpack.c.b16 %v2756, %v2748
  %v3805 = vpack.c.b16 %v2765, %v2757
  %v3806 = vpack.c.b16 %v2766, %v2758
  %v3807 = vpack.c.b16 %v2767, %v2759
  %v3808 = vpack.c.b16 %v2768, %v2760
  %v3809 = vpack.c.b16 %v2769, %v2761
  %v3810 = vpack.c.b16 %v2770, %v2762
  %v3811 = vpack.c.b16 %v2771, %v2763
  %v3812 = vpack.c.b16 %v2772, %v2764
  %v3813 = vpack.c.b16 %v2781, %v2773
  %v3814 = vpack.c.b16 %v2782, %v2774
  %v3815 = vpack.c.b16 %v2783, %v2775
  %v3816 = vpack.c.b16 %v2784, %v2776
  %v3817 = vpack.c.b16 %v2785, %v2777
  %v3818 = vpack.c.b16 %v2786, %v2778
  %v3819 = vpack.c.b16 %v2787, %v2779
  %v3820 = vpack.c.b16 %v2788, %v2780
  %v3821 = vpack.c.b16 %v2797, %v2789
  %v3822 = vpack.c.b16 %v2798, %v2790
  %v3823 = vpack.c.b16 %v2799, %v2791
  %v3824 = vpack.c.b16 %v2800, %v2792
  %v3825 = vpack.c.b16 %v2801, %v2793
  %v3826 = vpack.c.b16 %v2802, %v2794
  %v3827 = vpack.c.b16 %v2803, %v2795
  %v3828 = vpack.c.b16 %v2804, %v2796
  %v3829 = vpack.c.b16 %v2813, %v2805
  %v3830 = vpack.c.b16 %v2814, %v2806
  %v3831 = vpack.c.b16 %v2815, %v2807
  %v3832 = vpack.c.b16 %v2816, %v2808
  %v3833 = vpack.c.b16 %v2817, %v2809
  %v3834 = vpack.c.b16 %v2818, %v2810
  %v3835 = vpack.c.b16 %v2819, %v2811
  %v3836 = vpack.c.b16 %v2820, %v2812
  %v3837 = vpack.c.b16 %v2829, %v2821
  %v3838 = vpack.c.b16 %v2830, %v2822
  %v3839 = vpack.c.b16 %v2831, %v2823
  %v3840 = vpack.c.b16 %v2832, %v2824
  %v3841 = vpack.c.b16 %v2833, %v2825
  %v3842 = vpack.c.b16 %v2834, %v2826
  %v3843 = vpack.c.b16 %v2835, %v2827
  %v3844 = vpack.c.b16 %v2836, %v2828
  %v3845 = vpack.c.b16 %v2845, %v2837
  %v3846 = vpack.c.b16 %v2846, %v2838
  %v3847 = vpack.c.b16 %v2847, %v2839
  %v3848 = vpack.c.b16 %v2848, %v2840
  %v3849 = vpack.c.b16 %v2849, %v2841
  %v3850 = vpack.c.b16 %v2850, %v2842
  %v3851 = vpack.c.b16 %v2851, %v2843
  %v3852 = vpack.c.b16 %v2852, %v2844
  %v3853 = vpack.c.b16 %v2861, %v2853
  %v3854 = vpack.c.b16 %v2862, %v2854
  %v3855 = vpack.c.b16 %v2863, %v2855
  %v3856 = vpack.c.b16 %v2864, %v2856
  %v3857 = vpack.c.b16 %v2865, %v2857
  %v3858 = vpack.c.b16 %v2866, %v2858
  %v3859 = vpack.c.b16 %v2867, %v2859
  %v3860 = vpack.c.b16 %v2868, %v2860
  %v3861 = vpack.c.b16 %v2877, %v2869
  %v3862 = vpack.c.b16 %v2878, %v2870
  %v3863 = vpack.c.b16 %v2879, %v2871
  %v3864 = vpack.c.b16 %v2880, %v2872
  %v3865 = vpack.c.b16 %v2881, %v2873
  %v3866 = vpack.c.b16 %v2882, %v2874
  %v3867 = vpack.c.b16 %v2883, %v2875
  %v3868 = vpack.c.b16 %v2884, %v2876
  %v3869 = vpack.c.b16 %v2893, %v2885
  %v3870 = vpack.c.b16 %v2894, %v2886
  %v3871 = vpack.c.b16 %v2895, %v2887
  %v3872 = vpack.c.b16 %v2896, %v2888
  %v3873 = vpack.c.b16 %v2897, %v2889
  %v3874 = vpack.c.b16 %v2898, %v2890
  %v3875 = vpack.c.b16 %v2899, %v2891
  %v3876 = vpack.c.b16 %v2900, %v2892
  %v3877 = vpack.c.b16 %v2909, %v2901
  %v3878 = vpack.c.b16 %v2910, %v2902
  %v3879 = vpack.c.b16 %v2911, %v2903
  %v3880 = vpack.c.b16 %v2912, %v2904
  %v3881 = vpack.c.b16 %v2913, %v2905
  %v3882 = vpack.c.b16 %v2914, %v2906
  %v3883 = vpack.c.b16 %v2915, %v2907
  %v3884 = vpack.c.b16 %v2916, %v2908
  %v3885 = vpack.c.b16 %v2925, %v2917
  %v3886 = vpack.c.b16 %v2926, %v2918
  %v3887 = vpack.c.b16 %v2927, %v2919
  %v3888 = vpack.c.b16 %v2928, %v2920
  %v3889 = vpack.c.b16 %v2929, %v2921
  %v3890 = vpack.c.b16 %v2930, %v2922
  %v3891 = vpack.c.b16 %v2931, %v2923
  %v3892 = vpack.c.b16 %v2932, %v2924
  %v3893 = vpack.c.b16 %v2941, %v2933
  %v3894 = vpack.c.b16 %v2942, %v2934
  %v3895 = vpack.c.b16 %v2943, %v2935
  %v3896 = vpack.c.b16 %v2944, %v2936
  %v3897 = vpack.c.b16 %v2945, %v2937
  %v3898 = vpack.c.b16 %v2946, %v2938
  %v3899 = vpack.c.b16 %v2947, %v2939
  %v3900 = vpack.c.b16 %v2948, %v2940
  %v3901 = vpack.c.b16 %v2957, %v2949
  %v3902 = vpack.c.b16 %v2958, %v2950
  %v3903 = vpack.c.b16 %v2959, %v2951
  %v3904 = vpack.c.b16 %v2960, %v2952
  %v3905 = vpack.c.b16 %v2961, %v2953
  %v3906 = vpack.c.b16 %v2962, %v2954
  %v3907 = vpack.c.b16 %v2963, %v2955
  %v3908 = vpack.c.b16 %v2964, %v2956
  %v3909 = vpack.c.b16 %v2973, %v2965
  %v3910 = vpack.c.b16 %v2974, %v2966
  %v3911 = vpack.c.b16 %v2975, %v2967
  %v3912 = vpack.c.b16 %v2976, %v2968
  %v3913 = vpack.c.b16 %v2977, %v2969
  %v3914 = vpack.c.b16 %v2978, %v2970
  %v3915 = vpack.c.b16 %v2979, %v2971
  %v3916 = vpack.c.b16 %v2980, %v2972
  %v3917 = vpack.c.b16 %v2989, %v2981
  %v3918 = vpack.c.b16 %v2990, %v2982
  %v3919 = vpack.c.b16 %v2991, %v2983
  %v3920 = vpack.c.b16 %v2992, %v2984
  %v3921 = vpack.c.b16 %v2993, %v2985
  %v3922 = vpack.c.b16 %v2994, %v2986
  %v3923 = vpack.c.b16 %v2995, %v2987
  %v3924 = vpack.c.b16 %v2996, %v2988
  %v3925 = vpack.c.b16 %v3005, %v2997
  %v3926 = vpack.c.b16 %v3006, %v2998
  %v3927 = vpack.c.b16 %v3007, %v2999
  %v3928 = vpack.c.b16 %v3008, %v3000
  %v3929 = vpack.c.b16 %v3009, %v3001
  %v3930 = vpack.c.b16 %v3010, %v3002
  %v3931 = vpack.c.b16 %v3011, %v3003
  %v3932 = vpack.c.b16 %v3012, %v3004
  %v3933 = vpack.c.b16 %v3021, %v3013
  %v3934 = vpack.c.b16 %v3022, %v3014
  %v3935 = vpack.c.b16 %v3023, %v3015
  %v3936 = vpack.c.b16 %v3024, %v3016
  %v3937 = vpack.c.b16 %v3025, %v3017
  %v3938 = vpack.c.b16 %v3026, %v3018
  %v3939 = vpack.c.b16 %v3027, %v3019
  %v3940 = vpack.c.b16 %v3028, %v3020
  %v3941 = vpack.c.b16 %v3037, %v3029
  %v3942 = vpack.c.b16 %v3038, %v3030
  %v3943 = vpack.c.b16 %v3039, %v3031
  %v3944 = vpack.c.b16 %v3040, %v3032
  %v3945 = vpack.c.b16 %v3041, %v3033
  %v3946 = vpack.c.b16 %v3042, %v3034
  %v3947 = vpack.c.b16 %v3043, %v3035
  %v3948 = vpack.c.b16 %v3044, %v3036
  %v3949 = vpack.c.b16 %v3053, %v3045
  %v3950 = vpack.c.b16 %v3054, %v3046
  %v3951 = vpack.c.b16 %v3055, %v3047
  %v3952 = vpack.c.b16 %v3056, %v3048
  %v3953 = vpack.c.b16 %v3057, %v3049
  %v3954 = vpack.c.b16 %v3058, %v3050
  %v3955 = vpack.c.b16 %v3059, %v3051
  %v3956 = vpack.c.b16 %v3060, %v3052
  %v3957 = vpack.c.b16 %v3069, %v3061
  %v3958 = vpack.c.b16 %v3070, %v3062
  %v3959 = vpack.c.b16 %v3071, %v3063
  %v3960 = vpack.c.b16 %v3072, %v3064
  %v3961 = vpack.c.b16 %v3073, %v3065
  %v3962 = vpack.c.b16 %v3074, %v3066
  %v3963 = vpack.c.b16 %v3075, %v3067
  %v3964 = vpack.c.b16 %v3076, %v3068
  %v3965 = vpack.c.b16 %v3085, %v3077
  %v3966 = vpack.c.b16 %v3086, %v3078
  %v3967 = vpack.c.b16 %v3087, %v3079
  %v3968 = vpack.c.b16 %v3088, %v3080
  %v3969 = vpack.c.b16 %v3089, %v3081
  %v3970 = vpack.c.b16 %v3090, %v3082
  %v3971 = vpack.c.b16 %v3091, %v3083
  %v3972 = vpack.c.b16 %v3092, %v3084
  %v3973 = vpack.c.b16 %v3101, %v3093
  %v3974 = vpack.c.b16 %v3102, %v3094
  %v3975 = vpack.c.b16 %v3103, %v3095
  %v3976 = vpack.c.b16 %v3104, %v3096
  %v3977 = vpack.c.b16 %v3105, %v3097
  %v3978 = vpack.c.b16 %v3106, %v3098
  %v3979 = vpack.c.b16 %v3107, %v3099
  %v3980 = vpack.c.b16 %v3108, %v3100
  %v3981 = vpack.c.b16 %v3117, %v3109
  %v3982 = vpack.c.b16 %v3118, %v3110
  %v3983 = vpack.c.b16 %v3119, %v3111
  %v3984 = vpack.c.b16 %v3120, %v3112
  %v3985 = vpack.c.b16 %v3121, %v3113
  %v3986 = vpack.c.b16 %v3122, %v3114
  %v3987 = vpack.c.b16 %v3123, %v3115
  %v3988 = vpack.c.b16 %v3124, %v3116
  %v3989 = vpack.c.b16 %v3133, %v3125
  %v3990 = vpack.c.b16 %v3134, %v3126
  %v3991 = vpack.c.b16 %v3135, %v3127
  %v3992 = vpack.c.b16 %v3136, %v3128
  %v3993 = vpack.c.b16 %v3137, %v3129
  %v3994 = vpack.c.b16 %v3138, %v3130
  %v3995 = vpack.c.b16 %v3139, %v3131
  %v3996 = vpack.c.b16 %v3140, %v3132
  %v3997 = vpack.c.b16 %v3149, %v3141
  %v3998 = vpack.c.b16 %v3150, %v3142
  %v3999 = vpack.c.b16 %v3151, %v3143
  %v4000 = vpack.c.b16 %v3152, %v3144
  %v4001 = vpack.c.b16 %v3153, %v3145
  %v4002 = vpack.c.b16 %v3154, %v3146
  %v4003 = vpack.c.b16 %v3155, %v3147
  %v4004 = vpack.c.b16 %v3156, %v3148
  %v4005 = vpack.c.b16 %v3165, %v3157
  %v4006 = vpack.c.b16 %v3166, %v3158
  %v4007 = vpack.c.b16 %v3167, %v3159
  %v4008 = vpack.c.b16 %v3168, %v3160
  %v4009 = vpack.c.b16 %v3169, %v3161
  %v4010 = vpack.c.b16 %v3170, %v3162
  %v4011 = vpack.c.b16 %v3171, %v3163
  %v4012 = vpack.c.b16 %v3172, %v3164
  %v4013 = vpack.c.b16 %v3181, %v3173
  %v4014 = vpack.c.b16 %v3182, %v3174
  %v4015 = vpack.c.b16 %v3183, %v3175
  %v4016 = vpack.c.b16 %v3184, %v3176
  %v4017 = vpack.c.b16 %v3185, %v3177
  %v4018 = vpack.c.b16 %v3186, %v3178
  %v4019 = vpack.c.b16 %v3187, %v3179
  %v4020 = vpack.c.b16 %v3188, %v3180
  %v4021 = vpack.c.b16 %v3197, %v3189
  %v4022 = vpack.c.b16 %v3198, %v3190
  %v4023 = vpack.c.b16 %v3199, %v3191
  %v4024 = vpack.c.b16 %v3200, %v3192
  %v4025 = vpack.c.b16 %v3201, %v3193
  %v4026 = vpack.c.b16 %v3202, %v3194
  %v4027 = vpack.c.b16 %v3203, %v3195
  %v4028 = vpack.c.b16 %v3204, %v3196
  %v4029 = vpack.c.b16 %v3213, %v3205
  %v4030 = vpack.c.b16 %v3214, %v3206
  %v4031 = vpack.c.b16 %v3215, %v3207
  %v4032 = vpack.c.b16 %v3216, %v3208
  %v4033 = vpack.c.b16 %v3217, %v3209
  %v4034 = vpack.c.b16 %v3218, %v3210
  %v4035 = vpack.c.b16 %v3219, %v3211
  %v4036 = vpack.c.b16 %v3220, %v3212
  %v4037 = vpack.c.b16 %v3229, %v3221
  %v4038 = vpack.c.b16 %v3230, %v3222
  %v4039 = vpack.c.b16 %v3231, %v3223
  %v4040 = vpack.c.b16 %v3232, %v3224
  %v4041 = vpack.c.b16 %v3233, %v3225
  %v4042 = vpack.c.b16 %v3234, %v3226
  %v4043 = vpack.c.b16 %v3235, %v3227
  %v4044 = vpack.c.b16 %v3236, %v3228
  %v4045 = vpack.c.b16 %v3245, %v3237
  %v4046 = vpack.c.b16 %v3246, %v3238
  %v4047 = vpack.c.b16 %v3247, %v3239
  %v4048 = vpack.c.b16 %v3248, %v3240
  %v4049 = vpack.c.b16 %v3249, %v3241
  %v4050 = vpack.c.b16 %v3250, %v3242
  %v4051 = vpack.c.b16 %v3251, %v3243
  %v4052 = vpack.c.b16 %v3252, %v3244
  %v4053 = vpack.c.b16 %v3261, %v3253
  %v4054 = vpack.c.b16 %v3262, %v3254
  %v4055 = vpack.c.b16 %v3263, %v3255
  %v4056 = vpack.c.b16 %v3264, %v3256
  %v4057 = vpack.c.b16 %v3265, %v3257
  %v4058 = vpack.c.b16 %v3266, %v3258
  %v4059 = vpack.c.b16 %v3267, %v3259
  %v4060 = vpack.c.b16 %v3268, %v3260
  %v4061 = vpack.c.b16 %v3277, %v3269
  %v4062 = vpack.c.b16 %v3278, %v3270
  %v4063 = vpack.c.b16 %v3279, %v3271
  %v4064 = vpack.c.b16 %v3280, %v3272
  %v4065 = vpack.c.b16 %v3281, %v3273
  %v4066 = vpack.c.b16 %v3282, %v3274
  %v4067 = vpack.c.b16 %v3283, %v3275
  %v4068 = vpack.c.b16 %v3284, %v3276
  %vm4853 = vcmask 261120
  %v4855 = vsel %vm4853, %v106, 0
  %4857 = vmatprep.subr.bf16.mxu0 %v3342
  %4858 = vmatpush1.bf16.msra.mxu0 %v3341
  %4859 = vmatprep.subr.bf16.mxu0 %v3334
  %4860 = vmatpush1.bf16.msra.mxu0 %v3333
  %4861 = vmatprep.subr.bf16.mxu0 %v3326
  %4862 = vmatpush1.bf16.msra.mxu0 %v3325
  %4863 = vmatprep.subr.bf16.mxu0 %v3318
  %4864 = vmatpush1.bf16.msra.mxu0 %v3317
  %4865 = vmatprep.subr.bf16.mxu0 %v3310
  %4866 = vmatpush1.bf16.msra.mxu0 %v3309
  %4867 = vmatprep.subr.bf16.mxu0 %v3302
  %4868 = vmatpush1.bf16.msra.mxu0 %v3301
  %4869 = vmatprep.subr.bf16.mxu0 %v3294
  %4870 = vmatpush1.bf16.msra.mxu0 %v3293
  %4871 = vmatprep.subr.bf16.mxu0 %v3286
  %4872 = vmatpush1.bf16.msra.mxu0 %v3285
  %4873 = vmatprep.subr.bf16.mxu0 %v3406
  %4874 = vmatpush2.bf16.msra.mxu0 %v3405
  %4875 = vmatprep.subr.bf16.mxu0 %v3398
  %4876 = vmatpush2.bf16.msra.mxu0 %v3397
  %4877 = vmatprep.subr.bf16.mxu0 %v3390
  %4878 = vmatpush2.bf16.msra.mxu0 %v3389
  %4879 = vmatprep.subr.bf16.mxu0 %v3382
  %4880 = vmatpush2.bf16.msra.mxu0 %v3381
  %4881 = vmatprep.subr.bf16.mxu0 %v3374
  %4882 = vmatpush2.bf16.msra.mxu0 %v3373
  %4883 = vmatprep.subr.bf16.mxu0 %v3366
  %4884 = vmatpush2.bf16.msra.mxu0 %v3365
  %4885 = vmatprep.subr.bf16.mxu0 %v3358
  %4886 = vmatpush2.bf16.msra.mxu0 %v3357
  %4887 = vmatprep.subr.bf16.mxu0 %v3350
  %4888 = vmatpush2.bf16.msra.mxu0 %v3349
  %4889 = vmatprep.mubr.bf16.mxu0 %v95
  %4890 = vmatmul.mubr.bf16.gmra.mxu0 %v94
  %v4891 = vpop.f32.mrf.mxu0
  %v4892 = vadd.f32 %v896, %v4891
  %v4893 = vpop.f32.mrf.mxu0
  %v4894 = vadd.f32 %v900, %v4893
  %v4895 = vpop.f32.mrf.mxu0
  %v4896 = vpop.f32.mrf.mxu0
  %4897 = vdwg.mxu0
  %4898 = vmatprep.subr.bf16.mxu0 %v3470
  %4899 = vmatpush1.bf16.msra.mxu0 %v3469
  %4900 = vmatprep.subr.bf16.mxu0 %v3462
  %4901 = vmatpush1.bf16.msra.mxu0 %v3461
  %4902 = vmatprep.subr.bf16.mxu0 %v3454
  %4903 = vmatpush1.bf16.msra.mxu0 %v3453
  %4904 = vmatprep.subr.bf16.mxu0 %v3446
  %4905 = vmatpush1.bf16.msra.mxu0 %v3445
  %4906 = vmatprep.subr.bf16.mxu0 %v3438
  %4907 = vmatpush1.bf16.msra.mxu0 %v3437
  %4908 = vmatprep.subr.bf16.mxu0 %v3430
  %4909 = vmatpush1.bf16.msra.mxu0 %v3429
  %4910 = vmatprep.subr.bf16.mxu0 %v3422
  %4911 = vmatpush1.bf16.msra.mxu0 %v3421
  %4912 = vmatprep.subr.bf16.mxu0 %v3414
  %4913 = vmatpush1.bf16.msra.mxu0 %v3413
  %4914 = vmatprep.subr.bf16.mxu0 %v3534
  %4915 = vmatpush2.bf16.msra.mxu0 %v3533
  %4916 = vmatprep.subr.bf16.mxu0 %v3526
  %4917 = vmatpush2.bf16.msra.mxu0 %v3525
  %4918 = vmatprep.subr.bf16.mxu0 %v3518
  %4919 = vmatpush2.bf16.msra.mxu0 %v3517
  %4920 = vmatprep.subr.bf16.mxu0 %v3510
  %4921 = vmatpush2.bf16.msra.mxu0 %v3509
  %4922 = vmatprep.subr.bf16.mxu0 %v3502
  %4923 = vmatpush2.bf16.msra.mxu0 %v3501
  %4924 = vmatprep.subr.bf16.mxu0 %v3494
  %4925 = vmatpush2.bf16.msra.mxu0 %v3493
  %4926 = vmatprep.subr.bf16.mxu0 %v3486
  %4927 = vmatpush2.bf16.msra.mxu0 %v3485
  %4928 = vmatprep.subr.bf16.mxu0 %v3478
  %4929 = vmatpush2.bf16.msra.mxu0 %v3477
  %4930 = vmatprep.mubr.bf16.mxu0 %v97
  %4931 = vmatmul.mubr.bf16.gmra.mxu0 %v96
  %v4932 = vpop.f32.mrf.mxu0
  %v4933 = vadd.f32 %v4892, %v4932
  %v4934 = vpop.f32.mrf.mxu0
  %v4935 = vadd.f32 %v4894, %v4934
  %v4936 = vpop.f32.mrf.mxu0
  %v4937 = vpop.f32.mrf.mxu0
  %4938 = vdwg.mxu0
  %4939 = vmatprep.subr.bf16.mxu0 %v3598
  %4940 = vmatpush1.bf16.msra.mxu0 %v3597
  %4941 = vmatprep.subr.bf16.mxu0 %v3590
  %4942 = vmatpush1.bf16.msra.mxu0 %v3589
  %4943 = vmatprep.subr.bf16.mxu0 %v3582
  %4944 = vmatpush1.bf16.msra.mxu0 %v3581
  %4945 = vmatprep.subr.bf16.mxu0 %v3574
  %4946 = vmatpush1.bf16.msra.mxu0 %v3573
  %4947 = vmatprep.subr.bf16.mxu0 %v3566
  %4948 = vmatpush1.bf16.msra.mxu0 %v3565
  %4949 = vmatprep.subr.bf16.mxu0 %v3558
  %4950 = vmatpush1.bf16.msra.mxu0 %v3557
  %4951 = vmatprep.subr.bf16.mxu0 %v3550
  %4952 = vmatpush1.bf16.msra.mxu0 %v3549
  %4953 = vmatprep.subr.bf16.mxu0 %v3542
  %4954 = vmatpush1.bf16.msra.mxu0 %v3541
  %4955 = vmatprep.subr.bf16.mxu0 %v3662
  %4956 = vmatpush2.bf16.msra.mxu0 %v3661
  %4957 = vmatprep.subr.bf16.mxu0 %v3654
  %4958 = vmatpush2.bf16.msra.mxu0 %v3653
  %4959 = vmatprep.subr.bf16.mxu0 %v3646
  %4960 = vmatpush2.bf16.msra.mxu0 %v3645
  %4961 = vmatprep.subr.bf16.mxu0 %v3638
  %4962 = vmatpush2.bf16.msra.mxu0 %v3637
  %4963 = vmatprep.subr.bf16.mxu0 %v3630
  %4964 = vmatpush2.bf16.msra.mxu0 %v3629
  %4965 = vmatprep.subr.bf16.mxu0 %v3622
  %4966 = vmatpush2.bf16.msra.mxu0 %v3621
  %4967 = vmatprep.subr.bf16.mxu0 %v3614
  %4968 = vmatpush2.bf16.msra.mxu0 %v3613
  %4969 = vmatprep.subr.bf16.mxu0 %v3606
  %4970 = vmatpush2.bf16.msra.mxu0 %v3605
  %4971 = vmatprep.mubr.bf16.mxu0 %v99
  %4972 = vmatmul.mubr.bf16.gmra.mxu0 %v98
  %v4973 = vpop.f32.mrf.mxu0
  %v4974 = vadd.f32 %v4933, %v4973
  %v4975 = vpop.f32.mrf.mxu0
  %v4976 = vadd.f32 %v4935, %v4975
  %v4977 = vpop.f32.mrf.mxu0
  %v4978 = vpop.f32.mrf.mxu0
  %4979 = vdwg.mxu0
  %4980 = vmatprep.subr.bf16.mxu0 %v3726
  %4981 = vmatpush1.bf16.msra.mxu0 %v3725
  %4982 = vmatprep.subr.bf16.mxu0 %v3718
  %4983 = vmatpush1.bf16.msra.mxu0 %v3717
  %4984 = vmatprep.subr.bf16.mxu0 %v3710
  %4985 = vmatpush1.bf16.msra.mxu0 %v3709
  %4986 = vmatprep.subr.bf16.mxu0 %v3702
  %4987 = vmatpush1.bf16.msra.mxu0 %v3701
  %4988 = vmatprep.subr.bf16.mxu0 %v3694
  %4989 = vmatpush1.bf16.msra.mxu0 %v3693
  %4990 = vmatprep.subr.bf16.mxu0 %v3686
  %4991 = vmatpush1.bf16.msra.mxu0 %v3685
  %4992 = vmatprep.subr.bf16.mxu0 %v3678
  %4993 = vmatpush1.bf16.msra.mxu0 %v3677
  %4994 = vmatprep.subr.bf16.mxu0 %v3670
  %4995 = vmatpush1.bf16.msra.mxu0 %v3669
  %4996 = vmatprep.subr.bf16.mxu0 %v3790
  %4997 = vmatpush2.bf16.msra.mxu0 %v3789
  %4998 = vmatprep.subr.bf16.mxu0 %v3782
  %4999 = vmatpush2.bf16.msra.mxu0 %v3781
  %5000 = vmatprep.subr.bf16.mxu0 %v3774
  %5001 = vmatpush2.bf16.msra.mxu0 %v3773
  %5002 = vmatprep.subr.bf16.mxu0 %v3766
  %5003 = vmatpush2.bf16.msra.mxu0 %v3765
  %5004 = vmatprep.subr.bf16.mxu0 %v3758
  %5005 = vmatpush2.bf16.msra.mxu0 %v3757
  %5006 = vmatprep.subr.bf16.mxu0 %v3750
  %5007 = vmatpush2.bf16.msra.mxu0 %v3749
  %5008 = vmatprep.subr.bf16.mxu0 %v3742
  %5009 = vmatpush2.bf16.msra.mxu0 %v3741
  %5010 = vmatprep.subr.bf16.mxu0 %v3734
  %5011 = vmatpush2.bf16.msra.mxu0 %v3733
  %5012 = vmatprep.mubr.bf16.mxu0 %v101
  %5013 = vmatmul.mubr.bf16.gmra.mxu0 %v100
  %v5014 = vpop.f32.mrf.mxu0
  %v5015 = vadd.f32 %v4974, %v5014
  %v5016 = vpop.f32.mrf.mxu0
  %v5017 = vadd.f32 %v4976, %v5016
  %v5018 = vpop.f32.mrf.mxu0
  %v5019 = vpop.f32.mrf.mxu0
  %5020 = vdwg.mxu0
  %5021 = vmatprep.subr.bf16.mxu0 %v3854
  %5022 = vmatpush1.bf16.msra.mxu0 %v3853
  %5023 = vmatprep.subr.bf16.mxu0 %v3846
  %5024 = vmatpush1.bf16.msra.mxu0 %v3845
  %5025 = vmatprep.subr.bf16.mxu0 %v3838
  %5026 = vmatpush1.bf16.msra.mxu0 %v3837
  %5027 = vmatprep.subr.bf16.mxu0 %v3830
  %5028 = vmatpush1.bf16.msra.mxu0 %v3829
  %5029 = vmatprep.subr.bf16.mxu0 %v3822
  %5030 = vmatpush1.bf16.msra.mxu0 %v3821
  %5031 = vmatprep.subr.bf16.mxu0 %v3814
  %5032 = vmatpush1.bf16.msra.mxu0 %v3813
  %5033 = vmatprep.subr.bf16.mxu0 %v3806
  %5034 = vmatpush1.bf16.msra.mxu0 %v3805
  %5035 = vmatprep.subr.bf16.mxu0 %v3798
  %5036 = vmatpush1.bf16.msra.mxu0 %v3797
  %5037 = vmatprep.subr.bf16.mxu0 %v3918
  %5038 = vmatpush2.bf16.msra.mxu0 %v3917
  %5039 = vmatprep.subr.bf16.mxu0 %v3910
  %5040 = vmatpush2.bf16.msra.mxu0 %v3909
  %5041 = vmatprep.subr.bf16.mxu0 %v3902
  %5042 = vmatpush2.bf16.msra.mxu0 %v3901
  %5043 = vmatprep.subr.bf16.mxu0 %v3894
  %5044 = vmatpush2.bf16.msra.mxu0 %v3893
  %5045 = vmatprep.subr.bf16.mxu0 %v3886
  %5046 = vmatpush2.bf16.msra.mxu0 %v3885
  %5047 = vmatprep.subr.bf16.mxu0 %v3878
  %5048 = vmatpush2.bf16.msra.mxu0 %v3877
  %5049 = vmatprep.subr.bf16.mxu0 %v3870
  %5050 = vmatpush2.bf16.msra.mxu0 %v3869
  %5051 = vmatprep.subr.bf16.mxu0 %v3862
  %5052 = vmatpush2.bf16.msra.mxu0 %v3861
  %5053 = vmatprep.mubr.bf16.mxu0 %v103
  %5054 = vmatmul.mubr.bf16.gmra.mxu0 %v102
  %v5055 = vpop.f32.mrf.mxu0
  %v5056 = vadd.f32 %v5015, %v5055
  %v5057 = vpop.f32.mrf.mxu0
  %v5058 = vadd.f32 %v5017, %v5057
  %v5059 = vpop.f32.mrf.mxu0
  %v5060 = vpop.f32.mrf.mxu0
  %5061 = vdwg.mxu0
  %5062 = vmatprep.subr.bf16.mxu0 %v3982
  %5063 = vmatpush1.bf16.msra.mxu0 %v3981
  %5064 = vmatprep.subr.bf16.mxu0 %v3974
  %5065 = vmatpush1.bf16.msra.mxu0 %v3973
  %5066 = vmatprep.subr.bf16.mxu0 %v3966
  %5067 = vmatpush1.bf16.msra.mxu0 %v3965
  %5068 = vmatprep.subr.bf16.mxu0 %v3958
  %5069 = vmatpush1.bf16.msra.mxu0 %v3957
  %5070 = vmatprep.subr.bf16.mxu0 %v3950
  %5071 = vmatpush1.bf16.msra.mxu0 %v3949
  %5072 = vmatprep.subr.bf16.mxu0 %v3942
  %5073 = vmatpush1.bf16.msra.mxu0 %v3941
  %5074 = vmatprep.subr.bf16.mxu0 %v3934
  %5075 = vmatpush1.bf16.msra.mxu0 %v3933
  %5076 = vmatprep.subr.bf16.mxu0 %v3926
  %5077 = vmatpush1.bf16.msra.mxu0 %v3925
  %5078 = vmatprep.subr.bf16.mxu0 %v4046
  %5079 = vmatpush2.bf16.msra.mxu0 %v4045
  %5080 = vmatprep.subr.bf16.mxu0 %v4038
  %5081 = vmatpush2.bf16.msra.mxu0 %v4037
  %5082 = vmatprep.subr.bf16.mxu0 %v4030
  %5083 = vmatpush2.bf16.msra.mxu0 %v4029
  %5084 = vmatprep.subr.bf16.mxu0 %v4022
  %5085 = vmatpush2.bf16.msra.mxu0 %v4021
  %5086 = vmatprep.subr.bf16.mxu0 %v4014
  %5087 = vmatpush2.bf16.msra.mxu0 %v4013
  %5088 = vmatprep.subr.bf16.mxu0 %v4006
  %5089 = vmatpush2.bf16.msra.mxu0 %v4005
  %5090 = vmatprep.subr.bf16.mxu0 %v3998
  %5091 = vmatpush2.bf16.msra.mxu0 %v3997
  %5092 = vmatprep.subr.bf16.mxu0 %v3990
  %5093 = vmatpush2.bf16.msra.mxu0 %v3989
  %5094 = vmatprep.mubr.bf16.mxu0 %v105
  %5095 = vmatmul.mubr.bf16.gmra.mxu0 %v104
  %v5096 = vpop.f32.mrf.mxu0
  %v5097 = vadd.f32 %v5056, %v5096
  %v5098 = vpop.f32.mrf.mxu0
  %v5099 = vadd.f32 %v5058, %v5098
  %v5100 = vpop.f32.mrf.mxu0
  %v5101 = vpop.f32.mrf.mxu0
  %5102 = vdwg.mxu0
  %5103 = vmatprep.subr.bf16.mxu0 0
  %5104 = vmatpush1.bf16.msra.mxu0 0
  %5105 = vmatprep.subr.bf16.mxu0 0
  %5106 = vmatpush1.bf16.msra.mxu0 0
  %5107 = vmatprep.subr.bf16.mxu0 0
  %5108 = vmatpush1.bf16.msra.mxu0 0
  %5109 = vmatprep.subr.bf16.mxu0 0
  %5110 = vmatpush1.bf16.msra.mxu0 0
  %5111 = vmatprep.subr.bf16.mxu0 0
  %5112 = vmatpush1.bf16.msra.mxu0 0
  %5113 = vmatprep.subr.bf16.mxu0 0
  %5114 = vmatpush1.bf16.msra.mxu0 0
  %5115 = vmatprep.subr.bf16.mxu0 %v4062
  %5116 = vmatpush1.bf16.msra.mxu0 %v4061
  %5117 = vmatprep.subr.bf16.mxu0 %v4054
  %5118 = vmatpush1.bf16.msra.mxu0 %v4053
  %5119 = vmatprep.subr.bf16.mxu0 0
  %5120 = vmatpush2.bf16.msra.mxu0 0
  %5121 = vmatprep.subr.bf16.mxu0 0
  %5122 = vmatpush2.bf16.msra.mxu0 0
  %5123 = vmatprep.subr.bf16.mxu0 0
  %5124 = vmatpush2.bf16.msra.mxu0 0
  %5125 = vmatprep.subr.bf16.mxu0 0
  %5126 = vmatpush2.bf16.msra.mxu0 0
  %5127 = vmatprep.subr.bf16.mxu0 0
  %5128 = vmatpush2.bf16.msra.mxu0 0
  %5129 = vmatprep.subr.bf16.mxu0 0
  %5130 = vmatpush2.bf16.msra.mxu0 0
  %5131 = vmatprep.subr.bf16.mxu0 0
  %5132 = vmatpush2.bf16.msra.mxu0 0
  %5133 = vmatprep.subr.bf16.mxu0 0
  %5134 = vmatpush2.bf16.msra.mxu0 0
  %5135 = vmatprep.mubr.bf16.mxu0 0
  %5136 = vmatmul.mubr.bf16.gmra.mxu0 %v4855
  %v5137 = vpop.f32.mrf.mxu0
  %v5138 = vadd.f32 %v5097, %v5137
  %v5139 = vpop.f32.mrf.mxu0
  %v5140 = vadd.f32 %v5099, %v5139
  %v5141 = vpop.f32.mrf.mxu0
  %v5142 = vpop.f32.mrf.mxu0
  %5143 = vdwg.mxu0
  %5144 = vmatprep.subr.bf16.mxu0 %v3344
  %5145 = vmatpush1.bf16.msra.mxu0 %v3343
  %5146 = vmatprep.subr.bf16.mxu0 %v3336
  %5147 = vmatpush1.bf16.msra.mxu0 %v3335
  %5148 = vmatprep.subr.bf16.mxu0 %v3328
  %5149 = vmatpush1.bf16.msra.mxu0 %v3327
  %5150 = vmatprep.subr.bf16.mxu0 %v3320
  %5151 = vmatpush1.bf16.msra.mxu0 %v3319
  %5152 = vmatprep.subr.bf16.mxu0 %v3312
  %5153 = vmatpush1.bf16.msra.mxu0 %v3311
  %5154 = vmatprep.subr.bf16.mxu0 %v3304
  %5155 = vmatpush1.bf16.msra.mxu0 %v3303
  %5156 = vmatprep.subr.bf16.mxu0 %v3296
  %5157 = vmatpush1.bf16.msra.mxu0 %v3295
  %5158 = vmatprep.subr.bf16.mxu0 %v3288
  %5159 = vmatpush1.bf16.msra.mxu0 %v3287
  %5160 = vmatprep.subr.bf16.mxu0 %v3408
  %5161 = vmatpush2.bf16.msra.mxu0 %v3407
  %5162 = vmatprep.subr.bf16.mxu0 %v3400
  %5163 = vmatpush2.bf16.msra.mxu0 %v3399
  %5164 = vmatprep.subr.bf16.mxu0 %v3392
  %5165 = vmatpush2.bf16.msra.mxu0 %v3391
  %5166 = vmatprep.subr.bf16.mxu0 %v3384
  %5167 = vmatpush2.bf16.msra.mxu0 %v3383
  %5168 = vmatprep.subr.bf16.mxu0 %v3376
  %5169 = vmatpush2.bf16.msra.mxu0 %v3375
  %5170 = vmatprep.subr.bf16.mxu0 %v3368
  %5171 = vmatpush2.bf16.msra.mxu0 %v3367
  %5172 = vmatprep.subr.bf16.mxu0 %v3360
  %5173 = vmatpush2.bf16.msra.mxu0 %v3359
  %5174 = vmatprep.subr.bf16.mxu0 %v3352
  %5175 = vmatpush2.bf16.msra.mxu0 %v3351
  %5176 = vmatprep.mubr.bf16.mxu0 %v95
  %5177 = vmatmul.mubr.bf16.gmra.mxu0 %v94
  %v5178 = vpop.f32.mrf.mxu0
  %v5179 = vadd.f32 %v904, %v5178
  %v5180 = vpop.f32.mrf.mxu0
  %v5181 = vadd.f32 %v908, %v5180
  %v5182 = vpop.f32.mrf.mxu0
  %v5183 = vpop.f32.mrf.mxu0
  %5184 = vdwg.mxu0
  %5185 = vmatprep.subr.bf16.mxu0 %v3472
  %5186 = vmatpush1.bf16.msra.mxu0 %v3471
  %5187 = vmatprep.subr.bf16.mxu0 %v3464
  %5188 = vmatpush1.bf16.msra.mxu0 %v3463
  %5189 = vmatprep.subr.bf16.mxu0 %v3456
  %5190 = vmatpush1.bf16.msra.mxu0 %v3455
  %5191 = vmatprep.subr.bf16.mxu0 %v3448
  %5192 = vmatpush1.bf16.msra.mxu0 %v3447
  %5193 = vmatprep.subr.bf16.mxu0 %v3440
  %5194 = vmatpush1.bf16.msra.mxu0 %v3439
  %5195 = vmatprep.subr.bf16.mxu0 %v3432
  %5196 = vmatpush1.bf16.msra.mxu0 %v3431
  %5197 = vmatprep.subr.bf16.mxu0 %v3424
  %5198 = vmatpush1.bf16.msra.mxu0 %v3423
  %5199 = vmatprep.subr.bf16.mxu0 %v3416
  %5200 = vmatpush1.bf16.msra.mxu0 %v3415
  %5201 = vmatprep.subr.bf16.mxu0 %v3536
  %5202 = vmatpush2.bf16.msra.mxu0 %v3535
  %5203 = vmatprep.subr.bf16.mxu0 %v3528
  %5204 = vmatpush2.bf16.msra.mxu0 %v3527
  %5205 = vmatprep.subr.bf16.mxu0 %v3520
  %5206 = vmatpush2.bf16.msra.mxu0 %v3519
  %5207 = vmatprep.subr.bf16.mxu0 %v3512
  %5208 = vmatpush2.bf16.msra.mxu0 %v3511
  %5209 = vmatprep.subr.bf16.mxu0 %v3504
  %5210 = vmatpush2.bf16.msra.mxu0 %v3503
  %5211 = vmatprep.subr.bf16.mxu0 %v3496
  %5212 = vmatpush2.bf16.msra.mxu0 %v3495
  %5213 = vmatprep.subr.bf16.mxu0 %v3488
  %5214 = vmatpush2.bf16.msra.mxu0 %v3487
  %5215 = vmatprep.subr.bf16.mxu0 %v3480
  %5216 = vmatpush2.bf16.msra.mxu0 %v3479
  %5217 = vmatprep.mubr.bf16.mxu0 %v97
  %5218 = vmatmul.mubr.bf16.gmra.mxu0 %v96
  %v5219 = vpop.f32.mrf.mxu0
  %v5220 = vadd.f32 %v5179, %v5219
  %v5221 = vpop.f32.mrf.mxu0
  %v5222 = vadd.f32 %v5181, %v5221
  %v5223 = vpop.f32.mrf.mxu0
  %v5224 = vpop.f32.mrf.mxu0
  %5225 = vdwg.mxu0
  %5226 = vmatprep.subr.bf16.mxu0 %v3600
  %5227 = vmatpush1.bf16.msra.mxu0 %v3599
  %5228 = vmatprep.subr.bf16.mxu0 %v3592
  %5229 = vmatpush1.bf16.msra.mxu0 %v3591
  %5230 = vmatprep.subr.bf16.mxu0 %v3584
  %5231 = vmatpush1.bf16.msra.mxu0 %v3583
  %5232 = vmatprep.subr.bf16.mxu0 %v3576
  %5233 = vmatpush1.bf16.msra.mxu0 %v3575
  %5234 = vmatprep.subr.bf16.mxu0 %v3568
  %5235 = vmatpush1.bf16.msra.mxu0 %v3567
  %5236 = vmatprep.subr.bf16.mxu0 %v3560
  %5237 = vmatpush1.bf16.msra.mxu0 %v3559
  %5238 = vmatprep.subr.bf16.mxu0 %v3552
  %5239 = vmatpush1.bf16.msra.mxu0 %v3551
  %5240 = vmatprep.subr.bf16.mxu0 %v3544
  %5241 = vmatpush1.bf16.msra.mxu0 %v3543
  %5242 = vmatprep.subr.bf16.mxu0 %v3664
  %5243 = vmatpush2.bf16.msra.mxu0 %v3663
  %5244 = vmatprep.subr.bf16.mxu0 %v3656
  %5245 = vmatpush2.bf16.msra.mxu0 %v3655
  %5246 = vmatprep.subr.bf16.mxu0 %v3648
  %5247 = vmatpush2.bf16.msra.mxu0 %v3647
  %5248 = vmatprep.subr.bf16.mxu0 %v3640
  %5249 = vmatpush2.bf16.msra.mxu0 %v3639
  %5250 = vmatprep.subr.bf16.mxu0 %v3632
  %5251 = vmatpush2.bf16.msra.mxu0 %v3631
  %5252 = vmatprep.subr.bf16.mxu0 %v3624
  %5253 = vmatpush2.bf16.msra.mxu0 %v3623
  %5254 = vmatprep.subr.bf16.mxu0 %v3616
  %5255 = vmatpush2.bf16.msra.mxu0 %v3615
  %5256 = vmatprep.subr.bf16.mxu0 %v3608
  %5257 = vmatpush2.bf16.msra.mxu0 %v3607
  %5258 = vmatprep.mubr.bf16.mxu0 %v99
  %5259 = vmatmul.mubr.bf16.gmra.mxu0 %v98
  %v5260 = vpop.f32.mrf.mxu0
  %v5261 = vadd.f32 %v5220, %v5260
  %v5262 = vpop.f32.mrf.mxu0
  %v5263 = vadd.f32 %v5222, %v5262
  %v5264 = vpop.f32.mrf.mxu0
  %v5265 = vpop.f32.mrf.mxu0
  %5266 = vdwg.mxu0
  %5267 = vmatprep.subr.bf16.mxu0 %v3728
  %5268 = vmatpush1.bf16.msra.mxu0 %v3727
  %5269 = vmatprep.subr.bf16.mxu0 %v3720
  %5270 = vmatpush1.bf16.msra.mxu0 %v3719
  %5271 = vmatprep.subr.bf16.mxu0 %v3712
  %5272 = vmatpush1.bf16.msra.mxu0 %v3711
  %5273 = vmatprep.subr.bf16.mxu0 %v3704
  %5274 = vmatpush1.bf16.msra.mxu0 %v3703
  %5275 = vmatprep.subr.bf16.mxu0 %v3696
  %5276 = vmatpush1.bf16.msra.mxu0 %v3695
  %5277 = vmatprep.subr.bf16.mxu0 %v3688
  %5278 = vmatpush1.bf16.msra.mxu0 %v3687
  %5279 = vmatprep.subr.bf16.mxu0 %v3680
  %5280 = vmatpush1.bf16.msra.mxu0 %v3679
  %5281 = vmatprep.subr.bf16.mxu0 %v3672
  %5282 = vmatpush1.bf16.msra.mxu0 %v3671
  %5283 = vmatprep.subr.bf16.mxu0 %v3792
  %5284 = vmatpush2.bf16.msra.mxu0 %v3791
  %5285 = vmatprep.subr.bf16.mxu0 %v3784
  %5286 = vmatpush2.bf16.msra.mxu0 %v3783
  %5287 = vmatprep.subr.bf16.mxu0 %v3776
  %5288 = vmatpush2.bf16.msra.mxu0 %v3775
  %5289 = vmatprep.subr.bf16.mxu0 %v3768
  %5290 = vmatpush2.bf16.msra.mxu0 %v3767
  %5291 = vmatprep.subr.bf16.mxu0 %v3760
  %5292 = vmatpush2.bf16.msra.mxu0 %v3759
  %5293 = vmatprep.subr.bf16.mxu0 %v3752
  %5294 = vmatpush2.bf16.msra.mxu0 %v3751
  %5295 = vmatprep.subr.bf16.mxu0 %v3744
  %5296 = vmatpush2.bf16.msra.mxu0 %v3743
  %5297 = vmatprep.subr.bf16.mxu0 %v3736
  %5298 = vmatpush2.bf16.msra.mxu0 %v3735
  %5299 = vmatprep.mubr.bf16.mxu0 %v101
  %5300 = vmatmul.mubr.bf16.gmra.mxu0 %v100
  %v5301 = vpop.f32.mrf.mxu0
  %v5302 = vadd.f32 %v5261, %v5301
  %v5303 = vpop.f32.mrf.mxu0
  %v5304 = vadd.f32 %v5263, %v5303
  %v5305 = vpop.f32.mrf.mxu0
  %v5306 = vpop.f32.mrf.mxu0
  %5307 = vdwg.mxu0
  %5308 = vmatprep.subr.bf16.mxu0 %v3856
  %5309 = vmatpush1.bf16.msra.mxu0 %v3855
  %5310 = vmatprep.subr.bf16.mxu0 %v3848
  %5311 = vmatpush1.bf16.msra.mxu0 %v3847
  %5312 = vmatprep.subr.bf16.mxu0 %v3840
  %5313 = vmatpush1.bf16.msra.mxu0 %v3839
  %5314 = vmatprep.subr.bf16.mxu0 %v3832
  %5315 = vmatpush1.bf16.msra.mxu0 %v3831
  %5316 = vmatprep.subr.bf16.mxu0 %v3824
  %5317 = vmatpush1.bf16.msra.mxu0 %v3823
  %5318 = vmatprep.subr.bf16.mxu0 %v3816
  %5319 = vmatpush1.bf16.msra.mxu0 %v3815
  %5320 = vmatprep.subr.bf16.mxu0 %v3808
  %5321 = vmatpush1.bf16.msra.mxu0 %v3807
  %5322 = vmatprep.subr.bf16.mxu0 %v3800
  %5323 = vmatpush1.bf16.msra.mxu0 %v3799
  %5324 = vmatprep.subr.bf16.mxu0 %v3920
  %5325 = vmatpush2.bf16.msra.mxu0 %v3919
  %5326 = vmatprep.subr.bf16.mxu0 %v3912
  %5327 = vmatpush2.bf16.msra.mxu0 %v3911
  %5328 = vmatprep.subr.bf16.mxu0 %v3904
  %5329 = vmatpush2.bf16.msra.mxu0 %v3903
  %5330 = vmatprep.subr.bf16.mxu0 %v3896
  %5331 = vmatpush2.bf16.msra.mxu0 %v3895
  %5332 = vmatprep.subr.bf16.mxu0 %v3888
  %5333 = vmatpush2.bf16.msra.mxu0 %v3887
  %5334 = vmatprep.subr.bf16.mxu0 %v3880
  %5335 = vmatpush2.bf16.msra.mxu0 %v3879
  %5336 = vmatprep.subr.bf16.mxu0 %v3872
  %5337 = vmatpush2.bf16.msra.mxu0 %v3871
  %5338 = vmatprep.subr.bf16.mxu0 %v3864
  %5339 = vmatpush2.bf16.msra.mxu0 %v3863
  %5340 = vmatprep.mubr.bf16.mxu0 %v103
  %5341 = vmatmul.mubr.bf16.gmra.mxu0 %v102
  %v5342 = vpop.f32.mrf.mxu0
  %v5343 = vadd.f32 %v5302, %v5342
  %v5344 = vpop.f32.mrf.mxu0
  %v5345 = vadd.f32 %v5304, %v5344
  %v5346 = vpop.f32.mrf.mxu0
  %v5347 = vpop.f32.mrf.mxu0
  %5348 = vdwg.mxu0
  %5349 = vmatprep.subr.bf16.mxu0 %v3984
  %5350 = vmatpush1.bf16.msra.mxu0 %v3983
  %5351 = vmatprep.subr.bf16.mxu0 %v3976
  %5352 = vmatpush1.bf16.msra.mxu0 %v3975
  %5353 = vmatprep.subr.bf16.mxu0 %v3968
  %5354 = vmatpush1.bf16.msra.mxu0 %v3967
  %5355 = vmatprep.subr.bf16.mxu0 %v3960
  %5356 = vmatpush1.bf16.msra.mxu0 %v3959
  %5357 = vmatprep.subr.bf16.mxu0 %v3952
  %5358 = vmatpush1.bf16.msra.mxu0 %v3951
  %5359 = vmatprep.subr.bf16.mxu0 %v3944
  %5360 = vmatpush1.bf16.msra.mxu0 %v3943
  %5361 = vmatprep.subr.bf16.mxu0 %v3936
  %5362 = vmatpush1.bf16.msra.mxu0 %v3935
  %5363 = vmatprep.subr.bf16.mxu0 %v3928
  %5364 = vmatpush1.bf16.msra.mxu0 %v3927
  %5365 = vmatprep.subr.bf16.mxu0 %v4048
  %5366 = vmatpush2.bf16.msra.mxu0 %v4047
  %5367 = vmatprep.subr.bf16.mxu0 %v4040
  %5368 = vmatpush2.bf16.msra.mxu0 %v4039
  %5369 = vmatprep.subr.bf16.mxu0 %v4032
  %5370 = vmatpush2.bf16.msra.mxu0 %v4031
  %5371 = vmatprep.subr.bf16.mxu0 %v4024
  %5372 = vmatpush2.bf16.msra.mxu0 %v4023
  %5373 = vmatprep.subr.bf16.mxu0 %v4016
  %5374 = vmatpush2.bf16.msra.mxu0 %v4015
  %5375 = vmatprep.subr.bf16.mxu0 %v4008
  %5376 = vmatpush2.bf16.msra.mxu0 %v4007
  %5377 = vmatprep.subr.bf16.mxu0 %v4000
  %5378 = vmatpush2.bf16.msra.mxu0 %v3999
  %5379 = vmatprep.subr.bf16.mxu0 %v3992
  %5380 = vmatpush2.bf16.msra.mxu0 %v3991
  %5381 = vmatprep.mubr.bf16.mxu0 %v105
  %5382 = vmatmul.mubr.bf16.gmra.mxu0 %v104
  %v5383 = vpop.f32.mrf.mxu0
  %v5384 = vadd.f32 %v5343, %v5383
  %v5385 = vpop.f32.mrf.mxu0
  %v5386 = vadd.f32 %v5345, %v5385
  %v5387 = vpop.f32.mrf.mxu0
  %v5388 = vpop.f32.mrf.mxu0
  %5389 = vdwg.mxu0
  %5390 = vmatprep.subr.bf16.mxu0 0
  %5391 = vmatpush1.bf16.msra.mxu0 0
  %5392 = vmatprep.subr.bf16.mxu0 0
  %5393 = vmatpush1.bf16.msra.mxu0 0
  %5394 = vmatprep.subr.bf16.mxu0 0
  %5395 = vmatpush1.bf16.msra.mxu0 0
  %5396 = vmatprep.subr.bf16.mxu0 0
  %5397 = vmatpush1.bf16.msra.mxu0 0
  %5398 = vmatprep.subr.bf16.mxu0 0
  %5399 = vmatpush1.bf16.msra.mxu0 0
  %5400 = vmatprep.subr.bf16.mxu0 0
  %5401 = vmatpush1.bf16.msra.mxu0 0
  %5402 = vmatprep.subr.bf16.mxu0 %v4064
  %5403 = vmatpush1.bf16.msra.mxu0 %v4063
  %5404 = vmatprep.subr.bf16.mxu0 %v4056
  %5405 = vmatpush1.bf16.msra.mxu0 %v4055
  %5406 = vmatprep.subr.bf16.mxu0 0
  %5407 = vmatpush2.bf16.msra.mxu0 0
  %5408 = vmatprep.subr.bf16.mxu0 0
  %5409 = vmatpush2.bf16.msra.mxu0 0
  %5410 = vmatprep.subr.bf16.mxu0 0
  %5411 = vmatpush2.bf16.msra.mxu0 0
  %5412 = vmatprep.subr.bf16.mxu0 0
  %5413 = vmatpush2.bf16.msra.mxu0 0
  %5414 = vmatprep.subr.bf16.mxu0 0
  %5415 = vmatpush2.bf16.msra.mxu0 0
  %5416 = vmatprep.subr.bf16.mxu0 0
  %5417 = vmatpush2.bf16.msra.mxu0 0
  %5418 = vmatprep.subr.bf16.mxu0 0
  %5419 = vmatpush2.bf16.msra.mxu0 0
  %5420 = vmatprep.subr.bf16.mxu0 0
  %5421 = vmatpush2.bf16.msra.mxu0 0
  %5422 = vmatprep.mubr.bf16.mxu0 0
  %5423 = vmatmul.mubr.bf16.gmra.mxu0 %v4855
  %v5424 = vpop.f32.mrf.mxu0
  %v5425 = vadd.f32 %v5384, %v5424
  %v5426 = vpop.f32.mrf.mxu0
  %v5427 = vadd.f32 %v5386, %v5426
  %v5428 = vpop.f32.mrf.mxu0
  %v5429 = vpop.f32.mrf.mxu0
  %5430 = vdwg.mxu0
  %5431 = vmatprep.subr.bf16.mxu0 %v3346
  %5432 = vmatpush1.bf16.msra.mxu0 %v3345
  %5433 = vmatprep.subr.bf16.mxu0 %v3338
  %5434 = vmatpush1.bf16.msra.mxu0 %v3337
  %5435 = vmatprep.subr.bf16.mxu0 %v3330
  %5436 = vmatpush1.bf16.msra.mxu0 %v3329
  %5437 = vmatprep.subr.bf16.mxu0 %v3322
  %5438 = vmatpush1.bf16.msra.mxu0 %v3321
  %5439 = vmatprep.subr.bf16.mxu0 %v3314
  %5440 = vmatpush1.bf16.msra.mxu0 %v3313
  %5441 = vmatprep.subr.bf16.mxu0 %v3306
  %5442 = vmatpush1.bf16.msra.mxu0 %v3305
  %5443 = vmatprep.subr.bf16.mxu0 %v3298
  %5444 = vmatpush1.bf16.msra.mxu0 %v3297
  %5445 = vmatprep.subr.bf16.mxu0 %v3290
  %5446 = vmatpush1.bf16.msra.mxu0 %v3289
  %5447 = vmatprep.subr.bf16.mxu0 %v3410
  %5448 = vmatpush2.bf16.msra.mxu0 %v3409
  %5449 = vmatprep.subr.bf16.mxu0 %v3402
  %5450 = vmatpush2.bf16.msra.mxu0 %v3401
  %5451 = vmatprep.subr.bf16.mxu0 %v3394
  %5452 = vmatpush2.bf16.msra.mxu0 %v3393
  %5453 = vmatprep.subr.bf16.mxu0 %v3386
  %5454 = vmatpush2.bf16.msra.mxu0 %v3385
  %5455 = vmatprep.subr.bf16.mxu0 %v3378
  %5456 = vmatpush2.bf16.msra.mxu0 %v3377
  %5457 = vmatprep.subr.bf16.mxu0 %v3370
  %5458 = vmatpush2.bf16.msra.mxu0 %v3369
  %5459 = vmatprep.subr.bf16.mxu0 %v3362
  %5460 = vmatpush2.bf16.msra.mxu0 %v3361
  %5461 = vmatprep.subr.bf16.mxu0 %v3354
  %5462 = vmatpush2.bf16.msra.mxu0 %v3353
  %5463 = vmatprep.mubr.bf16.mxu0 %v95
  %5464 = vmatmul.mubr.bf16.gmra.mxu0 %v94
  %v5465 = vpop.f32.mrf.mxu0
  %v5466 = vadd.f32 %v912, %v5465
  %v5467 = vpop.f32.mrf.mxu0
  %v5468 = vadd.f32 %v916, %v5467
  %v5469 = vpop.f32.mrf.mxu0
  %v5470 = vpop.f32.mrf.mxu0
  %5471 = vdwg.mxu0
  %5472 = vmatprep.subr.bf16.mxu0 %v3474
  %5473 = vmatpush1.bf16.msra.mxu0 %v3473
  %5474 = vmatprep.subr.bf16.mxu0 %v3466
  %5475 = vmatpush1.bf16.msra.mxu0 %v3465
  %5476 = vmatprep.subr.bf16.mxu0 %v3458
  %5477 = vmatpush1.bf16.msra.mxu0 %v3457
  %5478 = vmatprep.subr.bf16.mxu0 %v3450
  %5479 = vmatpush1.bf16.msra.mxu0 %v3449
  %5480 = vmatprep.subr.bf16.mxu0 %v3442
  %5481 = vmatpush1.bf16.msra.mxu0 %v3441
  %5482 = vmatprep.subr.bf16.mxu0 %v3434
  %5483 = vmatpush1.bf16.msra.mxu0 %v3433
  %5484 = vmatprep.subr.bf16.mxu0 %v3426
  %5485 = vmatpush1.bf16.msra.mxu0 %v3425
  %5486 = vmatprep.subr.bf16.mxu0 %v3418
  %5487 = vmatpush1.bf16.msra.mxu0 %v3417
  %5488 = vmatprep.subr.bf16.mxu0 %v3538
  %5489 = vmatpush2.bf16.msra.mxu0 %v3537
  %5490 = vmatprep.subr.bf16.mxu0 %v3530
  %5491 = vmatpush2.bf16.msra.mxu0 %v3529
  %5492 = vmatprep.subr.bf16.mxu0 %v3522
  %5493 = vmatpush2.bf16.msra.mxu0 %v3521
  %5494 = vmatprep.subr.bf16.mxu0 %v3514
  %5495 = vmatpush2.bf16.msra.mxu0 %v3513
  %5496 = vmatprep.subr.bf16.mxu0 %v3506
  %5497 = vmatpush2.bf16.msra.mxu0 %v3505
  %5498 = vmatprep.subr.bf16.mxu0 %v3498
  %5499 = vmatpush2.bf16.msra.mxu0 %v3497
  %5500 = vmatprep.subr.bf16.mxu0 %v3490
  %5501 = vmatpush2.bf16.msra.mxu0 %v3489
  %5502 = vmatprep.subr.bf16.mxu0 %v3482
  %5503 = vmatpush2.bf16.msra.mxu0 %v3481
  %5504 = vmatprep.mubr.bf16.mxu0 %v97
  %5505 = vmatmul.mubr.bf16.gmra.mxu0 %v96
  %v5506 = vpop.f32.mrf.mxu0
  %v5507 = vadd.f32 %v5466, %v5506
  %v5508 = vpop.f32.mrf.mxu0
  %v5509 = vadd.f32 %v5468, %v5508
  %v5510 = vpop.f32.mrf.mxu0
  %v5511 = vpop.f32.mrf.mxu0
  %5512 = vdwg.mxu0
  %5513 = vmatprep.subr.bf16.mxu0 %v3602
  %5514 = vmatpush1.bf16.msra.mxu0 %v3601
  %5515 = vmatprep.subr.bf16.mxu0 %v3594
  %5516 = vmatpush1.bf16.msra.mxu0 %v3593
  %5517 = vmatprep.subr.bf16.mxu0 %v3586
  %5518 = vmatpush1.bf16.msra.mxu0 %v3585
  %5519 = vmatprep.subr.bf16.mxu0 %v3578
  %5520 = vmatpush1.bf16.msra.mxu0 %v3577
  %5521 = vmatprep.subr.bf16.mxu0 %v3570
  %5522 = vmatpush1.bf16.msra.mxu0 %v3569
  %5523 = vmatprep.subr.bf16.mxu0 %v3562
  %5524 = vmatpush1.bf16.msra.mxu0 %v3561
  %5525 = vmatprep.subr.bf16.mxu0 %v3554
  %5526 = vmatpush1.bf16.msra.mxu0 %v3553
  %5527 = vmatprep.subr.bf16.mxu0 %v3546
  %5528 = vmatpush1.bf16.msra.mxu0 %v3545
  %5529 = vmatprep.subr.bf16.mxu0 %v3666
  %5530 = vmatpush2.bf16.msra.mxu0 %v3665
  %5531 = vmatprep.subr.bf16.mxu0 %v3658
  %5532 = vmatpush2.bf16.msra.mxu0 %v3657
  %5533 = vmatprep.subr.bf16.mxu0 %v3650
  %5534 = vmatpush2.bf16.msra.mxu0 %v3649
  %5535 = vmatprep.subr.bf16.mxu0 %v3642
  %5536 = vmatpush2.bf16.msra.mxu0 %v3641
  %5537 = vmatprep.subr.bf16.mxu0 %v3634
  %5538 = vmatpush2.bf16.msra.mxu0 %v3633
  %5539 = vmatprep.subr.bf16.mxu0 %v3626
  %5540 = vmatpush2.bf16.msra.mxu0 %v3625
  %5541 = vmatprep.subr.bf16.mxu0 %v3618
  %5542 = vmatpush2.bf16.msra.mxu0 %v3617
  %5543 = vmatprep.subr.bf16.mxu0 %v3610
  %5544 = vmatpush2.bf16.msra.mxu0 %v3609
  %5545 = vmatprep.mubr.bf16.mxu0 %v99
  %5546 = vmatmul.mubr.bf16.gmra.mxu0 %v98
  %v5547 = vpop.f32.mrf.mxu0
  %v5548 = vadd.f32 %v5507, %v5547
  %v5549 = vpop.f32.mrf.mxu0
  %v5550 = vadd.f32 %v5509, %v5549
  %v5551 = vpop.f32.mrf.mxu0
  %v5552 = vpop.f32.mrf.mxu0
  %5553 = vdwg.mxu0
  %5554 = vmatprep.subr.bf16.mxu0 %v3730
  %5555 = vmatpush1.bf16.msra.mxu0 %v3729
  %5556 = vmatprep.subr.bf16.mxu0 %v3722
  %5557 = vmatpush1.bf16.msra.mxu0 %v3721
  %5558 = vmatprep.subr.bf16.mxu0 %v3714
  %5559 = vmatpush1.bf16.msra.mxu0 %v3713
  %5560 = vmatprep.subr.bf16.mxu0 %v3706
  %5561 = vmatpush1.bf16.msra.mxu0 %v3705
  %5562 = vmatprep.subr.bf16.mxu0 %v3698
  %5563 = vmatpush1.bf16.msra.mxu0 %v3697
  %5564 = vmatprep.subr.bf16.mxu0 %v3690
  %5565 = vmatpush1.bf16.msra.mxu0 %v3689
  %5566 = vmatprep.subr.bf16.mxu0 %v3682
  %5567 = vmatpush1.bf16.msra.mxu0 %v3681
  %5568 = vmatprep.subr.bf16.mxu0 %v3674
  %5569 = vmatpush1.bf16.msra.mxu0 %v3673
  %5570 = vmatprep.subr.bf16.mxu0 %v3794
  %5571 = vmatpush2.bf16.msra.mxu0 %v3793
  %5572 = vmatprep.subr.bf16.mxu0 %v3786
  %5573 = vmatpush2.bf16.msra.mxu0 %v3785
  %5574 = vmatprep.subr.bf16.mxu0 %v3778
  %5575 = vmatpush2.bf16.msra.mxu0 %v3777
  %5576 = vmatprep.subr.bf16.mxu0 %v3770
  %5577 = vmatpush2.bf16.msra.mxu0 %v3769
  %5578 = vmatprep.subr.bf16.mxu0 %v3762
  %5579 = vmatpush2.bf16.msra.mxu0 %v3761
  %5580 = vmatprep.subr.bf16.mxu0 %v3754
  %5581 = vmatpush2.bf16.msra.mxu0 %v3753
  %5582 = vmatprep.subr.bf16.mxu0 %v3746
  %5583 = vmatpush2.bf16.msra.mxu0 %v3745
  %5584 = vmatprep.subr.bf16.mxu0 %v3738
  %5585 = vmatpush2.bf16.msra.mxu0 %v3737
  %5586 = vmatprep.mubr.bf16.mxu0 %v101
  %5587 = vmatmul.mubr.bf16.gmra.mxu0 %v100
  %v5588 = vpop.f32.mrf.mxu0
  %v5589 = vadd.f32 %v5548, %v5588
  %v5590 = vpop.f32.mrf.mxu0
  %v5591 = vadd.f32 %v5550, %v5590
  %v5592 = vpop.f32.mrf.mxu0
  %v5593 = vpop.f32.mrf.mxu0
  %5594 = vdwg.mxu0
  %5595 = vmatprep.subr.bf16.mxu0 %v3858
  %5596 = vmatpush1.bf16.msra.mxu0 %v3857
  %5597 = vmatprep.subr.bf16.mxu0 %v3850
  %5598 = vmatpush1.bf16.msra.mxu0 %v3849
  %5599 = vmatprep.subr.bf16.mxu0 %v3842
  %5600 = vmatpush1.bf16.msra.mxu0 %v3841
  %5601 = vmatprep.subr.bf16.mxu0 %v3834
  %5602 = vmatpush1.bf16.msra.mxu0 %v3833
  %5603 = vmatprep.subr.bf16.mxu0 %v3826
  %5604 = vmatpush1.bf16.msra.mxu0 %v3825
  %5605 = vmatprep.subr.bf16.mxu0 %v3818
  %5606 = vmatpush1.bf16.msra.mxu0 %v3817
  %5607 = vmatprep.subr.bf16.mxu0 %v3810
  %5608 = vmatpush1.bf16.msra.mxu0 %v3809
  %5609 = vmatprep.subr.bf16.mxu0 %v3802
  %5610 = vmatpush1.bf16.msra.mxu0 %v3801
  %5611 = vmatprep.subr.bf16.mxu0 %v3922
  %5612 = vmatpush2.bf16.msra.mxu0 %v3921
  %5613 = vmatprep.subr.bf16.mxu0 %v3914
  %5614 = vmatpush2.bf16.msra.mxu0 %v3913
  %5615 = vmatprep.subr.bf16.mxu0 %v3906
  %5616 = vmatpush2.bf16.msra.mxu0 %v3905
  %5617 = vmatprep.subr.bf16.mxu0 %v3898
  %5618 = vmatpush2.bf16.msra.mxu0 %v3897
  %5619 = vmatprep.subr.bf16.mxu0 %v3890
  %5620 = vmatpush2.bf16.msra.mxu0 %v3889
  %5621 = vmatprep.subr.bf16.mxu0 %v3882
  %5622 = vmatpush2.bf16.msra.mxu0 %v3881
  %5623 = vmatprep.subr.bf16.mxu0 %v3874
  %5624 = vmatpush2.bf16.msra.mxu0 %v3873
  %5625 = vmatprep.subr.bf16.mxu0 %v3866
  %5626 = vmatpush2.bf16.msra.mxu0 %v3865
  %5627 = vmatprep.mubr.bf16.mxu0 %v103
  %5628 = vmatmul.mubr.bf16.gmra.mxu0 %v102
  %v5629 = vpop.f32.mrf.mxu0
  %v5630 = vadd.f32 %v5589, %v5629
  %v5631 = vpop.f32.mrf.mxu0
  %v5632 = vadd.f32 %v5591, %v5631
  %v5633 = vpop.f32.mrf.mxu0
  %v5634 = vpop.f32.mrf.mxu0
  %5635 = vdwg.mxu0
  %5636 = vmatprep.subr.bf16.mxu0 %v3986
  %5637 = vmatpush1.bf16.msra.mxu0 %v3985
  %5638 = vmatprep.subr.bf16.mxu0 %v3978
  %5639 = vmatpush1.bf16.msra.mxu0 %v3977
  %5640 = vmatprep.subr.bf16.mxu0 %v3970
  %5641 = vmatpush1.bf16.msra.mxu0 %v3969
  %5642 = vmatprep.subr.bf16.mxu0 %v3962
  %5643 = vmatpush1.bf16.msra.mxu0 %v3961
  %5644 = vmatprep.subr.bf16.mxu0 %v3954
  %5645 = vmatpush1.bf16.msra.mxu0 %v3953
  %5646 = vmatprep.subr.bf16.mxu0 %v3946
  %5647 = vmatpush1.bf16.msra.mxu0 %v3945
  %5648 = vmatprep.subr.bf16.mxu0 %v3938
  %5649 = vmatpush1.bf16.msra.mxu0 %v3937
  %5650 = vmatprep.subr.bf16.mxu0 %v3930
  %5651 = vmatpush1.bf16.msra.mxu0 %v3929
  %5652 = vmatprep.subr.bf16.mxu0 %v4050
  %5653 = vmatpush2.bf16.msra.mxu0 %v4049
  %5654 = vmatprep.subr.bf16.mxu0 %v4042
  %5655 = vmatpush2.bf16.msra.mxu0 %v4041
  %5656 = vmatprep.subr.bf16.mxu0 %v4034
  %5657 = vmatpush2.bf16.msra.mxu0 %v4033
  %5658 = vmatprep.subr.bf16.mxu0 %v4026
  %5659 = vmatpush2.bf16.msra.mxu0 %v4025
  %5660 = vmatprep.subr.bf16.mxu0 %v4018
  %5661 = vmatpush2.bf16.msra.mxu0 %v4017
  %5662 = vmatprep.subr.bf16.mxu0 %v4010
  %5663 = vmatpush2.bf16.msra.mxu0 %v4009
  %5664 = vmatprep.subr.bf16.mxu0 %v4002
  %5665 = vmatpush2.bf16.msra.mxu0 %v4001
  %5666 = vmatprep.subr.bf16.mxu0 %v3994
  %5667 = vmatpush2.bf16.msra.mxu0 %v3993
  %5668 = vmatprep.mubr.bf16.mxu0 %v105
  %5669 = vmatmul.mubr.bf16.gmra.mxu0 %v104
  %v5670 = vpop.f32.mrf.mxu0
  %v5671 = vadd.f32 %v5630, %v5670
  %v5672 = vpop.f32.mrf.mxu0
  %v5673 = vadd.f32 %v5632, %v5672
  %v5674 = vpop.f32.mrf.mxu0
  %v5675 = vpop.f32.mrf.mxu0
  %5676 = vdwg.mxu0
  %5677 = vmatprep.subr.bf16.mxu0 0
  %5678 = vmatpush1.bf16.msra.mxu0 0
  %5679 = vmatprep.subr.bf16.mxu0 0
  %5680 = vmatpush1.bf16.msra.mxu0 0
  %5681 = vmatprep.subr.bf16.mxu0 0
  %5682 = vmatpush1.bf16.msra.mxu0 0
  %5683 = vmatprep.subr.bf16.mxu0 0
  %5684 = vmatpush1.bf16.msra.mxu0 0
  %5685 = vmatprep.subr.bf16.mxu0 0
  %5686 = vmatpush1.bf16.msra.mxu0 0
  %5687 = vmatprep.subr.bf16.mxu0 0
  %5688 = vmatpush1.bf16.msra.mxu0 0
  %5689 = vmatprep.subr.bf16.mxu0 %v4066
  %5690 = vmatpush1.bf16.msra.mxu0 %v4065
  %5691 = vmatprep.subr.bf16.mxu0 %v4058
  %5692 = vmatpush1.bf16.msra.mxu0 %v4057
  %5693 = vmatprep.subr.bf16.mxu0 0
  %5694 = vmatpush2.bf16.msra.mxu0 0
  %5695 = vmatprep.subr.bf16.mxu0 0
  %5696 = vmatpush2.bf16.msra.mxu0 0
  %5697 = vmatprep.subr.bf16.mxu0 0
  %5698 = vmatpush2.bf16.msra.mxu0 0
  %5699 = vmatprep.subr.bf16.mxu0 0
  %5700 = vmatpush2.bf16.msra.mxu0 0
  %5701 = vmatprep.subr.bf16.mxu0 0
  %5702 = vmatpush2.bf16.msra.mxu0 0
  %5703 = vmatprep.subr.bf16.mxu0 0
  %5704 = vmatpush2.bf16.msra.mxu0 0
  %5705 = vmatprep.subr.bf16.mxu0 0
  %5706 = vmatpush2.bf16.msra.mxu0 0
  %5707 = vmatprep.subr.bf16.mxu0 0
  %5708 = vmatpush2.bf16.msra.mxu0 0
  %5709 = vmatprep.mubr.bf16.mxu0 0
  %5710 = vmatmul.mubr.bf16.gmra.mxu0 %v4855
  %v5711 = vpop.f32.mrf.mxu0
  %v5712 = vadd.f32 %v5671, %v5711
  %v5713 = vpop.f32.mrf.mxu0
  %v5714 = vadd.f32 %v5673, %v5713
  %v5715 = vpop.f32.mrf.mxu0
  %v5716 = vpop.f32.mrf.mxu0
  %5717 = vdwg.mxu0
  %5718 = vmatprep.subr.bf16.mxu0 %v3348
  %5719 = vmatpush1.bf16.msra.mxu0 %v3347
  %5720 = vmatprep.subr.bf16.mxu0 %v3340
  %5721 = vmatpush1.bf16.msra.mxu0 %v3339
  %5722 = vmatprep.subr.bf16.mxu0 %v3332
  %5723 = vmatpush1.bf16.msra.mxu0 %v3331
  %5724 = vmatprep.subr.bf16.mxu0 %v3324
  %5725 = vmatpush1.bf16.msra.mxu0 %v3323
  %5726 = vmatprep.subr.bf16.mxu0 %v3316
  %5727 = vmatpush1.bf16.msra.mxu0 %v3315
  %5728 = vmatprep.subr.bf16.mxu0 %v3308
  %5729 = vmatpush1.bf16.msra.mxu0 %v3307
  %5730 = vmatprep.subr.bf16.mxu0 %v3300
  %5731 = vmatpush1.bf16.msra.mxu0 %v3299
  %5732 = vmatprep.subr.bf16.mxu0 %v3292
  %5733 = vmatpush1.bf16.msra.mxu0 %v3291
  %5734 = vmatprep.subr.bf16.mxu0 %v3412
  %5735 = vmatpush2.bf16.msra.mxu0 %v3411
  %5736 = vmatprep.subr.bf16.mxu0 %v3404
  %5737 = vmatpush2.bf16.msra.mxu0 %v3403
  %5738 = vmatprep.subr.bf16.mxu0 %v3396
  %5739 = vmatpush2.bf16.msra.mxu0 %v3395
  %5740 = vmatprep.subr.bf16.mxu0 %v3388
  %5741 = vmatpush2.bf16.msra.mxu0 %v3387
  %5742 = vmatprep.subr.bf16.mxu0 %v3380
  %5743 = vmatpush2.bf16.msra.mxu0 %v3379
  %5744 = vmatprep.subr.bf16.mxu0 %v3372
  %5745 = vmatpush2.bf16.msra.mxu0 %v3371
  %5746 = vmatprep.subr.bf16.mxu0 %v3364
  %5747 = vmatpush2.bf16.msra.mxu0 %v3363
  %5748 = vmatprep.subr.bf16.mxu0 %v3356
  %5749 = vmatpush2.bf16.msra.mxu0 %v3355
  %5750 = vmatprep.mubr.bf16.mxu0 %v95
  %5751 = vmatmul.mubr.bf16.gmra.mxu0 %v94
  %v5752 = vpop.f32.mrf.mxu0
  %v5753 = vadd.f32 %v920, %v5752
  %v5754 = vpop.f32.mrf.mxu0
  %v5755 = vadd.f32 %v924, %v5754
  %v5756 = vpop.f32.mrf.mxu0
  %v5757 = vpop.f32.mrf.mxu0
  %5758 = vdwg.mxu0
  %5759 = vmatprep.subr.bf16.mxu0 %v3476
  %5760 = vmatpush1.bf16.msra.mxu0 %v3475
  %5761 = vmatprep.subr.bf16.mxu0 %v3468
  %5762 = vmatpush1.bf16.msra.mxu0 %v3467
  %5763 = vmatprep.subr.bf16.mxu0 %v3460
  %5764 = vmatpush1.bf16.msra.mxu0 %v3459
  %5765 = vmatprep.subr.bf16.mxu0 %v3452
  %5766 = vmatpush1.bf16.msra.mxu0 %v3451
  %5767 = vmatprep.subr.bf16.mxu0 %v3444
  %5768 = vmatpush1.bf16.msra.mxu0 %v3443
  %5769 = vmatprep.subr.bf16.mxu0 %v3436
  %5770 = vmatpush1.bf16.msra.mxu0 %v3435
  %5771 = vmatprep.subr.bf16.mxu0 %v3428
  %5772 = vmatpush1.bf16.msra.mxu0 %v3427
  %5773 = vmatprep.subr.bf16.mxu0 %v3420
  %5774 = vmatpush1.bf16.msra.mxu0 %v3419
  %5775 = vmatprep.subr.bf16.mxu0 %v3540
  %5776 = vmatpush2.bf16.msra.mxu0 %v3539
  %5777 = vmatprep.subr.bf16.mxu0 %v3532
  %5778 = vmatpush2.bf16.msra.mxu0 %v3531
  %5779 = vmatprep.subr.bf16.mxu0 %v3524
  %5780 = vmatpush2.bf16.msra.mxu0 %v3523
  %5781 = vmatprep.subr.bf16.mxu0 %v3516
  %5782 = vmatpush2.bf16.msra.mxu0 %v3515
  %5783 = vmatprep.subr.bf16.mxu0 %v3508
  %5784 = vmatpush2.bf16.msra.mxu0 %v3507
  %5785 = vmatprep.subr.bf16.mxu0 %v3500
  %5786 = vmatpush2.bf16.msra.mxu0 %v3499
  %5787 = vmatprep.subr.bf16.mxu0 %v3492
  %5788 = vmatpush2.bf16.msra.mxu0 %v3491
  %5789 = vmatprep.subr.bf16.mxu0 %v3484
  %5790 = vmatpush2.bf16.msra.mxu0 %v3483
  %5791 = vmatprep.mubr.bf16.mxu0 %v97
  %5792 = vmatmul.mubr.bf16.gmra.mxu0 %v96
  %v5793 = vpop.f32.mrf.mxu0
  %v5794 = vadd.f32 %v5753, %v5793
  %v5795 = vpop.f32.mrf.mxu0
  %v5796 = vadd.f32 %v5755, %v5795
  %v5797 = vpop.f32.mrf.mxu0
  %v5798 = vpop.f32.mrf.mxu0
  %5799 = vdwg.mxu0
  %5800 = vmatprep.subr.bf16.mxu0 %v3604
  %5801 = vmatpush1.bf16.msra.mxu0 %v3603
  %5802 = vmatprep.subr.bf16.mxu0 %v3596
  %5803 = vmatpush1.bf16.msra.mxu0 %v3595
  %5804 = vmatprep.subr.bf16.mxu0 %v3588
  %5805 = vmatpush1.bf16.msra.mxu0 %v3587
  %5806 = vmatprep.subr.bf16.mxu0 %v3580
  %5807 = vmatpush1.bf16.msra.mxu0 %v3579
  %5808 = vmatprep.subr.bf16.mxu0 %v3572
  %5809 = vmatpush1.bf16.msra.mxu0 %v3571
  %5810 = vmatprep.subr.bf16.mxu0 %v3564
  %5811 = vmatpush1.bf16.msra.mxu0 %v3563
  %5812 = vmatprep.subr.bf16.mxu0 %v3556
  %5813 = vmatpush1.bf16.msra.mxu0 %v3555
  %5814 = vmatprep.subr.bf16.mxu0 %v3548
  %5815 = vmatpush1.bf16.msra.mxu0 %v3547
  %5816 = vmatprep.subr.bf16.mxu0 %v3668
  %5817 = vmatpush2.bf16.msra.mxu0 %v3667
  %5818 = vmatprep.subr.bf16.mxu0 %v3660
  %5819 = vmatpush2.bf16.msra.mxu0 %v3659
  %5820 = vmatprep.subr.bf16.mxu0 %v3652
  %5821 = vmatpush2.bf16.msra.mxu0 %v3651
  %5822 = vmatprep.subr.bf16.mxu0 %v3644
  %5823 = vmatpush2.bf16.msra.mxu0 %v3643
  %5824 = vmatprep.subr.bf16.mxu0 %v3636
  %5825 = vmatpush2.bf16.msra.mxu0 %v3635
  %5826 = vmatprep.subr.bf16.mxu0 %v3628
  %5827 = vmatpush2.bf16.msra.mxu0 %v3627
  %5828 = vmatprep.subr.bf16.mxu0 %v3620
  %5829 = vmatpush2.bf16.msra.mxu0 %v3619
  %5830 = vmatprep.subr.bf16.mxu0 %v3612
  %5831 = vmatpush2.bf16.msra.mxu0 %v3611
  %5832 = vmatprep.mubr.bf16.mxu0 %v99
  %5833 = vmatmul.mubr.bf16.gmra.mxu0 %v98
  %v5834 = vpop.f32.mrf.mxu0
  %v5835 = vadd.f32 %v5794, %v5834
  %v5836 = vpop.f32.mrf.mxu0
  %v5837 = vadd.f32 %v5796, %v5836
  %v5838 = vpop.f32.mrf.mxu0
  %v5839 = vpop.f32.mrf.mxu0
  %5840 = vdwg.mxu0
  %5841 = vmatprep.subr.bf16.mxu0 %v3732
  %5842 = vmatpush1.bf16.msra.mxu0 %v3731
  %5843 = vmatprep.subr.bf16.mxu0 %v3724
  %5844 = vmatpush1.bf16.msra.mxu0 %v3723
  %5845 = vmatprep.subr.bf16.mxu0 %v3716
  %5846 = vmatpush1.bf16.msra.mxu0 %v3715
  %5847 = vmatprep.subr.bf16.mxu0 %v3708
  %5848 = vmatpush1.bf16.msra.mxu0 %v3707
  %5849 = vmatprep.subr.bf16.mxu0 %v3700
  %5850 = vmatpush1.bf16.msra.mxu0 %v3699
  %5851 = vmatprep.subr.bf16.mxu0 %v3692
  %5852 = vmatpush1.bf16.msra.mxu0 %v3691
  %5853 = vmatprep.subr.bf16.mxu0 %v3684
  %5854 = vmatpush1.bf16.msra.mxu0 %v3683
  %5855 = vmatprep.subr.bf16.mxu0 %v3676
  %5856 = vmatpush1.bf16.msra.mxu0 %v3675
  %5857 = vmatprep.subr.bf16.mxu0 %v3796
  %5858 = vmatpush2.bf16.msra.mxu0 %v3795
  %5859 = vmatprep.subr.bf16.mxu0 %v3788
  %5860 = vmatpush2.bf16.msra.mxu0 %v3787
  %5861 = vmatprep.subr.bf16.mxu0 %v3780
  %5862 = vmatpush2.bf16.msra.mxu0 %v3779
  %5863 = vmatprep.subr.bf16.mxu0 %v3772
  %5864 = vmatpush2.bf16.msra.mxu0 %v3771
  %5865 = vmatprep.subr.bf16.mxu0 %v3764
  %5866 = vmatpush2.bf16.msra.mxu0 %v3763
  %5867 = vmatprep.subr.bf16.mxu0 %v3756
  %5868 = vmatpush2.bf16.msra.mxu0 %v3755
  %5869 = vmatprep.subr.bf16.mxu0 %v3748
  %5870 = vmatpush2.bf16.msra.mxu0 %v3747
  %5871 = vmatprep.subr.bf16.mxu0 %v3740
  %5872 = vmatpush2.bf16.msra.mxu0 %v3739
  %5873 = vmatprep.mubr.bf16.mxu0 %v101
  %5874 = vmatmul.mubr.bf16.gmra.mxu0 %v100
  %v5875 = vpop.f32.mrf.mxu0
  %v5876 = vadd.f32 %v5835, %v5875
  %v5877 = vpop.f32.mrf.mxu0
  %v5878 = vadd.f32 %v5837, %v5877
  %v5879 = vpop.f32.mrf.mxu0
  %v5880 = vpop.f32.mrf.mxu0
  %5881 = vdwg.mxu0
  %5882 = vmatprep.subr.bf16.mxu0 %v3860
  %5883 = vmatpush1.bf16.msra.mxu0 %v3859
  %5884 = vmatprep.subr.bf16.mxu0 %v3852
  %5885 = vmatpush1.bf16.msra.mxu0 %v3851
  %5886 = vmatprep.subr.bf16.mxu0 %v3844
  %5887 = vmatpush1.bf16.msra.mxu0 %v3843
  %5888 = vmatprep.subr.bf16.mxu0 %v3836
  %5889 = vmatpush1.bf16.msra.mxu0 %v3835
  %5890 = vmatprep.subr.bf16.mxu0 %v3828
  %5891 = vmatpush1.bf16.msra.mxu0 %v3827
  %5892 = vmatprep.subr.bf16.mxu0 %v3820
  %5893 = vmatpush1.bf16.msra.mxu0 %v3819
  %5894 = vmatprep.subr.bf16.mxu0 %v3812
  %5895 = vmatpush1.bf16.msra.mxu0 %v3811
  %5896 = vmatprep.subr.bf16.mxu0 %v3804
  %5897 = vmatpush1.bf16.msra.mxu0 %v3803
  %5898 = vmatprep.subr.bf16.mxu0 %v3924
  %5899 = vmatpush2.bf16.msra.mxu0 %v3923
  %5900 = vmatprep.subr.bf16.mxu0 %v3916
  %5901 = vmatpush2.bf16.msra.mxu0 %v3915
  %5902 = vmatprep.subr.bf16.mxu0 %v3908
  %5903 = vmatpush2.bf16.msra.mxu0 %v3907
  %5904 = vmatprep.subr.bf16.mxu0 %v3900
  %5905 = vmatpush2.bf16.msra.mxu0 %v3899
  %5906 = vmatprep.subr.bf16.mxu0 %v3892
  %5907 = vmatpush2.bf16.msra.mxu0 %v3891
  %5908 = vmatprep.subr.bf16.mxu0 %v3884
  %5909 = vmatpush2.bf16.msra.mxu0 %v3883
  %5910 = vmatprep.subr.bf16.mxu0 %v3876
  %5911 = vmatpush2.bf16.msra.mxu0 %v3875
  %5912 = vmatprep.subr.bf16.mxu0 %v3868
  %5913 = vmatpush2.bf16.msra.mxu0 %v3867
  %5914 = vmatprep.mubr.bf16.mxu0 %v103
  %5915 = vmatmul.mubr.bf16.gmra.mxu0 %v102
  %v5916 = vpop.f32.mrf.mxu0
  %v5917 = vadd.f32 %v5876, %v5916
  %v5918 = vpop.f32.mrf.mxu0
  %v5919 = vadd.f32 %v5878, %v5918
  %v5920 = vpop.f32.mrf.mxu0
  %v5921 = vpop.f32.mrf.mxu0
  %5922 = vdwg.mxu0
  %5923 = vmatprep.subr.bf16.mxu0 %v3988
  %5924 = vmatpush1.bf16.msra.mxu0 %v3987
  %5925 = vmatprep.subr.bf16.mxu0 %v3980
  %5926 = vmatpush1.bf16.msra.mxu0 %v3979
  %5927 = vmatprep.subr.bf16.mxu0 %v3972
  %5928 = vmatpush1.bf16.msra.mxu0 %v3971
  %5929 = vmatprep.subr.bf16.mxu0 %v3964
  %5930 = vmatpush1.bf16.msra.mxu0 %v3963
  %5931 = vmatprep.subr.bf16.mxu0 %v3956
  %5932 = vmatpush1.bf16.msra.mxu0 %v3955
  %5933 = vmatprep.subr.bf16.mxu0 %v3948
  %5934 = vmatpush1.bf16.msra.mxu0 %v3947
  %5935 = vmatprep.subr.bf16.mxu0 %v3940
  %5936 = vmatpush1.bf16.msra.mxu0 %v3939
  %5937 = vmatprep.subr.bf16.mxu0 %v3932
  %5938 = vmatpush1.bf16.msra.mxu0 %v3931
  %5939 = vmatprep.subr.bf16.mxu0 %v4052
  %5940 = vmatpush2.bf16.msra.mxu0 %v4051
  %5941 = vmatprep.subr.bf16.mxu0 %v4044
  %5942 = vmatpush2.bf16.msra.mxu0 %v4043
  %5943 = vmatprep.subr.bf16.mxu0 %v4036
  %5944 = vmatpush2.bf16.msra.mxu0 %v4035
  %5945 = vmatprep.subr.bf16.mxu0 %v4028
  %5946 = vmatpush2.bf16.msra.mxu0 %v4027
  %5947 = vmatprep.subr.bf16.mxu0 %v4020
  %5948 = vmatpush2.bf16.msra.mxu0 %v4019
  %5949 = vmatprep.subr.bf16.mxu0 %v4012
  %5950 = vmatpush2.bf16.msra.mxu0 %v4011
  %5951 = vmatprep.subr.bf16.mxu0 %v4004
  %5952 = vmatpush2.bf16.msra.mxu0 %v4003
  %5953 = vmatprep.subr.bf16.mxu0 %v3996
  %5954 = vmatpush2.bf16.msra.mxu0 %v3995
  %5955 = vmatprep.mubr.bf16.mxu0 %v105
  %5956 = vmatmul.mubr.bf16.gmra.mxu0 %v104
  %v5957 = vpop.f32.mrf.mxu0
  %v5958 = vadd.f32 %v5917, %v5957
  %v5959 = vpop.f32.mrf.mxu0
  %v5960 = vadd.f32 %v5919, %v5959
  %v5961 = vpop.f32.mrf.mxu0
  %v5962 = vpop.f32.mrf.mxu0
  %5963 = vdwg.mxu0
  %5964 = vmatprep.subr.bf16.mxu0 0
  %5965 = vmatpush1.bf16.msra.mxu0 0
  %5966 = vmatprep.subr.bf16.mxu0 0
  %5967 = vmatpush1.bf16.msra.mxu0 0
  %5968 = vmatprep.subr.bf16.mxu0 0
  %5969 = vmatpush1.bf16.msra.mxu0 0
  %5970 = vmatprep.subr.bf16.mxu0 0
  %5971 = vmatpush1.bf16.msra.mxu0 0
  %5972 = vmatprep.subr.bf16.mxu0 0
  %5973 = vmatpush1.bf16.msra.mxu0 0
  %5974 = vmatprep.subr.bf16.mxu0 0
  %5975 = vmatpush1.bf16.msra.mxu0 0
  %5976 = vmatprep.subr.bf16.mxu0 %v4068
  %5977 = vmatpush1.bf16.msra.mxu0 %v4067
  %5978 = vmatprep.subr.bf16.mxu0 %v4060
  %5979 = vmatpush1.bf16.msra.mxu0 %v4059
  %5980 = vmatprep.subr.bf16.mxu0 0
  %5981 = vmatpush2.bf16.msra.mxu0 0
  %5982 = vmatprep.subr.bf16.mxu0 0
  %5983 = vmatpush2.bf16.msra.mxu0 0
  %5984 = vmatprep.subr.bf16.mxu0 0
  %5985 = vmatpush2.bf16.msra.mxu0 0
  %5986 = vmatprep.subr.bf16.mxu0 0
  %5987 = vmatpush2.bf16.msra.mxu0 0
  %5988 = vmatprep.subr.bf16.mxu0 0
  %5989 = vmatpush2.bf16.msra.mxu0 0
  %5990 = vmatprep.subr.bf16.mxu0 0
  %5991 = vmatpush2.bf16.msra.mxu0 0
  %5992 = vmatprep.subr.bf16.mxu0 0
  %5993 = vmatpush2.bf16.msra.mxu0 0
  %5994 = vmatprep.subr.bf16.mxu0 0
  %5995 = vmatpush2.bf16.msra.mxu0 0
  %5996 = vmatprep.mubr.bf16.mxu0 0
  %5997 = vmatmul.mubr.bf16.gmra.mxu0 %v4855
  %v5998 = vpop.f32.mrf.mxu0
  %v5999 = vadd.f32 %v5958, %v5998
  %v6000 = vpop.f32.mrf.mxu0
  %v6001 = vadd.f32 %v5960, %v6000
  %v6002 = vpop.f32.mrf.mxu0
  %v6003 = vpop.f32.mrf.mxu0
  %6004 = vdwg.mxu0
  %v6005 = vxor.u32 %v5138, 2147483648
  %v6006 = vxor.u32 %v5140, 2147483648
  %v6007 = vxor.u32 %v5425, 2147483648
  %v6008 = vxor.u32 %v5427, 2147483648
  %v6009 = vxor.u32 %v5712, 2147483648
  %v6010 = vxor.u32 %v5714, 2147483648
  %v6011 = vxor.u32 %v5999, 2147483648
  %v6012 = vxor.u32 %v6001, 2147483648
  %v6013 = vmul.f32 %v6005, 1.442695
  %v6014 = vpow.pop %v6013
  %v6015 = vmul.f32 %v6006, 1.442695
  %v6016 = vpow.pop %v6015
  %v6017 = vmul.f32 %v6007, 1.442695
  %v6018 = vpow.pop %v6017
  %v6019 = vmul.f32 %v6008, 1.442695
  %v6020 = vpow.pop %v6019
  %v6021 = vmul.f32 %v6009, 1.442695
  %v6022 = vpow.pop %v6021
  %v6023 = vmul.f32 %v6010, 1.442695
  %v6024 = vpow.pop %v6023
  %v6025 = vmul.f32 %v6011, 1.442695
  %v6026 = vpow.pop %v6025
  %v6027 = vmul.f32 %v6012, 1.442695
  %v6028 = vpow.pop %v6027
  %v6029 = vadd.f32 %v6014, 1.0
  %v6030 = vadd.f32 %v6016, 1.0
  %v6031 = vadd.f32 %v6018, 1.0
  %v6032 = vadd.f32 %v6020, 1.0
  %v6033 = vadd.f32 %v6022, 1.0
  %v6034 = vadd.f32 %v6024, 1.0
  %v6035 = vadd.f32 %v6026, 1.0
  %v6036 = vadd.f32 %v6028, 1.0
  %v6037 = vrcp.pop %v6029
  %v6038 = vmul.f32 1.0, %v6037
  %v6039 = vrcp.pop %v6030
  %v6040 = vmul.f32 1.0, %v6039
  %v6041 = vrcp.pop %v6031
  %v6042 = vmul.f32 1.0, %v6041
  %v6043 = vrcp.pop %v6032
  %v6044 = vmul.f32 1.0, %v6043
  %v6045 = vrcp.pop %v6033
  %v6046 = vmul.f32 1.0, %v6045
  %v6047 = vrcp.pop %v6034
  %v6048 = vmul.f32 1.0, %v6047
  %v6049 = vrcp.pop %v6035
  %v6050 = vmul.f32 1.0, %v6049
  %v6051 = vrcp.pop %v6036
  %v6052 = vmul.f32 1.0, %v6051
  %v6061 = vcombine.low %v6038, %v6040
  %v6062 = vcombine.low %v6042, %v6044
  %v6064 = vunpack.c.l.s4 1983009808
  %v6065 = vunpack.c.0.s8 %v6064
  %v6066 = vlaneseq
  %v6067 = vshrl.u32 %v6066, 7
  %v6068 = vsub.s32 %v6065, %v6067
  %v6069 = vrot.slane %v6061, %v6068
  %v6071 = vunpack.c.l.s4 1983009808
  %v6072 = vunpack.c.0.s8 %v6071
  %v6073 = vlaneseq
  %v6074 = vshrl.u32 %v6073, 7
  %v6075 = vsub.s32 %v6072, %v6074
  %v6076 = vrot.slane %v6062, %v6075
  %v6077 = vcombine.low %v6069, %v6076
  %v6078 = vcombine.low %v6046, %v6048
  %v6079 = vcombine.low %v6050, %v6052
  %v6081 = vunpack.c.l.s4 1983009808
  %v6082 = vunpack.c.0.s8 %v6081
  %v6083 = vlaneseq
  %v6084 = vshrl.u32 %v6083, 7
  %v6085 = vsub.s32 %v6082, %v6084
  %v6086 = vrot.slane %v6078, %v6085
  %v6088 = vunpack.c.l.s4 1983009808
  %v6089 = vunpack.c.0.s8 %v6088
  %v6090 = vlaneseq
  %v6091 = vshrl.u32 %v6090, 7
  %v6092 = vsub.s32 %v6089, %v6091
  %v6093 = vrot.slane %v6079, %v6092
  %v6094 = vcombine.low %v6086, %v6093
  %6097 = vst [vmem:[%s3] sm:$0xff] %v6077
  %6098 = vst [vmem:[%s3 + $0x8] sm:$0xff] %v6094
  // Predicated region
  $region14: #{_lambda_.9} parent=0 // pred_check
    _
  $region15: #{_lambda_.9} parent=0 // pred_check_branch
    %6100 = sbr.rel (0) target = $region17
  $region16: #{_lambda_.9} parent=0 // pred_region
    _
  $region17: #{_lambda_.9} parent=0 // pred_fallthru
    _
  // Predicated region
  $region18: #{_lambda_.9} parent=0 // pred_check
    _
  $region19: #{_lambda_.9} parent=0 // pred_check_branch
    %6102 = sbr.rel (0) target = $region21
  $region20: #{_lambda_.9} parent=0 // pred_region
    _
  $region21: #{_lambda_.9} parent=0 // pred_fallthru
    _

</llo_original>
